<compile_context>
chip_gen: v6e
topology: v6e:2x2x1
jax: 0.10.0
libtpu: 0.0.40
codegen_flags: <defaults>
</compile_context>

<pallas_src>
import functools

import jax
import jax.numpy as jnp
from jax.experimental import pallas as pl
from jax.experimental.pallas import tpu as pltpu

EPS = 1e-5
_LANE = 128
_COMPUTE_DTYPE = jnp.bfloat16   # MXU matmul inputs; accumulation stays f32.


def _round_up(v, m):
    return ((v + m - 1) // m) * m


def _pick_row_tile(h, target=32):
    """Largest row tile <= target that is a multiple of 8 and divides H."""
    cands = [t for t in range(8, min(h, target) + 1, 8) if h % t == 0]
    return max(cands) if cands else h


@functools.lru_cache(maxsize=1)
def _vmem_limit_bytes():
    """~3/4 of on-chip VMEM (v5e/v6e ~96 MiB, v7x ~48 MiB); safe fallback."""
    try:
        cap = getattr(pltpu.get_tpu_info(), "vmem_capacity_bytes", None)
        if cap:
            return int(min(cap * 3 // 4, 100 * 1024 * 1024))
    except Exception:
        pass
    return 32 * 1024 * 1024


# ------------------------------ Pallas kernel ------------------------------ #
def _stage_kernel(x_ref, xt_ref, xb_ref, scale_ref, shift_ref, w_ref, *rest,
                  add_residual: bool, emit_stats: bool, cpad: int):
    """Folded-BN affine -> ReLU -> 3x3 conv (+ residual) on one (batch, row-tile).

    x_ref  : (1, TH, W, C)  rows owned by this tile
    xt_ref : (1, 1, W, C)   row above the tile (clamped read; gated at image top)
    xb_ref : (1, 1, W, C)   row below the tile (clamped read; gated at bottom)
    w_ref  : (3, 3, cpad, cpad) bf16 conv weights, laid out (kh, kw, cin, cout)
    """
    idx = 0
    if add_residual:
        res_ref = rest[idx]; idx += 1
    out_ref = rest[idx]; idx += 1
    stats_ref = rest[idx] if emit_stats else None

    _, TH, W, C = x_ref.shape
    s = scale_ref[...].reshape(1, 1, 1, cpad)
    t = shift_ref[...].reshape(1, 1, 1, cpad)

    def act(v):
        """Channel-pad to cpad -> folded BN affine -> ReLU, in f32."""
        v = v.astype(jnp.float32)
        if cpad != C:
            v = jnp.concatenate(
                [v, jnp.zeros(v.shape[:3] + (cpad - C,), jnp.float32)], axis=-1)
        return jnp.maximum(v * s + t, 0.0)

    # Conv zero-padding applies to the *activation*: halo rows that fall
    # outside the image must contribute exactly 0, so gate them post-ReLU.
    r = pl.program_id(1)
    gate_top = jnp.where(r == 0, 0.0, 1.0)
    gate_bot = jnp.where(r == pl.num_programs(1) - 1, 0.0, 1.0)

    a_top = act(xt_ref[...]) * gate_top
    a_mid = act(x_ref[...])
    a_bot = act(xb_ref[...]) * gate_bot
    a = jnp.concatenate([a_top, a_mid, a_bot], axis=1)        # (1, TH+2, W, cpad)

    # One zero column per side for the kw shifts (was 8 per side before);
    # single f32 -> bf16 cast of the haloed activation for the MXU.
    zc = jnp.zeros((1, TH + 2, 1, cpad), jnp.float32)
    aw = jnp.concatenate([zc, a, zc], axis=2).astype(_COMPUTE_DTYPE)

    # 9 accumulating MXU matmuls (K = cpad each) instead of a materialized
    # (TH, W, 9*cpad) im2col buffer -> far lower VMEM/vreg pressure.
    acc = jnp.zeros((TH * W, cpad), jnp.float32)
    for kh in range(3):
        for kw in range(3):
            lhs = aw[:, kh:kh + TH, kw:kw + W, :].reshape(TH * W, cpad)
            acc = acc + jnp.dot(lhs, w_ref[kh, kw],
                                preferred_element_type=jnp.float32)

    if emit_stats:
        # Partial BN2 statistics from the f32 accumulator (padded channels are
        # exactly 0) -> no extra HBM pass over h1 in the wrapper.
        ssum = jnp.sum(acc, axis=0, keepdims=True)            # (1, cpad)
        ssq = jnp.sum(acc * acc, axis=0, keepdims=True)       # (1, cpad)
        stats_ref[...] = jnp.concatenate([ssum, ssq],
                                         axis=0).reshape(1, 1, 2, cpad)

    # Unpadded store (last dim C): masked vst, but 32x less HBM than a
    # lane-padded write at C=4; lane-dense automatically once C >= 128.
    out = acc.reshape(1, TH, W, cpad)[..., :C]
    if add_residual:
        out = out + res_ref[...].astype(jnp.float32)
    out_ref[...] = out.astype(out_ref.dtype)


# ------------------------------ pallas_call wrapper ------------------------ #
def _stage(inp, scale, shift, w, *, residual=None, emit_stats=False,
           out_dtype=jnp.float32, row_tile=None):
    """Grid (N, H//TH): affine + relu + 3x3 conv (+ residual) (+ BN stats)."""
    N, H, W, C = inp.shape
    cpad = w.shape[-1]
    th = row_tile or _pick_row_tile(H)
    assert H % th == 0, (H, th)
    rt = H // th

    idx_main = lambda n, r: (n, r, 0, 0)
    # Halo rows: H-block size 1 => block index == row index.  Clamped at the
    # image boundary (duplicate read) and gated to zero inside the kernel.
    idx_top = lambda n, r: (n, jnp.maximum(r * th - 1, 0), 0, 0)
    idx_bot = lambda n, r: (n, jnp.minimum(r * th + th, H - 1), 0, 0)
    bcast = lambda n, r: (0, 0)

    in_specs = [
        pl.BlockSpec((1, th, W, C), idx_main),                # owned rows
        pl.BlockSpec((1, 1, W, C), idx_top),                  # top halo row
        pl.BlockSpec((1, 1, W, C), idx_bot),                  # bottom halo row
        pl.BlockSpec((1, cpad), bcast),                       # BN scale
        pl.BlockSpec((1, cpad), bcast),                       # BN shift
        pl.BlockSpec((3, 3, cpad, cpad), lambda n, r: (0, 0, 0, 0)),
    ]
    args = [inp, inp, inp, scale, shift, w]
    if residual is not None:
        in_specs.append(pl.BlockSpec((1, th, W, C), idx_main))
        args.append(residual)

    out_shape = [jax.ShapeDtypeStruct((N, H, W, C), out_dtype)]
    out_specs = [pl.BlockSpec((1, th, W, C), idx_main)]
    if emit_stats:
        out_shape.append(jax.ShapeDtypeStruct((N, rt, 2, cpad), jnp.float32))
        out_specs.append(pl.BlockSpec((1, 1, 2, cpad), lambda n, r: (n, r, 0, 0)))

    kernel = functools.partial(_stage_kernel,
                               add_residual=residual is not None,
                               emit_stats=emit_stats, cpad=cpad)
    res = pl.pallas_call(
        kernel,
        out_shape=tuple(out_shape),
        grid=(N, rt),
        in_specs=in_specs,
        out_specs=tuple(out_specs),
        compiler_params=pltpu.CompilerParams(
            dimension_semantics=("parallel", "parallel"),
            vmem_limit_bytes=_vmem_limit_bytes()),
    )(*args)
    if not isinstance(res, (tuple, list)):
        res = (res,)
    return tuple(res)


# ---------------------------- host-side helpers ----------------------------- #
def _fold_bn(sum_c, sumsq_c, count, gamma, beta, cpad):
    """Fold batch-norm batch statistics into per-channel scale/shift."""
    mean = sum_c / count
    var = sumsq_c / count - mean * mean      # biased variance (train-mode BN)
    scale = gamma * jax.lax.rsqrt(var + EPS)
    shift = beta - mean * scale
    pad = cpad - scale.shape[0]
    scale = jnp.pad(scale, (0, pad))         # padded channels map to exactly 0
    shift = jnp.pad(shift, (0, pad))
    return (scale.reshape(1, cpad).astype(jnp.float32),
            shift.reshape(1, cpad).astype(jnp.float32))


def _prep_conv_weight(w_oihw, cpad):
    """OIHW -> (3, 3, cpad_in, cpad_out) bf16 with zero-padded channels."""
    co, ci, _, _ = w_oihw.shape
    w = jnp.transpose(w_oihw, (2, 3, 1, 0))                    # (kh, kw, ci, co)
    w = jnp.pad(w, ((0, 0), (0, 0), (0, cpad - ci), (0, cpad - co)))
    return w.astype(_COMPUTE_DTYPE)


@functools.partial(jax.jit, static_argnames=("row_tile",))
def preact_basic_block(x_nchw, g1, b1, w1_oihw, g2, b2, w2_oihw, row_tile=None):
    """PreActBasicBlock forward (training-mode BN, stride=1, no downsample)."""
    # TODO(synk): stride>1 / downsample branch and BN running-stat updates are
    # not implemented (module config is stride=1, downsample=None; fwd only).
    N, C, H, W = x_nchw.shape
    cpad = _round_up(C, _LANE)
    # TODO(synk): for C >= 192 on v6e/v7x, pad to a multiple of 256 so each
    # per-tap matmul fills the 256-wide MXU.

    x = jnp.transpose(x_nchw, (0, 2, 3, 1))       # NHWC f32, UNPADDED in HBM

    w1 = _prep_conv_weight(w1_oihw, cpad)
    w2 = _prep_conv_weight(w2_oihw, cpad)

    # BN1 statistics: single cheap pass over x in the wrapper.
    cnt = N * H * W
    s1, t1 = _fold_bn(jnp.sum(x, axis=(0, 1, 2)),
                      jnp.sum(x * x, axis=(0, 1, 2)), cnt, g1, b1, cpad)

    # Stage 1: bn1 -> relu -> conv1; also emits partial BN2 stats (f32).
    h1, stats = _stage(x, s1, t1, w1, emit_stats=True,
                       out_dtype=_COMPUTE_DTYPE, row_tile=row_tile)

    tot = jnp.sum(stats, axis=(0, 1))             # (2, cpad) tiny reduction
    s2, t2 = _fold_bn(tot[0, :C], tot[1, :C], cnt, g2, b2, cpad)

    # Stage 2: bn2 -> relu -> conv2 -> + residual (unpadded f32 x).
    out, = _stage(h1, s2, t2, w2, residual=x, emit_stats=False,
                  out_dtype=jnp.float32, row_tile=row_tile)

    return jnp.transpose(out, (0, 3, 1, 2))       # back to NCHW


# ----------------------------- pure-JAX reference --------------------------- #
def _ref_forward(x_nchw, g1, b1, w1_oihw, g2, b2, w2_oihw):
    def bn(x, g, b):
        m = jnp.mean(x, axis=(0, 2, 3), keepdims=True)
        v = jnp.mean((x - m) ** 2, axis=(0, 2, 3), keepdims=True)
        return (x - m) / jnp.sqrt(v + EPS) * g.reshape(1, -1, 1, 1) \
            + b.reshape(1, -1, 1, 1)

    def conv(x, w):
        return jax.lax.conv_general_dilated(
            x, w, window_strides=(1, 1), padding=((1, 1), (1, 1)),
            dimension_numbers=('NCHW', 'OIHW', 'NCHW'))

    residual = x_nchw
    o = jnp.maximum(bn(x_nchw, g1, b1), 0.0)
    o = conv(o, w1_oihw)
    o = jnp.maximum(bn(o, g2, b2), 0.0)
    o = conv(o, w2_oihw)
    return o + residual


if __name__ == "__main__":
    # Small shapes consistent with the module: inplanes = planes = 4,
    # stride = 1, downsample = None.
    N, C, H, W = 2, 4, 16, 16
    key = jax.random.PRNGKey(0)
    kx, kw1, kw2, kg1, kb1, kg2, kb2 = jax.random.split(key, 7)

    x_nchw = jax.random.normal(kx, (N, C, H, W), dtype=jnp.float32)
    w1_oihw = 0.1 * jax.random.normal(kw1, (C, C, 3, 3), dtype=jnp.float32)
    w2_oihw = 0.1 * jax.random.normal(kw2, (C, C, 3, 3), dtype=jnp.float32)
    g1 = 1.0 + 0.1 * jax.random.normal(kg1, (C,), dtype=jnp.float32)
    b1 = 0.1 * jax.random.normal(kb1, (C,), dtype=jnp.float32)
    g2 = 1.0 + 0.1 * jax.random.normal(kg2, (C,), dtype=jnp.float32)
    b2 = 0.1 * jax.random.normal(kb2, (C,), dtype=jnp.float32)

    ref = _ref_forward(x_nchw, g1, b1, w1_oihw, g2, b2, w2_oihw)

    # Default row tiling (single 16-row tile per batch element).
    out = jax.block_until_ready(
        preact_basic_block(x_nchw, g1, b1, w1_oihw, g2, b2, w2_oihw))
    assert out.shape == (N, C, H, W)
    max_err = float(jnp.max(jnp.abs(out - ref)))
    assert jnp.allclose(out, ref, atol=5e-2, rtol=5e-2), max_err

    # 8-row tiles: exercises the cross-tile H-halo exchange + boundary gating.
    out8 = jax.block_until_ready(
        preact_basic_block(x_nchw, g1, b1, w1_oihw, g2, b2, w2_oihw, row_tile=8))
    max_err8 = float(jnp.max(jnp.abs(out8 - ref)))
    assert jnp.allclose(out8, ref, atol=5e-2, rtol=5e-2), max_err8

    print("KERNEL_OK")
</pallas_src>

<mosaic_0001>
module attributes {stable_mosaic.version = 11 : i64} {
  func.func @_stage_kernel(%arg0: i32, %arg1: i32, %arg2: memref<1x16x16x4xf32, #tpu.memory_space<vmem>>, %arg3: memref<1x1x16x4xf32, #tpu.memory_space<vmem>>, %arg4: memref<1x1x16x4xf32, #tpu.memory_space<vmem>>, %arg5: memref<1x128xf32, #tpu.memory_space<vmem>>, %arg6: memref<1x128xf32, #tpu.memory_space<vmem>>, %arg7: memref<3x3x128x128xbf16, #tpu.memory_space<vmem>>, %arg8: memref<1x16x16x4xbf16, #tpu.memory_space<vmem>>, %arg9: memref<1x1x2x128xf32, #tpu.memory_space<vmem>>) attributes {dimension_semantics = [#tpu.dimension_semantics<parallel>, #tpu.dimension_semantics<parallel>], iteration_bounds = array<i64: 2, 1>, scalar_prefetch = 0 : i64, scratch_operands = 0 : i64, tpu.core_type = #tpu.core_type<tc>, window_params = [{transform_indices = @transform_0, window_bounds = array<i64: 1, 16, 16, 4>}, {transform_indices = @transform_1, window_bounds = array<i64: 1, 1, 16, 4>}, {transform_indices = @transform_2, window_bounds = array<i64: 1, 1, 16, 4>}, {pipeline_mode = #tpu.pipeline_mode<synchronous>, transform_indices = @transform_3, window_bounds = array<i64: 1, 128>}, {pipeline_mode = #tpu.pipeline_mode<synchronous>, transform_indices = @transform_4, window_bounds = array<i64: 1, 128>}, {pipeline_mode = #tpu.pipeline_mode<synchronous>, transform_indices = @transform_5, window_bounds = array<i64: 3, 3, 128, 128>}, {transform_indices = @transform_6, window_bounds = array<i64: 1, 16, 16, 4>}, {transform_indices = @transform_7, window_bounds = array<i64: 1, 1, 2, 128>}]} {
    %c0 = arith.constant 0 : index
    %c0_0 = arith.constant 0 : index
    %0 = vector.load %arg5[%c0, %c0_0] : memref<1x128xf32, #tpu.memory_space<vmem>>, vector<1x128xf32>
    %1 = vector.shape_cast %0 : vector<1x128xf32> to vector<1x1x1x128xf32>
    %c0_1 = arith.constant 0 : index
    %c0_2 = arith.constant 0 : index
    %2 = vector.load %arg6[%c0_1, %c0_2] : memref<1x128xf32, #tpu.memory_space<vmem>>, vector<1x128xf32>
    %3 = vector.shape_cast %2 : vector<1x128xf32> to vector<1x1x1x128xf32>
    %c0_i32 = arith.constant 0 : i32
    %4 = arith.cmpi eq, %arg1, %c0_i32 : i32
    %cst = arith.constant 0.000000e+00 : f32
    %cst_3 = arith.constant 1.000000e+00 : f32
    %5 = arith.select %4, %cst, %cst_3 : f32
    %c0_i32_4 = arith.constant 0 : i32
    %6 = arith.cmpi eq, %arg1, %c0_i32_4 : i32
    %cst_5 = arith.constant 0.000000e+00 : f32
    %cst_6 = arith.constant 1.000000e+00 : f32
    %7 = arith.select %6, %cst_5, %cst_6 : f32
    %c0_7 = arith.constant 0 : index
    %c0_8 = arith.constant 0 : index
    %c0_9 = arith.constant 0 : index
    %c0_10 = arith.constant 0 : index
    %8 = vector.load %arg3[%c0_7, %c0_8, %c0_9, %c0_10] : memref<1x1x16x4xf32, #tpu.memory_space<vmem>>, vector<1x1x16x4xf32>
    %cst_11 = arith.constant 0.000000e+00 : f32
    %9 = vector.broadcast %cst_11 : f32 to vector<1x1x16x124xf32>
    %10 = tpu.concatenate %8, %9 in 3 : vector<1x1x16x4xf32>, vector<1x1x16x124xf32> -> vector<1x1x16x128xf32>
    %11 = vector.broadcast %1 : vector<1x1x1x128xf32> to vector<1x1x16x128xf32>
    %12 = arith.mulf %10, %11 : vector<1x1x16x128xf32>
    %13 = vector.broadcast %3 : vector<1x1x1x128xf32> to vector<1x1x16x128xf32>
    %14 = arith.addf %12, %13 : vector<1x1x16x128xf32>
    %cst_12 = arith.constant 0.000000e+00 : f32
    %15 = vector.broadcast %cst_12 : f32 to vector<1x1x16x128xf32>
    %16 = arith.maximumf %14, %15 : vector<1x1x16x128xf32>
    %17 = vector.broadcast %5 : f32 to vector<1x1x16x128xf32>
    %18 = arith.mulf %16, %17 : vector<1x1x16x128xf32>
    %c0_13 = arith.constant 0 : index
    %c0_14 = arith.constant 0 : index
    %c0_15 = arith.constant 0 : index
    %c0_16 = arith.constant 0 : index
    %19 = vector.load %arg2[%c0_13, %c0_14, %c0_15, %c0_16] : memref<1x16x16x4xf32, #tpu.memory_space<vmem>>, vector<1x16x16x4xf32>
    %cst_17 = arith.constant 0.000000e+00 : f32
    %20 = vector.broadcast %cst_17 : f32 to vector<1x16x16x124xf32>
    %21 = tpu.concatenate %19, %20 in 3 : vector<1x16x16x4xf32>, vector<1x16x16x124xf32> -> vector<1x16x16x128xf32>
    %22 = vector.broadcast %1 : vector<1x1x1x128xf32> to vector<1x16x16x128xf32>
    %23 = arith.mulf %21, %22 : vector<1x16x16x128xf32>
    %24 = vector.broadcast %3 : vector<1x1x1x128xf32> to vector<1x16x16x128xf32>
    %25 = arith.addf %23, %24 : vector<1x16x16x128xf32>
    %cst_18 = arith.constant 0.000000e+00 : f32
    %26 = vector.broadcast %cst_18 : f32 to vector<1x16x16x128xf32>
    %27 = arith.maximumf %25, %26 : vector<1x16x16x128xf32>
    %c0_19 = arith.constant 0 : index
    %c0_20 = arith.constant 0 : index
    %c0_21 = arith.constant 0 : index
    %c0_22 = arith.constant 0 : index
    %28 = vector.load %arg4[%c0_19, %c0_20, %c0_21, %c0_22] : memref<1x1x16x4xf32, #tpu.memory_space<vmem>>, vector<1x1x16x4xf32>
    %cst_23 = arith.constant 0.000000e+00 : f32
    %29 = vector.broadcast %cst_23 : f32 to vector<1x1x16x124xf32>
    %30 = tpu.concatenate %28, %29 in 3 : vector<1x1x16x4xf32>, vector<1x1x16x124xf32> -> vector<1x1x16x128xf32>
    %31 = vector.broadcast %1 : vector<1x1x1x128xf32> to vector<1x1x16x128xf32>
    %32 = arith.mulf %30, %31 : vector<1x1x16x128xf32>
    %33 = vector.broadcast %3 : vector<1x1x1x128xf32> to vector<1x1x16x128xf32>
    %34 = arith.addf %32, %33 : vector<1x1x16x128xf32>
    %cst_24 = arith.constant 0.000000e+00 : f32
    %35 = vector.broadcast %cst_24 : f32 to vector<1x1x16x128xf32>
    %36 = arith.maximumf %34, %35 : vector<1x1x16x128xf32>
    %37 = vector.broadcast %7 : f32 to vector<1x1x16x128xf32>
    %38 = arith.mulf %36, %37 : vector<1x1x16x128xf32>
    %39 = tpu.concatenate %18, %27, %38 in 1 : vector<1x1x16x128xf32>, vector<1x16x16x128xf32>, vector<1x1x16x128xf32> -> vector<1x18x16x128xf32>
    %cst_25 = arith.constant 0.000000e+00 : f32
    %40 = vector.broadcast %cst_25 : f32 to vector<1x18x1x128xf32>
    %41 = tpu.concatenate %40, %39, %40 in 2 : vector<1x18x1x128xf32>, vector<1x18x16x128xf32>, vector<1x18x1x128xf32> -> vector<1x18x18x128xf32>
    %42 = arith.truncf %41 : vector<1x18x18x128xf32> to vector<1x18x18x128xbf16>
    %cst_26 = arith.constant 0.000000e+00 : f32
    %43 = vector.broadcast %cst_26 : f32 to vector<256x128xf32>
    %44 = vector.extract_strided_slice %42 {offsets = [0, 0, 0, 0], sizes = [1, 16, 16, 128], strides = [1, 1, 1, 1]} : vector<1x18x18x128xbf16> to vector<1x16x16x128xbf16>
    %45 = vector.shape_cast %44 : vector<1x16x16x128xbf16> to vector<256x128xbf16>
    %c0_27 = arith.constant 0 : index
    %c0_28 = arith.constant 0 : index
    %c0_29 = arith.constant 0 : index
    %c0_30 = arith.constant 0 : index
    %46 = vector.load %arg7[%c0_27, %c0_28, %c0_29, %c0_30] : memref<3x3x128x128xbf16, #tpu.memory_space<vmem>>, vector<1x1x128x128xbf16>
    %47 = vector.shape_cast %46 : vector<1x1x128x128xbf16> to vector<128x128xbf16>
    %cst_31 = arith.constant dense<0.000000e+00> : vector<256x128xf32>
    %48 = tpu.matmul %45, %47, %cst_31 {dimension_numbers = #tpu.dot_dimension_numbers<[1], [0], [0], [1], [0, 0, 1, 1], [], []>} : vector<256x128xbf16>, vector<128x128xbf16>, vector<256x128xf32> -> vector<256x128xf32>
    %49 = arith.addf %43, %48 : vector<256x128xf32>
    %50 = vector.extract_strided_slice %42 {offsets = [0, 0, 1, 0], sizes = [1, 16, 16, 128], strides = [1, 1, 1, 1]} : vector<1x18x18x128xbf16> to vector<1x16x16x128xbf16>
    %51 = vector.shape_cast %50 : vector<1x16x16x128xbf16> to vector<256x128xbf16>
    %c0_32 = arith.constant 0 : index
    %c1 = arith.constant 1 : index
    %c0_33 = arith.constant 0 : index
    %c0_34 = arith.constant 0 : index
    %52 = vector.load %arg7[%c0_32, %c1, %c0_33, %c0_34] : memref<3x3x128x128xbf16, #tpu.memory_space<vmem>>, vector<1x1x128x128xbf16>
    %53 = vector.shape_cast %52 : vector<1x1x128x128xbf16> to vector<128x128xbf16>
    %cst_35 = arith.constant dense<0.000000e+00> : vector<256x128xf32>
    %54 = tpu.matmul %51, %53, %cst_35 {dimension_numbers = #tpu.dot_dimension_numbers<[1], [0], [0], [1], [0, 0, 1, 1], [], []>} : vector<256x128xbf16>, vector<128x128xbf16>, vector<256x128xf32> -> vector<256x128xf32>
    %55 = arith.addf %49, %54 : vector<256x128xf32>
    %56 = vector.extract_strided_slice %42 {offsets = [0, 0, 2, 0], sizes = [1, 16, 16, 128], strides = [1, 1, 1, 1]} : vector<1x18x18x128xbf16> to vector<1x16x16x128xbf16>
    %57 = vector.shape_cast %56 : vector<1x16x16x128xbf16> to vector<256x128xbf16>
    %c0_36 = arith.constant 0 : index
    %c2 = arith.constant 2 : index
    %c0_37 = arith.constant 0 : index
    %c0_38 = arith.constant 0 : index
    %58 = vector.load %arg7[%c0_36, %c2, %c0_37, %c0_38] : memref<3x3x128x128xbf16, #tpu.memory_space<vmem>>, vector<1x1x128x128xbf16>
    %59 = vector.shape_cast %58 : vector<1x1x128x128xbf16> to vector<128x128xbf16>
    %cst_39 = arith.constant dense<0.000000e+00> : vector<256x128xf32>
    %60 = tpu.matmul %57, %59, %cst_39 {dimension_numbers = #tpu.dot_dimension_numbers<[1], [0], [0], [1], [0, 0, 1, 1], [], []>} : vector<256x128xbf16>, vector<128x128xbf16>, vector<256x128xf32> -> vector<256x128xf32>
    %61 = arith.addf %55, %60 : vector<256x128xf32>
    %62 = vector.extract_strided_slice %42 {offsets = [0, 1, 0, 0], sizes = [1, 16, 16, 128], strides = [1, 1, 1, 1]} : vector<1x18x18x128xbf16> to vector<1x16x16x128xbf16>
    %63 = vector.shape_cast %62 : vector<1x16x16x128xbf16> to vector<256x128xbf16>
    %c1_40 = arith.constant 1 : index
    %c0_41 = arith.constant 0 : index
    %c0_42 = arith.constant 0 : index
    %c0_43 = arith.constant 0 : index
    %64 = vector.load %arg7[%c1_40, %c0_41, %c0_42, %c0_43] : memref<3x3x128x128xbf16, #tpu.memory_space<vmem>>, vector<1x1x128x128xbf16>
    %65 = vector.shape_cast %64 : vector<1x1x128x128xbf16> to vector<128x128xbf16>
    %cst_44 = arith.constant dense<0.000000e+00> : vector<256x128xf32>
    %66 = tpu.matmul %63, %65, %cst_44 {dimension_numbers = #tpu.dot_dimension_numbers<[1], [0], [0], [1], [0, 0, 1, 1], [], []>} : vector<256x128xbf16>, vector<128x128xbf16>, vector<256x128xf32> -> vector<256x128xf32>
    %67 = arith.addf %61, %66 : vector<256x128xf32>
    %68 = vector.extract_strided_slice %42 {offsets = [0, 1, 1, 0], sizes = [1, 16, 16, 128], strides = [1, 1, 1, 1]} : vector<1x18x18x128xbf16> to vector<1x16x16x128xbf16>
    %69 = vector.shape_cast %68 : vector<1x16x16x128xbf16> to vector<256x128xbf16>
    %c1_45 = arith.constant 1 : index
    %c1_46 = arith.constant 1 : index
    %c0_47 = arith.constant 0 : index
    %c0_48 = arith.constant 0 : index
    %70 = vector.load %arg7[%c1_45, %c1_46, %c0_47, %c0_48] : memref<3x3x128x128xbf16, #tpu.memory_space<vmem>>, vector<1x1x128x128xbf16>
    %71 = vector.shape_cast %70 : vector<1x1x128x128xbf16> to vector<128x128xbf16>
    %cst_49 = arith.constant dense<0.000000e+00> : vector<256x128xf32>
    %72 = tpu.matmul %69, %71, %cst_49 {dimension_numbers = #tpu.dot_dimension_numbers<[1], [0], [0], [1], [0, 0, 1, 1], [], []>} : vector<256x128xbf16>, vector<128x128xbf16>, vector<256x128xf32> -> vector<256x128xf32>
    %73 = arith.addf %67, %72 : vector<256x128xf32>
    %74 = vector.extract_strided_slice %42 {offsets = [0, 1, 2, 0], sizes = [1, 16, 16, 128], strides = [1, 1, 1, 1]} : vector<1x18x18x128xbf16> to vector<1x16x16x128xbf16>
    %75 = vector.shape_cast %74 : vector<1x16x16x128xbf16> to vector<256x128xbf16>
    %c1_50 = arith.constant 1 : index
    %c2_51 = arith.constant 2 : index
    %c0_52 = arith.constant 0 : index
    %c0_53 = arith.constant 0 : index
    %76 = vector.load %arg7[%c1_50, %c2_51, %c0_52, %c0_53] : memref<3x3x128x128xbf16, #tpu.memory_space<vmem>>, vector<1x1x128x128xbf16>
    %77 = vector.shape_cast %76 : vector<1x1x128x128xbf16> to vector<128x128xbf16>
    %cst_54 = arith.constant dense<0.000000e+00> : vector<256x128xf32>
    %78 = tpu.matmul %75, %77, %cst_54 {dimension_numbers = #tpu.dot_dimension_numbers<[1], [0], [0], [1], [0, 0, 1, 1], [], []>} : vector<256x128xbf16>, vector<128x128xbf16>, vector<256x128xf32> -> vector<256x128xf32>
    %79 = arith.addf %73, %78 : vector<256x128xf32>
    %80 = vector.extract_strided_slice %42 {offsets = [0, 2, 0, 0], sizes = [1, 16, 16, 128], strides = [1, 1, 1, 1]} : vector<1x18x18x128xbf16> to vector<1x16x16x128xbf16>
    %81 = vector.shape_cast %80 : vector<1x16x16x128xbf16> to vector<256x128xbf16>
    %c2_55 = arith.constant 2 : index
    %c0_56 = arith.constant 0 : index
    %c0_57 = arith.constant 0 : index
    %c0_58 = arith.constant 0 : index
    %82 = vector.load %arg7[%c2_55, %c0_56, %c0_57, %c0_58] : memref<3x3x128x128xbf16, #tpu.memory_space<vmem>>, vector<1x1x128x128xbf16>
    %83 = vector.shape_cast %82 : vector<1x1x128x128xbf16> to vector<128x128xbf16>
    %cst_59 = arith.constant dense<0.000000e+00> : vector<256x128xf32>
    %84 = tpu.matmul %81, %83, %cst_59 {dimension_numbers = #tpu.dot_dimension_numbers<[1], [0], [0], [1], [0, 0, 1, 1], [], []>} : vector<256x128xbf16>, vector<128x128xbf16>, vector<256x128xf32> -> vector<256x128xf32>
    %85 = arith.addf %79, %84 : vector<256x128xf32>
    %86 = vector.extract_strided_slice %42 {offsets = [0, 2, 1, 0], sizes = [1, 16, 16, 128], strides = [1, 1, 1, 1]} : vector<1x18x18x128xbf16> to vector<1x16x16x128xbf16>
    %87 = vector.shape_cast %86 : vector<1x16x16x128xbf16> to vector<256x128xbf16>
    %c2_60 = arith.constant 2 : index
    %c1_61 = arith.constant 1 : index
    %c0_62 = arith.constant 0 : index
    %c0_63 = arith.constant 0 : index
    %88 = vector.load %arg7[%c2_60, %c1_61, %c0_62, %c0_63] : memref<3x3x128x128xbf16, #tpu.memory_space<vmem>>, vector<1x1x128x128xbf16>
    %89 = vector.shape_cast %88 : vector<1x1x128x128xbf16> to vector<128x128xbf16>
    %cst_64 = arith.constant dense<0.000000e+00> : vector<256x128xf32>
    %90 = tpu.matmul %87, %89, %cst_64 {dimension_numbers = #tpu.dot_dimension_numbers<[1], [0], [0], [1], [0, 0, 1, 1], [], []>} : vector<256x128xbf16>, vector<128x128xbf16>, vector<256x128xf32> -> vector<256x128xf32>
    %91 = arith.addf %85, %90 : vector<256x128xf32>
    %92 = vector.extract_strided_slice %42 {offsets = [0, 2, 2, 0], sizes = [1, 16, 16, 128], strides = [1, 1, 1, 1]} : vector<1x18x18x128xbf16> to vector<1x16x16x128xbf16>
    %93 = vector.shape_cast %92 : vector<1x16x16x128xbf16> to vector<256x128xbf16>
    %c2_65 = arith.constant 2 : index
    %c2_66 = arith.constant 2 : index
    %c0_67 = arith.constant 0 : index
    %c0_68 = arith.constant 0 : index
    %94 = vector.load %arg7[%c2_65, %c2_66, %c0_67, %c0_68] : memref<3x3x128x128xbf16, #tpu.memory_space<vmem>>, vector<1x1x128x128xbf16>
    %95 = vector.shape_cast %94 : vector<1x1x128x128xbf16> to vector<128x128xbf16>
    %cst_69 = arith.constant dense<0.000000e+00> : vector<256x128xf32>
    %96 = tpu.matmul %93, %95, %cst_69 {dimension_numbers = #tpu.dot_dimension_numbers<[1], [0], [0], [1], [0, 0, 1, 1], [], []>} : vector<256x128xbf16>, vector<128x128xbf16>, vector<256x128xf32> -> vector<256x128xf32>
    %97 = arith.addf %91, %96 : vector<256x128xf32>
    %cst_70 = arith.constant dense<0.000000e+00> : vector<128xf32>
    %98 = vector.multi_reduction <add>, %97, %cst_70 [0] : vector<256x128xf32> to vector<128xf32>
    %99 = vector.shape_cast %98 : vector<128xf32> to vector<1x128xf32>
    %100 = arith.mulf %97, %97 : vector<256x128xf32>
    %cst_71 = arith.constant dense<0.000000e+00> : vector<128xf32>
    %101 = vector.multi_reduction <add>, %100, %cst_71 [0] : vector<256x128xf32> to vector<128xf32>
    %102 = vector.shape_cast %101 : vector<128xf32> to vector<1x128xf32>
    %103 = tpu.concatenate %99, %102 in 0 : vector<1x128xf32>, vector<1x128xf32> -> vector<2x128xf32>
    %104 = vector.shape_cast %103 : vector<2x128xf32> to vector<1x1x2x128xf32>
    %c0_72 = arith.constant 0 : index
    %c0_73 = arith.constant 0 : index
    %c0_74 = arith.constant 0 : index
    %c0_75 = arith.constant 0 : index
    %105 = vector.load %arg9[%c0_72, %c0_73, %c0_74, %c0_75] : memref<1x1x2x128xf32, #tpu.memory_space<vmem>>, vector<1x1x2x128xf32>
    tpu.vector_store %arg9[%c0_72, %c0_73, %c0_74, %c0_75], %104 {strides = array<i32>} : memref<1x1x2x128xf32, #tpu.memory_space<vmem>>, vector<1x1x2x128xf32>,
    %106 = vector.shape_cast %97 : vector<256x128xf32> to vector<1x16x16x128xf32>
    %107 = vector.extract_strided_slice %106 {offsets = [0, 0, 0, 0], sizes = [1, 16, 16, 4], strides = [1, 1, 1, 1]} : vector<1x16x16x128xf32> to vector<1x16x16x4xf32>
    %108 = arith.truncf %107 : vector<1x16x16x4xf32> to vector<1x16x16x4xbf16>
    %c0_76 = arith.constant 0 : index
    %c0_77 = arith.constant 0 : index
    %c0_78 = arith.constant 0 : index
    %c0_79 = arith.constant 0 : index
    %109 = vector.load %arg8[%c0_76, %c0_77, %c0_78, %c0_79] : memref<1x16x16x4xbf16, #tpu.memory_space<vmem>>, vector<1x16x16x4xbf16>
    tpu.vector_store %arg8[%c0_76, %c0_77, %c0_78, %c0_79], %108 {strides = array<i32>} : memref<1x16x16x4xbf16, #tpu.memory_space<vmem>>, vector<1x16x16x4xbf16>,
    return
  }
  func.func @transform_0(%arg0: i32, %arg1: i32) -> (i32, i32, i32, i32) {
    %c0_i32 = arith.constant 0 : i32
    %c0_i32_0 = arith.constant 0 : i32
    %c0_i32_1 = arith.constant 0 : i32
    return %arg0, %arg1, %c0_i32, %c0_i32_0 : i32, i32, i32, i32
  }
  func.func @transform_1(%arg0: i32, %arg1: i32) -> (i32, i32, i32, i32) {
    %c16_i32 = arith.constant 16 : i32
    %0 = arith.muli %arg1, %c16_i32 : i32
    %c1_i32 = arith.constant 1 : i32
    %1 = arith.subi %0, %c1_i32 : i32
    %c0_i32 = arith.constant 0 : i32
    %2 = arith.maxsi %1, %c0_i32 : i32
    %c0_i32_0 = arith.constant 0 : i32
    %c0_i32_1 = arith.constant 0 : i32
    %c0_i32_2 = arith.constant 0 : i32
    return %arg0, %2, %c0_i32_0, %c0_i32_1 : i32, i32, i32, i32
  }
  func.func @transform_2(%arg0: i32, %arg1: i32) -> (i32, i32, i32, i32) {
    %c16_i32 = arith.constant 16 : i32
    %0 = arith.muli %arg1, %c16_i32 : i32
    %c16_i32_0 = arith.constant 16 : i32
    %1 = arith.addi %0, %c16_i32_0 : i32
    %c15_i32 = arith.constant 15 : i32
    %2 = arith.minsi %1, %c15_i32 : i32
    %c0_i32 = arith.constant 0 : i32
    %c0_i32_1 = arith.constant 0 : i32
    %c0_i32_2 = arith.constant 0 : i32
    return %arg0, %2, %c0_i32, %c0_i32_1 : i32, i32, i32, i32
  }
  func.func @transform_3(%arg0: i32, %arg1: i32) -> (i32, i32) {
    %c0_i32 = arith.constant 0 : i32
    %c0_i32_0 = arith.constant 0 : i32
    %c0_i32_1 = arith.constant 0 : i32
    return %c0_i32, %c0_i32_0 : i32, i32
  }
  func.func @transform_4(%arg0: i32, %arg1: i32) -> (i32, i32) {
    %c0_i32 = arith.constant 0 : i32
    %c0_i32_0 = arith.constant 0 : i32
    %c0_i32_1 = arith.constant 0 : i32
    return %c0_i32, %c0_i32_0 : i32, i32
  }
  func.func @transform_5(%arg0: i32, %arg1: i32) -> (i32, i32, i32, i32) {
    %c0_i32 = arith.constant 0 : i32
    %c0_i32_0 = arith.constant 0 : i32
    %c0_i32_1 = arith.constant 0 : i32
    %c0_i32_2 = arith.constant 0 : i32
    %c0_i32_3 = arith.constant 0 : i32
    return %c0_i32, %c0_i32_0, %c0_i32_1, %c0_i32_2 : i32, i32, i32, i32
  }
  func.func @transform_6(%arg0: i32, %arg1: i32) -> (i32, i32, i32, i32) {
    %c0_i32 = arith.constant 0 : i32
    %c0_i32_0 = arith.constant 0 : i32
    %c0_i32_1 = arith.constant 0 : i32
    return %arg0, %arg1, %c0_i32, %c0_i32_0 : i32, i32, i32, i32
  }
  func.func @transform_7(%arg0: i32, %arg1: i32) -> (i32, i32, i32, i32) {
    %c0_i32 = arith.constant 0 : i32
    %c0_i32_0 = arith.constant 0 : i32
    %c0_i32_1 = arith.constant 0 : i32
    return %arg0, %arg1, %c0_i32, %c0_i32_0 : i32, i32, i32, i32
  }
}

module attributes {stable_mosaic.version = 11 : i64} {
  func.func @_stage_kernel(%arg0: i32, %arg1: i32, %arg2: memref<1x16x16x4xbf16, #tpu.memory_space<vmem>>, %arg3: memref<1x1x16x4xbf16, #tpu.memory_space<vmem>>, %arg4: memref<1x1x16x4xbf16, #tpu.memory_space<vmem>>, %arg5: memref<1x128xf32, #tpu.memory_space<vmem>>, %arg6: memref<1x128xf32, #tpu.memory_space<vmem>>, %arg7: memref<3x3x128x128xbf16, #tpu.memory_space<vmem>>, %arg8: memref<1x16x16x4xf32, #tpu.memory_space<vmem>>, %arg9: memref<1x16x16x4xf32, #tpu.memory_space<vmem>>) attributes {dimension_semantics = [#tpu.dimension_semantics<parallel>, #tpu.dimension_semantics<parallel>], iteration_bounds = array<i64: 2, 1>, scalar_prefetch = 0 : i64, scratch_operands = 0 : i64, tpu.core_type = #tpu.core_type<tc>, window_params = [{transform_indices = @transform_0, window_bounds = array<i64: 1, 16, 16, 4>}, {transform_indices = @transform_1, window_bounds = array<i64: 1, 1, 16, 4>}, {transform_indices = @transform_2, window_bounds = array<i64: 1, 1, 16, 4>}, {pipeline_mode = #tpu.pipeline_mode<synchronous>, transform_indices = @transform_3, window_bounds = array<i64: 1, 128>}, {pipeline_mode = #tpu.pipeline_mode<synchronous>, transform_indices = @transform_4, window_bounds = array<i64: 1, 128>}, {pipeline_mode = #tpu.pipeline_mode<synchronous>, transform_indices = @transform_5, window_bounds = array<i64: 3, 3, 128, 128>}, {transform_indices = @transform_6, window_bounds = array<i64: 1, 16, 16, 4>}, {transform_indices = @transform_7, window_bounds = array<i64: 1, 16, 16, 4>}]} {
    %c0 = arith.constant 0 : index
    %c0_0 = arith.constant 0 : index
    %0 = vector.load %arg5[%c0, %c0_0] : memref<1x128xf32, #tpu.memory_space<vmem>>, vector<1x128xf32>
    %1 = vector.shape_cast %0 : vector<1x128xf32> to vector<1x1x1x128xf32>
    %c0_1 = arith.constant 0 : index
    %c0_2 = arith.constant 0 : index
    %2 = vector.load %arg6[%c0_1, %c0_2] : memref<1x128xf32, #tpu.memory_space<vmem>>, vector<1x128xf32>
    %3 = vector.shape_cast %2 : vector<1x128xf32> to vector<1x1x1x128xf32>
    %c0_i32 = arith.constant 0 : i32
    %4 = arith.cmpi eq, %arg1, %c0_i32 : i32
    %cst = arith.constant 0.000000e+00 : f32
    %cst_3 = arith.constant 1.000000e+00 : f32
    %5 = arith.select %4, %cst, %cst_3 : f32
    %c0_i32_4 = arith.constant 0 : i32
    %6 = arith.cmpi eq, %arg1, %c0_i32_4 : i32
    %cst_5 = arith.constant 0.000000e+00 : f32
    %cst_6 = arith.constant 1.000000e+00 : f32
    %7 = arith.select %6, %cst_5, %cst_6 : f32
    %c0_7 = arith.constant 0 : index
    %c0_8 = arith.constant 0 : index
    %c0_9 = arith.constant 0 : index
    %c0_10 = arith.constant 0 : index
    %8 = vector.load %arg3[%c0_7, %c0_8, %c0_9, %c0_10] : memref<1x1x16x4xbf16, #tpu.memory_space<vmem>>, vector<1x1x16x4xbf16>
    %9 = arith.extf %8 : vector<1x1x16x4xbf16> to vector<1x1x16x4xf32>
    %cst_11 = arith.constant 0.000000e+00 : f32
    %10 = vector.broadcast %cst_11 : f32 to vector<1x1x16x124xf32>
    %11 = tpu.concatenate %9, %10 in 3 : vector<1x1x16x4xf32>, vector<1x1x16x124xf32> -> vector<1x1x16x128xf32>
    %12 = vector.broadcast %1 : vector<1x1x1x128xf32> to vector<1x1x16x128xf32>
    %13 = arith.mulf %11, %12 : vector<1x1x16x128xf32>
    %14 = vector.broadcast %3 : vector<1x1x1x128xf32> to vector<1x1x16x128xf32>
    %15 = arith.addf %13, %14 : vector<1x1x16x128xf32>
    %cst_12 = arith.constant 0.000000e+00 : f32
    %16 = vector.broadcast %cst_12 : f32 to vector<1x1x16x128xf32>
    %17 = arith.maximumf %15, %16 : vector<1x1x16x128xf32>
    %18 = vector.broadcast %5 : f32 to vector<1x1x16x128xf32>
    %19 = arith.mulf %17, %18 : vector<1x1x16x128xf32>
    %c0_13 = arith.constant 0 : index
    %c0_14 = arith.constant 0 : index
    %c0_15 = arith.constant 0 : index
    %c0_16 = arith.constant 0 : index
    %20 = vector.load %arg2[%c0_13, %c0_14, %c0_15, %c0_16] : memref<1x16x16x4xbf16, #tpu.memory_space<vmem>>, vector<1x16x16x4xbf16>
    %21 = arith.extf %20 : vector<1x16x16x4xbf16> to vector<1x16x16x4xf32>
    %cst_17 = arith.constant 0.000000e+00 : f32
    %22 = vector.broadcast %cst_17 : f32 to vector<1x16x16x124xf32>
    %23 = tpu.concatenate %21, %22 in 3 : vector<1x16x16x4xf32>, vector<1x16x16x124xf32> -> vector<1x16x16x128xf32>
    %24 = vector.broadcast %1 : vector<1x1x1x128xf32> to vector<1x16x16x128xf32>
    %25 = arith.mulf %23, %24 : vector<1x16x16x128xf32>
    %26 = vector.broadcast %3 : vector<1x1x1x128xf32> to vector<1x16x16x128xf32>
    %27 = arith.addf %25, %26 : vector<1x16x16x128xf32>
    %cst_18 = arith.constant 0.000000e+00 : f32
    %28 = vector.broadcast %cst_18 : f32 to vector<1x16x16x128xf32>
    %29 = arith.maximumf %27, %28 : vector<1x16x16x128xf32>
    %c0_19 = arith.constant 0 : index
    %c0_20 = arith.constant 0 : index
    %c0_21 = arith.constant 0 : index
    %c0_22 = arith.constant 0 : index
    %30 = vector.load %arg4[%c0_19, %c0_20, %c0_21, %c0_22] : memref<1x1x16x4xbf16, #tpu.memory_space<vmem>>, vector<1x1x16x4xbf16>
    %31 = arith.extf %30 : vector<1x1x16x4xbf16> to vector<1x1x16x4xf32>
    %cst_23 = arith.constant 0.000000e+00 : f32
    %32 = vector.broadcast %cst_23 : f32 to vector<1x1x16x124xf32>
    %33 = tpu.concatenate %31, %32 in 3 : vector<1x1x16x4xf32>, vector<1x1x16x124xf32> -> vector<1x1x16x128xf32>
    %34 = vector.broadcast %1 : vector<1x1x1x128xf32> to vector<1x1x16x128xf32>
    %35 = arith.mulf %33, %34 : vector<1x1x16x128xf32>
    %36 = vector.broadcast %3 : vector<1x1x1x128xf32> to vector<1x1x16x128xf32>
    %37 = arith.addf %35, %36 : vector<1x1x16x128xf32>
    %cst_24 = arith.constant 0.000000e+00 : f32
    %38 = vector.broadcast %cst_24 : f32 to vector<1x1x16x128xf32>
    %39 = arith.maximumf %37, %38 : vector<1x1x16x128xf32>
    %40 = vector.broadcast %7 : f32 to vector<1x1x16x128xf32>
    %41 = arith.mulf %39, %40 : vector<1x1x16x128xf32>
    %42 = tpu.concatenate %19, %29, %41 in 1 : vector<1x1x16x128xf32>, vector<1x16x16x128xf32>, vector<1x1x16x128xf32> -> vector<1x18x16x128xf32>
    %cst_25 = arith.constant 0.000000e+00 : f32
    %43 = vector.broadcast %cst_25 : f32 to vector<1x18x1x128xf32>
    %44 = tpu.concatenate %43, %42, %43 in 2 : vector<1x18x1x128xf32>, vector<1x18x16x128xf32>, vector<1x18x1x128xf32> -> vector<1x18x18x128xf32>
    %45 = arith.truncf %44 : vector<1x18x18x128xf32> to vector<1x18x18x128xbf16>
    %cst_26 = arith.constant 0.000000e+00 : f32
    %46 = vector.broadcast %cst_26 : f32 to vector<256x128xf32>
    %47 = vector.extract_strided_slice %45 {offsets = [0, 0, 0, 0], sizes = [1, 16, 16, 128], strides = [1, 1, 1, 1]} : vector<1x18x18x128xbf16> to vector<1x16x16x128xbf16>
    %48 = vector.shape_cast %47 : vector<1x16x16x128xbf16> to vector<256x128xbf16>
    %c0_27 = arith.constant 0 : index
    %c0_28 = arith.constant 0 : index
    %c0_29 = arith.constant 0 : index
    %c0_30 = arith.constant 0 : index
    %49 = vector.load %arg7[%c0_27, %c0_28, %c0_29, %c0_30] : memref<3x3x128x128xbf16, #tpu.memory_space<vmem>>, vector<1x1x128x128xbf16>
    %50 = vector.shape_cast %49 : vector<1x1x128x128xbf16> to vector<128x128xbf16>
    %cst_31 = arith.constant dense<0.000000e+00> : vector<256x128xf32>
    %51 = tpu.matmul %48, %50, %cst_31 {dimension_numbers = #tpu.dot_dimension_numbers<[1], [0], [0], [1], [0, 0, 1, 1], [], []>} : vector<256x128xbf16>, vector<128x128xbf16>, vector<256x128xf32> -> vector<256x128xf32>
    %52 = arith.addf %46, %51 : vector<256x128xf32>
    %53 = vector.extract_strided_slice %45 {offsets = [0, 0, 1, 0], sizes = [1, 16, 16, 128], strides = [1, 1, 1, 1]} : vector<1x18x18x128xbf16> to vector<1x16x16x128xbf16>
    %54 = vector.shape_cast %53 : vector<1x16x16x128xbf16> to vector<256x128xbf16>
    %c0_32 = arith.constant 0 : index
    %c1 = arith.constant 1 : index
    %c0_33 = arith.constant 0 : index
    %c0_34 = arith.constant 0 : index
    %55 = vector.load %arg7[%c0_32, %c1, %c0_33, %c0_34] : memref<3x3x128x128xbf16, #tpu.memory_space<vmem>>, vector<1x1x128x128xbf16>
    %56 = vector.shape_cast %55 : vector<1x1x128x128xbf16> to vector<128x128xbf16>
    %cst_35 = arith.constant dense<0.000000e+00> : vector<256x128xf32>
    %57 = tpu.matmul %54, %56, %cst_35 {dimension_numbers = #tpu.dot_dimension_numbers<[1], [0], [0], [1], [0, 0, 1, 1], [], []>} : vector<256x128xbf16>, vector<128x128xbf16>, vector<256x128xf32> -> vector<256x128xf32>
    %58 = arith.addf %52, %57 : vector<256x128xf32>
    %59 = vector.extract_strided_slice %45 {offsets = [0, 0, 2, 0], sizes = [1, 16, 16, 128], strides = [1, 1, 1, 1]} : vector<1x18x18x128xbf16> to vector<1x16x16x128xbf16>
    %60 = vector.shape_cast %59 : vector<1x16x16x128xbf16> to vector<256x128xbf16>
    %c0_36 = arith.constant 0 : index
    %c2 = arith.constant 2 : index
    %c0_37 = arith.constant 0 : index
    %c0_38 = arith.constant 0 : index
    %61 = vector.load %arg7[%c0_36, %c2, %c0_37, %c0_38] : memref<3x3x128x128xbf16, #tpu.memory_space<vmem>>, vector<1x1x128x128xbf16>
    %62 = vector.shape_cast %61 : vector<1x1x128x128xbf16> to vector<128x128xbf16>
    %cst_39 = arith.constant dense<0.000000e+00> : vector<256x128xf32>
    %63 = tpu.matmul %60, %62, %cst_39 {dimension_numbers = #tpu.dot_dimension_numbers<[1], [0], [0], [1], [0, 0, 1, 1], [], []>} : vector<256x128xbf16>, vector<128x128xbf16>, vector<256x128xf32> -> vector<256x128xf32>
    %64 = arith.addf %58, %63 : vector<256x128xf32>
    %65 = vector.extract_strided_slice %45 {offsets = [0, 1, 0, 0], sizes = [1, 16, 16, 128], strides = [1, 1, 1, 1]} : vector<1x18x18x128xbf16> to vector<1x16x16x128xbf16>
    %66 = vector.shape_cast %65 : vector<1x16x16x128xbf16> to vector<256x128xbf16>
    %c1_40 = arith.constant 1 : index
    %c0_41 = arith.constant 0 : index
    %c0_42 = arith.constant 0 : index
    %c0_43 = arith.constant 0 : index
    %67 = vector.load %arg7[%c1_40, %c0_41, %c0_42, %c0_43] : memref<3x3x128x128xbf16, #tpu.memory_space<vmem>>, vector<1x1x128x128xbf16>
    %68 = vector.shape_cast %67 : vector<1x1x128x128xbf16> to vector<128x128xbf16>
    %cst_44 = arith.constant dense<0.000000e+00> : vector<256x128xf32>
    %69 = tpu.matmul %66, %68, %cst_44 {dimension_numbers = #tpu.dot_dimension_numbers<[1], [0], [0], [1], [0, 0, 1, 1], [], []>} : vector<256x128xbf16>, vector<128x128xbf16>, vector<256x128xf32> -> vector<256x128xf32>
    %70 = arith.addf %64, %69 : vector<256x128xf32>
    %71 = vector.extract_strided_slice %45 {offsets = [0, 1, 1, 0], sizes = [1, 16, 16, 128], strides = [1, 1, 1, 1]} : vector<1x18x18x128xbf16> to vector<1x16x16x128xbf16>
    %72 = vector.shape_cast %71 : vector<1x16x16x128xbf16> to vector<256x128xbf16>
    %c1_45 = arith.constant 1 : index
    %c1_46 = arith.constant 1 : index
    %c0_47 = arith.constant 0 : index
    %c0_48 = arith.constant 0 : index
    %73 = vector.load %arg7[%c1_45, %c1_46, %c0_47, %c0_48] : memref<3x3x128x128xbf16, #tpu.memory_space<vmem>>, vector<1x1x128x128xbf16>
    %74 = vector.shape_cast %73 : vector<1x1x128x128xbf16> to vector<128x128xbf16>
    %cst_49 = arith.constant dense<0.000000e+00> : vector<256x128xf32>
    %75 = tpu.matmul %72, %74, %cst_49 {dimension_numbers = #tpu.dot_dimension_numbers<[1], [0], [0], [1], [0, 0, 1, 1], [], []>} : vector<256x128xbf16>, vector<128x128xbf16>, vector<256x128xf32> -> vector<256x128xf32>
    %76 = arith.addf %70, %75 : vector<256x128xf32>
    %77 = vector.extract_strided_slice %45 {offsets = [0, 1, 2, 0], sizes = [1, 16, 16, 128], strides = [1, 1, 1, 1]} : vector<1x18x18x128xbf16> to vector<1x16x16x128xbf16>
    %78 = vector.shape_cast %77 : vector<1x16x16x128xbf16> to vector<256x128xbf16>
    %c1_50 = arith.constant 1 : index
    %c2_51 = arith.constant 2 : index
    %c0_52 = arith.constant 0 : index
    %c0_53 = arith.constant 0 : index
    %79 = vector.load %arg7[%c1_50, %c2_51, %c0_52, %c0_53] : memref<3x3x128x128xbf16, #tpu.memory_space<vmem>>, vector<1x1x128x128xbf16>
    %80 = vector.shape_cast %79 : vector<1x1x128x128xbf16> to vector<128x128xbf16>
    %cst_54 = arith.constant dense<0.000000e+00> : vector<256x128xf32>
    %81 = tpu.matmul %78, %80, %cst_54 {dimension_numbers = #tpu.dot_dimension_numbers<[1], [0], [0], [1], [0, 0, 1, 1], [], []>} : vector<256x128xbf16>, vector<128x128xbf16>, vector<256x128xf32> -> vector<256x128xf32>
    %82 = arith.addf %76, %81 : vector<256x128xf32>
    %83 = vector.extract_strided_slice %45 {offsets = [0, 2, 0, 0], sizes = [1, 16, 16, 128], strides = [1, 1, 1, 1]} : vector<1x18x18x128xbf16> to vector<1x16x16x128xbf16>
    %84 = vector.shape_cast %83 : vector<1x16x16x128xbf16> to vector<256x128xbf16>
    %c2_55 = arith.constant 2 : index
    %c0_56 = arith.constant 0 : index
    %c0_57 = arith.constant 0 : index
    %c0_58 = arith.constant 0 : index
    %85 = vector.load %arg7[%c2_55, %c0_56, %c0_57, %c0_58] : memref<3x3x128x128xbf16, #tpu.memory_space<vmem>>, vector<1x1x128x128xbf16>
    %86 = vector.shape_cast %85 : vector<1x1x128x128xbf16> to vector<128x128xbf16>
    %cst_59 = arith.constant dense<0.000000e+00> : vector<256x128xf32>
    %87 = tpu.matmul %84, %86, %cst_59 {dimension_numbers = #tpu.dot_dimension_numbers<[1], [0], [0], [1], [0, 0, 1, 1], [], []>} : vector<256x128xbf16>, vector<128x128xbf16>, vector<256x128xf32> -> vector<256x128xf32>
    %88 = arith.addf %82, %87 : vector<256x128xf32>
    %89 = vector.extract_strided_slice %45 {offsets = [0, 2, 1, 0], sizes = [1, 16, 16, 128], strides = [1, 1, 1, 1]} : vector<1x18x18x128xbf16> to vector<1x16x16x128xbf16>
    %90 = vector.shape_cast %89 : vector<1x16x16x128xbf16> to vector<256x128xbf16>
    %c2_60 = arith.constant 2 : index
    %c1_61 = arith.constant 1 : index
    %c0_62 = arith.constant 0 : index
    %c0_63 = arith.constant 0 : index
    %91 = vector.load %arg7[%c2_60, %c1_61, %c0_62, %c0_63] : memref<3x3x128x128xbf16, #tpu.memory_space<vmem>>, vector<1x1x128x128xbf16>
    %92 = vector.shape_cast %91 : vector<1x1x128x128xbf16> to vector<128x128xbf16>
    %cst_64 = arith.constant dense<0.000000e+00> : vector<256x128xf32>
    %93 = tpu.matmul %90, %92, %cst_64 {dimension_numbers = #tpu.dot_dimension_numbers<[1], [0], [0], [1], [0, 0, 1, 1], [], []>} : vector<256x128xbf16>, vector<128x128xbf16>, vector<256x128xf32> -> vector<256x128xf32>
    %94 = arith.addf %88, %93 : vector<256x128xf32>
    %95 = vector.extract_strided_slice %45 {offsets = [0, 2, 2, 0], sizes = [1, 16, 16, 128], strides = [1, 1, 1, 1]} : vector<1x18x18x128xbf16> to vector<1x16x16x128xbf16>
    %96 = vector.shape_cast %95 : vector<1x16x16x128xbf16> to vector<256x128xbf16>
    %c2_65 = arith.constant 2 : index
    %c2_66 = arith.constant 2 : index
    %c0_67 = arith.constant 0 : index
    %c0_68 = arith.constant 0 : index
    %97 = vector.load %arg7[%c2_65, %c2_66, %c0_67, %c0_68] : memref<3x3x128x128xbf16, #tpu.memory_space<vmem>>, vector<1x1x128x128xbf16>
    %98 = vector.shape_cast %97 : vector<1x1x128x128xbf16> to vector<128x128xbf16>
    %cst_69 = arith.constant dense<0.000000e+00> : vector<256x128xf32>
    %99 = tpu.matmul %96, %98, %cst_69 {dimension_numbers = #tpu.dot_dimension_numbers<[1], [0], [0], [1], [0, 0, 1, 1], [], []>} : vector<256x128xbf16>, vector<128x128xbf16>, vector<256x128xf32> -> vector<256x128xf32>
    %100 = arith.addf %94, %99 : vector<256x128xf32>
    %101 = vector.shape_cast %100 : vector<256x128xf32> to vector<1x16x16x128xf32>
    %102 = vector.extract_strided_slice %101 {offsets = [0, 0, 0, 0], sizes = [1, 16, 16, 4], strides = [1, 1, 1, 1]} : vector<1x16x16x128xf32> to vector<1x16x16x4xf32>
    %c0_70 = arith.constant 0 : index
    %c0_71 = arith.constant 0 : index
    %c0_72 = arith.constant 0 : index
    %c0_73 = arith.constant 0 : index
    %103 = vector.load %arg8[%c0_70, %c0_71, %c0_72, %c0_73] : memref<1x16x16x4xf32, #tpu.memory_space<vmem>>, vector<1x16x16x4xf32>
    %104 = arith.addf %102, %103 : vector<1x16x16x4xf32>
    %c0_74 = arith.constant 0 : index
    %c0_75 = arith.constant 0 : index
    %c0_76 = arith.constant 0 : index
    %c0_77 = arith.constant 0 : index
    %105 = vector.load %arg9[%c0_74, %c0_75, %c0_76, %c0_77] : memref<1x16x16x4xf32, #tpu.memory_space<vmem>>, vector<1x16x16x4xf32>
    tpu.vector_store %arg9[%c0_74, %c0_75, %c0_76, %c0_77], %104 {strides = array<i32>} : memref<1x16x16x4xf32, #tpu.memory_space<vmem>>, vector<1x16x16x4xf32>,
    return
  }
  func.func @transform_0(%arg0: i32, %arg1: i32) -> (i32, i32, i32, i32) {
    %c0_i32 = arith.constant 0 : i32
    %c0_i32_0 = arith.constant 0 : i32
    %c0_i32_1 = arith.constant 0 : i32
    return %arg0, %arg1, %c0_i32, %c0_i32_0 : i32, i32, i32, i32
  }
  func.func @transform_1(%arg0: i32, %arg1: i32) -> (i32, i32, i32, i32) {
    %c16_i32 = arith.constant 16 : i32
    %0 = arith.muli %arg1, %c16_i32 : i32
    %c1_i32 = arith.constant 1 : i32
    %1 = arith.subi %0, %c1_i32 : i32
    %c0_i32 = arith.constant 0 : i32
    %2 = arith.maxsi %1, %c0_i32 : i32
    %c0_i32_0 = arith.constant 0 : i32
    %c0_i32_1 = arith.constant 0 : i32
    %c0_i32_2 = arith.constant 0 : i32
    return %arg0, %2, %c0_i32_0, %c0_i32_1 : i32, i32, i32, i32
  }
  func.func @transform_2(%arg0: i32, %arg1: i32) -> (i32, i32, i32, i32) {
    %c16_i32 = arith.constant 16 : i32
    %0 = arith.muli %arg1, %c16_i32 : i32
    %c16_i32_0 = arith.constant 16 : i32
    %1 = arith.addi %0, %c16_i32_0 : i32
    %c15_i32 = arith.constant 15 : i32
    %2 = arith.minsi %1, %c15_i32 : i32
    %c0_i32 = arith.constant 0 : i32
    %c0_i32_1 = arith.constant 0 : i32
    %c0_i32_2 = arith.constant 0 : i32
    return %arg0, %2, %c0_i32, %c0_i32_1 : i32, i32, i32, i32
  }
  func.func @transform_3(%arg0: i32, %arg1: i32) -> (i32, i32) {
    %c0_i32 = arith.constant 0 : i32
    %c0_i32_0 = arith.constant 0 : i32
    %c0_i32_1 = arith.constant 0 : i32
    return %c0_i32, %c0_i32_0 : i32, i32
  }
  func.func @transform_4(%arg0: i32, %arg1: i32) -> (i32, i32) {
    %c0_i32 = arith.constant 0 : i32
    %c0_i32_0 = arith.constant 0 : i32
    %c0_i32_1 = arith.constant 0 : i32
    return %c0_i32, %c0_i32_0 : i32, i32
  }
  func.func @transform_5(%arg0: i32, %arg1: i32) -> (i32, i32, i32, i32) {
    %c0_i32 = arith.constant 0 : i32
    %c0_i32_0 = arith.constant 0 : i32
    %c0_i32_1 = arith.constant 0 : i32
    %c0_i32_2 = arith.constant 0 : i32
    %c0_i32_3 = arith.constant 0 : i32
    return %c0_i32, %c0_i32_0, %c0_i32_1, %c0_i32_2 : i32, i32, i32, i32
  }
  func.func @transform_6(%arg0: i32, %arg1: i32) -> (i32, i32, i32, i32) {
    %c0_i32 = arith.constant 0 : i32
    %c0_i32_0 = arith.constant 0 : i32
    %c0_i32_1 = arith.constant 0 : i32
    return %arg0, %arg1, %c0_i32, %c0_i32_0 : i32, i32, i32, i32
  }
  func.func @transform_7(%arg0: i32, %arg1: i32) -> (i32, i32, i32, i32) {
    %c0_i32 = arith.constant 0 : i32
    %c0_i32_0 = arith.constant 0 : i32
    %c0_i32_1 = arith.constant 0 : i32
    return %arg0, %arg1, %c0_i32, %c0_i32_0 : i32, i32, i32, i32
  }
}

</mosaic_0001>

<llo_original>
// kernel: preact_basic_block.2
$region0: #{preact_basic_block.2}
  #allocation0 [shape = 'u32[]', space=smem, size = 0x4, offset = 0x4, fixed_abs, tag = 'smem constant byte address 0x4 - core index']
  #allocation1 [shape = 'u32[144,128]{1,0:T(1,128)}', space=vmem, size = 0x12000, scoped, tag = 'internal scratch']
  %s0 = inlined_call_operand.vmem [shape: f32[2,16,16,4], index: 0, kind: input, shape index: {}, may-alias: {0,1,2}]
  %s1 = inlined_call_operand.vmem [shape: f32[2,16,16,4], index: 1, kind: input, shape index: {}, may-alias: {0,1,2}]
  %s2 = inlined_call_operand.vmem [shape: f32[2,16,16,4], index: 2, kind: input, shape index: {}, may-alias: {0,1,2}]
  %s3 = inlined_call_operand.vmem [shape: f32[1,128], index: 3, kind: input, shape index: {}]
  %s4 = inlined_call_operand.vmem [shape: f32[1,128], index: 4, kind: input, shape index: {}]
  %s5 = inlined_call_operand.vmem [shape: bf16[3,3,128,128], index: 5, kind: input, shape index: {}]
  %s6 = inlined_call_operand.vmem [shape: bf16[2,16,16,4], index: 6, kind: output, shape index: {0}]
  %s7 = inlined_call_operand.vmem [shape: f32[2,1,2,128], index: 7, kind: output, shape index: {1}]
  %8 = xla_tuple %s6, %s7
  %s9 = sld [smem:[#allocation0]]
  $region65: #{preact_basic_block.2} parent=0
    _
  %s11 = ssub.s32 1, %s9
  %s12 = scalar_select 0, %s11, %s9
  loop: start=0, step=1, limit=4
  $region2: #{preact_basic_block.2} parent=0 // loop_pre_header
    _
  $region3: #{preact_basic_block.2} parent=0 // loop_header
    %s14 = sphi 0, %s18
    %p15 = scmp.ge.s32.totalorder %s14, 4
    %s21 = sphi 0, %s33
    %s22 = sphi 0, %s29
    %s23 = sphi 0, %s21
    %s24 = sphi 0, %s22
    %s25 = sphi 0, %s23
    %s26 = sphi 0, %s24
    %s38 = sphi 0, %s40
    %s41 = sphi 0, %s38
    %s42 = sphi 0, %s41
    %s58 = sphi 0, %s42
    %s74 = sphi 0, %s76
    %s77 = sphi 0, %s74
    %s78 = sphi 0, %s77
    %s94 = sphi 0, %s78
    %s110 = sphi 0, %s112
    %s113 = sphi 0, %s110
    %s114 = sphi 0, %s113
    %s130 = sphi 0, %s114
    %s134 = sphi 0, %s134
    %s136 = sphi 0, %s134
    %s137 = sphi 0, %s136
    %s151 = sphi 0, %s137
    %s155 = sphi 0, %s155
    %s157 = sphi 0, %s155
    %s158 = sphi 0, %s157
    %s172 = sphi 0, %s158
    %s176 = sphi 0, %s176
    %s178 = sphi 0, %s176
    %s179 = sphi 0, %s178
    %s193 = sphi 0, %s179
    %s201 = sphi 0, %s203
    %s204 = sphi 0, %s201
    %s205 = sphi 0, %s204
    %s221 = sphi 0, %s205
    %s229 = sphi 0, %s231
    %s232 = sphi 0, %s229
    %s233 = sphi 0, %s232
    %s249 = sphi 0, %s233
  $region4: #{preact_basic_block.2} parent=0 // loop_header_branch
    %17 = sbr.rel (%p15) target = $region8
  $region5: #{preact_basic_block.2} parent=0 // loop_body
    %s19 = ssub.s32 %s14, 1
    %s20 = ssub.s32 %s14, 2
    %s27 = sadd.s32 1, %s22
    %p28 = scmp.ge.s32.totalorder %s27, 1
    %s29 = scalar_select %p28, 0, %s27
    %s30 = sadd.s32 1, %s21
    %s31 = scalar_select %p28, %s30, %s21
    %p32 = scmp.ge.s32.totalorder %s31, 2
    %s33 = scalar_select %p32, 0, %s31
    %s34 = ssub.s32 %s21, %s33
    %s35 = ssub.s32 %s22, %s29
    %s36 = sor.u32 %s34, %s35
    %p37 = scmp.eq.s32.totalorder %s36, 0
    %s39 = sadd.s32 %s38, 1
    %s40 = scalar_select %p37, %s38, %s39
    %p43 = pneg %p37
    %p44 = scmp.eq.s32.totalorder %s14, 1
    %p45 = por %p43, %p44
    %p46 = scmp.ne.s32.totalorder %s38, %s41
    %p47 = scmp.eq.s32.totalorder %s14, 0
    %p48 = por %p46, %p47
    %p49 = scmp.ne.s32.totalorder %s38, %s41
    %p50 = scmp.eq.s32.totalorder %s19, 1
    %p51 = por %p49, %p50
    %p52 = scmp.ne.s32.totalorder %s41, %s42
    %p53 = scmp.eq.s32.totalorder %s19, 0
    %p54 = por %p52, %p53
    %p55 = scmp.ne.s32.totalorder %s41, %s42
    %p56 = scmp.eq.s32.totalorder %s20, 1
    %p57 = por %p55, %p56
    %p59 = scmp.ne.s32.totalorder %s42, %s58
    %p60 = scmp.eq.s32.totalorder %s20, 0
    %p61 = por %p59, %p60
    %s62 = smul.u32 %s22, 16
    %s63 = ssub.s32 %s62, 1
    %p64 = scmp.gt.s32.totalorder %s63, 0
    %s65 = scalar_select %p64, %s63, 0
    %s66 = smul.u32 %s29, 16
    %s67 = ssub.s32 %s66, 1
    %p68 = scmp.gt.s32.totalorder %s67, 0
    %s69 = scalar_select %p68, %s67, 0
    %s70 = ssub.s32 %s21, %s33
    %s71 = ssub.s32 %s65, %s69
    %s72 = sor.u32 %s70, %s71
    %p73 = scmp.eq.s32.totalorder %s72, 0
    %s75 = sadd.s32 %s74, 1
    %s76 = scalar_select %p73, %s74, %s75
    %p79 = pneg %p73
    %p80 = scmp.eq.s32.totalorder %s14, 1
    %p81 = por %p79, %p80
    %p82 = scmp.ne.s32.totalorder %s74, %s77
    %p83 = scmp.eq.s32.totalorder %s14, 0
    %p84 = por %p82, %p83
    %p85 = scmp.ne.s32.totalorder %s74, %s77
    %p86 = scmp.eq.s32.totalorder %s19, 1
    %p87 = por %p85, %p86
    %p88 = scmp.ne.s32.totalorder %s77, %s78
    %p89 = scmp.eq.s32.totalorder %s19, 0
    %p90 = por %p88, %p89
    %p91 = scmp.ne.s32.totalorder %s77, %s78
    %p92 = scmp.eq.s32.totalorder %s20, 1
    %p93 = por %p91, %p92
    %p95 = scmp.ne.s32.totalorder %s78, %s94
    %p96 = scmp.eq.s32.totalorder %s20, 0
    %p97 = por %p95, %p96
    %s98 = smul.u32 %s22, 16
    %s99 = sadd.s32 %s98, 16
    %p100 = scmp.lt.s32.totalorder %s99, 15
    %s101 = scalar_select %p100, %s99, 15
    %s102 = smul.u32 %s29, 16
    %s103 = sadd.s32 %s102, 16
    %p104 = scmp.lt.s32.totalorder %s103, 15
    %s105 = scalar_select %p104, %s103, 15
    %s106 = ssub.s32 %s21, %s33
    %s107 = ssub.s32 %s101, %s105
    %s108 = sor.u32 %s106, %s107
    %p109 = scmp.eq.s32.totalorder %s108, 0
    %s111 = sadd.s32 %s110, 1
    %s112 = scalar_select %p109, %s110, %s111
    %p115 = pneg %p109
    %p116 = scmp.eq.s32.totalorder %s14, 1
    %p117 = por %p115, %p116
    %p118 = scmp.ne.s32.totalorder %s110, %s113
    %p119 = scmp.eq.s32.totalorder %s14, 0
    %p120 = por %p118, %p119
    %p121 = scmp.ne.s32.totalorder %s110, %s113
    %p122 = scmp.eq.s32.totalorder %s19, 1
    %p123 = por %p121, %p122
    %p124 = scmp.ne.s32.totalorder %s113, %s114
    %p125 = scmp.eq.s32.totalorder %s19, 0
    %p126 = por %p124, %p125
    %p127 = scmp.ne.s32.totalorder %s113, %s114
    %p128 = scmp.eq.s32.totalorder %s20, 1
    %p129 = por %p127, %p128
    %p131 = scmp.ne.s32.totalorder %s114, %s130
    %p132 = scmp.eq.s32.totalorder %s20, 0
    %p133 = por %p131, %p132
    %s135 = sadd.s32 %s134, 1
    %p138 = scmp.eq.s32.totalorder %s14, 1
    %p139 = scmp.ne.s32.totalorder %s134, %s136
    %p140 = scmp.eq.s32.totalorder %s14, 0
    %p141 = por %p139, %p140
    %p142 = scmp.ne.s32.totalorder %s134, %s136
    %p143 = scmp.eq.s32.totalorder %s19, 1
    %p144 = por %p142, %p143
    %p145 = scmp.ne.s32.totalorder %s136, %s137
    %p146 = scmp.eq.s32.totalorder %s19, 0
    %p147 = por %p145, %p146
    %p148 = scmp.ne.s32.totalorder %s136, %s137
    %p149 = scmp.eq.s32.totalorder %s20, 1
    %p150 = por %p148, %p149
    %p152 = scmp.ne.s32.totalorder %s137, %s151
    %p153 = scmp.eq.s32.totalorder %s20, 0
    %p154 = por %p152, %p153
    %s156 = sadd.s32 %s155, 1
    %p159 = scmp.eq.s32.totalorder %s14, 1
    %p160 = scmp.ne.s32.totalorder %s155, %s157
    %p161 = scmp.eq.s32.totalorder %s14, 0
    %p162 = por %p160, %p161
    %p163 = scmp.ne.s32.totalorder %s155, %s157
    %p164 = scmp.eq.s32.totalorder %s19, 1
    %p165 = por %p163, %p164
    %p166 = scmp.ne.s32.totalorder %s157, %s158
    %p167 = scmp.eq.s32.totalorder %s19, 0
    %p168 = por %p166, %p167
    %p169 = scmp.ne.s32.totalorder %s157, %s158
    %p170 = scmp.eq.s32.totalorder %s20, 1
    %p171 = por %p169, %p170
    %p173 = scmp.ne.s32.totalorder %s158, %s172
    %p174 = scmp.eq.s32.totalorder %s20, 0
    %p175 = por %p173, %p174
    %s177 = sadd.s32 %s176, 1
    %p180 = scmp.eq.s32.totalorder %s14, 1
    %p181 = scmp.ne.s32.totalorder %s176, %s178
    %p182 = scmp.eq.s32.totalorder %s14, 0
    %p183 = por %p181, %p182
    %p184 = scmp.ne.s32.totalorder %s176, %s178
    %p185 = scmp.eq.s32.totalorder %s19, 1
    %p186 = por %p184, %p185
    %p187 = scmp.ne.s32.totalorder %s178, %s179
    %p188 = scmp.eq.s32.totalorder %s19, 0
    %p189 = por %p187, %p188
    %p190 = scmp.ne.s32.totalorder %s178, %s179
    %p191 = scmp.eq.s32.totalorder %s20, 1
    %p192 = por %p190, %p191
    %p194 = scmp.ne.s32.totalorder %s179, %s193
    %p195 = scmp.eq.s32.totalorder %s20, 0
    %p196 = por %p194, %p195
    %s197 = ssub.s32 %s21, %s33
    %s198 = ssub.s32 %s22, %s29
    %s199 = sor.u32 %s197, %s198
    %p200 = scmp.eq.s32.totalorder %s199, 0
    %s202 = sadd.s32 %s201, 1
    %s203 = scalar_select %p200, %s201, %s202
    %p206 = pneg %p200
    %p207 = scmp.eq.s32.totalorder %s14, 1
    %p208 = por %p206, %p207
    %p209 = scmp.ne.s32.totalorder %s201, %s204
    %p210 = scmp.eq.s32.totalorder %s14, 0
    %p211 = por %p209, %p210
    %p212 = scmp.ne.s32.totalorder %s201, %s204
    %p213 = scmp.eq.s32.totalorder %s19, 1
    %p214 = por %p212, %p213
    %p215 = scmp.ne.s32.totalorder %s204, %s205
    %p216 = scmp.eq.s32.totalorder %s19, 0
    %p217 = por %p215, %p216
    %p218 = scmp.ne.s32.totalorder %s204, %s205
    %p219 = scmp.eq.s32.totalorder %s20, 1
    %p220 = por %p218, %p219
    %p222 = scmp.ne.s32.totalorder %s205, %s221
    %p223 = scmp.eq.s32.totalorder %s20, 0
    %p224 = por %p222, %p223
    %s225 = ssub.s32 %s21, %s33
    %s226 = ssub.s32 %s22, %s29
    %s227 = sor.u32 %s225, %s226
    %p228 = scmp.eq.s32.totalorder %s227, 0
    %s230 = sadd.s32 %s229, 1
    %s231 = scalar_select %p228, %s229, %s230
    %p234 = pneg %p228
    %p235 = scmp.eq.s32.totalorder %s14, 1
    %p236 = por %p234, %p235
    %p237 = scmp.ne.s32.totalorder %s229, %s232
    %p238 = scmp.eq.s32.totalorder %s14, 0
    %p239 = por %p237, %p238
    %p240 = scmp.ne.s32.totalorder %s229, %s232
    %p241 = scmp.eq.s32.totalorder %s19, 1
    %p242 = por %p240, %p241
    %p243 = scmp.ne.s32.totalorder %s232, %s233
    %p244 = scmp.eq.s32.totalorder %s19, 0
    %p245 = por %p243, %p244
    %p246 = scmp.ne.s32.totalorder %s232, %s233
    %p247 = scmp.eq.s32.totalorder %s20, 1
    %p248 = por %p246, %p247
    %p250 = scmp.ne.s32.totalorder %s233, %s249
    %p251 = scmp.eq.s32.totalorder %s20, 0
    %p252 = por %p250, %p251
    %p253 = scmp.le.s32.totalorder 1, %s14
    %p254 = scmp.lt.s32.totalorder %s14, 3
    %p255 = pnand %p253, %p254
    %p256 = pneg %p255
    // Predicated region
    $region9: #{preact_basic_block.2} parent=5 // pred_check
      _
    $region10: #{preact_basic_block.2} parent=5 // pred_check_branch
      %258 = sbr.rel (%p255) target = $region12
    $region11: #{preact_basic_block.2} parent=5 // pred_region
      %s259 = ssub.s32 %s14, 1
      // Predicated region
      $region13: #{preact_basic_block.2} parent=11 // pred_check
        %p260 = pneg %p147
      $region14: #{preact_basic_block.2} parent=11 // pred_check_branch
        %262 = sbr.rel (%p260) target = $region16
      $region15: #{preact_basic_block.2} parent=11 // pred_region
        _
      $region16: #{preact_basic_block.2} parent=11 // pred_fallthru
        _
      // Predicated region
      $region17: #{preact_basic_block.2} parent=11 // pred_check
        %p263 = pneg %p168
      $region18: #{preact_basic_block.2} parent=11 // pred_check_branch
        %265 = sbr.rel (%p263) target = $region20
      $region19: #{preact_basic_block.2} parent=11 // pred_region
        _
      $region20: #{preact_basic_block.2} parent=11 // pred_fallthru
        _
      // Predicated region
      $region21: #{preact_basic_block.2} parent=11 // pred_check
        %p266 = pneg %p189
      $region22: #{preact_basic_block.2} parent=11 // pred_check_branch
        %268 = sbr.rel (%p266) target = $region24
      $region23: #{preact_basic_block.2} parent=11 // pred_region
        _
      $region24: #{preact_basic_block.2} parent=11 // pred_fallthru
        _
    $region12: #{preact_basic_block.2} parent=5 // pred_fallthru
      _
    %p269 = scmp.lt.s32.totalorder %s14, 2
    // Predicated region
    $region25: #{preact_basic_block.2} parent=5 // pred_check
      %p270 = pneg %p269
    $region26: #{preact_basic_block.2} parent=5 // pred_check_branch
      %272 = sbr.rel (%p270) target = $region28
    $region27: #{preact_basic_block.2} parent=5 // pred_region
      // Predicated region
      $region29: #{preact_basic_block.2} parent=27 // pred_check
        %p273 = pneg %p48
      $region30: #{preact_basic_block.2} parent=27 // pred_check_branch
        %275 = sbr.rel (%p273) target = $region32
      $region31: #{preact_basic_block.2} parent=27 // pred_region
        %s276 = smul.u32 16, %s22
        %p277 = scmp.lt.s32.totalorder %s21, 1
        %s278 = scalar_select %p277, %s21, 1
        %p279 = scmp.lt.s32.totalorder %s276, 15
        %s280 = scalar_select %p279, %s276, 15
        %s281 = smul.addr %s280, 2
        %s282 = smul.addr %s278, 32
        %s283 = sadd.s32 %s281, %s282
        %s284 = smul.addr %s283, 8
        %s285 = scalar_lea.vmem %s0, %s284
        %s286 = smul.u32 16, %s22
      $region32: #{preact_basic_block.2} parent=27 // pred_fallthru
        _
      // Predicated region
      $region33: #{preact_basic_block.2} parent=27 // pred_check
        %p287 = pneg %p84
      $region34: #{preact_basic_block.2} parent=27 // pred_check_branch
        %289 = sbr.rel (%p287) target = $region36
      $region35: #{preact_basic_block.2} parent=27 // pred_region
        %s290 = smul.u32 %s22, 16
        %s291 = ssub.s32 %s290, 1
        %p292 = scmp.gt.s32.totalorder %s291, 0
        %s293 = scalar_select %p292, %s291, 0
        %p294 = scmp.lt.s32.totalorder %s21, 1
        %s295 = scalar_select %p294, %s21, 1
        %p296 = scmp.lt.s32.totalorder %s293, 15
        %s297 = scalar_select %p296, %s293, 15
        %s298 = smul.addr %s297, 2
        %s299 = smul.addr %s295, 32
        %s300 = sadd.s32 %s298, %s299
        %s301 = smul.addr %s300, 8
        %s302 = scalar_lea.vmem %s1, %s301
        %s303 = smul.u32 %s22, 16
        %s304 = ssub.s32 %s303, 1
        %p305 = scmp.gt.s32.totalorder %s304, 0
        %s306 = scalar_select %p305, %s304, 0
      $region36: #{preact_basic_block.2} parent=27 // pred_fallthru
        _
      // Predicated region
      $region37: #{preact_basic_block.2} parent=27 // pred_check
        %p307 = pneg %p120
      $region38: #{preact_basic_block.2} parent=27 // pred_check_branch
        %309 = sbr.rel (%p307) target = $region40
      $region39: #{preact_basic_block.2} parent=27 // pred_region
        %s310 = smul.u32 %s22, 16
        %s311 = sadd.s32 %s310, 16
        %p312 = scmp.lt.s32.totalorder %s311, 15
        %s313 = scalar_select %p312, %s311, 15
        %p314 = scmp.lt.s32.totalorder %s21, 1
        %s315 = scalar_select %p314, %s21, 1
        %p316 = scmp.lt.s32.totalorder %s313, 15
        %s317 = scalar_select %p316, %s313, 15
        %s318 = smul.addr %s317, 2
        %s319 = smul.addr %s315, 32
        %s320 = sadd.s32 %s318, %s319
        %s321 = smul.addr %s320, 8
        %s322 = scalar_lea.vmem %s2, %s321
        %s323 = smul.u32 %s22, 16
        %s324 = sadd.s32 %s323, 16
        %p325 = scmp.lt.s32.totalorder %s324, 15
        %s326 = scalar_select %p325, %s324, 15
      $region40: #{preact_basic_block.2} parent=27 // pred_fallthru
        _
    $region28: #{preact_basic_block.2} parent=5 // pred_fallthru
      _
    %p327 = scmp.le.s32.totalorder 1, %s14
    %p328 = scmp.lt.s32.totalorder %s14, 3
    %p329 = pnand %p327, %p328
    %p330 = pneg %p329
    // Predicated region
    $region41: #{preact_basic_block.2} parent=5 // pred_check
      _
    $region42: #{preact_basic_block.2} parent=5 // pred_check_branch
      %332 = sbr.rel (%p329) target = $region44
    $region43: #{preact_basic_block.2} parent=5 // pred_region
      %s333 = ssub.s32 %s14, 1
      %s334 = smul.u32 16, %s24
      %p335 = scmp.lt.s32.totalorder %s23, 1
      %s336 = scalar_select %p335, %s23, 1
      %p337 = scmp.lt.s32.totalorder %s334, 15
      %s338 = scalar_select %p337, %s334, 15
      %s339 = smul.addr %s338, 2
      %s340 = smul.addr %s336, 32
      %s341 = sadd.s32 %s339, %s340
      %s342 = smul.addr %s341, 8
      %s343 = scalar_lea.vmem %s0, %s342
      %p344 = pneg %p54
      %p345 = pneg %p51
      %s346 = smul.u32 %s24, 16
      %s347 = ssub.s32 %s346, 1
      %p348 = scmp.gt.s32.totalorder %s347, 0
      %s349 = scalar_select %p348, %s347, 0
      %p350 = scmp.lt.s32.totalorder %s23, 1
      %s351 = scalar_select %p350, %s23, 1
      %p352 = scmp.lt.s32.totalorder %s349, 15
      %s353 = scalar_select %p352, %s349, 15
      %s354 = smul.addr %s353, 2
      %s355 = smul.addr %s351, 32
      %s356 = sadd.s32 %s354, %s355
      %s357 = smul.addr %s356, 8
      %s358 = scalar_lea.vmem %s1, %s357
      %p359 = pneg %p90
      %p360 = pneg %p87
      %s361 = smul.u32 %s24, 16
      %s362 = sadd.s32 %s361, 16
      %p363 = scmp.lt.s32.totalorder %s362, 15
      %s364 = scalar_select %p363, %s362, 15
      %p365 = scmp.lt.s32.totalorder %s23, 1
      %s366 = scalar_select %p365, %s23, 1
      %p367 = scmp.lt.s32.totalorder %s364, 15
      %s368 = scalar_select %p367, %s364, 15
      %s369 = smul.addr %s368, 2
      %s370 = smul.addr %s366, 32
      %s371 = sadd.s32 %s369, %s370
      %s372 = smul.addr %s371, 8
      %s373 = scalar_lea.vmem %s2, %s372
      %p374 = pneg %p126
      %p375 = pneg %p123
      %p376 = pneg %p147
      %p377 = pneg %p144
      %p378 = pneg %p168
      %p379 = pneg %p165
      %p380 = pneg %p189
      %p381 = pneg %p186
      %p382 = pneg %p217
      %p383 = pneg %p214
      %s384 = smul.u32 16, %s24
      %p385 = scmp.lt.s32.totalorder %s23, 1
      %s386 = scalar_select %p385, %s23, 1
      %p387 = scmp.lt.s32.totalorder %s384, 15
      %s388 = scalar_select %p387, %s384, 15
      %s389 = smul.addr %s388, 2
      %s390 = smul.addr %s386, 32
      %s391 = sadd.s32 %s389, %s390
      %s392 = smul.addr %s391, 4
      %s393 = scalar_lea.vmem %s6, %s392
      %p394 = pneg %p245
      %p395 = pneg %p242
      %p396 = scmp.lt.s32.totalorder %s23, 1
      %s397 = scalar_select %p396, %s23, 1
      %p398 = scmp.lt.s32.totalorder %s24, 0
      %s399 = scalar_select %p398, %s24, 0
      %s400 = sadd.s32 %s399, %s397
      %s401 = smul.addr %s400, 2
      %s402 = scalar_lea.vmem %s7, %s401
      %s403 = smul.u32 16, %s24
      %p404 = scmp.lt.s32.totalorder %s23, 1
      %s405 = scalar_select %p404, %s23, 1
      %p406 = scmp.lt.s32.totalorder %s403, 15
      %s407 = scalar_select %p406, %s403, 15
      %s408 = smul.addr %s407, 2
      %s409 = smul.addr %s405, 32
      %s410 = sadd.s32 %s408, %s409
      %s411 = smul.addr %s410, 8
      %s412 = scalar_lea.vmem %s0, %s411
      %s413 = smul.u32 16, %s24
      %s414 = smul.u32 %s24, 16
      %s415 = ssub.s32 %s414, 1
      %p416 = scmp.gt.s32.totalorder %s415, 0
      %s417 = scalar_select %p416, %s415, 0
      %p418 = scmp.lt.s32.totalorder %s23, 1
      %s419 = scalar_select %p418, %s23, 1
      %p420 = scmp.lt.s32.totalorder %s417, 15
      %s421 = scalar_select %p420, %s417, 15
      %s422 = smul.addr %s421, 2
      %s423 = smul.addr %s419, 32
      %s424 = sadd.s32 %s422, %s423
      %s425 = smul.addr %s424, 8
      %s426 = scalar_lea.vmem %s1, %s425
      %s427 = smul.u32 %s24, 16
      %s428 = ssub.s32 %s427, 1
      %p429 = scmp.gt.s32.totalorder %s428, 0
      %s430 = scalar_select %p429, %s428, 0
      %s431 = smul.u32 %s24, 16
      %s432 = sadd.s32 %s431, 16
      %p433 = scmp.lt.s32.totalorder %s432, 15
      %s434 = scalar_select %p433, %s432, 15
      %p435 = scmp.lt.s32.totalorder %s23, 1
      %s436 = scalar_select %p435, %s23, 1
      %p437 = scmp.lt.s32.totalorder %s434, 15
      %s438 = scalar_select %p437, %s434, 15
      %s439 = smul.addr %s438, 2
      %s440 = smul.addr %s436, 32
      %s441 = sadd.s32 %s439, %s440
      %s442 = smul.addr %s441, 8
      %s443 = scalar_lea.vmem %s2, %s442
      %s444 = smul.u32 %s24, 16
      %s445 = sadd.s32 %s444, 16
      %p446 = scmp.lt.s32.totalorder %s445, 15
      %s447 = scalar_select %p446, %s445, 15
      %s448 = smul.u32 16, %s24
      %p449 = scmp.lt.s32.totalorder %s23, 1
      %s450 = scalar_select %p449, %s23, 1
      %p451 = scmp.lt.s32.totalorder %s448, 15
      %s452 = scalar_select %p451, %s448, 15
      %s453 = smul.addr %s452, 2
      %s454 = smul.addr %s450, 32
      %s455 = sadd.s32 %s453, %s454
      %s456 = smul.addr %s455, 4
      %s457 = scalar_lea.vmem %s6, %s456
      %s458 = smul.u32 16, %s24
      %p459 = scmp.lt.s32.totalorder %s23, 1
      %s460 = scalar_select %p459, %s23, 1
      %p461 = scmp.lt.s32.totalorder %s24, 0
      %s462 = scalar_select %p461, %s24, 0
      %s463 = sadd.s32 %s462, %s460
      %s464 = smul.addr %s463, 2
      %s465 = scalar_lea.vmem %s7, %s464
      %v467 = vld [vmem:[%s3] sm:$0x1]
      %v468 = vld [vmem:[%s4] sm:$0x1]
      %p469 = scmp.eq.s32.totalorder %s24, 0
      %s470 = scalar_select %p469, 0.0, 1.0
      %v471 = vld [vmem:[%s426] sm:$0xff]
      %v472 = vld [vmem:[%s426 + $0x8] sm:$0xff]
      %vm473 = vcmask 31744
      %v474 = vsel %vm473, %v471, 0.0
      %v475 = vsel %vm473, %v472, 0.0
      %v477 = vlaneseq
      %v478 = vshrl.u32 %v477, 7
      %v479 = vsub.s32 0, %v478
      %v480 = vrot.slane %v467, %v479
      %v482 = vmul.f32 %v474, %v480
      %v483 = vmul.f32 %v475, %v480
      %v485 = vlaneseq
      %v486 = vshrl.u32 %v485, 7
      %v487 = vsub.s32 0, %v486
      %v488 = vrot.slane %v468, %v487
      %v490 = vadd.f32 %v482, %v488
      %v491 = vadd.f32 %v483, %v488
      %v492 = vmax.f32 %v490, 0.0
      %v493 = vmax.f32 %v491, 0.0
      %v494 = vstv %s470
      %v495 = vmul.f32 %v492, %v494
      %v496 = vmul.f32 %v493, %v494
      %v497 = vld [vmem:[%s412] sm:$0xff]
      %v498 = vld [vmem:[%s412 + $0x8] sm:$0xff]
      %v499 = vld [vmem:[%s412 + $0x10] sm:$0xff]
      %v500 = vld [vmem:[%s412 + $0x18] sm:$0xff]
      %v501 = vld [vmem:[%s412 + $0x20] sm:$0xff]
      %v502 = vld [vmem:[%s412 + $0x28] sm:$0xff]
      %v503 = vld [vmem:[%s412 + $0x30] sm:$0xff]
      %v504 = vld [vmem:[%s412 + $0x38] sm:$0xff]
      %v505 = vld [vmem:[%s412 + $0x40] sm:$0xff]
      %v506 = vld [vmem:[%s412 + $0x48] sm:$0xff]
      %v507 = vld [vmem:[%s412 + $0x50] sm:$0xff]
      %v508 = vld [vmem:[%s412 + $0x58] sm:$0xff]
      %v509 = vld [vmem:[%s412 + $0x60] sm:$0xff]
      %v510 = vld [vmem:[%s412 + $0x68] sm:$0xff]
      %v511 = vld [vmem:[%s412 + $0x70] sm:$0xff]
      %v512 = vld [vmem:[%s412 + $0x78] sm:$0xff]
      %v513 = vld [vmem:[%s412 + $0x80] sm:$0xff]
      %v514 = vld [vmem:[%s412 + $0x88] sm:$0xff]
      %v515 = vld [vmem:[%s412 + $0x90] sm:$0xff]
      %v516 = vld [vmem:[%s412 + $0x98] sm:$0xff]
      %v517 = vld [vmem:[%s412 + $0xa0] sm:$0xff]
      %v518 = vld [vmem:[%s412 + $0xa8] sm:$0xff]
      %v519 = vld [vmem:[%s412 + $0xb0] sm:$0xff]
      %v520 = vld [vmem:[%s412 + $0xb8] sm:$0xff]
      %v521 = vld [vmem:[%s412 + $0xc0] sm:$0xff]
      %v522 = vld [vmem:[%s412 + $0xc8] sm:$0xff]
      %v523 = vld [vmem:[%s412 + $0xd0] sm:$0xff]
      %v524 = vld [vmem:[%s412 + $0xd8] sm:$0xff]
      %v525 = vld [vmem:[%s412 + $0xe0] sm:$0xff]
      %v526 = vld [vmem:[%s412 + $0xe8] sm:$0xff]
      %v527 = vld [vmem:[%s412 + $0xf0] sm:$0xff]
      %v528 = vld [vmem:[%s412 + $0xf8] sm:$0xff]
      %v529 = vsel %vm473, %v497, 0.0
      %v530 = vsel %vm473, %v498, 0.0
      %v531 = vsel %vm473, %v499, 0.0
      %v532 = vsel %vm473, %v500, 0.0
      %v533 = vsel %vm473, %v501, 0.0
      %v534 = vsel %vm473, %v502, 0.0
      %v535 = vsel %vm473, %v503, 0.0
      %v536 = vsel %vm473, %v504, 0.0
      %v537 = vsel %vm473, %v505, 0.0
      %v538 = vsel %vm473, %v506, 0.0
      %v539 = vsel %vm473, %v507, 0.0
      %v540 = vsel %vm473, %v508, 0.0
      %v541 = vsel %vm473, %v509, 0.0
      %v542 = vsel %vm473, %v510, 0.0
      %v543 = vsel %vm473, %v511, 0.0
      %v544 = vsel %vm473, %v512, 0.0
      %v545 = vsel %vm473, %v513, 0.0
      %v546 = vsel %vm473, %v514, 0.0
      %v547 = vsel %vm473, %v515, 0.0
      %v548 = vsel %vm473, %v516, 0.0
      %v549 = vsel %vm473, %v517, 0.0
      %v550 = vsel %vm473, %v518, 0.0
      %v551 = vsel %vm473, %v519, 0.0
      %v552 = vsel %vm473, %v520, 0.0
      %v553 = vsel %vm473, %v521, 0.0
      %v554 = vsel %vm473, %v522, 0.0
      %v555 = vsel %vm473, %v523, 0.0
      %v556 = vsel %vm473, %v524, 0.0
      %v557 = vsel %vm473, %v525, 0.0
      %v558 = vsel %vm473, %v526, 0.0
      %v559 = vsel %vm473, %v527, 0.0
      %v560 = vsel %vm473, %v528, 0.0
      %v561 = vmul.f32 %v529, %v480
      %v562 = vmul.f32 %v530, %v480
      %v563 = vmul.f32 %v531, %v480
      %v564 = vmul.f32 %v532, %v480
      %v565 = vmul.f32 %v533, %v480
      %v566 = vmul.f32 %v534, %v480
      %v567 = vmul.f32 %v535, %v480
      %v568 = vmul.f32 %v536, %v480
      %v569 = vmul.f32 %v537, %v480
      %v570 = vmul.f32 %v538, %v480
      %v571 = vmul.f32 %v539, %v480
      %v572 = vmul.f32 %v540, %v480
      %v573 = vmul.f32 %v541, %v480
      %v574 = vmul.f32 %v542, %v480
      %v575 = vmul.f32 %v543, %v480
      %v576 = vmul.f32 %v544, %v480
      %v577 = vmul.f32 %v545, %v480
      %v578 = vmul.f32 %v546, %v480
      %v579 = vmul.f32 %v547, %v480
      %v580 = vmul.f32 %v548, %v480
      %v581 = vmul.f32 %v549, %v480
      %v582 = vmul.f32 %v550, %v480
      %v583 = vmul.f32 %v551, %v480
      %v584 = vmul.f32 %v552, %v480
      %v585 = vmul.f32 %v553, %v480
      %v586 = vmul.f32 %v554, %v480
      %v587 = vmul.f32 %v555, %v480
      %v588 = vmul.f32 %v556, %v480
      %v589 = vmul.f32 %v557, %v480
      %v590 = vmul.f32 %v558, %v480
      %v591 = vmul.f32 %v559, %v480
      %v592 = vmul.f32 %v560, %v480
      %v593 = vadd.f32 %v561, %v488
      %v594 = vadd.f32 %v562, %v488
      %v595 = vadd.f32 %v563, %v488
      %v596 = vadd.f32 %v564, %v488
      %v597 = vadd.f32 %v565, %v488
      %v598 = vadd.f32 %v566, %v488
      %v599 = vadd.f32 %v567, %v488
      %v600 = vadd.f32 %v568, %v488
      %v601 = vadd.f32 %v569, %v488
      %v602 = vadd.f32 %v570, %v488
      %v603 = vadd.f32 %v571, %v488
      %v604 = vadd.f32 %v572, %v488
      %v605 = vadd.f32 %v573, %v488
      %v606 = vadd.f32 %v574, %v488
      %v607 = vadd.f32 %v575, %v488
      %v608 = vadd.f32 %v576, %v488
      %v609 = vadd.f32 %v577, %v488
      %v610 = vadd.f32 %v578, %v488
      %v611 = vadd.f32 %v579, %v488
      %v612 = vadd.f32 %v580, %v488
      %v613 = vadd.f32 %v581, %v488
      %v614 = vadd.f32 %v582, %v488
      %v615 = vadd.f32 %v583, %v488
      %v616 = vadd.f32 %v584, %v488
      %v617 = vadd.f32 %v585, %v488
      %v618 = vadd.f32 %v586, %v488
      %v619 = vadd.f32 %v587, %v488
      %v620 = vadd.f32 %v588, %v488
      %v621 = vadd.f32 %v589, %v488
      %v622 = vadd.f32 %v590, %v488
      %v623 = vadd.f32 %v591, %v488
      %v624 = vadd.f32 %v592, %v488
      %v625 = vmax.f32 %v593, 0.0
      %v626 = vmax.f32 %v594, 0.0
      %v627 = vmax.f32 %v595, 0.0
      %v628 = vmax.f32 %v596, 0.0
      %v629 = vmax.f32 %v597, 0.0
      %v630 = vmax.f32 %v598, 0.0
      %v631 = vmax.f32 %v599, 0.0
      %v632 = vmax.f32 %v600, 0.0
      %v633 = vmax.f32 %v601, 0.0
      %v634 = vmax.f32 %v602, 0.0
      %v635 = vmax.f32 %v603, 0.0
      %v636 = vmax.f32 %v604, 0.0
      %v637 = vmax.f32 %v605, 0.0
      %v638 = vmax.f32 %v606, 0.0
      %v639 = vmax.f32 %v607, 0.0
      %v640 = vmax.f32 %v608, 0.0
      %v641 = vmax.f32 %v609, 0.0
      %v642 = vmax.f32 %v610, 0.0
      %v643 = vmax.f32 %v611, 0.0
      %v644 = vmax.f32 %v612, 0.0
      %v645 = vmax.f32 %v613, 0.0
      %v646 = vmax.f32 %v614, 0.0
      %v647 = vmax.f32 %v615, 0.0
      %v648 = vmax.f32 %v616, 0.0
      %v649 = vmax.f32 %v617, 0.0
      %v650 = vmax.f32 %v618, 0.0
      %v651 = vmax.f32 %v619, 0.0
      %v652 = vmax.f32 %v620, 0.0
      %v653 = vmax.f32 %v621, 0.0
      %v654 = vmax.f32 %v622, 0.0
      %v655 = vmax.f32 %v623, 0.0
      %v656 = vmax.f32 %v624, 0.0
      %v657 = vld [vmem:[%s443] sm:$0xff]
      %v658 = vld [vmem:[%s443 + $0x8] sm:$0xff]
      %v659 = vsel %vm473, %v657, 0.0
      %v660 = vsel %vm473, %v658, 0.0
      %v661 = vmul.f32 %v659, %v480
      %v662 = vmul.f32 %v660, %v480
      %v663 = vadd.f32 %v661, %v488
      %v664 = vadd.f32 %v662, %v488
      %v665 = vmax.f32 %v663, 0.0
      %v666 = vmax.f32 %v664, 0.0
      %v667 = vmul.f32 %v665, %v494
      %v668 = vmul.f32 %v666, %v494
      %vm705 = vcmask 1040384
      %v706 = vrot.slane %v495, 7
      %v707 = vrot.slane %v496, 7
      %v708 = vsel %vm705, %v706, %v707
      %v709 = vrot.slane %v625, 7
      %v710 = vrot.slane %v626, 7
      %v711 = vsel %vm705, %v709, %v710
      %v712 = vrot.slane %v627, 7
      %v713 = vrot.slane %v628, 7
      %v714 = vsel %vm705, %v712, %v713
      %v715 = vrot.slane %v629, 7
      %v716 = vrot.slane %v630, 7
      %v717 = vsel %vm705, %v715, %v716
      %v718 = vrot.slane %v631, 7
      %v719 = vrot.slane %v632, 7
      %v720 = vsel %vm705, %v718, %v719
      %v721 = vrot.slane %v633, 7
      %v722 = vrot.slane %v634, 7
      %v723 = vsel %vm705, %v721, %v722
      %v724 = vrot.slane %v635, 7
      %v725 = vrot.slane %v636, 7
      %v726 = vsel %vm705, %v724, %v725
      %v727 = vrot.slane %v637, 7
      %v728 = vrot.slane %v638, 7
      %v729 = vsel %vm705, %v727, %v728
      %v730 = vrot.slane %v639, 7
      %v731 = vrot.slane %v640, 7
      %v732 = vsel %vm705, %v730, %v731
      %v733 = vrot.slane %v641, 7
      %v734 = vrot.slane %v642, 7
      %v735 = vsel %vm705, %v733, %v734
      %v736 = vrot.slane %v643, 7
      %v737 = vrot.slane %v644, 7
      %v738 = vsel %vm705, %v736, %v737
      %v739 = vrot.slane %v645, 7
      %v740 = vrot.slane %v646, 7
      %v741 = vsel %vm705, %v739, %v740
      %v742 = vrot.slane %v647, 7
      %v743 = vrot.slane %v648, 7
      %v744 = vsel %vm705, %v742, %v743
      %v745 = vrot.slane %v649, 7
      %v746 = vrot.slane %v650, 7
      %v747 = vsel %vm705, %v745, %v746
      %v748 = vrot.slane %v651, 7
      %v749 = vrot.slane %v652, 7
      %v750 = vsel %vm705, %v748, %v749
      %v751 = vrot.slane %v653, 7
      %v752 = vrot.slane %v654, 7
      %v753 = vsel %vm705, %v751, %v752
      %v754 = vrot.slane %v655, 7
      %v755 = vrot.slane %v656, 7
      %v756 = vsel %vm705, %v754, %v755
      %v757 = vrot.slane %v667, 7
      %v758 = vrot.slane %v668, 7
      %v759 = vsel %vm705, %v757, %v758
      %v814 = vsel %vm705, 0.0, %v706
      %v815 = vsel %vm705, 0.0, %v709
      %v816 = vsel %vm705, 0.0, %v712
      %v817 = vsel %vm705, 0.0, %v715
      %v818 = vsel %vm705, 0.0, %v718
      %v819 = vsel %vm705, 0.0, %v721
      %v820 = vsel %vm705, 0.0, %v724
      %v821 = vsel %vm705, 0.0, %v727
      %v822 = vsel %vm705, 0.0, %v730
      %v823 = vsel %vm705, 0.0, %v733
      %v824 = vsel %vm705, 0.0, %v736
      %v825 = vsel %vm705, 0.0, %v739
      %v826 = vsel %vm705, 0.0, %v742
      %v827 = vsel %vm705, 0.0, %v745
      %v828 = vsel %vm705, 0.0, %v748
      %v829 = vsel %vm705, 0.0, %v751
      %v830 = vsel %vm705, 0.0, %v754
      %v831 = vsel %vm705, 0.0, %v757
      %v832 = vsel %vm705, %v707, 0.0
      %v833 = vsel %vm705, %v710, 0.0
      %v834 = vsel %vm705, %v713, 0.0
      %v835 = vsel %vm705, %v716, 0.0
      %v836 = vsel %vm705, %v719, 0.0
      %v837 = vsel %vm705, %v722, 0.0
      %v838 = vsel %vm705, %v725, 0.0
      %v839 = vsel %vm705, %v728, 0.0
      %v840 = vsel %vm705, %v731, 0.0
      %v841 = vsel %vm705, %v734, 0.0
      %v842 = vsel %vm705, %v737, 0.0
      %v843 = vsel %vm705, %v740, 0.0
      %v844 = vsel %vm705, %v743, 0.0
      %v845 = vsel %vm705, %v746, 0.0
      %v846 = vsel %vm705, %v749, 0.0
      %v847 = vsel %vm705, %v752, 0.0
      %v848 = vsel %vm705, %v755, 0.0
      %v849 = vsel %vm705, %v758, 0.0
      %v850 = vpack.c.bf16 %v708, %v814
      %v851 = vpack.c.bf16 %v832, %v832
      %v852 = vpack.c.bf16 %v711, %v815
      %v853 = vpack.c.bf16 %v833, %v833
      %v854 = vpack.c.bf16 %v714, %v816
      %v855 = vpack.c.bf16 %v834, %v834
      %v856 = vpack.c.bf16 %v717, %v817
      %v857 = vpack.c.bf16 %v835, %v835
      %v858 = vpack.c.bf16 %v720, %v818
      %v859 = vpack.c.bf16 %v836, %v836
      %v860 = vpack.c.bf16 %v723, %v819
      %v861 = vpack.c.bf16 %v837, %v837
      %v862 = vpack.c.bf16 %v726, %v820
      %v863 = vpack.c.bf16 %v838, %v838
      %v864 = vpack.c.bf16 %v729, %v821
      %v865 = vpack.c.bf16 %v839, %v839
      %v866 = vpack.c.bf16 %v732, %v822
      %v867 = vpack.c.bf16 %v840, %v840
      %v868 = vpack.c.bf16 %v735, %v823
      %v869 = vpack.c.bf16 %v841, %v841
      %v870 = vpack.c.bf16 %v738, %v824
      %v871 = vpack.c.bf16 %v842, %v842
      %v872 = vpack.c.bf16 %v741, %v825
      %v873 = vpack.c.bf16 %v843, %v843
      %v874 = vpack.c.bf16 %v744, %v826
      %v875 = vpack.c.bf16 %v844, %v844
      %v876 = vpack.c.bf16 %v747, %v827
      %v877 = vpack.c.bf16 %v845, %v845
      %v878 = vpack.c.bf16 %v750, %v828
      %v879 = vpack.c.bf16 %v846, %v846
      %v880 = vpack.c.bf16 %v753, %v829
      %v881 = vpack.c.bf16 %v847, %v847
      %v882 = vpack.c.bf16 %v756, %v830
      %v883 = vpack.c.bf16 %v848, %v848
      %v884 = vpack.c.bf16 %v759, %v831
      %v885 = vpack.c.bf16 %v849, %v849
      %v886 = vld [vmem:[%s5] sm:$0xf]
      %v887 = vld [vmem:[%s5 + $0x4] sm:$0xf]
      %v888 = vld [vmem:[%s5 + $0x8] sm:$0xf]
      %v889 = vld [vmem:[%s5 + $0xc] sm:$0xf]
      %v890 = vld [vmem:[%s5 + $0x10] sm:$0xf]
      %v891 = vld [vmem:[%s5 + $0x14] sm:$0xf]
      %v892 = vld [vmem:[%s5 + $0x18] sm:$0xf]
      %v893 = vld [vmem:[%s5 + $0x1c] sm:$0xf]
      %v894 = vld [vmem:[%s5 + $0x20] sm:$0xf]
      %v895 = vld [vmem:[%s5 + $0x24] sm:$0xf]
      %v896 = vld [vmem:[%s5 + $0x28] sm:$0xf]
      %v897 = vld [vmem:[%s5 + $0x2c] sm:$0xf]
      %v898 = vld [vmem:[%s5 + $0x30] sm:$0xf]
      %v899 = vld [vmem:[%s5 + $0x34] sm:$0xf]
      %v900 = vld [vmem:[%s5 + $0x38] sm:$0xf]
      %v901 = vld [vmem:[%s5 + $0x3c] sm:$0xf]
      %vm902 = vsmask.f32 7424
      %v904 = vshrl.u32 %v850, 16
      %v906 = vshll.u32 %v850, 16
      %v908 = vrot.slane %v906, 1
      %v909 = vor.u32 %v904, %v908
      %v911 = vshll.u32 %v851, 16
      %v913 = vrot.slane %v911, 1
      %v914 = vsel %vm902, %v909, %v913
      %v916 = vshrl.u32 %v852, 16
      %v918 = vshll.u32 %v852, 16
      %v920 = vrot.slane %v918, 1
      %v921 = vor.u32 %v916, %v920
      %v923 = vshll.u32 %v853, 16
      %v925 = vrot.slane %v923, 1
      %v926 = vsel %vm902, %v921, %v925
      %v928 = vshrl.u32 %v854, 16
      %v930 = vshll.u32 %v854, 16
      %v932 = vrot.slane %v930, 1
      %v933 = vor.u32 %v928, %v932
      %v935 = vshll.u32 %v855, 16
      %v937 = vrot.slane %v935, 1
      %v938 = vsel %vm902, %v933, %v937
      %v940 = vshrl.u32 %v856, 16
      %v942 = vshll.u32 %v856, 16
      %v944 = vrot.slane %v942, 1
      %v945 = vor.u32 %v940, %v944
      %v947 = vshll.u32 %v857, 16
      %v949 = vrot.slane %v947, 1
      %v950 = vsel %vm902, %v945, %v949
      %v952 = vshrl.u32 %v858, 16
      %v954 = vshll.u32 %v858, 16
      %v956 = vrot.slane %v954, 1
      %v957 = vor.u32 %v952, %v956
      %v959 = vshll.u32 %v859, 16
      %v961 = vrot.slane %v959, 1
      %v962 = vsel %vm902, %v957, %v961
      %v964 = vshrl.u32 %v860, 16
      %v966 = vshll.u32 %v860, 16
      %v968 = vrot.slane %v966, 1
      %v969 = vor.u32 %v964, %v968
      %v971 = vshll.u32 %v861, 16
      %v973 = vrot.slane %v971, 1
      %v974 = vsel %vm902, %v969, %v973
      %v976 = vshrl.u32 %v862, 16
      %v978 = vshll.u32 %v862, 16
      %v980 = vrot.slane %v978, 1
      %v981 = vor.u32 %v976, %v980
      %v983 = vshll.u32 %v863, 16
      %v985 = vrot.slane %v983, 1
      %v986 = vsel %vm902, %v981, %v985
      %v988 = vshrl.u32 %v864, 16
      %v990 = vshll.u32 %v864, 16
      %v992 = vrot.slane %v990, 1
      %v993 = vor.u32 %v988, %v992
      %v995 = vshll.u32 %v865, 16
      %v997 = vrot.slane %v995, 1
      %v998 = vsel %vm902, %v993, %v997
      %v1000 = vshrl.u32 %v866, 16
      %v1002 = vshll.u32 %v866, 16
      %v1004 = vrot.slane %v1002, 1
      %v1005 = vor.u32 %v1000, %v1004
      %v1007 = vshll.u32 %v867, 16
      %v1009 = vrot.slane %v1007, 1
      %v1010 = vsel %vm902, %v1005, %v1009
      %v1012 = vshrl.u32 %v868, 16
      %v1014 = vshll.u32 %v868, 16
      %v1016 = vrot.slane %v1014, 1
      %v1017 = vor.u32 %v1012, %v1016
      %v1019 = vshll.u32 %v869, 16
      %v1021 = vrot.slane %v1019, 1
      %v1022 = vsel %vm902, %v1017, %v1021
      %v1024 = vshrl.u32 %v870, 16
      %v1026 = vshll.u32 %v870, 16
      %v1028 = vrot.slane %v1026, 1
      %v1029 = vor.u32 %v1024, %v1028
      %v1031 = vshll.u32 %v871, 16
      %v1033 = vrot.slane %v1031, 1
      %v1034 = vsel %vm902, %v1029, %v1033
      %v1036 = vshrl.u32 %v872, 16
      %v1038 = vshll.u32 %v872, 16
      %v1040 = vrot.slane %v1038, 1
      %v1041 = vor.u32 %v1036, %v1040
      %v1043 = vshll.u32 %v873, 16
      %v1045 = vrot.slane %v1043, 1
      %v1046 = vsel %vm902, %v1041, %v1045
      %v1048 = vshrl.u32 %v874, 16
      %v1050 = vshll.u32 %v874, 16
      %v1052 = vrot.slane %v1050, 1
      %v1053 = vor.u32 %v1048, %v1052
      %v1055 = vshll.u32 %v875, 16
      %v1057 = vrot.slane %v1055, 1
      %v1058 = vsel %vm902, %v1053, %v1057
      %v1060 = vshrl.u32 %v876, 16
      %v1062 = vshll.u32 %v876, 16
      %v1064 = vrot.slane %v1062, 1
      %v1065 = vor.u32 %v1060, %v1064
      %v1067 = vshll.u32 %v877, 16
      %v1069 = vrot.slane %v1067, 1
      %v1070 = vsel %vm902, %v1065, %v1069
      %v1072 = vshrl.u32 %v878, 16
      %v1074 = vshll.u32 %v878, 16
      %v1076 = vrot.slane %v1074, 1
      %v1077 = vor.u32 %v1072, %v1076
      %v1079 = vshll.u32 %v879, 16
      %v1081 = vrot.slane %v1079, 1
      %v1082 = vsel %vm902, %v1077, %v1081
      %v1084 = vshrl.u32 %v880, 16
      %v1086 = vshll.u32 %v880, 16
      %v1088 = vrot.slane %v1086, 1
      %v1089 = vor.u32 %v1084, %v1088
      %v1091 = vshll.u32 %v881, 16
      %v1093 = vrot.slane %v1091, 1
      %v1094 = vsel %vm902, %v1089, %v1093
      %s1111 = scalar_lea.vmem %s5, 64
      %v1112 = vld [vmem:[%s1111] sm:$0xf]
      %v1113 = vld [vmem:[%s1111 + $0x4] sm:$0xf]
      %v1114 = vld [vmem:[%s1111 + $0x8] sm:$0xf]
      %v1115 = vld [vmem:[%s1111 + $0xc] sm:$0xf]
      %v1116 = vld [vmem:[%s1111 + $0x10] sm:$0xf]
      %v1117 = vld [vmem:[%s1111 + $0x14] sm:$0xf]
      %v1118 = vld [vmem:[%s1111 + $0x18] sm:$0xf]
      %v1119 = vld [vmem:[%s1111 + $0x1c] sm:$0xf]
      %v1120 = vld [vmem:[%s1111 + $0x20] sm:$0xf]
      %v1121 = vld [vmem:[%s1111 + $0x24] sm:$0xf]
      %v1122 = vld [vmem:[%s1111 + $0x28] sm:$0xf]
      %v1123 = vld [vmem:[%s1111 + $0x2c] sm:$0xf]
      %v1124 = vld [vmem:[%s1111 + $0x30] sm:$0xf]
      %v1125 = vld [vmem:[%s1111 + $0x34] sm:$0xf]
      %v1126 = vld [vmem:[%s1111 + $0x38] sm:$0xf]
      %v1127 = vld [vmem:[%s1111 + $0x3c] sm:$0xf]
      %v1144 = vunpack.c.l.b16 %v1112
      %v1145 = vunpack.c.l.b16 %v1113
      %v1146 = vunpack.c.l.b16 %v1114
      %v1147 = vunpack.c.l.b16 %v1115
      %v1148 = vunpack.c.l.b16 %v1116
      %v1149 = vunpack.c.l.b16 %v1117
      %v1150 = vunpack.c.l.b16 %v1118
      %v1151 = vunpack.c.l.b16 %v1119
      %v1152 = vunpack.c.l.b16 %v1120
      %v1153 = vunpack.c.l.b16 %v1121
      %v1154 = vunpack.c.l.b16 %v1122
      %v1155 = vunpack.c.l.b16 %v1123
      %v1156 = vunpack.c.l.b16 %v1124
      %v1157 = vunpack.c.l.b16 %v1125
      %v1158 = vunpack.c.l.b16 %v1126
      %v1159 = vunpack.c.l.b16 %v1127
      %v1160 = vpack.c.b16 %v1145, %v1144
      %v1161 = vpack.c.b16 %v1147, %v1146
      %v1162 = vpack.c.b16 %v1149, %v1148
      %v1163 = vpack.c.b16 %v1151, %v1150
      %v1164 = vpack.c.b16 %v1153, %v1152
      %v1165 = vpack.c.b16 %v1155, %v1154
      %v1166 = vpack.c.b16 %v1157, %v1156
      %v1167 = vpack.c.b16 %v1159, %v1158
      %1176 = vmatprep.subr.bf16.mxu0 0
      %1177 = vmatpush1.bf16.msra.mxu0 %v1167
      %1178 = vmatprep.subr.bf16.mxu0 0
      %1179 = vmatpush1.bf16.msra.mxu0 %v1166
      %1180 = vmatprep.subr.bf16.mxu0 0
      %1181 = vmatpush1.bf16.msra.mxu0 %v1165
      %1182 = vmatprep.subr.bf16.mxu0 0
      %1183 = vmatpush1.bf16.msra.mxu0 %v1164
      %1184 = vmatprep.subr.bf16.mxu0 0
      %1185 = vmatpush1.bf16.msra.mxu0 %v1163
      %1186 = vmatprep.subr.bf16.mxu0 0
      %1187 = vmatpush1.bf16.msra.mxu0 %v1162
      %1188 = vmatprep.subr.bf16.mxu0 0
      %1189 = vmatpush1.bf16.msra.mxu0 %v1161
      %1190 = vmatprep.subr.bf16.mxu0 0
      %1191 = vmatpush1.bf16.msra.mxu0 %v1160
      %1192 = vmatprep.subr.bf16.mxu0 0
      %1193 = vmatpush2.bf16.msra.mxu0 0
      %1194 = vmatprep.subr.bf16.mxu0 0
      %1195 = vmatpush2.bf16.msra.mxu0 0
      %1196 = vmatprep.subr.bf16.mxu0 0
      %1197 = vmatpush2.bf16.msra.mxu0 0
      %1198 = vmatprep.subr.bf16.mxu0 0
      %1199 = vmatpush2.bf16.msra.mxu0 0
      %1200 = vmatprep.subr.bf16.mxu0 0
      %1201 = vmatpush2.bf16.msra.mxu0 0
      %1202 = vmatprep.subr.bf16.mxu0 0
      %1203 = vmatpush2.bf16.msra.mxu0 0
      %1204 = vmatprep.subr.bf16.mxu0 0
      %1205 = vmatpush2.bf16.msra.mxu0 0
      %1206 = vmatprep.subr.bf16.mxu0 0
      %1207 = vmatpush2.bf16.msra.mxu0 0
      %1208 = vmatprep.mubr.bf16.mxu0 0
      %1209 = vmatmul.mubr.bf16.gmra.mxu0 %v914
      %v1210 = vpop.f32.mrf.mxu0
      %v1211 = vadd.f32 0.0, %v1210
      %v1212 = vpop.f32.mrf.mxu0
      %v1213 = vpop.f32.mrf.mxu0
      %v1214 = vadd.f32 0.0, %v1213
      %v1215 = vpop.f32.mrf.mxu0
      %1216 = vmatprep.mubr.bf16.mxu0 0
      %1217 = vmatmul.mubr.bf16.gmra.mxu0 %v926
      %v1218 = vpop.f32.mrf.mxu0
      %v1219 = vadd.f32 0.0, %v1218
      %v1220 = vpop.f32.mrf.mxu0
      %v1221 = vpop.f32.mrf.mxu0
      %v1222 = vadd.f32 0.0, %v1221
      %v1223 = vpop.f32.mrf.mxu0
      %1224 = vmatprep.mubr.bf16.mxu0 0
      %1225 = vmatmul.mubr.bf16.gmra.mxu0 %v938
      %v1226 = vpop.f32.mrf.mxu0
      %v1227 = vadd.f32 0.0, %v1226
      %v1228 = vpop.f32.mrf.mxu0
      %v1229 = vpop.f32.mrf.mxu0
      %v1230 = vadd.f32 0.0, %v1229
      %v1231 = vpop.f32.mrf.mxu0
      %1232 = vmatprep.mubr.bf16.mxu0 0
      %1233 = vmatmul.mubr.bf16.gmra.mxu0 %v950
      %v1234 = vpop.f32.mrf.mxu0
      %v1235 = vadd.f32 0.0, %v1234
      %v1236 = vpop.f32.mrf.mxu0
      %v1237 = vpop.f32.mrf.mxu0
      %v1238 = vadd.f32 0.0, %v1237
      %v1239 = vpop.f32.mrf.mxu0
      %1240 = vmatprep.mubr.bf16.mxu0 0
      %1241 = vmatmul.mubr.bf16.gmra.mxu0 %v962
      %v1242 = vpop.f32.mrf.mxu0
      %v1243 = vadd.f32 0.0, %v1242
      %v1244 = vpop.f32.mrf.mxu0
      %v1245 = vpop.f32.mrf.mxu0
      %v1246 = vadd.f32 0.0, %v1245
      %v1247 = vpop.f32.mrf.mxu0
      %1248 = vmatprep.mubr.bf16.mxu0 0
      %1249 = vmatmul.mubr.bf16.gmra.mxu0 %v974
      %v1250 = vpop.f32.mrf.mxu0
      %v1251 = vadd.f32 0.0, %v1250
      %v1252 = vpop.f32.mrf.mxu0
      %v1253 = vpop.f32.mrf.mxu0
      %v1254 = vadd.f32 0.0, %v1253
      %v1255 = vpop.f32.mrf.mxu0
      %1256 = vmatprep.mubr.bf16.mxu0 0
      %1257 = vmatmul.mubr.bf16.gmra.mxu0 %v986
      %v1258 = vpop.f32.mrf.mxu0
      %v1259 = vadd.f32 0.0, %v1258
      %v1260 = vpop.f32.mrf.mxu0
      %v1261 = vpop.f32.mrf.mxu0
      %v1262 = vadd.f32 0.0, %v1261
      %v1263 = vpop.f32.mrf.mxu0
      %1264 = vmatprep.mubr.bf16.mxu0 0
      %1265 = vmatmul.mubr.bf16.gmra.mxu0 %v998
      %v1266 = vpop.f32.mrf.mxu0
      %v1267 = vadd.f32 0.0, %v1266
      %v1268 = vpop.f32.mrf.mxu0
      %v1269 = vpop.f32.mrf.mxu0
      %v1270 = vadd.f32 0.0, %v1269
      %v1271 = vpop.f32.mrf.mxu0
      %1272 = vmatprep.mubr.bf16.mxu0 0
      %1273 = vmatmul.mubr.bf16.gmra.mxu0 %v1010
      %v1274 = vpop.f32.mrf.mxu0
      %v1275 = vadd.f32 0.0, %v1274
      %v1276 = vpop.f32.mrf.mxu0
      %v1277 = vpop.f32.mrf.mxu0
      %v1278 = vadd.f32 0.0, %v1277
      %v1279 = vpop.f32.mrf.mxu0
      %1280 = vmatprep.mubr.bf16.mxu0 0
      %1281 = vmatmul.mubr.bf16.gmra.mxu0 %v1022
      %v1282 = vpop.f32.mrf.mxu0
      %v1283 = vadd.f32 0.0, %v1282
      %v1284 = vpop.f32.mrf.mxu0
      %v1285 = vpop.f32.mrf.mxu0
      %v1286 = vadd.f32 0.0, %v1285
      %v1287 = vpop.f32.mrf.mxu0
      %1288 = vmatprep.mubr.bf16.mxu0 0
      %1289 = vmatmul.mubr.bf16.gmra.mxu0 %v1034
      %v1290 = vpop.f32.mrf.mxu0
      %v1291 = vadd.f32 0.0, %v1290
      %v1292 = vpop.f32.mrf.mxu0
      %v1293 = vpop.f32.mrf.mxu0
      %v1294 = vadd.f32 0.0, %v1293
      %v1295 = vpop.f32.mrf.mxu0
      %1296 = vmatprep.mubr.bf16.mxu0 0
      %1297 = vmatmul.mubr.bf16.gmra.mxu0 %v1046
      %v1298 = vpop.f32.mrf.mxu0
      %v1299 = vadd.f32 0.0, %v1298
      %v1300 = vpop.f32.mrf.mxu0
      %v1301 = vpop.f32.mrf.mxu0
      %v1302 = vadd.f32 0.0, %v1301
      %v1303 = vpop.f32.mrf.mxu0
      %1304 = vmatprep.mubr.bf16.mxu0 0
      %1305 = vmatmul.mubr.bf16.gmra.mxu0 %v1058
      %v1306 = vpop.f32.mrf.mxu0
      %v1307 = vadd.f32 0.0, %v1306
      %v1308 = vpop.f32.mrf.mxu0
      %v1309 = vpop.f32.mrf.mxu0
      %v1310 = vadd.f32 0.0, %v1309
      %v1311 = vpop.f32.mrf.mxu0
      %1312 = vmatprep.mubr.bf16.mxu0 0
      %1313 = vmatmul.mubr.bf16.gmra.mxu0 %v1070
      %v1314 = vpop.f32.mrf.mxu0
      %v1315 = vadd.f32 0.0, %v1314
      %v1316 = vpop.f32.mrf.mxu0
      %v1317 = vpop.f32.mrf.mxu0
      %v1318 = vadd.f32 0.0, %v1317
      %v1319 = vpop.f32.mrf.mxu0
      %1320 = vmatprep.mubr.bf16.mxu0 0
      %1321 = vmatmul.mubr.bf16.gmra.mxu0 %v1082
      %v1322 = vpop.f32.mrf.mxu0
      %v1323 = vadd.f32 0.0, %v1322
      %v1324 = vpop.f32.mrf.mxu0
      %v1325 = vpop.f32.mrf.mxu0
      %v1326 = vadd.f32 0.0, %v1325
      %v1327 = vpop.f32.mrf.mxu0
      %1328 = vmatprep.mubr.bf16.mxu0 0
      %1329 = vmatmul.mubr.bf16.gmra.mxu0 %v1094
      %v1330 = vpop.f32.mrf.mxu0
      %v1331 = vadd.f32 0.0, %v1330
      %v1332 = vpop.f32.mrf.mxu0
      %v1333 = vpop.f32.mrf.mxu0
      %v1334 = vadd.f32 0.0, %v1333
      %v1335 = vpop.f32.mrf.mxu0
      %1336 = vdwg.mxu0
      %v1353 = vunpack.c.l.b16 %v886
      %v1354 = vunpack.c.l.b16 %v887
      %v1355 = vunpack.c.l.b16 %v888
      %v1356 = vunpack.c.l.b16 %v889
      %v1357 = vunpack.c.l.b16 %v890
      %v1358 = vunpack.c.l.b16 %v891
      %v1359 = vunpack.c.l.b16 %v892
      %v1360 = vunpack.c.l.b16 %v893
      %v1361 = vunpack.c.l.b16 %v894
      %v1362 = vunpack.c.l.b16 %v895
      %v1363 = vunpack.c.l.b16 %v896
      %v1364 = vunpack.c.l.b16 %v897
      %v1365 = vunpack.c.l.b16 %v898
      %v1366 = vunpack.c.l.b16 %v899
      %v1367 = vunpack.c.l.b16 %v900
      %v1368 = vunpack.c.l.b16 %v901
      %v1369 = vpack.c.b16 %v1354, %v1353
      %v1370 = vpack.c.b16 %v1356, %v1355
      %v1371 = vpack.c.b16 %v1358, %v1357
      %v1372 = vpack.c.b16 %v1360, %v1359
      %v1373 = vpack.c.b16 %v1362, %v1361
      %v1374 = vpack.c.b16 %v1364, %v1363
      %v1375 = vpack.c.b16 %v1366, %v1365
      %v1376 = vpack.c.b16 %v1368, %v1367
      %1385 = vmatprep.subr.bf16.mxu0 0
      %1386 = vmatpush1.bf16.msra.mxu0 %v1376
      %1387 = vmatprep.subr.bf16.mxu0 0
      %1388 = vmatpush1.bf16.msra.mxu0 %v1375
      %1389 = vmatprep.subr.bf16.mxu0 0
      %1390 = vmatpush1.bf16.msra.mxu0 %v1374
      %1391 = vmatprep.subr.bf16.mxu0 0
      %1392 = vmatpush1.bf16.msra.mxu0 %v1373
      %1393 = vmatprep.subr.bf16.mxu0 0
      %1394 = vmatpush1.bf16.msra.mxu0 %v1372
      %1395 = vmatprep.subr.bf16.mxu0 0
      %1396 = vmatpush1.bf16.msra.mxu0 %v1371
      %1397 = vmatprep.subr.bf16.mxu0 0
      %1398 = vmatpush1.bf16.msra.mxu0 %v1370
      %1399 = vmatprep.subr.bf16.mxu0 0
      %1400 = vmatpush1.bf16.msra.mxu0 %v1369
      %1401 = vmatprep.subr.bf16.mxu0 0
      %1402 = vmatpush2.bf16.msra.mxu0 0
      %1403 = vmatprep.subr.bf16.mxu0 0
      %1404 = vmatpush2.bf16.msra.mxu0 0
      %1405 = vmatprep.subr.bf16.mxu0 0
      %1406 = vmatpush2.bf16.msra.mxu0 0
      %1407 = vmatprep.subr.bf16.mxu0 0
      %1408 = vmatpush2.bf16.msra.mxu0 0
      %1409 = vmatprep.subr.bf16.mxu0 0
      %1410 = vmatpush2.bf16.msra.mxu0 0
      %1411 = vmatprep.subr.bf16.mxu0 0
      %1412 = vmatpush2.bf16.msra.mxu0 0
      %1413 = vmatprep.subr.bf16.mxu0 0
      %1414 = vmatpush2.bf16.msra.mxu0 0
      %1415 = vmatprep.subr.bf16.mxu0 0
      %1416 = vmatpush2.bf16.msra.mxu0 0
      %1417 = vmatprep.mubr.bf16.mxu0 0
      %1418 = vmatmul.mubr.bf16.gmra.mxu0 %v850
      %v1419 = vpop.f32.mrf.mxu0
      %v1420 = vadd.f32 %v1211, %v1419
      %v1421 = vpop.f32.mrf.mxu0
      %v1422 = vpop.f32.mrf.mxu0
      %v1423 = vadd.f32 %v1214, %v1422
      %v1424 = vpop.f32.mrf.mxu0
      %1425 = vmatprep.mubr.bf16.mxu0 0
      %1426 = vmatmul.mubr.bf16.gmra.mxu0 %v852
      %v1427 = vpop.f32.mrf.mxu0
      %v1428 = vadd.f32 %v1219, %v1427
      %v1429 = vpop.f32.mrf.mxu0
      %v1430 = vpop.f32.mrf.mxu0
      %v1431 = vadd.f32 %v1222, %v1430
      %v1432 = vpop.f32.mrf.mxu0
      %1433 = vmatprep.mubr.bf16.mxu0 0
      %1434 = vmatmul.mubr.bf16.gmra.mxu0 %v854
      %v1435 = vpop.f32.mrf.mxu0
      %v1436 = vadd.f32 %v1227, %v1435
      %v1437 = vpop.f32.mrf.mxu0
      %v1438 = vpop.f32.mrf.mxu0
      %v1439 = vadd.f32 %v1230, %v1438
      %v1440 = vpop.f32.mrf.mxu0
      %1441 = vmatprep.mubr.bf16.mxu0 0
      %1442 = vmatmul.mubr.bf16.gmra.mxu0 %v856
      %v1443 = vpop.f32.mrf.mxu0
      %v1444 = vadd.f32 %v1235, %v1443
      %v1445 = vpop.f32.mrf.mxu0
      %v1446 = vpop.f32.mrf.mxu0
      %v1447 = vadd.f32 %v1238, %v1446
      %v1448 = vpop.f32.mrf.mxu0
      %1449 = vmatprep.mubr.bf16.mxu0 0
      %1450 = vmatmul.mubr.bf16.gmra.mxu0 %v858
      %v1451 = vpop.f32.mrf.mxu0
      %v1452 = vadd.f32 %v1243, %v1451
      %v1453 = vpop.f32.mrf.mxu0
      %v1454 = vpop.f32.mrf.mxu0
      %v1455 = vadd.f32 %v1246, %v1454
      %v1456 = vpop.f32.mrf.mxu0
      %1457 = vmatprep.mubr.bf16.mxu0 0
      %1458 = vmatmul.mubr.bf16.gmra.mxu0 %v860
      %v1459 = vpop.f32.mrf.mxu0
      %v1460 = vadd.f32 %v1251, %v1459
      %v1461 = vpop.f32.mrf.mxu0
      %v1462 = vpop.f32.mrf.mxu0
      %v1463 = vadd.f32 %v1254, %v1462
      %v1464 = vpop.f32.mrf.mxu0
      %1465 = vmatprep.mubr.bf16.mxu0 0
      %1466 = vmatmul.mubr.bf16.gmra.mxu0 %v862
      %v1467 = vpop.f32.mrf.mxu0
      %v1468 = vadd.f32 %v1259, %v1467
      %v1469 = vpop.f32.mrf.mxu0
      %v1470 = vpop.f32.mrf.mxu0
      %v1471 = vadd.f32 %v1262, %v1470
      %v1472 = vpop.f32.mrf.mxu0
      %1473 = vmatprep.mubr.bf16.mxu0 0
      %1474 = vmatmul.mubr.bf16.gmra.mxu0 %v864
      %v1475 = vpop.f32.mrf.mxu0
      %v1476 = vadd.f32 %v1267, %v1475
      %v1477 = vpop.f32.mrf.mxu0
      %v1478 = vpop.f32.mrf.mxu0
      %v1479 = vadd.f32 %v1270, %v1478
      %v1480 = vpop.f32.mrf.mxu0
      %1481 = vmatprep.mubr.bf16.mxu0 0
      %1482 = vmatmul.mubr.bf16.gmra.mxu0 %v866
      %v1483 = vpop.f32.mrf.mxu0
      %v1484 = vadd.f32 %v1275, %v1483
      %v1485 = vpop.f32.mrf.mxu0
      %v1486 = vpop.f32.mrf.mxu0
      %v1487 = vadd.f32 %v1278, %v1486
      %v1488 = vpop.f32.mrf.mxu0
      %1489 = vmatprep.mubr.bf16.mxu0 0
      %1490 = vmatmul.mubr.bf16.gmra.mxu0 %v868
      %v1491 = vpop.f32.mrf.mxu0
      %v1492 = vadd.f32 %v1283, %v1491
      %v1493 = vpop.f32.mrf.mxu0
      %v1494 = vpop.f32.mrf.mxu0
      %v1495 = vadd.f32 %v1286, %v1494
      %v1496 = vpop.f32.mrf.mxu0
      %1497 = vmatprep.mubr.bf16.mxu0 0
      %1498 = vmatmul.mubr.bf16.gmra.mxu0 %v870
      %v1499 = vpop.f32.mrf.mxu0
      %v1500 = vadd.f32 %v1291, %v1499
      %v1501 = vpop.f32.mrf.mxu0
      %v1502 = vpop.f32.mrf.mxu0
      %v1503 = vadd.f32 %v1294, %v1502
      %v1504 = vpop.f32.mrf.mxu0
      %1505 = vmatprep.mubr.bf16.mxu0 0
      %1506 = vmatmul.mubr.bf16.gmra.mxu0 %v872
      %v1507 = vpop.f32.mrf.mxu0
      %v1508 = vadd.f32 %v1299, %v1507
      %v1509 = vpop.f32.mrf.mxu0
      %v1510 = vpop.f32.mrf.mxu0
      %v1511 = vadd.f32 %v1302, %v1510
      %v1512 = vpop.f32.mrf.mxu0
      %1513 = vmatprep.mubr.bf16.mxu0 0
      %1514 = vmatmul.mubr.bf16.gmra.mxu0 %v874
      %v1515 = vpop.f32.mrf.mxu0
      %v1516 = vadd.f32 %v1307, %v1515
      %v1517 = vpop.f32.mrf.mxu0
      %v1518 = vpop.f32.mrf.mxu0
      %v1519 = vadd.f32 %v1310, %v1518
      %v1520 = vpop.f32.mrf.mxu0
      %1521 = vmatprep.mubr.bf16.mxu0 0
      %1522 = vmatmul.mubr.bf16.gmra.mxu0 %v876
      %v1523 = vpop.f32.mrf.mxu0
      %v1524 = vadd.f32 %v1315, %v1523
      %v1525 = vpop.f32.mrf.mxu0
      %v1526 = vpop.f32.mrf.mxu0
      %v1527 = vadd.f32 %v1318, %v1526
      %v1528 = vpop.f32.mrf.mxu0
      %1529 = vmatprep.mubr.bf16.mxu0 0
      %1530 = vmatmul.mubr.bf16.gmra.mxu0 %v878
      %v1531 = vpop.f32.mrf.mxu0
      %v1532 = vadd.f32 %v1323, %v1531
      %v1533 = vpop.f32.mrf.mxu0
      %v1534 = vpop.f32.mrf.mxu0
      %v1535 = vadd.f32 %v1326, %v1534
      %v1536 = vpop.f32.mrf.mxu0
      %1537 = vmatprep.mubr.bf16.mxu0 0
      %1538 = vmatmul.mubr.bf16.gmra.mxu0 %v880
      %v1539 = vpop.f32.mrf.mxu0
      %v1540 = vadd.f32 %v1331, %v1539
      %v1541 = vpop.f32.mrf.mxu0
      %v1542 = vpop.f32.mrf.mxu0
      %v1543 = vadd.f32 %v1334, %v1542
      %v1544 = vpop.f32.mrf.mxu0
      %1545 = vdwg.mxu0
      %vm1578 = vcmask 1046528
      %v1579 = vrot.slane %v850, 1
      %v1580 = vrot.slane %v851, 1
      %v1581 = vsel %vm1578, %v1579, %v1580
      %v1582 = vrot.slane %v852, 1
      %v1583 = vrot.slane %v853, 1
      %v1584 = vsel %vm1578, %v1582, %v1583
      %v1585 = vrot.slane %v854, 1
      %v1586 = vrot.slane %v855, 1
      %v1587 = vsel %vm1578, %v1585, %v1586
      %v1588 = vrot.slane %v856, 1
      %v1589 = vrot.slane %v857, 1
      %v1590 = vsel %vm1578, %v1588, %v1589
      %v1591 = vrot.slane %v858, 1
      %v1592 = vrot.slane %v859, 1
      %v1593 = vsel %vm1578, %v1591, %v1592
      %v1594 = vrot.slane %v860, 1
      %v1595 = vrot.slane %v861, 1
      %v1596 = vsel %vm1578, %v1594, %v1595
      %v1597 = vrot.slane %v862, 1
      %v1598 = vrot.slane %v863, 1
      %v1599 = vsel %vm1578, %v1597, %v1598
      %v1600 = vrot.slane %v864, 1
      %v1601 = vrot.slane %v865, 1
      %v1602 = vsel %vm1578, %v1600, %v1601
      %v1603 = vrot.slane %v866, 1
      %v1604 = vrot.slane %v867, 1
      %v1605 = vsel %vm1578, %v1603, %v1604
      %v1606 = vrot.slane %v868, 1
      %v1607 = vrot.slane %v869, 1
      %v1608 = vsel %vm1578, %v1606, %v1607
      %v1609 = vrot.slane %v870, 1
      %v1610 = vrot.slane %v871, 1
      %v1611 = vsel %vm1578, %v1609, %v1610
      %v1612 = vrot.slane %v872, 1
      %v1613 = vrot.slane %v873, 1
      %v1614 = vsel %vm1578, %v1612, %v1613
      %v1615 = vrot.slane %v874, 1
      %v1616 = vrot.slane %v875, 1
      %v1617 = vsel %vm1578, %v1615, %v1616
      %v1618 = vrot.slane %v876, 1
      %v1619 = vrot.slane %v877, 1
      %v1620 = vsel %vm1578, %v1618, %v1619
      %v1621 = vrot.slane %v878, 1
      %v1622 = vrot.slane %v879, 1
      %v1623 = vsel %vm1578, %v1621, %v1622
      %v1624 = vrot.slane %v880, 1
      %v1625 = vrot.slane %v881, 1
      %v1626 = vsel %vm1578, %v1624, %v1625
      %s1643 = scalar_lea.vmem %s5, 128
      %v1644 = vld [vmem:[%s1643] sm:$0xf]
      %v1645 = vld [vmem:[%s1643 + $0x4] sm:$0xf]
      %v1646 = vld [vmem:[%s1643 + $0x8] sm:$0xf]
      %v1647 = vld [vmem:[%s1643 + $0xc] sm:$0xf]
      %v1648 = vld [vmem:[%s1643 + $0x10] sm:$0xf]
      %v1649 = vld [vmem:[%s1643 + $0x14] sm:$0xf]
      %v1650 = vld [vmem:[%s1643 + $0x18] sm:$0xf]
      %v1651 = vld [vmem:[%s1643 + $0x1c] sm:$0xf]
      %v1652 = vld [vmem:[%s1643 + $0x20] sm:$0xf]
      %v1653 = vld [vmem:[%s1643 + $0x24] sm:$0xf]
      %v1654 = vld [vmem:[%s1643 + $0x28] sm:$0xf]
      %v1655 = vld [vmem:[%s1643 + $0x2c] sm:$0xf]
      %v1656 = vld [vmem:[%s1643 + $0x30] sm:$0xf]
      %v1657 = vld [vmem:[%s1643 + $0x34] sm:$0xf]
      %v1658 = vld [vmem:[%s1643 + $0x38] sm:$0xf]
      %v1659 = vld [vmem:[%s1643 + $0x3c] sm:$0xf]
      %v1676 = vunpack.c.l.b16 %v1644
      %v1677 = vunpack.c.l.b16 %v1645
      %v1678 = vunpack.c.l.b16 %v1646
      %v1679 = vunpack.c.l.b16 %v1647
      %v1680 = vunpack.c.l.b16 %v1648
      %v1681 = vunpack.c.l.b16 %v1649
      %v1682 = vunpack.c.l.b16 %v1650
      %v1683 = vunpack.c.l.b16 %v1651
      %v1684 = vunpack.c.l.b16 %v1652
      %v1685 = vunpack.c.l.b16 %v1653
      %v1686 = vunpack.c.l.b16 %v1654
      %v1687 = vunpack.c.l.b16 %v1655
      %v1688 = vunpack.c.l.b16 %v1656
      %v1689 = vunpack.c.l.b16 %v1657
      %v1690 = vunpack.c.l.b16 %v1658
      %v1691 = vunpack.c.l.b16 %v1659
      %v1692 = vpack.c.b16 %v1677, %v1676
      %v1693 = vpack.c.b16 %v1679, %v1678
      %v1694 = vpack.c.b16 %v1681, %v1680
      %v1695 = vpack.c.b16 %v1683, %v1682
      %v1696 = vpack.c.b16 %v1685, %v1684
      %v1697 = vpack.c.b16 %v1687, %v1686
      %v1698 = vpack.c.b16 %v1689, %v1688
      %v1699 = vpack.c.b16 %v1691, %v1690
      %1708 = vmatprep.subr.bf16.mxu0 0
      %1709 = vmatpush1.bf16.msra.mxu0 %v1699
      %1710 = vmatprep.subr.bf16.mxu0 0
      %1711 = vmatpush1.bf16.msra.mxu0 %v1698
      %1712 = vmatprep.subr.bf16.mxu0 0
      %1713 = vmatpush1.bf16.msra.mxu0 %v1697
      %1714 = vmatprep.subr.bf16.mxu0 0
      %1715 = vmatpush1.bf16.msra.mxu0 %v1696
      %1716 = vmatprep.subr.bf16.mxu0 0
      %1717 = vmatpush1.bf16.msra.mxu0 %v1695
      %1718 = vmatprep.subr.bf16.mxu0 0
      %1719 = vmatpush1.bf16.msra.mxu0 %v1694
      %1720 = vmatprep.subr.bf16.mxu0 0
      %1721 = vmatpush1.bf16.msra.mxu0 %v1693
      %1722 = vmatprep.subr.bf16.mxu0 0
      %1723 = vmatpush1.bf16.msra.mxu0 %v1692
      %1724 = vmatprep.subr.bf16.mxu0 0
      %1725 = vmatpush2.bf16.msra.mxu0 0
      %1726 = vmatprep.subr.bf16.mxu0 0
      %1727 = vmatpush2.bf16.msra.mxu0 0
      %1728 = vmatprep.subr.bf16.mxu0 0
      %1729 = vmatpush2.bf16.msra.mxu0 0
      %1730 = vmatprep.subr.bf16.mxu0 0
      %1731 = vmatpush2.bf16.msra.mxu0 0
      %1732 = vmatprep.subr.bf16.mxu0 0
      %1733 = vmatpush2.bf16.msra.mxu0 0
      %1734 = vmatprep.subr.bf16.mxu0 0
      %1735 = vmatpush2.bf16.msra.mxu0 0
      %1736 = vmatprep.subr.bf16.mxu0 0
      %1737 = vmatpush2.bf16.msra.mxu0 0
      %1738 = vmatprep.subr.bf16.mxu0 0
      %1739 = vmatpush2.bf16.msra.mxu0 0
      %1740 = vmatprep.mubr.bf16.mxu0 0
      %1741 = vmatmul.mubr.bf16.gmra.mxu0 %v1581
      %v1742 = vpop.f32.mrf.mxu0
      %v1743 = vadd.f32 0.0, %v1742
      %v1744 = vpop.f32.mrf.mxu0
      %v1745 = vpop.f32.mrf.mxu0
      %v1746 = vadd.f32 0.0, %v1745
      %v1747 = vpop.f32.mrf.mxu0
      %1748 = vmatprep.mubr.bf16.mxu0 0
      %1749 = vmatmul.mubr.bf16.gmra.mxu0 %v1584
      %v1750 = vpop.f32.mrf.mxu0
      %v1751 = vadd.f32 0.0, %v1750
      %v1752 = vpop.f32.mrf.mxu0
      %v1753 = vpop.f32.mrf.mxu0
      %v1754 = vadd.f32 0.0, %v1753
      %v1755 = vpop.f32.mrf.mxu0
      %1756 = vmatprep.mubr.bf16.mxu0 0
      %1757 = vmatmul.mubr.bf16.gmra.mxu0 %v1587
      %v1758 = vpop.f32.mrf.mxu0
      %v1759 = vadd.f32 0.0, %v1758
      %v1760 = vpop.f32.mrf.mxu0
      %v1761 = vpop.f32.mrf.mxu0
      %v1762 = vadd.f32 0.0, %v1761
      %v1763 = vpop.f32.mrf.mxu0
      %1764 = vmatprep.mubr.bf16.mxu0 0
      %1765 = vmatmul.mubr.bf16.gmra.mxu0 %v1590
      %v1766 = vpop.f32.mrf.mxu0
      %v1767 = vadd.f32 0.0, %v1766
      %v1768 = vpop.f32.mrf.mxu0
      %v1769 = vpop.f32.mrf.mxu0
      %v1770 = vadd.f32 0.0, %v1769
      %v1771 = vpop.f32.mrf.mxu0
      %1772 = vmatprep.mubr.bf16.mxu0 0
      %1773 = vmatmul.mubr.bf16.gmra.mxu0 %v1593
      %v1774 = vpop.f32.mrf.mxu0
      %v1775 = vadd.f32 0.0, %v1774
      %v1776 = vpop.f32.mrf.mxu0
      %v1777 = vpop.f32.mrf.mxu0
      %v1778 = vadd.f32 0.0, %v1777
      %v1779 = vpop.f32.mrf.mxu0
      %1780 = vmatprep.mubr.bf16.mxu0 0
      %1781 = vmatmul.mubr.bf16.gmra.mxu0 %v1596
      %v1782 = vpop.f32.mrf.mxu0
      %v1783 = vadd.f32 0.0, %v1782
      %v1784 = vpop.f32.mrf.mxu0
      %v1785 = vpop.f32.mrf.mxu0
      %v1786 = vadd.f32 0.0, %v1785
      %v1787 = vpop.f32.mrf.mxu0
      %1788 = vmatprep.mubr.bf16.mxu0 0
      %1789 = vmatmul.mubr.bf16.gmra.mxu0 %v1599
      %v1790 = vpop.f32.mrf.mxu0
      %v1791 = vadd.f32 0.0, %v1790
      %v1792 = vpop.f32.mrf.mxu0
      %v1793 = vpop.f32.mrf.mxu0
      %v1794 = vadd.f32 0.0, %v1793
      %v1795 = vpop.f32.mrf.mxu0
      %1796 = vmatprep.mubr.bf16.mxu0 0
      %1797 = vmatmul.mubr.bf16.gmra.mxu0 %v1602
      %v1798 = vpop.f32.mrf.mxu0
      %v1799 = vadd.f32 0.0, %v1798
      %v1800 = vpop.f32.mrf.mxu0
      %v1801 = vpop.f32.mrf.mxu0
      %v1802 = vadd.f32 0.0, %v1801
      %v1803 = vpop.f32.mrf.mxu0
      %1804 = vmatprep.mubr.bf16.mxu0 0
      %1805 = vmatmul.mubr.bf16.gmra.mxu0 %v1605
      %v1806 = vpop.f32.mrf.mxu0
      %v1807 = vadd.f32 0.0, %v1806
      %v1808 = vpop.f32.mrf.mxu0
      %v1809 = vpop.f32.mrf.mxu0
      %v1810 = vadd.f32 0.0, %v1809
      %v1811 = vpop.f32.mrf.mxu0
      %1812 = vmatprep.mubr.bf16.mxu0 0
      %1813 = vmatmul.mubr.bf16.gmra.mxu0 %v1608
      %v1814 = vpop.f32.mrf.mxu0
      %v1815 = vadd.f32 0.0, %v1814
      %v1816 = vpop.f32.mrf.mxu0
      %v1817 = vpop.f32.mrf.mxu0
      %v1818 = vadd.f32 0.0, %v1817
      %v1819 = vpop.f32.mrf.mxu0
      %1820 = vmatprep.mubr.bf16.mxu0 0
      %1821 = vmatmul.mubr.bf16.gmra.mxu0 %v1611
      %v1822 = vpop.f32.mrf.mxu0
      %v1823 = vadd.f32 0.0, %v1822
      %v1824 = vpop.f32.mrf.mxu0
      %v1825 = vpop.f32.mrf.mxu0
      %v1826 = vadd.f32 0.0, %v1825
      %v1827 = vpop.f32.mrf.mxu0
      %1828 = vmatprep.mubr.bf16.mxu0 0
      %1829 = vmatmul.mubr.bf16.gmra.mxu0 %v1614
      %v1830 = vpop.f32.mrf.mxu0
      %v1831 = vadd.f32 0.0, %v1830
      %v1832 = vpop.f32.mrf.mxu0
      %v1833 = vpop.f32.mrf.mxu0
      %v1834 = vadd.f32 0.0, %v1833
      %v1835 = vpop.f32.mrf.mxu0
      %1836 = vmatprep.mubr.bf16.mxu0 0
      %1837 = vmatmul.mubr.bf16.gmra.mxu0 %v1617
      %v1838 = vpop.f32.mrf.mxu0
      %v1839 = vadd.f32 0.0, %v1838
      %v1840 = vpop.f32.mrf.mxu0
      %v1841 = vpop.f32.mrf.mxu0
      %v1842 = vadd.f32 0.0, %v1841
      %v1843 = vpop.f32.mrf.mxu0
      %1844 = vmatprep.mubr.bf16.mxu0 0
      %1845 = vmatmul.mubr.bf16.gmra.mxu0 %v1620
      %v1846 = vpop.f32.mrf.mxu0
      %v1847 = vadd.f32 0.0, %v1846
      %v1848 = vpop.f32.mrf.mxu0
      %v1849 = vpop.f32.mrf.mxu0
      %v1850 = vadd.f32 0.0, %v1849
      %v1851 = vpop.f32.mrf.mxu0
      %1852 = vmatprep.mubr.bf16.mxu0 0
      %1853 = vmatmul.mubr.bf16.gmra.mxu0 %v1623
      %v1854 = vpop.f32.mrf.mxu0
      %v1855 = vadd.f32 0.0, %v1854
      %v1856 = vpop.f32.mrf.mxu0
      %v1857 = vpop.f32.mrf.mxu0
      %v1858 = vadd.f32 0.0, %v1857
      %v1859 = vpop.f32.mrf.mxu0
      %1860 = vmatprep.mubr.bf16.mxu0 0
      %1861 = vmatmul.mubr.bf16.gmra.mxu0 %v1626
      %v1862 = vpop.f32.mrf.mxu0
      %v1863 = vadd.f32 0.0, %v1862
      %v1864 = vpop.f32.mrf.mxu0
      %v1865 = vpop.f32.mrf.mxu0
      %v1866 = vadd.f32 0.0, %v1865
      %v1867 = vpop.f32.mrf.mxu0
      %1868 = vdwg.mxu0
      %v1869 = vadd.f32 %v1420, %v1743
      %v1870 = vadd.f32 %v1423, %v1746
      %v1871 = vadd.f32 %v1428, %v1751
      %v1872 = vadd.f32 %v1431, %v1754
      %v1873 = vadd.f32 %v1436, %v1759
      %v1874 = vadd.f32 %v1439, %v1762
      %v1875 = vadd.f32 %v1444, %v1767
      %v1876 = vadd.f32 %v1447, %v1770
      %v1877 = vadd.f32 %v1452, %v1775
      %v1878 = vadd.f32 %v1455, %v1778
      %v1879 = vadd.f32 %v1460, %v1783
      %v1880 = vadd.f32 %v1463, %v1786
      %v1881 = vadd.f32 %v1468, %v1791
      %v1882 = vadd.f32 %v1471, %v1794
      %v1883 = vadd.f32 %v1476, %v1799
      %v1884 = vadd.f32 %v1479, %v1802
      %v1885 = vadd.f32 %v1484, %v1807
      %v1886 = vadd.f32 %v1487, %v1810
      %v1887 = vadd.f32 %v1492, %v1815
      %v1888 = vadd.f32 %v1495, %v1818
      %v1889 = vadd.f32 %v1500, %v1823
      %v1890 = vadd.f32 %v1503, %v1826
      %v1891 = vadd.f32 %v1508, %v1831
      %v1892 = vadd.f32 %v1511, %v1834
      %v1893 = vadd.f32 %v1516, %v1839
      %v1894 = vadd.f32 %v1519, %v1842
      %v1895 = vadd.f32 %v1524, %v1847
      %v1896 = vadd.f32 %v1527, %v1850
      %v1897 = vadd.f32 %v1532, %v1855
      %v1898 = vadd.f32 %v1535, %v1858
      %v1899 = vadd.f32 %v1540, %v1863
      %v1900 = vadd.f32 %v1543, %v1866
      %s1901 = scalar_lea.vmem %s5, 192
      %v1902 = vld [vmem:[%s1901] sm:$0xf]
      %v1903 = vld [vmem:[%s1901 + $0x4] sm:$0xf]
      %v1904 = vld [vmem:[%s1901 + $0x8] sm:$0xf]
      %v1905 = vld [vmem:[%s1901 + $0xc] sm:$0xf]
      %v1906 = vld [vmem:[%s1901 + $0x10] sm:$0xf]
      %v1907 = vld [vmem:[%s1901 + $0x14] sm:$0xf]
      %v1908 = vld [vmem:[%s1901 + $0x18] sm:$0xf]
      %v1909 = vld [vmem:[%s1901 + $0x1c] sm:$0xf]
      %v1910 = vld [vmem:[%s1901 + $0x20] sm:$0xf]
      %v1911 = vld [vmem:[%s1901 + $0x24] sm:$0xf]
      %v1912 = vld [vmem:[%s1901 + $0x28] sm:$0xf]
      %v1913 = vld [vmem:[%s1901 + $0x2c] sm:$0xf]
      %v1914 = vld [vmem:[%s1901 + $0x30] sm:$0xf]
      %v1915 = vld [vmem:[%s1901 + $0x34] sm:$0xf]
      %v1916 = vld [vmem:[%s1901 + $0x38] sm:$0xf]
      %v1917 = vld [vmem:[%s1901 + $0x3c] sm:$0xf]
      %v1934 = vunpack.c.l.b16 %v1902
      %v1935 = vunpack.c.l.b16 %v1903
      %v1936 = vunpack.c.l.b16 %v1904
      %v1937 = vunpack.c.l.b16 %v1905
      %v1938 = vunpack.c.l.b16 %v1906
      %v1939 = vunpack.c.l.b16 %v1907
      %v1940 = vunpack.c.l.b16 %v1908
      %v1941 = vunpack.c.l.b16 %v1909
      %v1942 = vunpack.c.l.b16 %v1910
      %v1943 = vunpack.c.l.b16 %v1911
      %v1944 = vunpack.c.l.b16 %v1912
      %v1945 = vunpack.c.l.b16 %v1913
      %v1946 = vunpack.c.l.b16 %v1914
      %v1947 = vunpack.c.l.b16 %v1915
      %v1948 = vunpack.c.l.b16 %v1916
      %v1949 = vunpack.c.l.b16 %v1917
      %v1950 = vpack.c.b16 %v1935, %v1934
      %v1951 = vpack.c.b16 %v1937, %v1936
      %v1952 = vpack.c.b16 %v1939, %v1938
      %v1953 = vpack.c.b16 %v1941, %v1940
      %v1954 = vpack.c.b16 %v1943, %v1942
      %v1955 = vpack.c.b16 %v1945, %v1944
      %v1956 = vpack.c.b16 %v1947, %v1946
      %v1957 = vpack.c.b16 %v1949, %v1948
      %1966 = vmatprep.subr.bf16.mxu0 0
      %1967 = vmatpush1.bf16.msra.mxu0 %v1957
      %1968 = vmatprep.subr.bf16.mxu0 0
      %1969 = vmatpush1.bf16.msra.mxu0 %v1956
      %1970 = vmatprep.subr.bf16.mxu0 0
      %1971 = vmatpush1.bf16.msra.mxu0 %v1955
      %1972 = vmatprep.subr.bf16.mxu0 0
      %1973 = vmatpush1.bf16.msra.mxu0 %v1954
      %1974 = vmatprep.subr.bf16.mxu0 0
      %1975 = vmatpush1.bf16.msra.mxu0 %v1953
      %1976 = vmatprep.subr.bf16.mxu0 0
      %1977 = vmatpush1.bf16.msra.mxu0 %v1952
      %1978 = vmatprep.subr.bf16.mxu0 0
      %1979 = vmatpush1.bf16.msra.mxu0 %v1951
      %1980 = vmatprep.subr.bf16.mxu0 0
      %1981 = vmatpush1.bf16.msra.mxu0 %v1950
      %1982 = vmatprep.subr.bf16.mxu0 0
      %1983 = vmatpush2.bf16.msra.mxu0 0
      %1984 = vmatprep.subr.bf16.mxu0 0
      %1985 = vmatpush2.bf16.msra.mxu0 0
      %1986 = vmatprep.subr.bf16.mxu0 0
      %1987 = vmatpush2.bf16.msra.mxu0 0
      %1988 = vmatprep.subr.bf16.mxu0 0
      %1989 = vmatpush2.bf16.msra.mxu0 0
      %1990 = vmatprep.subr.bf16.mxu0 0
      %1991 = vmatpush2.bf16.msra.mxu0 0
      %1992 = vmatprep.subr.bf16.mxu0 0
      %1993 = vmatpush2.bf16.msra.mxu0 0
      %1994 = vmatprep.subr.bf16.mxu0 0
      %1995 = vmatpush2.bf16.msra.mxu0 0
      %1996 = vmatprep.subr.bf16.mxu0 0
      %1997 = vmatpush2.bf16.msra.mxu0 0
      %1998 = vmatprep.mubr.bf16.mxu0 0
      %1999 = vmatmul.mubr.bf16.gmra.mxu0 %v852
      %v2000 = vpop.f32.mrf.mxu0
      %v2001 = vadd.f32 0.0, %v2000
      %v2002 = vpop.f32.mrf.mxu0
      %v2003 = vpop.f32.mrf.mxu0
      %v2004 = vadd.f32 0.0, %v2003
      %v2005 = vpop.f32.mrf.mxu0
      %2006 = vmatprep.mubr.bf16.mxu0 0
      %2007 = vmatmul.mubr.bf16.gmra.mxu0 %v854
      %v2008 = vpop.f32.mrf.mxu0
      %v2009 = vadd.f32 0.0, %v2008
      %v2010 = vpop.f32.mrf.mxu0
      %v2011 = vpop.f32.mrf.mxu0
      %v2012 = vadd.f32 0.0, %v2011
      %v2013 = vpop.f32.mrf.mxu0
      %2014 = vmatprep.mubr.bf16.mxu0 0
      %2015 = vmatmul.mubr.bf16.gmra.mxu0 %v856
      %v2016 = vpop.f32.mrf.mxu0
      %v2017 = vadd.f32 0.0, %v2016
      %v2018 = vpop.f32.mrf.mxu0
      %v2019 = vpop.f32.mrf.mxu0
      %v2020 = vadd.f32 0.0, %v2019
      %v2021 = vpop.f32.mrf.mxu0
      %2022 = vmatprep.mubr.bf16.mxu0 0
      %2023 = vmatmul.mubr.bf16.gmra.mxu0 %v858
      %v2024 = vpop.f32.mrf.mxu0
      %v2025 = vadd.f32 0.0, %v2024
      %v2026 = vpop.f32.mrf.mxu0
      %v2027 = vpop.f32.mrf.mxu0
      %v2028 = vadd.f32 0.0, %v2027
      %v2029 = vpop.f32.mrf.mxu0
      %2030 = vmatprep.mubr.bf16.mxu0 0
      %2031 = vmatmul.mubr.bf16.gmra.mxu0 %v860
      %v2032 = vpop.f32.mrf.mxu0
      %v2033 = vadd.f32 0.0, %v2032
      %v2034 = vpop.f32.mrf.mxu0
      %v2035 = vpop.f32.mrf.mxu0
      %v2036 = vadd.f32 0.0, %v2035
      %v2037 = vpop.f32.mrf.mxu0
      %2038 = vmatprep.mubr.bf16.mxu0 0
      %2039 = vmatmul.mubr.bf16.gmra.mxu0 %v862
      %v2040 = vpop.f32.mrf.mxu0
      %v2041 = vadd.f32 0.0, %v2040
      %v2042 = vpop.f32.mrf.mxu0
      %v2043 = vpop.f32.mrf.mxu0
      %v2044 = vadd.f32 0.0, %v2043
      %v2045 = vpop.f32.mrf.mxu0
      %2046 = vmatprep.mubr.bf16.mxu0 0
      %2047 = vmatmul.mubr.bf16.gmra.mxu0 %v864
      %v2048 = vpop.f32.mrf.mxu0
      %v2049 = vadd.f32 0.0, %v2048
      %v2050 = vpop.f32.mrf.mxu0
      %v2051 = vpop.f32.mrf.mxu0
      %v2052 = vadd.f32 0.0, %v2051
      %v2053 = vpop.f32.mrf.mxu0
      %2054 = vmatprep.mubr.bf16.mxu0 0
      %2055 = vmatmul.mubr.bf16.gmra.mxu0 %v866
      %v2056 = vpop.f32.mrf.mxu0
      %v2057 = vadd.f32 0.0, %v2056
      %v2058 = vpop.f32.mrf.mxu0
      %v2059 = vpop.f32.mrf.mxu0
      %v2060 = vadd.f32 0.0, %v2059
      %v2061 = vpop.f32.mrf.mxu0
      %2062 = vmatprep.mubr.bf16.mxu0 0
      %2063 = vmatmul.mubr.bf16.gmra.mxu0 %v868
      %v2064 = vpop.f32.mrf.mxu0
      %v2065 = vadd.f32 0.0, %v2064
      %v2066 = vpop.f32.mrf.mxu0
      %v2067 = vpop.f32.mrf.mxu0
      %v2068 = vadd.f32 0.0, %v2067
      %v2069 = vpop.f32.mrf.mxu0
      %2070 = vmatprep.mubr.bf16.mxu0 0
      %2071 = vmatmul.mubr.bf16.gmra.mxu0 %v870
      %v2072 = vpop.f32.mrf.mxu0
      %v2073 = vadd.f32 0.0, %v2072
      %v2074 = vpop.f32.mrf.mxu0
      %v2075 = vpop.f32.mrf.mxu0
      %v2076 = vadd.f32 0.0, %v2075
      %v2077 = vpop.f32.mrf.mxu0
      %2078 = vmatprep.mubr.bf16.mxu0 0
      %2079 = vmatmul.mubr.bf16.gmra.mxu0 %v872
      %v2080 = vpop.f32.mrf.mxu0
      %v2081 = vadd.f32 0.0, %v2080
      %v2082 = vpop.f32.mrf.mxu0
      %v2083 = vpop.f32.mrf.mxu0
      %v2084 = vadd.f32 0.0, %v2083
      %v2085 = vpop.f32.mrf.mxu0
      %2086 = vmatprep.mubr.bf16.mxu0 0
      %2087 = vmatmul.mubr.bf16.gmra.mxu0 %v874
      %v2088 = vpop.f32.mrf.mxu0
      %v2089 = vadd.f32 0.0, %v2088
      %v2090 = vpop.f32.mrf.mxu0
      %v2091 = vpop.f32.mrf.mxu0
      %v2092 = vadd.f32 0.0, %v2091
      %v2093 = vpop.f32.mrf.mxu0
      %2094 = vmatprep.mubr.bf16.mxu0 0
      %2095 = vmatmul.mubr.bf16.gmra.mxu0 %v876
      %v2096 = vpop.f32.mrf.mxu0
      %v2097 = vadd.f32 0.0, %v2096
      %v2098 = vpop.f32.mrf.mxu0
      %v2099 = vpop.f32.mrf.mxu0
      %v2100 = vadd.f32 0.0, %v2099
      %v2101 = vpop.f32.mrf.mxu0
      %2102 = vmatprep.mubr.bf16.mxu0 0
      %2103 = vmatmul.mubr.bf16.gmra.mxu0 %v878
      %v2104 = vpop.f32.mrf.mxu0
      %v2105 = vadd.f32 0.0, %v2104
      %v2106 = vpop.f32.mrf.mxu0
      %v2107 = vpop.f32.mrf.mxu0
      %v2108 = vadd.f32 0.0, %v2107
      %v2109 = vpop.f32.mrf.mxu0
      %2110 = vmatprep.mubr.bf16.mxu0 0
      %2111 = vmatmul.mubr.bf16.gmra.mxu0 %v880
      %v2112 = vpop.f32.mrf.mxu0
      %v2113 = vadd.f32 0.0, %v2112
      %v2114 = vpop.f32.mrf.mxu0
      %v2115 = vpop.f32.mrf.mxu0
      %v2116 = vadd.f32 0.0, %v2115
      %v2117 = vpop.f32.mrf.mxu0
      %2118 = vmatprep.mubr.bf16.mxu0 0
      %2119 = vmatmul.mubr.bf16.gmra.mxu0 %v882
      %v2120 = vpop.f32.mrf.mxu0
      %v2121 = vadd.f32 0.0, %v2120
      %v2122 = vpop.f32.mrf.mxu0
      %v2123 = vpop.f32.mrf.mxu0
      %v2124 = vadd.f32 0.0, %v2123
      %v2125 = vpop.f32.mrf.mxu0
      %2126 = vdwg.mxu0
      %v2127 = vadd.f32 %v1869, %v2001
      %v2128 = vadd.f32 %v1870, %v2004
      %v2129 = vadd.f32 %v1871, %v2009
      %v2130 = vadd.f32 %v1872, %v2012
      %v2131 = vadd.f32 %v1873, %v2017
      %v2132 = vadd.f32 %v1874, %v2020
      %v2133 = vadd.f32 %v1875, %v2025
      %v2134 = vadd.f32 %v1876, %v2028
      %v2135 = vadd.f32 %v1877, %v2033
      %v2136 = vadd.f32 %v1878, %v2036
      %v2137 = vadd.f32 %v1879, %v2041
      %v2138 = vadd.f32 %v1880, %v2044
      %v2139 = vadd.f32 %v1881, %v2049
      %v2140 = vadd.f32 %v1882, %v2052
      %v2141 = vadd.f32 %v1883, %v2057
      %v2142 = vadd.f32 %v1884, %v2060
      %v2143 = vadd.f32 %v1885, %v2065
      %v2144 = vadd.f32 %v1886, %v2068
      %v2145 = vadd.f32 %v1887, %v2073
      %v2146 = vadd.f32 %v1888, %v2076
      %v2147 = vadd.f32 %v1889, %v2081
      %v2148 = vadd.f32 %v1890, %v2084
      %v2149 = vadd.f32 %v1891, %v2089
      %v2150 = vadd.f32 %v1892, %v2092
      %v2151 = vadd.f32 %v1893, %v2097
      %v2152 = vadd.f32 %v1894, %v2100
      %v2153 = vadd.f32 %v1895, %v2105
      %v2154 = vadd.f32 %v1896, %v2108
      %v2155 = vadd.f32 %v1897, %v2113
      %v2156 = vadd.f32 %v1898, %v2116
      %v2157 = vadd.f32 %v1899, %v2121
      %v2158 = vadd.f32 %v1900, %v2124
      %v2160 = vshrl.u32 %v882, 16
      %v2162 = vshll.u32 %v882, 16
      %v2164 = vrot.slane %v2162, 1
      %v2165 = vor.u32 %v2160, %v2164
      %v2167 = vshll.u32 %v883, 16
      %v2169 = vrot.slane %v2167, 1
      %v2170 = vsel %vm902, %v2165, %v2169
      %s2172 = scalar_lea.vmem %s5, 256
      %v2173 = vld [vmem:[%s2172] sm:$0xf]
      %v2174 = vld [vmem:[%s2172 + $0x4] sm:$0xf]
      %v2175 = vld [vmem:[%s2172 + $0x8] sm:$0xf]
      %v2176 = vld [vmem:[%s2172 + $0xc] sm:$0xf]
      %v2177 = vld [vmem:[%s2172 + $0x10] sm:$0xf]
      %v2178 = vld [vmem:[%s2172 + $0x14] sm:$0xf]
      %v2179 = vld [vmem:[%s2172 + $0x18] sm:$0xf]
      %v2180 = vld [vmem:[%s2172 + $0x1c] sm:$0xf]
      %v2181 = vld [vmem:[%s2172 + $0x20] sm:$0xf]
      %v2182 = vld [vmem:[%s2172 + $0x24] sm:$0xf]
      %v2183 = vld [vmem:[%s2172 + $0x28] sm:$0xf]
      %v2184 = vld [vmem:[%s2172 + $0x2c] sm:$0xf]
      %v2185 = vld [vmem:[%s2172 + $0x30] sm:$0xf]
      %v2186 = vld [vmem:[%s2172 + $0x34] sm:$0xf]
      %v2187 = vld [vmem:[%s2172 + $0x38] sm:$0xf]
      %v2188 = vld [vmem:[%s2172 + $0x3c] sm:$0xf]
      %v2205 = vunpack.c.l.b16 %v2173
      %v2206 = vunpack.c.l.b16 %v2174
      %v2207 = vunpack.c.l.b16 %v2175
      %v2208 = vunpack.c.l.b16 %v2176
      %v2209 = vunpack.c.l.b16 %v2177
      %v2210 = vunpack.c.l.b16 %v2178
      %v2211 = vunpack.c.l.b16 %v2179
      %v2212 = vunpack.c.l.b16 %v2180
      %v2213 = vunpack.c.l.b16 %v2181
      %v2214 = vunpack.c.l.b16 %v2182
      %v2215 = vunpack.c.l.b16 %v2183
      %v2216 = vunpack.c.l.b16 %v2184
      %v2217 = vunpack.c.l.b16 %v2185
      %v2218 = vunpack.c.l.b16 %v2186
      %v2219 = vunpack.c.l.b16 %v2187
      %v2220 = vunpack.c.l.b16 %v2188
      %v2221 = vpack.c.b16 %v2206, %v2205
      %v2222 = vpack.c.b16 %v2208, %v2207
      %v2223 = vpack.c.b16 %v2210, %v2209
      %v2224 = vpack.c.b16 %v2212, %v2211
      %v2225 = vpack.c.b16 %v2214, %v2213
      %v2226 = vpack.c.b16 %v2216, %v2215
      %v2227 = vpack.c.b16 %v2218, %v2217
      %v2228 = vpack.c.b16 %v2220, %v2219
      %2237 = vmatprep.subr.bf16.mxu0 0
      %2238 = vmatpush1.bf16.msra.mxu0 %v2228
      %2239 = vmatprep.subr.bf16.mxu0 0
      %2240 = vmatpush1.bf16.msra.mxu0 %v2227
      %2241 = vmatprep.subr.bf16.mxu0 0
      %2242 = vmatpush1.bf16.msra.mxu0 %v2226
      %2243 = vmatprep.subr.bf16.mxu0 0
      %2244 = vmatpush1.bf16.msra.mxu0 %v2225
      %2245 = vmatprep.subr.bf16.mxu0 0
      %2246 = vmatpush1.bf16.msra.mxu0 %v2224
      %2247 = vmatprep.subr.bf16.mxu0 0
      %2248 = vmatpush1.bf16.msra.mxu0 %v2223
      %2249 = vmatprep.subr.bf16.mxu0 0
      %2250 = vmatpush1.bf16.msra.mxu0 %v2222
      %2251 = vmatprep.subr.bf16.mxu0 0
      %2252 = vmatpush1.bf16.msra.mxu0 %v2221
      %2253 = vmatprep.subr.bf16.mxu0 0
      %2254 = vmatpush2.bf16.msra.mxu0 0
      %2255 = vmatprep.subr.bf16.mxu0 0
      %2256 = vmatpush2.bf16.msra.mxu0 0
      %2257 = vmatprep.subr.bf16.mxu0 0
      %2258 = vmatpush2.bf16.msra.mxu0 0
      %2259 = vmatprep.subr.bf16.mxu0 0
      %2260 = vmatpush2.bf16.msra.mxu0 0
      %2261 = vmatprep.subr.bf16.mxu0 0
      %2262 = vmatpush2.bf16.msra.mxu0 0
      %2263 = vmatprep.subr.bf16.mxu0 0
      %2264 = vmatpush2.bf16.msra.mxu0 0
      %2265 = vmatprep.subr.bf16.mxu0 0
      %2266 = vmatpush2.bf16.msra.mxu0 0
      %2267 = vmatprep.subr.bf16.mxu0 0
      %2268 = vmatpush2.bf16.msra.mxu0 0
      %2269 = vmatprep.mubr.bf16.mxu0 0
      %2270 = vmatmul.mubr.bf16.gmra.mxu0 %v926
      %v2271 = vpop.f32.mrf.mxu0
      %v2272 = vadd.f32 0.0, %v2271
      %v2273 = vpop.f32.mrf.mxu0
      %v2274 = vpop.f32.mrf.mxu0
      %v2275 = vadd.f32 0.0, %v2274
      %v2276 = vpop.f32.mrf.mxu0
      %2277 = vmatprep.mubr.bf16.mxu0 0
      %2278 = vmatmul.mubr.bf16.gmra.mxu0 %v938
      %v2279 = vpop.f32.mrf.mxu0
      %v2280 = vadd.f32 0.0, %v2279
      %v2281 = vpop.f32.mrf.mxu0
      %v2282 = vpop.f32.mrf.mxu0
      %v2283 = vadd.f32 0.0, %v2282
      %v2284 = vpop.f32.mrf.mxu0
      %2285 = vmatprep.mubr.bf16.mxu0 0
      %2286 = vmatmul.mubr.bf16.gmra.mxu0 %v950
      %v2287 = vpop.f32.mrf.mxu0
      %v2288 = vadd.f32 0.0, %v2287
      %v2289 = vpop.f32.mrf.mxu0
      %v2290 = vpop.f32.mrf.mxu0
      %v2291 = vadd.f32 0.0, %v2290
      %v2292 = vpop.f32.mrf.mxu0
      %2293 = vmatprep.mubr.bf16.mxu0 0
      %2294 = vmatmul.mubr.bf16.gmra.mxu0 %v962
      %v2295 = vpop.f32.mrf.mxu0
      %v2296 = vadd.f32 0.0, %v2295
      %v2297 = vpop.f32.mrf.mxu0
      %v2298 = vpop.f32.mrf.mxu0
      %v2299 = vadd.f32 0.0, %v2298
      %v2300 = vpop.f32.mrf.mxu0
      %2301 = vmatprep.mubr.bf16.mxu0 0
      %2302 = vmatmul.mubr.bf16.gmra.mxu0 %v974
      %v2303 = vpop.f32.mrf.mxu0
      %v2304 = vadd.f32 0.0, %v2303
      %v2305 = vpop.f32.mrf.mxu0
      %v2306 = vpop.f32.mrf.mxu0
      %v2307 = vadd.f32 0.0, %v2306
      %v2308 = vpop.f32.mrf.mxu0
      %2309 = vmatprep.mubr.bf16.mxu0 0
      %2310 = vmatmul.mubr.bf16.gmra.mxu0 %v986
      %v2311 = vpop.f32.mrf.mxu0
      %v2312 = vadd.f32 0.0, %v2311
      %v2313 = vpop.f32.mrf.mxu0
      %v2314 = vpop.f32.mrf.mxu0
      %v2315 = vadd.f32 0.0, %v2314
      %v2316 = vpop.f32.mrf.mxu0
      %2317 = vmatprep.mubr.bf16.mxu0 0
      %2318 = vmatmul.mubr.bf16.gmra.mxu0 %v998
      %v2319 = vpop.f32.mrf.mxu0
      %v2320 = vadd.f32 0.0, %v2319
      %v2321 = vpop.f32.mrf.mxu0
      %v2322 = vpop.f32.mrf.mxu0
      %v2323 = vadd.f32 0.0, %v2322
      %v2324 = vpop.f32.mrf.mxu0
      %2325 = vmatprep.mubr.bf16.mxu0 0
      %2326 = vmatmul.mubr.bf16.gmra.mxu0 %v1010
      %v2327 = vpop.f32.mrf.mxu0
      %v2328 = vadd.f32 0.0, %v2327
      %v2329 = vpop.f32.mrf.mxu0
      %v2330 = vpop.f32.mrf.mxu0
      %v2331 = vadd.f32 0.0, %v2330
      %v2332 = vpop.f32.mrf.mxu0
      %2333 = vmatprep.mubr.bf16.mxu0 0
      %2334 = vmatmul.mubr.bf16.gmra.mxu0 %v1022
      %v2335 = vpop.f32.mrf.mxu0
      %v2336 = vadd.f32 0.0, %v2335
      %v2337 = vpop.f32.mrf.mxu0
      %v2338 = vpop.f32.mrf.mxu0
      %v2339 = vadd.f32 0.0, %v2338
      %v2340 = vpop.f32.mrf.mxu0
      %2341 = vmatprep.mubr.bf16.mxu0 0
      %2342 = vmatmul.mubr.bf16.gmra.mxu0 %v1034
      %v2343 = vpop.f32.mrf.mxu0
      %v2344 = vadd.f32 0.0, %v2343
      %v2345 = vpop.f32.mrf.mxu0
      %v2346 = vpop.f32.mrf.mxu0
      %v2347 = vadd.f32 0.0, %v2346
      %v2348 = vpop.f32.mrf.mxu0
      %2349 = vmatprep.mubr.bf16.mxu0 0
      %2350 = vmatmul.mubr.bf16.gmra.mxu0 %v1046
      %v2351 = vpop.f32.mrf.mxu0
      %v2352 = vadd.f32 0.0, %v2351
      %v2353 = vpop.f32.mrf.mxu0
      %v2354 = vpop.f32.mrf.mxu0
      %v2355 = vadd.f32 0.0, %v2354
      %v2356 = vpop.f32.mrf.mxu0
      %2357 = vmatprep.mubr.bf16.mxu0 0
      %2358 = vmatmul.mubr.bf16.gmra.mxu0 %v1058
      %v2359 = vpop.f32.mrf.mxu0
      %v2360 = vadd.f32 0.0, %v2359
      %v2361 = vpop.f32.mrf.mxu0
      %v2362 = vpop.f32.mrf.mxu0
      %v2363 = vadd.f32 0.0, %v2362
      %v2364 = vpop.f32.mrf.mxu0
      %2365 = vmatprep.mubr.bf16.mxu0 0
      %2366 = vmatmul.mubr.bf16.gmra.mxu0 %v1070
      %v2367 = vpop.f32.mrf.mxu0
      %v2368 = vadd.f32 0.0, %v2367
      %v2369 = vpop.f32.mrf.mxu0
      %v2370 = vpop.f32.mrf.mxu0
      %v2371 = vadd.f32 0.0, %v2370
      %v2372 = vpop.f32.mrf.mxu0
      %2373 = vmatprep.mubr.bf16.mxu0 0
      %2374 = vmatmul.mubr.bf16.gmra.mxu0 %v1082
      %v2375 = vpop.f32.mrf.mxu0
      %v2376 = vadd.f32 0.0, %v2375
      %v2377 = vpop.f32.mrf.mxu0
      %v2378 = vpop.f32.mrf.mxu0
      %v2379 = vadd.f32 0.0, %v2378
      %v2380 = vpop.f32.mrf.mxu0
      %2381 = vmatprep.mubr.bf16.mxu0 0
      %2382 = vmatmul.mubr.bf16.gmra.mxu0 %v1094
      %v2383 = vpop.f32.mrf.mxu0
      %v2384 = vadd.f32 0.0, %v2383
      %v2385 = vpop.f32.mrf.mxu0
      %v2386 = vpop.f32.mrf.mxu0
      %v2387 = vadd.f32 0.0, %v2386
      %v2388 = vpop.f32.mrf.mxu0
      %2389 = vmatprep.mubr.bf16.mxu0 0
      %2390 = vmatmul.mubr.bf16.gmra.mxu0 %v2170
      %v2391 = vpop.f32.mrf.mxu0
      %v2392 = vadd.f32 0.0, %v2391
      %v2393 = vpop.f32.mrf.mxu0
      %v2394 = vpop.f32.mrf.mxu0
      %v2395 = vadd.f32 0.0, %v2394
      %v2396 = vpop.f32.mrf.mxu0
      %2397 = vdwg.mxu0
      %v2398 = vadd.f32 %v2127, %v2272
      %v2399 = vadd.f32 %v2128, %v2275
      %v2400 = vadd.f32 %v2129, %v2280
      %v2401 = vadd.f32 %v2130, %v2283
      %v2402 = vadd.f32 %v2131, %v2288
      %v2403 = vadd.f32 %v2132, %v2291
      %v2404 = vadd.f32 %v2133, %v2296
      %v2405 = vadd.f32 %v2134, %v2299
      %v2406 = vadd.f32 %v2135, %v2304
      %v2407 = vadd.f32 %v2136, %v2307
      %v2408 = vadd.f32 %v2137, %v2312
      %v2409 = vadd.f32 %v2138, %v2315
      %v2410 = vadd.f32 %v2139, %v2320
      %v2411 = vadd.f32 %v2140, %v2323
      %v2412 = vadd.f32 %v2141, %v2328
      %v2413 = vadd.f32 %v2142, %v2331
      %v2414 = vadd.f32 %v2143, %v2336
      %v2415 = vadd.f32 %v2144, %v2339
      %v2416 = vadd.f32 %v2145, %v2344
      %v2417 = vadd.f32 %v2146, %v2347
      %v2418 = vadd.f32 %v2147, %v2352
      %v2419 = vadd.f32 %v2148, %v2355
      %v2420 = vadd.f32 %v2149, %v2360
      %v2421 = vadd.f32 %v2150, %v2363
      %v2422 = vadd.f32 %v2151, %v2368
      %v2423 = vadd.f32 %v2152, %v2371
      %v2424 = vadd.f32 %v2153, %v2376
      %v2425 = vadd.f32 %v2154, %v2379
      %v2426 = vadd.f32 %v2155, %v2384
      %v2427 = vadd.f32 %v2156, %v2387
      %v2428 = vadd.f32 %v2157, %v2392
      %v2429 = vadd.f32 %v2158, %v2395
      %v2432 = vrot.slane %v882, 1
      %v2433 = vrot.slane %v883, 1
      %v2434 = vsel %vm1578, %v2432, %v2433
      %s2436 = scalar_lea.vmem %s5, 320
      %v2437 = vld [vmem:[%s2436] sm:$0xf]
      %v2438 = vld [vmem:[%s2436 + $0x4] sm:$0xf]
      %v2439 = vld [vmem:[%s2436 + $0x8] sm:$0xf]
      %v2440 = vld [vmem:[%s2436 + $0xc] sm:$0xf]
      %v2441 = vld [vmem:[%s2436 + $0x10] sm:$0xf]
      %v2442 = vld [vmem:[%s2436 + $0x14] sm:$0xf]
      %v2443 = vld [vmem:[%s2436 + $0x18] sm:$0xf]
      %v2444 = vld [vmem:[%s2436 + $0x1c] sm:$0xf]
      %v2445 = vld [vmem:[%s2436 + $0x20] sm:$0xf]
      %v2446 = vld [vmem:[%s2436 + $0x24] sm:$0xf]
      %v2447 = vld [vmem:[%s2436 + $0x28] sm:$0xf]
      %v2448 = vld [vmem:[%s2436 + $0x2c] sm:$0xf]
      %v2449 = vld [vmem:[%s2436 + $0x30] sm:$0xf]
      %v2450 = vld [vmem:[%s2436 + $0x34] sm:$0xf]
      %v2451 = vld [vmem:[%s2436 + $0x38] sm:$0xf]
      %v2452 = vld [vmem:[%s2436 + $0x3c] sm:$0xf]
      %v2469 = vunpack.c.l.b16 %v2437
      %v2470 = vunpack.c.l.b16 %v2438
      %v2471 = vunpack.c.l.b16 %v2439
      %v2472 = vunpack.c.l.b16 %v2440
      %v2473 = vunpack.c.l.b16 %v2441
      %v2474 = vunpack.c.l.b16 %v2442
      %v2475 = vunpack.c.l.b16 %v2443
      %v2476 = vunpack.c.l.b16 %v2444
      %v2477 = vunpack.c.l.b16 %v2445
      %v2478 = vunpack.c.l.b16 %v2446
      %v2479 = vunpack.c.l.b16 %v2447
      %v2480 = vunpack.c.l.b16 %v2448
      %v2481 = vunpack.c.l.b16 %v2449
      %v2482 = vunpack.c.l.b16 %v2450
      %v2483 = vunpack.c.l.b16 %v2451
      %v2484 = vunpack.c.l.b16 %v2452
      %v2485 = vpack.c.b16 %v2470, %v2469
      %v2486 = vpack.c.b16 %v2472, %v2471
      %v2487 = vpack.c.b16 %v2474, %v2473
      %v2488 = vpack.c.b16 %v2476, %v2475
      %v2489 = vpack.c.b16 %v2478, %v2477
      %v2490 = vpack.c.b16 %v2480, %v2479
      %v2491 = vpack.c.b16 %v2482, %v2481
      %v2492 = vpack.c.b16 %v2484, %v2483
      %2501 = vmatprep.subr.bf16.mxu0 0
      %2502 = vmatpush1.bf16.msra.mxu0 %v2492
      %2503 = vmatprep.subr.bf16.mxu0 0
      %2504 = vmatpush1.bf16.msra.mxu0 %v2491
      %2505 = vmatprep.subr.bf16.mxu0 0
      %2506 = vmatpush1.bf16.msra.mxu0 %v2490
      %2507 = vmatprep.subr.bf16.mxu0 0
      %2508 = vmatpush1.bf16.msra.mxu0 %v2489
      %2509 = vmatprep.subr.bf16.mxu0 0
      %2510 = vmatpush1.bf16.msra.mxu0 %v2488
      %2511 = vmatprep.subr.bf16.mxu0 0
      %2512 = vmatpush1.bf16.msra.mxu0 %v2487
      %2513 = vmatprep.subr.bf16.mxu0 0
      %2514 = vmatpush1.bf16.msra.mxu0 %v2486
      %2515 = vmatprep.subr.bf16.mxu0 0
      %2516 = vmatpush1.bf16.msra.mxu0 %v2485
      %2517 = vmatprep.subr.bf16.mxu0 0
      %2518 = vmatpush2.bf16.msra.mxu0 0
      %2519 = vmatprep.subr.bf16.mxu0 0
      %2520 = vmatpush2.bf16.msra.mxu0 0
      %2521 = vmatprep.subr.bf16.mxu0 0
      %2522 = vmatpush2.bf16.msra.mxu0 0
      %2523 = vmatprep.subr.bf16.mxu0 0
      %2524 = vmatpush2.bf16.msra.mxu0 0
      %2525 = vmatprep.subr.bf16.mxu0 0
      %2526 = vmatpush2.bf16.msra.mxu0 0
      %2527 = vmatprep.subr.bf16.mxu0 0
      %2528 = vmatpush2.bf16.msra.mxu0 0
      %2529 = vmatprep.subr.bf16.mxu0 0
      %2530 = vmatpush2.bf16.msra.mxu0 0
      %2531 = vmatprep.subr.bf16.mxu0 0
      %2532 = vmatpush2.bf16.msra.mxu0 0
      %2533 = vmatprep.mubr.bf16.mxu0 0
      %2534 = vmatmul.mubr.bf16.gmra.mxu0 %v1584
      %v2535 = vpop.f32.mrf.mxu0
      %v2536 = vadd.f32 0.0, %v2535
      %v2537 = vpop.f32.mrf.mxu0
      %v2538 = vpop.f32.mrf.mxu0
      %v2539 = vadd.f32 0.0, %v2538
      %v2540 = vpop.f32.mrf.mxu0
      %2541 = vmatprep.mubr.bf16.mxu0 0
      %2542 = vmatmul.mubr.bf16.gmra.mxu0 %v1587
      %v2543 = vpop.f32.mrf.mxu0
      %v2544 = vadd.f32 0.0, %v2543
      %v2545 = vpop.f32.mrf.mxu0
      %v2546 = vpop.f32.mrf.mxu0
      %v2547 = vadd.f32 0.0, %v2546
      %v2548 = vpop.f32.mrf.mxu0
      %2549 = vmatprep.mubr.bf16.mxu0 0
      %2550 = vmatmul.mubr.bf16.gmra.mxu0 %v1590
      %v2551 = vpop.f32.mrf.mxu0
      %v2552 = vadd.f32 0.0, %v2551
      %v2553 = vpop.f32.mrf.mxu0
      %v2554 = vpop.f32.mrf.mxu0
      %v2555 = vadd.f32 0.0, %v2554
      %v2556 = vpop.f32.mrf.mxu0
      %2557 = vmatprep.mubr.bf16.mxu0 0
      %2558 = vmatmul.mubr.bf16.gmra.mxu0 %v1593
      %v2559 = vpop.f32.mrf.mxu0
      %v2560 = vadd.f32 0.0, %v2559
      %v2561 = vpop.f32.mrf.mxu0
      %v2562 = vpop.f32.mrf.mxu0
      %v2563 = vadd.f32 0.0, %v2562
      %v2564 = vpop.f32.mrf.mxu0
      %2565 = vmatprep.mubr.bf16.mxu0 0
      %2566 = vmatmul.mubr.bf16.gmra.mxu0 %v1596
      %v2567 = vpop.f32.mrf.mxu0
      %v2568 = vadd.f32 0.0, %v2567
      %v2569 = vpop.f32.mrf.mxu0
      %v2570 = vpop.f32.mrf.mxu0
      %v2571 = vadd.f32 0.0, %v2570
      %v2572 = vpop.f32.mrf.mxu0
      %2573 = vmatprep.mubr.bf16.mxu0 0
      %2574 = vmatmul.mubr.bf16.gmra.mxu0 %v1599
      %v2575 = vpop.f32.mrf.mxu0
      %v2576 = vadd.f32 0.0, %v2575
      %v2577 = vpop.f32.mrf.mxu0
      %v2578 = vpop.f32.mrf.mxu0
      %v2579 = vadd.f32 0.0, %v2578
      %v2580 = vpop.f32.mrf.mxu0
      %2581 = vmatprep.mubr.bf16.mxu0 0
      %2582 = vmatmul.mubr.bf16.gmra.mxu0 %v1602
      %v2583 = vpop.f32.mrf.mxu0
      %v2584 = vadd.f32 0.0, %v2583
      %v2585 = vpop.f32.mrf.mxu0
      %v2586 = vpop.f32.mrf.mxu0
      %v2587 = vadd.f32 0.0, %v2586
      %v2588 = vpop.f32.mrf.mxu0
      %2589 = vmatprep.mubr.bf16.mxu0 0
      %2590 = vmatmul.mubr.bf16.gmra.mxu0 %v1605
      %v2591 = vpop.f32.mrf.mxu0
      %v2592 = vadd.f32 0.0, %v2591
      %v2593 = vpop.f32.mrf.mxu0
      %v2594 = vpop.f32.mrf.mxu0
      %v2595 = vadd.f32 0.0, %v2594
      %v2596 = vpop.f32.mrf.mxu0
      %2597 = vmatprep.mubr.bf16.mxu0 0
      %2598 = vmatmul.mubr.bf16.gmra.mxu0 %v1608
      %v2599 = vpop.f32.mrf.mxu0
      %v2600 = vadd.f32 0.0, %v2599
      %v2601 = vpop.f32.mrf.mxu0
      %v2602 = vpop.f32.mrf.mxu0
      %v2603 = vadd.f32 0.0, %v2602
      %v2604 = vpop.f32.mrf.mxu0
      %2605 = vmatprep.mubr.bf16.mxu0 0
      %2606 = vmatmul.mubr.bf16.gmra.mxu0 %v1611
      %v2607 = vpop.f32.mrf.mxu0
      %v2608 = vadd.f32 0.0, %v2607
      %v2609 = vpop.f32.mrf.mxu0
      %v2610 = vpop.f32.mrf.mxu0
      %v2611 = vadd.f32 0.0, %v2610
      %v2612 = vpop.f32.mrf.mxu0
      %2613 = vmatprep.mubr.bf16.mxu0 0
      %2614 = vmatmul.mubr.bf16.gmra.mxu0 %v1614
      %v2615 = vpop.f32.mrf.mxu0
      %v2616 = vadd.f32 0.0, %v2615
      %v2617 = vpop.f32.mrf.mxu0
      %v2618 = vpop.f32.mrf.mxu0
      %v2619 = vadd.f32 0.0, %v2618
      %v2620 = vpop.f32.mrf.mxu0
      %2621 = vmatprep.mubr.bf16.mxu0 0
      %2622 = vmatmul.mubr.bf16.gmra.mxu0 %v1617
      %v2623 = vpop.f32.mrf.mxu0
      %v2624 = vadd.f32 0.0, %v2623
      %v2625 = vpop.f32.mrf.mxu0
      %v2626 = vpop.f32.mrf.mxu0
      %v2627 = vadd.f32 0.0, %v2626
      %v2628 = vpop.f32.mrf.mxu0
      %2629 = vmatprep.mubr.bf16.mxu0 0
      %2630 = vmatmul.mubr.bf16.gmra.mxu0 %v1620
      %v2631 = vpop.f32.mrf.mxu0
      %v2632 = vadd.f32 0.0, %v2631
      %v2633 = vpop.f32.mrf.mxu0
      %v2634 = vpop.f32.mrf.mxu0
      %v2635 = vadd.f32 0.0, %v2634
      %v2636 = vpop.f32.mrf.mxu0
      %2637 = vmatprep.mubr.bf16.mxu0 0
      %2638 = vmatmul.mubr.bf16.gmra.mxu0 %v1623
      %v2639 = vpop.f32.mrf.mxu0
      %v2640 = vadd.f32 0.0, %v2639
      %v2641 = vpop.f32.mrf.mxu0
      %v2642 = vpop.f32.mrf.mxu0
      %v2643 = vadd.f32 0.0, %v2642
      %v2644 = vpop.f32.mrf.mxu0
      %2645 = vmatprep.mubr.bf16.mxu0 0
      %2646 = vmatmul.mubr.bf16.gmra.mxu0 %v1626
      %v2647 = vpop.f32.mrf.mxu0
      %v2648 = vadd.f32 0.0, %v2647
      %v2649 = vpop.f32.mrf.mxu0
      %v2650 = vpop.f32.mrf.mxu0
      %v2651 = vadd.f32 0.0, %v2650
      %v2652 = vpop.f32.mrf.mxu0
      %2653 = vmatprep.mubr.bf16.mxu0 0
      %2654 = vmatmul.mubr.bf16.gmra.mxu0 %v2434
      %v2655 = vpop.f32.mrf.mxu0
      %v2656 = vadd.f32 0.0, %v2655
      %v2657 = vpop.f32.mrf.mxu0
      %v2658 = vpop.f32.mrf.mxu0
      %v2659 = vadd.f32 0.0, %v2658
      %v2660 = vpop.f32.mrf.mxu0
      %2661 = vdwg.mxu0
      %v2662 = vadd.f32 %v2398, %v2536
      %v2663 = vadd.f32 %v2399, %v2539
      %v2664 = vadd.f32 %v2400, %v2544
      %v2665 = vadd.f32 %v2401, %v2547
      %v2666 = vadd.f32 %v2402, %v2552
      %v2667 = vadd.f32 %v2403, %v2555
      %v2668 = vadd.f32 %v2404, %v2560
      %v2669 = vadd.f32 %v2405, %v2563
      %v2670 = vadd.f32 %v2406, %v2568
      %v2671 = vadd.f32 %v2407, %v2571
      %v2672 = vadd.f32 %v2408, %v2576
      %v2673 = vadd.f32 %v2409, %v2579
      %v2674 = vadd.f32 %v2410, %v2584
      %v2675 = vadd.f32 %v2411, %v2587
      %v2676 = vadd.f32 %v2412, %v2592
      %v2677 = vadd.f32 %v2413, %v2595
      %v2678 = vadd.f32 %v2414, %v2600
      %v2679 = vadd.f32 %v2415, %v2603
      %v2680 = vadd.f32 %v2416, %v2608
      %v2681 = vadd.f32 %v2417, %v2611
      %v2682 = vadd.f32 %v2418, %v2616
      %v2683 = vadd.f32 %v2419, %v2619
      %v2684 = vadd.f32 %v2420, %v2624
      %v2685 = vadd.f32 %v2421, %v2627
      %v2686 = vadd.f32 %v2422, %v2632
      %v2687 = vadd.f32 %v2423, %v2635
      %v2688 = vadd.f32 %v2424, %v2640
      %v2689 = vadd.f32 %v2425, %v2643
      %v2690 = vadd.f32 %v2426, %v2648
      %v2691 = vadd.f32 %v2427, %v2651
      %v2692 = vadd.f32 %v2428, %v2656
      %v2693 = vadd.f32 %v2429, %v2659
      %s2694 = scalar_lea.vmem %s5, 384
      %v2695 = vld [vmem:[%s2694] sm:$0xf]
      %v2696 = vld [vmem:[%s2694 + $0x4] sm:$0xf]
      %v2697 = vld [vmem:[%s2694 + $0x8] sm:$0xf]
      %v2698 = vld [vmem:[%s2694 + $0xc] sm:$0xf]
      %v2699 = vld [vmem:[%s2694 + $0x10] sm:$0xf]
      %v2700 = vld [vmem:[%s2694 + $0x14] sm:$0xf]
      %v2701 = vld [vmem:[%s2694 + $0x18] sm:$0xf]
      %v2702 = vld [vmem:[%s2694 + $0x1c] sm:$0xf]
      %v2703 = vld [vmem:[%s2694 + $0x20] sm:$0xf]
      %v2704 = vld [vmem:[%s2694 + $0x24] sm:$0xf]
      %v2705 = vld [vmem:[%s2694 + $0x28] sm:$0xf]
      %v2706 = vld [vmem:[%s2694 + $0x2c] sm:$0xf]
      %v2707 = vld [vmem:[%s2694 + $0x30] sm:$0xf]
      %v2708 = vld [vmem:[%s2694 + $0x34] sm:$0xf]
      %v2709 = vld [vmem:[%s2694 + $0x38] sm:$0xf]
      %v2710 = vld [vmem:[%s2694 + $0x3c] sm:$0xf]
      %v2727 = vunpack.c.l.b16 %v2695
      %v2728 = vunpack.c.l.b16 %v2696
      %v2729 = vunpack.c.l.b16 %v2697
      %v2730 = vunpack.c.l.b16 %v2698
      %v2731 = vunpack.c.l.b16 %v2699
      %v2732 = vunpack.c.l.b16 %v2700
      %v2733 = vunpack.c.l.b16 %v2701
      %v2734 = vunpack.c.l.b16 %v2702
      %v2735 = vunpack.c.l.b16 %v2703
      %v2736 = vunpack.c.l.b16 %v2704
      %v2737 = vunpack.c.l.b16 %v2705
      %v2738 = vunpack.c.l.b16 %v2706
      %v2739 = vunpack.c.l.b16 %v2707
      %v2740 = vunpack.c.l.b16 %v2708
      %v2741 = vunpack.c.l.b16 %v2709
      %v2742 = vunpack.c.l.b16 %v2710
      %v2743 = vpack.c.b16 %v2728, %v2727
      %v2744 = vpack.c.b16 %v2730, %v2729
      %v2745 = vpack.c.b16 %v2732, %v2731
      %v2746 = vpack.c.b16 %v2734, %v2733
      %v2747 = vpack.c.b16 %v2736, %v2735
      %v2748 = vpack.c.b16 %v2738, %v2737
      %v2749 = vpack.c.b16 %v2740, %v2739
      %v2750 = vpack.c.b16 %v2742, %v2741
      %2759 = vmatprep.subr.bf16.mxu0 0
      %2760 = vmatpush1.bf16.msra.mxu0 %v2750
      %2761 = vmatprep.subr.bf16.mxu0 0
      %2762 = vmatpush1.bf16.msra.mxu0 %v2749
      %2763 = vmatprep.subr.bf16.mxu0 0
      %2764 = vmatpush1.bf16.msra.mxu0 %v2748
      %2765 = vmatprep.subr.bf16.mxu0 0
      %2766 = vmatpush1.bf16.msra.mxu0 %v2747
      %2767 = vmatprep.subr.bf16.mxu0 0
      %2768 = vmatpush1.bf16.msra.mxu0 %v2746
      %2769 = vmatprep.subr.bf16.mxu0 0
      %2770 = vmatpush1.bf16.msra.mxu0 %v2745
      %2771 = vmatprep.subr.bf16.mxu0 0
      %2772 = vmatpush1.bf16.msra.mxu0 %v2744
      %2773 = vmatprep.subr.bf16.mxu0 0
      %2774 = vmatpush1.bf16.msra.mxu0 %v2743
      %2775 = vmatprep.subr.bf16.mxu0 0
      %2776 = vmatpush2.bf16.msra.mxu0 0
      %2777 = vmatprep.subr.bf16.mxu0 0
      %2778 = vmatpush2.bf16.msra.mxu0 0
      %2779 = vmatprep.subr.bf16.mxu0 0
      %2780 = vmatpush2.bf16.msra.mxu0 0
      %2781 = vmatprep.subr.bf16.mxu0 0
      %2782 = vmatpush2.bf16.msra.mxu0 0
      %2783 = vmatprep.subr.bf16.mxu0 0
      %2784 = vmatpush2.bf16.msra.mxu0 0
      %2785 = vmatprep.subr.bf16.mxu0 0
      %2786 = vmatpush2.bf16.msra.mxu0 0
      %2787 = vmatprep.subr.bf16.mxu0 0
      %2788 = vmatpush2.bf16.msra.mxu0 0
      %2789 = vmatprep.subr.bf16.mxu0 0
      %2790 = vmatpush2.bf16.msra.mxu0 0
      %2791 = vmatprep.mubr.bf16.mxu0 0
      %2792 = vmatmul.mubr.bf16.gmra.mxu0 %v854
      %v2793 = vpop.f32.mrf.mxu0
      %v2794 = vadd.f32 0.0, %v2793
      %v2795 = vpop.f32.mrf.mxu0
      %v2796 = vpop.f32.mrf.mxu0
      %v2797 = vadd.f32 0.0, %v2796
      %v2798 = vpop.f32.mrf.mxu0
      %2799 = vmatprep.mubr.bf16.mxu0 0
      %2800 = vmatmul.mubr.bf16.gmra.mxu0 %v856
      %v2801 = vpop.f32.mrf.mxu0
      %v2802 = vadd.f32 0.0, %v2801
      %v2803 = vpop.f32.mrf.mxu0
      %v2804 = vpop.f32.mrf.mxu0
      %v2805 = vadd.f32 0.0, %v2804
      %v2806 = vpop.f32.mrf.mxu0
      %2807 = vmatprep.mubr.bf16.mxu0 0
      %2808 = vmatmul.mubr.bf16.gmra.mxu0 %v858
      %v2809 = vpop.f32.mrf.mxu0
      %v2810 = vadd.f32 0.0, %v2809
      %v2811 = vpop.f32.mrf.mxu0
      %v2812 = vpop.f32.mrf.mxu0
      %v2813 = vadd.f32 0.0, %v2812
      %v2814 = vpop.f32.mrf.mxu0
      %2815 = vmatprep.mubr.bf16.mxu0 0
      %2816 = vmatmul.mubr.bf16.gmra.mxu0 %v860
      %v2817 = vpop.f32.mrf.mxu0
      %v2818 = vadd.f32 0.0, %v2817
      %v2819 = vpop.f32.mrf.mxu0
      %v2820 = vpop.f32.mrf.mxu0
      %v2821 = vadd.f32 0.0, %v2820
      %v2822 = vpop.f32.mrf.mxu0
      %2823 = vmatprep.mubr.bf16.mxu0 0
      %2824 = vmatmul.mubr.bf16.gmra.mxu0 %v862
      %v2825 = vpop.f32.mrf.mxu0
      %v2826 = vadd.f32 0.0, %v2825
      %v2827 = vpop.f32.mrf.mxu0
      %v2828 = vpop.f32.mrf.mxu0
      %v2829 = vadd.f32 0.0, %v2828
      %v2830 = vpop.f32.mrf.mxu0
      %2831 = vmatprep.mubr.bf16.mxu0 0
      %2832 = vmatmul.mubr.bf16.gmra.mxu0 %v864
      %v2833 = vpop.f32.mrf.mxu0
      %v2834 = vadd.f32 0.0, %v2833
      %v2835 = vpop.f32.mrf.mxu0
      %v2836 = vpop.f32.mrf.mxu0
      %v2837 = vadd.f32 0.0, %v2836
      %v2838 = vpop.f32.mrf.mxu0
      %2839 = vmatprep.mubr.bf16.mxu0 0
      %2840 = vmatmul.mubr.bf16.gmra.mxu0 %v866
      %v2841 = vpop.f32.mrf.mxu0
      %v2842 = vadd.f32 0.0, %v2841
      %v2843 = vpop.f32.mrf.mxu0
      %v2844 = vpop.f32.mrf.mxu0
      %v2845 = vadd.f32 0.0, %v2844
      %v2846 = vpop.f32.mrf.mxu0
      %2847 = vmatprep.mubr.bf16.mxu0 0
      %2848 = vmatmul.mubr.bf16.gmra.mxu0 %v868
      %v2849 = vpop.f32.mrf.mxu0
      %v2850 = vadd.f32 0.0, %v2849
      %v2851 = vpop.f32.mrf.mxu0
      %v2852 = vpop.f32.mrf.mxu0
      %v2853 = vadd.f32 0.0, %v2852
      %v2854 = vpop.f32.mrf.mxu0
      %2855 = vmatprep.mubr.bf16.mxu0 0
      %2856 = vmatmul.mubr.bf16.gmra.mxu0 %v870
      %v2857 = vpop.f32.mrf.mxu0
      %v2858 = vadd.f32 0.0, %v2857
      %v2859 = vpop.f32.mrf.mxu0
      %v2860 = vpop.f32.mrf.mxu0
      %v2861 = vadd.f32 0.0, %v2860
      %v2862 = vpop.f32.mrf.mxu0
      %2863 = vmatprep.mubr.bf16.mxu0 0
      %2864 = vmatmul.mubr.bf16.gmra.mxu0 %v872
      %v2865 = vpop.f32.mrf.mxu0
      %v2866 = vadd.f32 0.0, %v2865
      %v2867 = vpop.f32.mrf.mxu0
      %v2868 = vpop.f32.mrf.mxu0
      %v2869 = vadd.f32 0.0, %v2868
      %v2870 = vpop.f32.mrf.mxu0
      %2871 = vmatprep.mubr.bf16.mxu0 0
      %2872 = vmatmul.mubr.bf16.gmra.mxu0 %v874
      %v2873 = vpop.f32.mrf.mxu0
      %v2874 = vadd.f32 0.0, %v2873
      %v2875 = vpop.f32.mrf.mxu0
      %v2876 = vpop.f32.mrf.mxu0
      %v2877 = vadd.f32 0.0, %v2876
      %v2878 = vpop.f32.mrf.mxu0
      %2879 = vmatprep.mubr.bf16.mxu0 0
      %2880 = vmatmul.mubr.bf16.gmra.mxu0 %v876
      %v2881 = vpop.f32.mrf.mxu0
      %v2882 = vadd.f32 0.0, %v2881
      %v2883 = vpop.f32.mrf.mxu0
      %v2884 = vpop.f32.mrf.mxu0
      %v2885 = vadd.f32 0.0, %v2884
      %v2886 = vpop.f32.mrf.mxu0
      %2887 = vmatprep.mubr.bf16.mxu0 0
      %2888 = vmatmul.mubr.bf16.gmra.mxu0 %v878
      %v2889 = vpop.f32.mrf.mxu0
      %v2890 = vadd.f32 0.0, %v2889
      %v2891 = vpop.f32.mrf.mxu0
      %v2892 = vpop.f32.mrf.mxu0
      %v2893 = vadd.f32 0.0, %v2892
      %v2894 = vpop.f32.mrf.mxu0
      %2895 = vmatprep.mubr.bf16.mxu0 0
      %2896 = vmatmul.mubr.bf16.gmra.mxu0 %v880
      %v2897 = vpop.f32.mrf.mxu0
      %v2898 = vadd.f32 0.0, %v2897
      %v2899 = vpop.f32.mrf.mxu0
      %v2900 = vpop.f32.mrf.mxu0
      %v2901 = vadd.f32 0.0, %v2900
      %v2902 = vpop.f32.mrf.mxu0
      %2903 = vmatprep.mubr.bf16.mxu0 0
      %2904 = vmatmul.mubr.bf16.gmra.mxu0 %v882
      %v2905 = vpop.f32.mrf.mxu0
      %v2906 = vadd.f32 0.0, %v2905
      %v2907 = vpop.f32.mrf.mxu0
      %v2908 = vpop.f32.mrf.mxu0
      %v2909 = vadd.f32 0.0, %v2908
      %v2910 = vpop.f32.mrf.mxu0
      %2911 = vmatprep.mubr.bf16.mxu0 0
      %2912 = vmatmul.mubr.bf16.gmra.mxu0 %v884
      %v2913 = vpop.f32.mrf.mxu0
      %v2914 = vadd.f32 0.0, %v2913
      %v2915 = vpop.f32.mrf.mxu0
      %v2916 = vpop.f32.mrf.mxu0
      %v2917 = vadd.f32 0.0, %v2916
      %v2918 = vpop.f32.mrf.mxu0
      %2919 = vdwg.mxu0
      %v2920 = vadd.f32 %v2662, %v2794
      %v2921 = vadd.f32 %v2663, %v2797
      %v2922 = vadd.f32 %v2664, %v2802
      %v2923 = vadd.f32 %v2665, %v2805
      %v2924 = vadd.f32 %v2666, %v2810
      %v2925 = vadd.f32 %v2667, %v2813
      %v2926 = vadd.f32 %v2668, %v2818
      %v2927 = vadd.f32 %v2669, %v2821
      %v2928 = vadd.f32 %v2670, %v2826
      %v2929 = vadd.f32 %v2671, %v2829
      %v2930 = vadd.f32 %v2672, %v2834
      %v2931 = vadd.f32 %v2673, %v2837
      %v2932 = vadd.f32 %v2674, %v2842
      %v2933 = vadd.f32 %v2675, %v2845
      %v2934 = vadd.f32 %v2676, %v2850
      %v2935 = vadd.f32 %v2677, %v2853
      %v2936 = vadd.f32 %v2678, %v2858
      %v2937 = vadd.f32 %v2679, %v2861
      %v2938 = vadd.f32 %v2680, %v2866
      %v2939 = vadd.f32 %v2681, %v2869
      %v2940 = vadd.f32 %v2682, %v2874
      %v2941 = vadd.f32 %v2683, %v2877
      %v2942 = vadd.f32 %v2684, %v2882
      %v2943 = vadd.f32 %v2685, %v2885
      %v2944 = vadd.f32 %v2686, %v2890
      %v2945 = vadd.f32 %v2687, %v2893
      %v2946 = vadd.f32 %v2688, %v2898
      %v2947 = vadd.f32 %v2689, %v2901
      %v2948 = vadd.f32 %v2690, %v2906
      %v2949 = vadd.f32 %v2691, %v2909
      %v2950 = vadd.f32 %v2692, %v2914
      %v2951 = vadd.f32 %v2693, %v2917
      %v2953 = vshrl.u32 %v884, 16
      %v2955 = vshll.u32 %v884, 16
      %v2957 = vrot.slane %v2955, 1
      %v2958 = vor.u32 %v2953, %v2957
      %v2960 = vshll.u32 %v885, 16
      %v2962 = vrot.slane %v2960, 1
      %v2963 = vsel %vm902, %v2958, %v2962
      %s2965 = scalar_lea.vmem %s5, 448
      %v2966 = vld [vmem:[%s2965] sm:$0xf]
      %v2967 = vld [vmem:[%s2965 + $0x4] sm:$0xf]
      %v2968 = vld [vmem:[%s2965 + $0x8] sm:$0xf]
      %v2969 = vld [vmem:[%s2965 + $0xc] sm:$0xf]
      %v2970 = vld [vmem:[%s2965 + $0x10] sm:$0xf]
      %v2971 = vld [vmem:[%s2965 + $0x14] sm:$0xf]
      %v2972 = vld [vmem:[%s2965 + $0x18] sm:$0xf]
      %v2973 = vld [vmem:[%s2965 + $0x1c] sm:$0xf]
      %v2974 = vld [vmem:[%s2965 + $0x20] sm:$0xf]
      %v2975 = vld [vmem:[%s2965 + $0x24] sm:$0xf]
      %v2976 = vld [vmem:[%s2965 + $0x28] sm:$0xf]
      %v2977 = vld [vmem:[%s2965 + $0x2c] sm:$0xf]
      %v2978 = vld [vmem:[%s2965 + $0x30] sm:$0xf]
      %v2979 = vld [vmem:[%s2965 + $0x34] sm:$0xf]
      %v2980 = vld [vmem:[%s2965 + $0x38] sm:$0xf]
      %v2981 = vld [vmem:[%s2965 + $0x3c] sm:$0xf]
      %v2998 = vunpack.c.l.b16 %v2966
      %v2999 = vunpack.c.l.b16 %v2967
      %v3000 = vunpack.c.l.b16 %v2968
      %v3001 = vunpack.c.l.b16 %v2969
      %v3002 = vunpack.c.l.b16 %v2970
      %v3003 = vunpack.c.l.b16 %v2971
      %v3004 = vunpack.c.l.b16 %v2972
      %v3005 = vunpack.c.l.b16 %v2973
      %v3006 = vunpack.c.l.b16 %v2974
      %v3007 = vunpack.c.l.b16 %v2975
      %v3008 = vunpack.c.l.b16 %v2976
      %v3009 = vunpack.c.l.b16 %v2977
      %v3010 = vunpack.c.l.b16 %v2978
      %v3011 = vunpack.c.l.b16 %v2979
      %v3012 = vunpack.c.l.b16 %v2980
      %v3013 = vunpack.c.l.b16 %v2981
      %v3014 = vpack.c.b16 %v2999, %v2998
      %v3015 = vpack.c.b16 %v3001, %v3000
      %v3016 = vpack.c.b16 %v3003, %v3002
      %v3017 = vpack.c.b16 %v3005, %v3004
      %v3018 = vpack.c.b16 %v3007, %v3006
      %v3019 = vpack.c.b16 %v3009, %v3008
      %v3020 = vpack.c.b16 %v3011, %v3010
      %v3021 = vpack.c.b16 %v3013, %v3012
      %3030 = vmatprep.subr.bf16.mxu0 0
      %3031 = vmatpush1.bf16.msra.mxu0 %v3021
      %3032 = vmatprep.subr.bf16.mxu0 0
      %3033 = vmatpush1.bf16.msra.mxu0 %v3020
      %3034 = vmatprep.subr.bf16.mxu0 0
      %3035 = vmatpush1.bf16.msra.mxu0 %v3019
      %3036 = vmatprep.subr.bf16.mxu0 0
      %3037 = vmatpush1.bf16.msra.mxu0 %v3018
      %3038 = vmatprep.subr.bf16.mxu0 0
      %3039 = vmatpush1.bf16.msra.mxu0 %v3017
      %3040 = vmatprep.subr.bf16.mxu0 0
      %3041 = vmatpush1.bf16.msra.mxu0 %v3016
      %3042 = vmatprep.subr.bf16.mxu0 0
      %3043 = vmatpush1.bf16.msra.mxu0 %v3015
      %3044 = vmatprep.subr.bf16.mxu0 0
      %3045 = vmatpush1.bf16.msra.mxu0 %v3014
      %3046 = vmatprep.subr.bf16.mxu0 0
      %3047 = vmatpush2.bf16.msra.mxu0 0
      %3048 = vmatprep.subr.bf16.mxu0 0
      %3049 = vmatpush2.bf16.msra.mxu0 0
      %3050 = vmatprep.subr.bf16.mxu0 0
      %3051 = vmatpush2.bf16.msra.mxu0 0
      %3052 = vmatprep.subr.bf16.mxu0 0
      %3053 = vmatpush2.bf16.msra.mxu0 0
      %3054 = vmatprep.subr.bf16.mxu0 0
      %3055 = vmatpush2.bf16.msra.mxu0 0
      %3056 = vmatprep.subr.bf16.mxu0 0
      %3057 = vmatpush2.bf16.msra.mxu0 0
      %3058 = vmatprep.subr.bf16.mxu0 0
      %3059 = vmatpush2.bf16.msra.mxu0 0
      %3060 = vmatprep.subr.bf16.mxu0 0
      %3061 = vmatpush2.bf16.msra.mxu0 0
      %3062 = vmatprep.mubr.bf16.mxu0 0
      %3063 = vmatmul.mubr.bf16.gmra.mxu0 %v938
      %v3064 = vpop.f32.mrf.mxu0
      %v3065 = vadd.f32 0.0, %v3064
      %v3066 = vpop.f32.mrf.mxu0
      %v3067 = vpop.f32.mrf.mxu0
      %v3068 = vadd.f32 0.0, %v3067
      %v3069 = vpop.f32.mrf.mxu0
      %3070 = vmatprep.mubr.bf16.mxu0 0
      %3071 = vmatmul.mubr.bf16.gmra.mxu0 %v950
      %v3072 = vpop.f32.mrf.mxu0
      %v3073 = vadd.f32 0.0, %v3072
      %v3074 = vpop.f32.mrf.mxu0
      %v3075 = vpop.f32.mrf.mxu0
      %v3076 = vadd.f32 0.0, %v3075
      %v3077 = vpop.f32.mrf.mxu0
      %3078 = vmatprep.mubr.bf16.mxu0 0
      %3079 = vmatmul.mubr.bf16.gmra.mxu0 %v962
      %v3080 = vpop.f32.mrf.mxu0
      %v3081 = vadd.f32 0.0, %v3080
      %v3082 = vpop.f32.mrf.mxu0
      %v3083 = vpop.f32.mrf.mxu0
      %v3084 = vadd.f32 0.0, %v3083
      %v3085 = vpop.f32.mrf.mxu0
      %3086 = vmatprep.mubr.bf16.mxu0 0
      %3087 = vmatmul.mubr.bf16.gmra.mxu0 %v974
      %v3088 = vpop.f32.mrf.mxu0
      %v3089 = vadd.f32 0.0, %v3088
      %v3090 = vpop.f32.mrf.mxu0
      %v3091 = vpop.f32.mrf.mxu0
      %v3092 = vadd.f32 0.0, %v3091
      %v3093 = vpop.f32.mrf.mxu0
      %3094 = vmatprep.mubr.bf16.mxu0 0
      %3095 = vmatmul.mubr.bf16.gmra.mxu0 %v986
      %v3096 = vpop.f32.mrf.mxu0
      %v3097 = vadd.f32 0.0, %v3096
      %v3098 = vpop.f32.mrf.mxu0
      %v3099 = vpop.f32.mrf.mxu0
      %v3100 = vadd.f32 0.0, %v3099
      %v3101 = vpop.f32.mrf.mxu0
      %3102 = vmatprep.mubr.bf16.mxu0 0
      %3103 = vmatmul.mubr.bf16.gmra.mxu0 %v998
      %v3104 = vpop.f32.mrf.mxu0
      %v3105 = vadd.f32 0.0, %v3104
      %v3106 = vpop.f32.mrf.mxu0
      %v3107 = vpop.f32.mrf.mxu0
      %v3108 = vadd.f32 0.0, %v3107
      %v3109 = vpop.f32.mrf.mxu0
      %3110 = vmatprep.mubr.bf16.mxu0 0
      %3111 = vmatmul.mubr.bf16.gmra.mxu0 %v1010
      %v3112 = vpop.f32.mrf.mxu0
      %v3113 = vadd.f32 0.0, %v3112
      %v3114 = vpop.f32.mrf.mxu0
      %v3115 = vpop.f32.mrf.mxu0
      %v3116 = vadd.f32 0.0, %v3115
      %v3117 = vpop.f32.mrf.mxu0
      %3118 = vmatprep.mubr.bf16.mxu0 0
      %3119 = vmatmul.mubr.bf16.gmra.mxu0 %v1022
      %v3120 = vpop.f32.mrf.mxu0
      %v3121 = vadd.f32 0.0, %v3120
      %v3122 = vpop.f32.mrf.mxu0
      %v3123 = vpop.f32.mrf.mxu0
      %v3124 = vadd.f32 0.0, %v3123
      %v3125 = vpop.f32.mrf.mxu0
      %3126 = vmatprep.mubr.bf16.mxu0 0
      %3127 = vmatmul.mubr.bf16.gmra.mxu0 %v1034
      %v3128 = vpop.f32.mrf.mxu0
      %v3129 = vadd.f32 0.0, %v3128
      %v3130 = vpop.f32.mrf.mxu0
      %v3131 = vpop.f32.mrf.mxu0
      %v3132 = vadd.f32 0.0, %v3131
      %v3133 = vpop.f32.mrf.mxu0
      %3134 = vmatprep.mubr.bf16.mxu0 0
      %3135 = vmatmul.mubr.bf16.gmra.mxu0 %v1046
      %v3136 = vpop.f32.mrf.mxu0
      %v3137 = vadd.f32 0.0, %v3136
      %v3138 = vpop.f32.mrf.mxu0
      %v3139 = vpop.f32.mrf.mxu0
      %v3140 = vadd.f32 0.0, %v3139
      %v3141 = vpop.f32.mrf.mxu0
      %3142 = vmatprep.mubr.bf16.mxu0 0
      %3143 = vmatmul.mubr.bf16.gmra.mxu0 %v1058
      %v3144 = vpop.f32.mrf.mxu0
      %v3145 = vadd.f32 0.0, %v3144
      %v3146 = vpop.f32.mrf.mxu0
      %v3147 = vpop.f32.mrf.mxu0
      %v3148 = vadd.f32 0.0, %v3147
      %v3149 = vpop.f32.mrf.mxu0
      %3150 = vmatprep.mubr.bf16.mxu0 0
      %3151 = vmatmul.mubr.bf16.gmra.mxu0 %v1070
      %v3152 = vpop.f32.mrf.mxu0
      %v3153 = vadd.f32 0.0, %v3152
      %v3154 = vpop.f32.mrf.mxu0
      %v3155 = vpop.f32.mrf.mxu0
      %v3156 = vadd.f32 0.0, %v3155
      %v3157 = vpop.f32.mrf.mxu0
      %3158 = vmatprep.mubr.bf16.mxu0 0
      %3159 = vmatmul.mubr.bf16.gmra.mxu0 %v1082
      %v3160 = vpop.f32.mrf.mxu0
      %v3161 = vadd.f32 0.0, %v3160
      %v3162 = vpop.f32.mrf.mxu0
      %v3163 = vpop.f32.mrf.mxu0
      %v3164 = vadd.f32 0.0, %v3163
      %v3165 = vpop.f32.mrf.mxu0
      %3166 = vmatprep.mubr.bf16.mxu0 0
      %3167 = vmatmul.mubr.bf16.gmra.mxu0 %v1094
      %v3168 = vpop.f32.mrf.mxu0
      %v3169 = vadd.f32 0.0, %v3168
      %v3170 = vpop.f32.mrf.mxu0
      %v3171 = vpop.f32.mrf.mxu0
      %v3172 = vadd.f32 0.0, %v3171
      %v3173 = vpop.f32.mrf.mxu0
      %3174 = vmatprep.mubr.bf16.mxu0 0
      %3175 = vmatmul.mubr.bf16.gmra.mxu0 %v2170
      %v3176 = vpop.f32.mrf.mxu0
      %v3177 = vadd.f32 0.0, %v3176
      %v3178 = vpop.f32.mrf.mxu0
      %v3179 = vpop.f32.mrf.mxu0
      %v3180 = vadd.f32 0.0, %v3179
      %v3181 = vpop.f32.mrf.mxu0
      %3182 = vmatprep.mubr.bf16.mxu0 0
      %3183 = vmatmul.mubr.bf16.gmra.mxu0 %v2963
      %v3184 = vpop.f32.mrf.mxu0
      %v3185 = vadd.f32 0.0, %v3184
      %v3186 = vpop.f32.mrf.mxu0
      %v3187 = vpop.f32.mrf.mxu0
      %v3188 = vadd.f32 0.0, %v3187
      %v3189 = vpop.f32.mrf.mxu0
      %3190 = vdwg.mxu0
      %v3191 = vadd.f32 %v2920, %v3065
      %v3192 = vadd.f32 %v2921, %v3068
      %v3193 = vadd.f32 %v2922, %v3073
      %v3194 = vadd.f32 %v2923, %v3076
      %v3195 = vadd.f32 %v2924, %v3081
      %v3196 = vadd.f32 %v2925, %v3084
      %v3197 = vadd.f32 %v2926, %v3089
      %v3198 = vadd.f32 %v2927, %v3092
      %v3199 = vadd.f32 %v2928, %v3097
      %v3200 = vadd.f32 %v2929, %v3100
      %v3201 = vadd.f32 %v2930, %v3105
      %v3202 = vadd.f32 %v2931, %v3108
      %v3203 = vadd.f32 %v2932, %v3113
      %v3204 = vadd.f32 %v2933, %v3116
      %v3205 = vadd.f32 %v2934, %v3121
      %v3206 = vadd.f32 %v2935, %v3124
      %v3207 = vadd.f32 %v2936, %v3129
      %v3208 = vadd.f32 %v2937, %v3132
      %v3209 = vadd.f32 %v2938, %v3137
      %v3210 = vadd.f32 %v2939, %v3140
      %v3211 = vadd.f32 %v2940, %v3145
      %v3212 = vadd.f32 %v2941, %v3148
      %v3213 = vadd.f32 %v2942, %v3153
      %v3214 = vadd.f32 %v2943, %v3156
      %v3215 = vadd.f32 %v2944, %v3161
      %v3216 = vadd.f32 %v2945, %v3164
      %v3217 = vadd.f32 %v2946, %v3169
      %v3218 = vadd.f32 %v2947, %v3172
      %v3219 = vadd.f32 %v2948, %v3177
      %v3220 = vadd.f32 %v2949, %v3180
      %v3221 = vadd.f32 %v2950, %v3185
      %v3222 = vadd.f32 %v2951, %v3188
      %v3225 = vrot.slane %v884, 1
      %v3226 = vrot.slane %v885, 1
      %v3227 = vsel %vm1578, %v3225, %v3226
      %s3229 = scalar_lea.vmem %s5, 512
      %v3230 = vld [vmem:[%s3229] sm:$0xf]
      %v3231 = vld [vmem:[%s3229 + $0x4] sm:$0xf]
      %v3232 = vld [vmem:[%s3229 + $0x8] sm:$0xf]
      %v3233 = vld [vmem:[%s3229 + $0xc] sm:$0xf]
      %v3234 = vld [vmem:[%s3229 + $0x10] sm:$0xf]
      %v3235 = vld [vmem:[%s3229 + $0x14] sm:$0xf]
      %v3236 = vld [vmem:[%s3229 + $0x18] sm:$0xf]
      %v3237 = vld [vmem:[%s3229 + $0x1c] sm:$0xf]
      %v3238 = vld [vmem:[%s3229 + $0x20] sm:$0xf]
      %v3239 = vld [vmem:[%s3229 + $0x24] sm:$0xf]
      %v3240 = vld [vmem:[%s3229 + $0x28] sm:$0xf]
      %v3241 = vld [vmem:[%s3229 + $0x2c] sm:$0xf]
      %v3242 = vld [vmem:[%s3229 + $0x30] sm:$0xf]
      %v3243 = vld [vmem:[%s3229 + $0x34] sm:$0xf]
      %v3244 = vld [vmem:[%s3229 + $0x38] sm:$0xf]
      %v3245 = vld [vmem:[%s3229 + $0x3c] sm:$0xf]
      %v3262 = vunpack.c.l.b16 %v3230
      %v3263 = vunpack.c.l.b16 %v3231
      %v3264 = vunpack.c.l.b16 %v3232
      %v3265 = vunpack.c.l.b16 %v3233
      %v3266 = vunpack.c.l.b16 %v3234
      %v3267 = vunpack.c.l.b16 %v3235
      %v3268 = vunpack.c.l.b16 %v3236
      %v3269 = vunpack.c.l.b16 %v3237
      %v3270 = vunpack.c.l.b16 %v3238
      %v3271 = vunpack.c.l.b16 %v3239
      %v3272 = vunpack.c.l.b16 %v3240
      %v3273 = vunpack.c.l.b16 %v3241
      %v3274 = vunpack.c.l.b16 %v3242
      %v3275 = vunpack.c.l.b16 %v3243
      %v3276 = vunpack.c.l.b16 %v3244
      %v3277 = vunpack.c.l.b16 %v3245
      %v3278 = vpack.c.b16 %v3263, %v3262
      %v3279 = vpack.c.b16 %v3265, %v3264
      %v3280 = vpack.c.b16 %v3267, %v3266
      %v3281 = vpack.c.b16 %v3269, %v3268
      %v3282 = vpack.c.b16 %v3271, %v3270
      %v3283 = vpack.c.b16 %v3273, %v3272
      %v3284 = vpack.c.b16 %v3275, %v3274
      %v3285 = vpack.c.b16 %v3277, %v3276
      %3294 = vmatprep.subr.bf16.mxu0 0
      %3295 = vmatpush1.bf16.msra.mxu0 %v3285
      %3296 = vmatprep.subr.bf16.mxu0 0
      %3297 = vmatpush1.bf16.msra.mxu0 %v3284
      %3298 = vmatprep.subr.bf16.mxu0 0
      %3299 = vmatpush1.bf16.msra.mxu0 %v3283
      %3300 = vmatprep.subr.bf16.mxu0 0
      %3301 = vmatpush1.bf16.msra.mxu0 %v3282
      %3302 = vmatprep.subr.bf16.mxu0 0
      %3303 = vmatpush1.bf16.msra.mxu0 %v3281
      %3304 = vmatprep.subr.bf16.mxu0 0
      %3305 = vmatpush1.bf16.msra.mxu0 %v3280
      %3306 = vmatprep.subr.bf16.mxu0 0
      %3307 = vmatpush1.bf16.msra.mxu0 %v3279
      %3308 = vmatprep.subr.bf16.mxu0 0
      %3309 = vmatpush1.bf16.msra.mxu0 %v3278
      %3310 = vmatprep.subr.bf16.mxu0 0
      %3311 = vmatpush2.bf16.msra.mxu0 0
      %3312 = vmatprep.subr.bf16.mxu0 0
      %3313 = vmatpush2.bf16.msra.mxu0 0
      %3314 = vmatprep.subr.bf16.mxu0 0
      %3315 = vmatpush2.bf16.msra.mxu0 0
      %3316 = vmatprep.subr.bf16.mxu0 0
      %3317 = vmatpush2.bf16.msra.mxu0 0
      %3318 = vmatprep.subr.bf16.mxu0 0
      %3319 = vmatpush2.bf16.msra.mxu0 0
      %3320 = vmatprep.subr.bf16.mxu0 0
      %3321 = vmatpush2.bf16.msra.mxu0 0
      %3322 = vmatprep.subr.bf16.mxu0 0
      %3323 = vmatpush2.bf16.msra.mxu0 0
      %3324 = vmatprep.subr.bf16.mxu0 0
      %3325 = vmatpush2.bf16.msra.mxu0 0
      %3326 = vmatprep.mubr.bf16.mxu0 0
      %3327 = vmatmul.mubr.bf16.gmra.mxu0 %v1587
      %v3328 = vpop.f32.mrf.mxu0
      %v3329 = vadd.f32 0.0, %v3328
      %v3330 = vpop.f32.mrf.mxu0
      %v3331 = vpop.f32.mrf.mxu0
      %v3332 = vadd.f32 0.0, %v3331
      %v3333 = vpop.f32.mrf.mxu0
      %3334 = vmatprep.mubr.bf16.mxu0 0
      %3335 = vmatmul.mubr.bf16.gmra.mxu0 %v1590
      %v3336 = vpop.f32.mrf.mxu0
      %v3337 = vadd.f32 0.0, %v3336
      %v3338 = vpop.f32.mrf.mxu0
      %v3339 = vpop.f32.mrf.mxu0
      %v3340 = vadd.f32 0.0, %v3339
      %v3341 = vpop.f32.mrf.mxu0
      %3342 = vmatprep.mubr.bf16.mxu0 0
      %3343 = vmatmul.mubr.bf16.gmra.mxu0 %v1593
      %v3344 = vpop.f32.mrf.mxu0
      %v3345 = vadd.f32 0.0, %v3344
      %v3346 = vpop.f32.mrf.mxu0
      %v3347 = vpop.f32.mrf.mxu0
      %v3348 = vadd.f32 0.0, %v3347
      %v3349 = vpop.f32.mrf.mxu0
      %3350 = vmatprep.mubr.bf16.mxu0 0
      %3351 = vmatmul.mubr.bf16.gmra.mxu0 %v1596
      %v3352 = vpop.f32.mrf.mxu0
      %v3353 = vadd.f32 0.0, %v3352
      %v3354 = vpop.f32.mrf.mxu0
      %v3355 = vpop.f32.mrf.mxu0
      %v3356 = vadd.f32 0.0, %v3355
      %v3357 = vpop.f32.mrf.mxu0
      %3358 = vmatprep.mubr.bf16.mxu0 0
      %3359 = vmatmul.mubr.bf16.gmra.mxu0 %v1599
      %v3360 = vpop.f32.mrf.mxu0
      %v3361 = vadd.f32 0.0, %v3360
      %v3362 = vpop.f32.mrf.mxu0
      %v3363 = vpop.f32.mrf.mxu0
      %v3364 = vadd.f32 0.0, %v3363
      %v3365 = vpop.f32.mrf.mxu0
      %3366 = vmatprep.mubr.bf16.mxu0 0
      %3367 = vmatmul.mubr.bf16.gmra.mxu0 %v1602
      %v3368 = vpop.f32.mrf.mxu0
      %v3369 = vadd.f32 0.0, %v3368
      %v3370 = vpop.f32.mrf.mxu0
      %v3371 = vpop.f32.mrf.mxu0
      %v3372 = vadd.f32 0.0, %v3371
      %v3373 = vpop.f32.mrf.mxu0
      %3374 = vmatprep.mubr.bf16.mxu0 0
      %3375 = vmatmul.mubr.bf16.gmra.mxu0 %v1605
      %v3376 = vpop.f32.mrf.mxu0
      %v3377 = vadd.f32 0.0, %v3376
      %v3378 = vpop.f32.mrf.mxu0
      %v3379 = vpop.f32.mrf.mxu0
      %v3380 = vadd.f32 0.0, %v3379
      %v3381 = vpop.f32.mrf.mxu0
      %3382 = vmatprep.mubr.bf16.mxu0 0
      %3383 = vmatmul.mubr.bf16.gmra.mxu0 %v1608
      %v3384 = vpop.f32.mrf.mxu0
      %v3385 = vadd.f32 0.0, %v3384
      %v3386 = vpop.f32.mrf.mxu0
      %v3387 = vpop.f32.mrf.mxu0
      %v3388 = vadd.f32 0.0, %v3387
      %v3389 = vpop.f32.mrf.mxu0
      %3390 = vmatprep.mubr.bf16.mxu0 0
      %3391 = vmatmul.mubr.bf16.gmra.mxu0 %v1611
      %v3392 = vpop.f32.mrf.mxu0
      %v3393 = vadd.f32 0.0, %v3392
      %v3394 = vpop.f32.mrf.mxu0
      %v3395 = vpop.f32.mrf.mxu0
      %v3396 = vadd.f32 0.0, %v3395
      %v3397 = vpop.f32.mrf.mxu0
      %3398 = vmatprep.mubr.bf16.mxu0 0
      %3399 = vmatmul.mubr.bf16.gmra.mxu0 %v1614
      %v3400 = vpop.f32.mrf.mxu0
      %v3401 = vadd.f32 0.0, %v3400
      %v3402 = vpop.f32.mrf.mxu0
      %v3403 = vpop.f32.mrf.mxu0
      %v3404 = vadd.f32 0.0, %v3403
      %v3405 = vpop.f32.mrf.mxu0
      %3406 = vmatprep.mubr.bf16.mxu0 0
      %3407 = vmatmul.mubr.bf16.gmra.mxu0 %v1617
      %v3408 = vpop.f32.mrf.mxu0
      %v3409 = vadd.f32 0.0, %v3408
      %v3410 = vpop.f32.mrf.mxu0
      %v3411 = vpop.f32.mrf.mxu0
      %v3412 = vadd.f32 0.0, %v3411
      %v3413 = vpop.f32.mrf.mxu0
      %3414 = vmatprep.mubr.bf16.mxu0 0
      %3415 = vmatmul.mubr.bf16.gmra.mxu0 %v1620
      %v3416 = vpop.f32.mrf.mxu0
      %v3417 = vadd.f32 0.0, %v3416
      %v3418 = vpop.f32.mrf.mxu0
      %v3419 = vpop.f32.mrf.mxu0
      %v3420 = vadd.f32 0.0, %v3419
      %v3421 = vpop.f32.mrf.mxu0
      %3422 = vmatprep.mubr.bf16.mxu0 0
      %3423 = vmatmul.mubr.bf16.gmra.mxu0 %v1623
      %v3424 = vpop.f32.mrf.mxu0
      %v3425 = vadd.f32 0.0, %v3424
      %v3426 = vpop.f32.mrf.mxu0
      %v3427 = vpop.f32.mrf.mxu0
      %v3428 = vadd.f32 0.0, %v3427
      %v3429 = vpop.f32.mrf.mxu0
      %3430 = vmatprep.mubr.bf16.mxu0 0
      %3431 = vmatmul.mubr.bf16.gmra.mxu0 %v1626
      %v3432 = vpop.f32.mrf.mxu0
      %v3433 = vadd.f32 0.0, %v3432
      %v3434 = vpop.f32.mrf.mxu0
      %v3435 = vpop.f32.mrf.mxu0
      %v3436 = vadd.f32 0.0, %v3435
      %v3437 = vpop.f32.mrf.mxu0
      %3438 = vmatprep.mubr.bf16.mxu0 0
      %3439 = vmatmul.mubr.bf16.gmra.mxu0 %v2434
      %v3440 = vpop.f32.mrf.mxu0
      %v3441 = vadd.f32 0.0, %v3440
      %v3442 = vpop.f32.mrf.mxu0
      %v3443 = vpop.f32.mrf.mxu0
      %v3444 = vadd.f32 0.0, %v3443
      %v3445 = vpop.f32.mrf.mxu0
      %3446 = vmatprep.mubr.bf16.mxu0 0
      %3447 = vmatmul.mubr.bf16.gmra.mxu0 %v3227
      %v3448 = vpop.f32.mrf.mxu0
      %v3449 = vadd.f32 0.0, %v3448
      %v3450 = vpop.f32.mrf.mxu0
      %v3451 = vpop.f32.mrf.mxu0
      %v3452 = vadd.f32 0.0, %v3451
      %v3453 = vpop.f32.mrf.mxu0
      %3454 = vdwg.mxu0
      %v3455 = vadd.f32 %v3191, %v3329
      %v3456 = vadd.f32 %v3192, %v3332
      %v3457 = vadd.f32 %v3193, %v3337
      %v3458 = vadd.f32 %v3194, %v3340
      %v3459 = vadd.f32 %v3195, %v3345
      %v3460 = vadd.f32 %v3196, %v3348
      %v3461 = vadd.f32 %v3197, %v3353
      %v3462 = vadd.f32 %v3198, %v3356
      %v3463 = vadd.f32 %v3199, %v3361
      %v3464 = vadd.f32 %v3200, %v3364
      %v3465 = vadd.f32 %v3201, %v3369
      %v3466 = vadd.f32 %v3202, %v3372
      %v3467 = vadd.f32 %v3203, %v3377
      %v3468 = vadd.f32 %v3204, %v3380
      %v3469 = vadd.f32 %v3205, %v3385
      %v3470 = vadd.f32 %v3206, %v3388
      %v3471 = vadd.f32 %v3207, %v3393
      %v3472 = vadd.f32 %v3208, %v3396
      %v3473 = vadd.f32 %v3209, %v3401
      %v3474 = vadd.f32 %v3210, %v3404
      %v3475 = vadd.f32 %v3211, %v3409
      %v3476 = vadd.f32 %v3212, %v3412
      %v3477 = vadd.f32 %v3213, %v3417
      %v3478 = vadd.f32 %v3214, %v3420
      %v3479 = vadd.f32 %v3215, %v3425
      %v3480 = vadd.f32 %v3216, %v3428
      %v3481 = vadd.f32 %v3217, %v3433
      %v3482 = vadd.f32 %v3218, %v3436
      %v3483 = vadd.f32 %v3219, %v3441
      %v3484 = vadd.f32 %v3220, %v3444
      %v3485 = vadd.f32 %v3221, %v3449
      %v3486 = vadd.f32 %v3222, %v3452
      %v3487 = vadd.f32 %v3455, %v3456
      %v3488 = vadd.f32 %v3487, %v3457
      %v3489 = vadd.f32 %v3488, %v3458
      %v3490 = vadd.f32 %v3489, %v3459
      %v3491 = vadd.f32 %v3490, %v3460
      %v3492 = vadd.f32 %v3491, %v3461
      %v3493 = vadd.f32 %v3492, %v3462
      %v3494 = vadd.f32 %v3493, %v3463
      %v3495 = vadd.f32 %v3494, %v3464
      %v3496 = vadd.f32 %v3495, %v3465
      %v3497 = vadd.f32 %v3496, %v3466
      %v3498 = vadd.f32 %v3497, %v3467
      %v3499 = vadd.f32 %v3498, %v3468
      %v3500 = vadd.f32 %v3499, %v3469
      %v3501 = vadd.f32 %v3500, %v3470
      %v3502 = vadd.f32 %v3501, %v3471
      %v3503 = vadd.f32 %v3502, %v3472
      %v3504 = vadd.f32 %v3503, %v3473
      %v3505 = vadd.f32 %v3504, %v3474
      %v3506 = vadd.f32 %v3505, %v3475
      %v3507 = vadd.f32 %v3506, %v3476
      %v3508 = vadd.f32 %v3507, %v3477
      %v3509 = vadd.f32 %v3508, %v3478
      %v3510 = vadd.f32 %v3509, %v3479
      %v3511 = vadd.f32 %v3510, %v3480
      %v3512 = vadd.f32 %v3511, %v3481
      %v3513 = vadd.f32 %v3512, %v3482
      %v3514 = vadd.f32 %v3513, %v3483
      %v3515 = vadd.f32 %v3514, %v3484
      %v3516 = vadd.f32 %v3515, %v3485
      %v3517 = vadd.f32 %v3516, %v3486
      %v3518 = vrot.slane %v3517, 4
      %v3519 = vadd.f32 %v3517, %v3518
      %v3520 = vrot.slane %v3519, 2
      %v3521 = vadd.f32 %v3519, %v3520
      %v3522 = vrot.slane %v3521, 1
      %v3523 = vadd.f32 %v3521, %v3522
      %v3524 = vmul.f32 %v3455, %v3455
      %v3525 = vmul.f32 %v3456, %v3456
      %v3526 = vmul.f32 %v3457, %v3457
      %v3527 = vmul.f32 %v3458, %v3458
      %v3528 = vmul.f32 %v3459, %v3459
      %v3529 = vmul.f32 %v3460, %v3460
      %v3530 = vmul.f32 %v3461, %v3461
      %v3531 = vmul.f32 %v3462, %v3462
      %v3532 = vmul.f32 %v3463, %v3463
      %v3533 = vmul.f32 %v3464, %v3464
      %v3534 = vmul.f32 %v3465, %v3465
      %v3535 = vmul.f32 %v3466, %v3466
      %v3536 = vmul.f32 %v3467, %v3467
      %v3537 = vmul.f32 %v3468, %v3468
      %v3538 = vmul.f32 %v3469, %v3469
      %v3539 = vmul.f32 %v3470, %v3470
      %v3540 = vmul.f32 %v3471, %v3471
      %v3541 = vmul.f32 %v3472, %v3472
      %v3542 = vmul.f32 %v3473, %v3473
      %v3543 = vmul.f32 %v3474, %v3474
      %v3544 = vmul.f32 %v3475, %v3475
      %v3545 = vmul.f32 %v3476, %v3476
      %v3546 = vmul.f32 %v3477, %v3477
      %v3547 = vmul.f32 %v3478, %v3478
      %v3548 = vmul.f32 %v3479, %v3479
      %v3549 = vmul.f32 %v3480, %v3480
      %v3550 = vmul.f32 %v3481, %v3481
      %v3551 = vmul.f32 %v3482, %v3482
      %v3552 = vmul.f32 %v3483, %v3483
      %v3553 = vmul.f32 %v3484, %v3484
      %v3554 = vmul.f32 %v3485, %v3485
      %v3555 = vmul.f32 %v3486, %v3486
      %v3556 = vadd.f32 %v3524, %v3525
      %v3557 = vadd.f32 %v3556, %v3526
      %v3558 = vadd.f32 %v3557, %v3527
      %v3559 = vadd.f32 %v3558, %v3528
      %v3560 = vadd.f32 %v3559, %v3529
      %v3561 = vadd.f32 %v3560, %v3530
      %v3562 = vadd.f32 %v3561, %v3531
      %v3563 = vadd.f32 %v3562, %v3532
      %v3564 = vadd.f32 %v3563, %v3533
      %v3565 = vadd.f32 %v3564, %v3534
      %v3566 = vadd.f32 %v3565, %v3535
      %v3567 = vadd.f32 %v3566, %v3536
      %v3568 = vadd.f32 %v3567, %v3537
      %v3569 = vadd.f32 %v3568, %v3538
      %v3570 = vadd.f32 %v3569, %v3539
      %v3571 = vadd.f32 %v3570, %v3540
      %v3572 = vadd.f32 %v3571, %v3541
      %v3573 = vadd.f32 %v3572, %v3542
      %v3574 = vadd.f32 %v3573, %v3543
      %v3575 = vadd.f32 %v3574, %v3544
      %v3576 = vadd.f32 %v3575, %v3545
      %v3577 = vadd.f32 %v3576, %v3546
      %v3578 = vadd.f32 %v3577, %v3547
      %v3579 = vadd.f32 %v3578, %v3548
      %v3580 = vadd.f32 %v3579, %v3549
      %v3581 = vadd.f32 %v3580, %v3550
      %v3582 = vadd.f32 %v3581, %v3551
      %v3583 = vadd.f32 %v3582, %v3552
      %v3584 = vadd.f32 %v3583, %v3553
      %v3585 = vadd.f32 %v3584, %v3554
      %v3586 = vadd.f32 %v3585, %v3555
      %v3587 = vrot.slane %v3586, 4
      %v3588 = vadd.f32 %v3586, %v3587
      %v3589 = vrot.slane %v3588, 2
      %v3590 = vadd.f32 %v3588, %v3589
      %v3591 = vrot.slane %v3590, 1
      %v3592 = vadd.f32 %v3590, %v3591
      %v3593 = vsel %vm705, %v3523, %v3592
      %3594 = vst [vmem:[%s465] sm:$0x3] %v3593
      %v3595 = vpack.c.bf16 %v3456, %v3455
      %v3596 = vpack.c.bf16 %v3458, %v3457
      %v3597 = vpack.c.bf16 %v3460, %v3459
      %v3598 = vpack.c.bf16 %v3462, %v3461
      %v3599 = vpack.c.bf16 %v3464, %v3463
      %v3600 = vpack.c.bf16 %v3466, %v3465
      %v3601 = vpack.c.bf16 %v3468, %v3467
      %v3602 = vpack.c.bf16 %v3470, %v3469
      %v3603 = vpack.c.bf16 %v3472, %v3471
      %v3604 = vpack.c.bf16 %v3474, %v3473
      %v3605 = vpack.c.bf16 %v3476, %v3475
      %v3606 = vpack.c.bf16 %v3478, %v3477
      %v3607 = vpack.c.bf16 %v3480, %v3479
      %v3608 = vpack.c.bf16 %v3482, %v3481
      %v3609 = vpack.c.bf16 %v3484, %v3483
      %v3610 = vpack.c.bf16 %v3486, %v3485
      %v3627 = vunpack.c.l.b16 %v3595
      %v3628 = vunpack.c.h.b16 %v3595
      %v3629 = vunpack.c.l.b16 %v3596
      %v3630 = vunpack.c.h.b16 %v3596
      %v3631 = vunpack.c.l.b16 %v3597
      %v3632 = vunpack.c.h.b16 %v3597
      %v3633 = vunpack.c.l.b16 %v3598
      %v3634 = vunpack.c.h.b16 %v3598
      %v3635 = vunpack.c.l.b16 %v3599
      %v3636 = vunpack.c.h.b16 %v3599
      %v3637 = vunpack.c.l.b16 %v3600
      %v3638 = vunpack.c.h.b16 %v3600
      %v3639 = vunpack.c.l.b16 %v3601
      %v3640 = vunpack.c.h.b16 %v3601
      %v3641 = vunpack.c.l.b16 %v3602
      %v3642 = vunpack.c.h.b16 %v3602
      %v3643 = vunpack.c.l.b16 %v3603
      %v3644 = vunpack.c.h.b16 %v3603
      %v3645 = vunpack.c.l.b16 %v3604
      %v3646 = vunpack.c.h.b16 %v3604
      %v3647 = vunpack.c.l.b16 %v3605
      %v3648 = vunpack.c.h.b16 %v3605
      %v3649 = vunpack.c.l.b16 %v3606
      %v3650 = vunpack.c.h.b16 %v3606
      %v3651 = vunpack.c.l.b16 %v3607
      %v3652 = vunpack.c.h.b16 %v3607
      %v3653 = vunpack.c.l.b16 %v3608
      %v3654 = vunpack.c.h.b16 %v3608
      %v3655 = vunpack.c.l.b16 %v3609
      %v3656 = vunpack.c.h.b16 %v3609
      %v3657 = vunpack.c.l.b16 %v3610
      %v3658 = vunpack.c.h.b16 %v3610
      %v3659 = vpack.c.b16 %v3627, %v3627
      %v3660 = vpack.c.b16 %v3628, %v3628
      %v3661 = vpack.c.b16 %v3629, %v3629
      %v3662 = vpack.c.b16 %v3630, %v3630
      %v3663 = vpack.c.b16 %v3631, %v3631
      %v3664 = vpack.c.b16 %v3632, %v3632
      %v3665 = vpack.c.b16 %v3633, %v3633
      %v3666 = vpack.c.b16 %v3634, %v3634
      %v3667 = vpack.c.b16 %v3635, %v3635
      %v3668 = vpack.c.b16 %v3636, %v3636
      %v3669 = vpack.c.b16 %v3637, %v3637
      %v3670 = vpack.c.b16 %v3638, %v3638
      %v3671 = vpack.c.b16 %v3639, %v3639
      %v3672 = vpack.c.b16 %v3640, %v3640
      %v3673 = vpack.c.b16 %v3641, %v3641
      %v3674 = vpack.c.b16 %v3642, %v3642
      %v3675 = vpack.c.b16 %v3643, %v3643
      %v3676 = vpack.c.b16 %v3644, %v3644
      %v3677 = vpack.c.b16 %v3645, %v3645
      %v3678 = vpack.c.b16 %v3646, %v3646
      %v3679 = vpack.c.b16 %v3647, %v3647
      %v3680 = vpack.c.b16 %v3648, %v3648
      %v3681 = vpack.c.b16 %v3649, %v3649
      %v3682 = vpack.c.b16 %v3650, %v3650
      %v3683 = vpack.c.b16 %v3651, %v3651
      %v3684 = vpack.c.b16 %v3652, %v3652
      %v3685 = vpack.c.b16 %v3653, %v3653
      %v3686 = vpack.c.b16 %v3654, %v3654
      %v3687 = vpack.c.b16 %v3655, %v3655
      %v3688 = vpack.c.b16 %v3656, %v3656
      %v3689 = vpack.c.b16 %v3657, %v3657
      %v3690 = vpack.c.b16 %v3658, %v3658
      %vm3723 = vcmask 27648
      %3724 = vst.msk [vmem:[%s457] sm:$0xf] %vm3723, %v3659
      %3725 = vst.msk [vmem:[%s457 + $0x4] sm:$0xf] %vm3723, %v3660
      %3726 = vst.msk [vmem:[%s457 + $0x8] sm:$0xf] %vm3723, %v3661
      %3727 = vst.msk [vmem:[%s457 + $0xc] sm:$0xf] %vm3723, %v3662
      %3728 = vst.msk [vmem:[%s457 + $0x10] sm:$0xf] %vm3723, %v3663
      %3729 = vst.msk [vmem:[%s457 + $0x14] sm:$0xf] %vm3723, %v3664
      %3730 = vst.msk [vmem:[%s457 + $0x18] sm:$0xf] %vm3723, %v3665
      %3731 = vst.msk [vmem:[%s457 + $0x1c] sm:$0xf] %vm3723, %v3666
      %3732 = vst.msk [vmem:[%s457 + $0x20] sm:$0xf] %vm3723, %v3667
      %3733 = vst.msk [vmem:[%s457 + $0x24] sm:$0xf] %vm3723, %v3668
      %3734 = vst.msk [vmem:[%s457 + $0x28] sm:$0xf] %vm3723, %v3669
      %3735 = vst.msk [vmem:[%s457 + $0x2c] sm:$0xf] %vm3723, %v3670
      %3736 = vst.msk [vmem:[%s457 + $0x30] sm:$0xf] %vm3723, %v3671
      %3737 = vst.msk [vmem:[%s457 + $0x34] sm:$0xf] %vm3723, %v3672
      %3738 = vst.msk [vmem:[%s457 + $0x38] sm:$0xf] %vm3723, %v3673
      %3739 = vst.msk [vmem:[%s457 + $0x3c] sm:$0xf] %vm3723, %v3674
      %3740 = vst.msk [vmem:[%s457 + $0x40] sm:$0xf] %vm3723, %v3675
      %3741 = vst.msk [vmem:[%s457 + $0x44] sm:$0xf] %vm3723, %v3676
      %3742 = vst.msk [vmem:[%s457 + $0x48] sm:$0xf] %vm3723, %v3677
      %3743 = vst.msk [vmem:[%s457 + $0x4c] sm:$0xf] %vm3723, %v3678
      %3744 = vst.msk [vmem:[%s457 + $0x50] sm:$0xf] %vm3723, %v3679
      %3745 = vst.msk [vmem:[%s457 + $0x54] sm:$0xf] %vm3723, %v3680
      %3746 = vst.msk [vmem:[%s457 + $0x58] sm:$0xf] %vm3723, %v3681
      %3747 = vst.msk [vmem:[%s457 + $0x5c] sm:$0xf] %vm3723, %v3682
      %3748 = vst.msk [vmem:[%s457 + $0x60] sm:$0xf] %vm3723, %v3683
      %3749 = vst.msk [vmem:[%s457 + $0x64] sm:$0xf] %vm3723, %v3684
      %3750 = vst.msk [vmem:[%s457 + $0x68] sm:$0xf] %vm3723, %v3685
      %3751 = vst.msk [vmem:[%s457 + $0x6c] sm:$0xf] %vm3723, %v3686
      %3752 = vst.msk [vmem:[%s457 + $0x70] sm:$0xf] %vm3723, %v3687
      %3753 = vst.msk [vmem:[%s457 + $0x74] sm:$0xf] %vm3723, %v3688
      %3754 = vst.msk [vmem:[%s457 + $0x78] sm:$0xf] %vm3723, %v3689
      %3755 = vst.msk [vmem:[%s457 + $0x7c] sm:$0xf] %vm3723, %v3690
      %s3756 = smul.u32 16, %s24
      %p3757 = scmp.lt.s32.totalorder %s23, 1
      %s3758 = scalar_select %p3757, %s23, 1
      %p3759 = scmp.lt.s32.totalorder %s3756, 15
      %s3760 = scalar_select %p3759, %s3756, 15
      %s3761 = smul.addr %s3760, 2
      %s3762 = smul.addr %s3758, 32
      %s3763 = sadd.s32 %s3761, %s3762
      %s3764 = smul.addr %s3763, 4
      %s3765 = scalar_lea.vmem %s6, %s3764
      %p3766 = scmp.lt.s32.totalorder %s23, 1
      %s3767 = scalar_select %p3766, %s23, 1
      %p3768 = scmp.lt.s32.totalorder %s24, 0
      %s3769 = scalar_select %p3768, %s24, 0
      %s3770 = sadd.s32 %s3769, %s3767
      %s3771 = smul.addr %s3770, 2
      %s3772 = scalar_lea.vmem %s7, %s3771
      // Predicated region
      $region45: #{preact_basic_block.2} parent=43 // pred_check
        %p3773 = pneg %p214
      $region46: #{preact_basic_block.2} parent=43 // pred_check_branch
        %3775 = sbr.rel (%p3773) target = $region48
      $region47: #{preact_basic_block.2} parent=43 // pred_region
        %s3776 = smul.u32 16, %s24
      $region48: #{preact_basic_block.2} parent=43 // pred_fallthru
        _
      // Predicated region
      $region49: #{preact_basic_block.2} parent=43 // pred_check
        %p3777 = pneg %p242
      $region50: #{preact_basic_block.2} parent=43 // pred_check_branch
        %3779 = sbr.rel (%p3777) target = $region52
      $region51: #{preact_basic_block.2} parent=43 // pred_region
        _
      $region52: #{preact_basic_block.2} parent=43 // pred_fallthru
        _
    $region44: #{preact_basic_block.2} parent=5 // pred_fallthru
      _
    %p3780 = scmp.le.s32.totalorder 2, %s14
    // Predicated region
    $region53: #{preact_basic_block.2} parent=5 // pred_check
      %p3781 = pneg %p3780
    $region54: #{preact_basic_block.2} parent=5 // pred_check_branch
      %3783 = sbr.rel (%p3781) target = $region56
    $region55: #{preact_basic_block.2} parent=5 // pred_region
      %s3784 = ssub.s32 %s14, 2
      // Predicated region
      $region57: #{preact_basic_block.2} parent=55 // pred_check
        %p3785 = pneg %p220
      $region58: #{preact_basic_block.2} parent=55 // pred_check_branch
        %3787 = sbr.rel (%p3785) target = $region60
      $region59: #{preact_basic_block.2} parent=55 // pred_region
        %s3788 = smul.u32 16, %s26
        %p3789 = scmp.lt.s32.totalorder %s25, 1
        %s3790 = scalar_select %p3789, %s25, 1
        %p3791 = scmp.lt.s32.totalorder %s3788, 15
        %s3792 = scalar_select %p3791, %s3788, 15
        %s3793 = smul.addr %s3792, 2
        %s3794 = smul.addr %s3790, 32
        %s3795 = sadd.s32 %s3793, %s3794
        %s3796 = smul.addr %s3795, 4
        %s3797 = scalar_lea.vmem %s6, %s3796
      $region60: #{preact_basic_block.2} parent=55 // pred_fallthru
        _
      // Predicated region
      $region61: #{preact_basic_block.2} parent=55 // pred_check
        %p3798 = pneg %p248
      $region62: #{preact_basic_block.2} parent=55 // pred_check_branch
        %3800 = sbr.rel (%p3798) target = $region64
      $region63: #{preact_basic_block.2} parent=55 // pred_region
        %p3801 = scmp.lt.s32.totalorder %s25, 1
        %s3802 = scalar_select %p3801, %s25, 1
        %p3803 = scmp.lt.s32.totalorder %s26, 0
        %s3804 = scalar_select %p3803, %s26, 0
        %s3805 = sadd.s32 %s3804, %s3802
        %s3806 = smul.addr %s3805, 2
        %s3807 = scalar_lea.vmem %s7, %s3806
      $region64: #{preact_basic_block.2} parent=55 // pred_fallthru
        _
    $region56: #{preact_basic_block.2} parent=5 // pred_fallthru
      _
  $region6: #{preact_basic_block.2} parent=0 // loop_footer
    %s18 = sadd.s32 1, %s14
  $region7: #{preact_basic_block.2} parent=0 // loop_footer_branch
    %13 = sbr.rel target = $region3
  $region8: #{preact_basic_block.2} parent=0 // loop_exit
    _

// kernel: preact_basic_block.3
$region0: #{preact_basic_block.3}
  #allocation0 [shape = 'u32[]', space=smem, size = 0x4, offset = 0x4, fixed_abs, tag = 'smem constant byte address 0x4 - core index']
  #allocation1 [shape = 'u32[144,128]{1,0:T(1,128)}', space=vmem, size = 0x12000, scoped, tag = 'internal scratch']
  %s0 = inlined_call_operand.vmem [shape: bf16[2,16,16,4], index: 0, kind: input, shape index: {}, may-alias: {0,1,2}]
  %s1 = inlined_call_operand.vmem [shape: bf16[2,16,16,4], index: 1, kind: input, shape index: {}, may-alias: {0,1,2}]
  %s2 = inlined_call_operand.vmem [shape: bf16[2,16,16,4], index: 2, kind: input, shape index: {}, may-alias: {0,1,2}]
  %s3 = inlined_call_operand.vmem [shape: f32[1,128], index: 3, kind: input, shape index: {}]
  %s4 = inlined_call_operand.vmem [shape: f32[1,128], index: 4, kind: input, shape index: {}]
  %s5 = inlined_call_operand.vmem [shape: bf16[3,3,128,128], index: 5, kind: input, shape index: {}]
  %s6 = inlined_call_operand.vmem [shape: f32[2,16,16,4], index: 6, kind: input, shape index: {}]
  %s7 = inlined_call_operand.vmem [shape: f32[2,16,16,4], index: 7, kind: output, shape index: {}]
  %s8 = sld [smem:[#allocation0]]
  $region61: #{preact_basic_block.3} parent=0
    _
  %s10 = ssub.s32 1, %s8
  %s11 = scalar_select 0, %s10, %s8
  loop: start=0, step=1, limit=4
  $region2: #{preact_basic_block.3} parent=0 // loop_pre_header
    _
  $region3: #{preact_basic_block.3} parent=0 // loop_header
    %s13 = sphi 0, %s17
    %p14 = scmp.ge.s32.totalorder %s13, 4
    %s20 = sphi 0, %s32
    %s21 = sphi 0, %s28
    %s22 = sphi 0, %s20
    %s23 = sphi 0, %s21
    %s24 = sphi 0, %s22
    %s25 = sphi 0, %s23
    %s37 = sphi 0, %s39
    %s40 = sphi 0, %s37
    %s41 = sphi 0, %s40
    %s57 = sphi 0, %s41
    %s73 = sphi 0, %s75
    %s76 = sphi 0, %s73
    %s77 = sphi 0, %s76
    %s93 = sphi 0, %s77
    %s109 = sphi 0, %s111
    %s112 = sphi 0, %s109
    %s113 = sphi 0, %s112
    %s129 = sphi 0, %s113
    %s133 = sphi 0, %s133
    %s135 = sphi 0, %s133
    %s136 = sphi 0, %s135
    %s150 = sphi 0, %s136
    %s154 = sphi 0, %s154
    %s156 = sphi 0, %s154
    %s157 = sphi 0, %s156
    %s171 = sphi 0, %s157
    %s175 = sphi 0, %s175
    %s177 = sphi 0, %s175
    %s178 = sphi 0, %s177
    %s192 = sphi 0, %s178
    %s200 = sphi 0, %s202
    %s203 = sphi 0, %s200
    %s204 = sphi 0, %s203
    %s220 = sphi 0, %s204
    %s228 = sphi 0, %s230
    %s231 = sphi 0, %s228
    %s232 = sphi 0, %s231
    %s248 = sphi 0, %s232
  $region4: #{preact_basic_block.3} parent=0 // loop_header_branch
    %16 = sbr.rel (%p14) target = $region8
  $region5: #{preact_basic_block.3} parent=0 // loop_body
    %s18 = ssub.s32 %s13, 1
    %s19 = ssub.s32 %s13, 2
    %s26 = sadd.s32 1, %s21
    %p27 = scmp.ge.s32.totalorder %s26, 1
    %s28 = scalar_select %p27, 0, %s26
    %s29 = sadd.s32 1, %s20
    %s30 = scalar_select %p27, %s29, %s20
    %p31 = scmp.ge.s32.totalorder %s30, 2
    %s32 = scalar_select %p31, 0, %s30
    %s33 = ssub.s32 %s20, %s32
    %s34 = ssub.s32 %s21, %s28
    %s35 = sor.u32 %s33, %s34
    %p36 = scmp.eq.s32.totalorder %s35, 0
    %s38 = sadd.s32 %s37, 1
    %s39 = scalar_select %p36, %s37, %s38
    %p42 = pneg %p36
    %p43 = scmp.eq.s32.totalorder %s13, 1
    %p44 = por %p42, %p43
    %p45 = scmp.ne.s32.totalorder %s37, %s40
    %p46 = scmp.eq.s32.totalorder %s13, 0
    %p47 = por %p45, %p46
    %p48 = scmp.ne.s32.totalorder %s37, %s40
    %p49 = scmp.eq.s32.totalorder %s18, 1
    %p50 = por %p48, %p49
    %p51 = scmp.ne.s32.totalorder %s40, %s41
    %p52 = scmp.eq.s32.totalorder %s18, 0
    %p53 = por %p51, %p52
    %p54 = scmp.ne.s32.totalorder %s40, %s41
    %p55 = scmp.eq.s32.totalorder %s19, 1
    %p56 = por %p54, %p55
    %p58 = scmp.ne.s32.totalorder %s41, %s57
    %p59 = scmp.eq.s32.totalorder %s19, 0
    %p60 = por %p58, %p59
    %s61 = smul.u32 %s21, 16
    %s62 = ssub.s32 %s61, 1
    %p63 = scmp.gt.s32.totalorder %s62, 0
    %s64 = scalar_select %p63, %s62, 0
    %s65 = smul.u32 %s28, 16
    %s66 = ssub.s32 %s65, 1
    %p67 = scmp.gt.s32.totalorder %s66, 0
    %s68 = scalar_select %p67, %s66, 0
    %s69 = ssub.s32 %s20, %s32
    %s70 = ssub.s32 %s64, %s68
    %s71 = sor.u32 %s69, %s70
    %p72 = scmp.eq.s32.totalorder %s71, 0
    %s74 = sadd.s32 %s73, 1
    %s75 = scalar_select %p72, %s73, %s74
    %p78 = pneg %p72
    %p79 = scmp.eq.s32.totalorder %s13, 1
    %p80 = por %p78, %p79
    %p81 = scmp.ne.s32.totalorder %s73, %s76
    %p82 = scmp.eq.s32.totalorder %s13, 0
    %p83 = por %p81, %p82
    %p84 = scmp.ne.s32.totalorder %s73, %s76
    %p85 = scmp.eq.s32.totalorder %s18, 1
    %p86 = por %p84, %p85
    %p87 = scmp.ne.s32.totalorder %s76, %s77
    %p88 = scmp.eq.s32.totalorder %s18, 0
    %p89 = por %p87, %p88
    %p90 = scmp.ne.s32.totalorder %s76, %s77
    %p91 = scmp.eq.s32.totalorder %s19, 1
    %p92 = por %p90, %p91
    %p94 = scmp.ne.s32.totalorder %s77, %s93
    %p95 = scmp.eq.s32.totalorder %s19, 0
    %p96 = por %p94, %p95
    %s97 = smul.u32 %s21, 16
    %s98 = sadd.s32 %s97, 16
    %p99 = scmp.lt.s32.totalorder %s98, 15
    %s100 = scalar_select %p99, %s98, 15
    %s101 = smul.u32 %s28, 16
    %s102 = sadd.s32 %s101, 16
    %p103 = scmp.lt.s32.totalorder %s102, 15
    %s104 = scalar_select %p103, %s102, 15
    %s105 = ssub.s32 %s20, %s32
    %s106 = ssub.s32 %s100, %s104
    %s107 = sor.u32 %s105, %s106
    %p108 = scmp.eq.s32.totalorder %s107, 0
    %s110 = sadd.s32 %s109, 1
    %s111 = scalar_select %p108, %s109, %s110
    %p114 = pneg %p108
    %p115 = scmp.eq.s32.totalorder %s13, 1
    %p116 = por %p114, %p115
    %p117 = scmp.ne.s32.totalorder %s109, %s112
    %p118 = scmp.eq.s32.totalorder %s13, 0
    %p119 = por %p117, %p118
    %p120 = scmp.ne.s32.totalorder %s109, %s112
    %p121 = scmp.eq.s32.totalorder %s18, 1
    %p122 = por %p120, %p121
    %p123 = scmp.ne.s32.totalorder %s112, %s113
    %p124 = scmp.eq.s32.totalorder %s18, 0
    %p125 = por %p123, %p124
    %p126 = scmp.ne.s32.totalorder %s112, %s113
    %p127 = scmp.eq.s32.totalorder %s19, 1
    %p128 = por %p126, %p127
    %p130 = scmp.ne.s32.totalorder %s113, %s129
    %p131 = scmp.eq.s32.totalorder %s19, 0
    %p132 = por %p130, %p131
    %s134 = sadd.s32 %s133, 1
    %p137 = scmp.eq.s32.totalorder %s13, 1
    %p138 = scmp.ne.s32.totalorder %s133, %s135
    %p139 = scmp.eq.s32.totalorder %s13, 0
    %p140 = por %p138, %p139
    %p141 = scmp.ne.s32.totalorder %s133, %s135
    %p142 = scmp.eq.s32.totalorder %s18, 1
    %p143 = por %p141, %p142
    %p144 = scmp.ne.s32.totalorder %s135, %s136
    %p145 = scmp.eq.s32.totalorder %s18, 0
    %p146 = por %p144, %p145
    %p147 = scmp.ne.s32.totalorder %s135, %s136
    %p148 = scmp.eq.s32.totalorder %s19, 1
    %p149 = por %p147, %p148
    %p151 = scmp.ne.s32.totalorder %s136, %s150
    %p152 = scmp.eq.s32.totalorder %s19, 0
    %p153 = por %p151, %p152
    %s155 = sadd.s32 %s154, 1
    %p158 = scmp.eq.s32.totalorder %s13, 1
    %p159 = scmp.ne.s32.totalorder %s154, %s156
    %p160 = scmp.eq.s32.totalorder %s13, 0
    %p161 = por %p159, %p160
    %p162 = scmp.ne.s32.totalorder %s154, %s156
    %p163 = scmp.eq.s32.totalorder %s18, 1
    %p164 = por %p162, %p163
    %p165 = scmp.ne.s32.totalorder %s156, %s157
    %p166 = scmp.eq.s32.totalorder %s18, 0
    %p167 = por %p165, %p166
    %p168 = scmp.ne.s32.totalorder %s156, %s157
    %p169 = scmp.eq.s32.totalorder %s19, 1
    %p170 = por %p168, %p169
    %p172 = scmp.ne.s32.totalorder %s157, %s171
    %p173 = scmp.eq.s32.totalorder %s19, 0
    %p174 = por %p172, %p173
    %s176 = sadd.s32 %s175, 1
    %p179 = scmp.eq.s32.totalorder %s13, 1
    %p180 = scmp.ne.s32.totalorder %s175, %s177
    %p181 = scmp.eq.s32.totalorder %s13, 0
    %p182 = por %p180, %p181
    %p183 = scmp.ne.s32.totalorder %s175, %s177
    %p184 = scmp.eq.s32.totalorder %s18, 1
    %p185 = por %p183, %p184
    %p186 = scmp.ne.s32.totalorder %s177, %s178
    %p187 = scmp.eq.s32.totalorder %s18, 0
    %p188 = por %p186, %p187
    %p189 = scmp.ne.s32.totalorder %s177, %s178
    %p190 = scmp.eq.s32.totalorder %s19, 1
    %p191 = por %p189, %p190
    %p193 = scmp.ne.s32.totalorder %s178, %s192
    %p194 = scmp.eq.s32.totalorder %s19, 0
    %p195 = por %p193, %p194
    %s196 = ssub.s32 %s20, %s32
    %s197 = ssub.s32 %s21, %s28
    %s198 = sor.u32 %s196, %s197
    %p199 = scmp.eq.s32.totalorder %s198, 0
    %s201 = sadd.s32 %s200, 1
    %s202 = scalar_select %p199, %s200, %s201
    %p205 = pneg %p199
    %p206 = scmp.eq.s32.totalorder %s13, 1
    %p207 = por %p205, %p206
    %p208 = scmp.ne.s32.totalorder %s200, %s203
    %p209 = scmp.eq.s32.totalorder %s13, 0
    %p210 = por %p208, %p209
    %p211 = scmp.ne.s32.totalorder %s200, %s203
    %p212 = scmp.eq.s32.totalorder %s18, 1
    %p213 = por %p211, %p212
    %p214 = scmp.ne.s32.totalorder %s203, %s204
    %p215 = scmp.eq.s32.totalorder %s18, 0
    %p216 = por %p214, %p215
    %p217 = scmp.ne.s32.totalorder %s203, %s204
    %p218 = scmp.eq.s32.totalorder %s19, 1
    %p219 = por %p217, %p218
    %p221 = scmp.ne.s32.totalorder %s204, %s220
    %p222 = scmp.eq.s32.totalorder %s19, 0
    %p223 = por %p221, %p222
    %s224 = ssub.s32 %s20, %s32
    %s225 = ssub.s32 %s21, %s28
    %s226 = sor.u32 %s224, %s225
    %p227 = scmp.eq.s32.totalorder %s226, 0
    %s229 = sadd.s32 %s228, 1
    %s230 = scalar_select %p227, %s228, %s229
    %p233 = pneg %p227
    %p234 = scmp.eq.s32.totalorder %s13, 1
    %p235 = por %p233, %p234
    %p236 = scmp.ne.s32.totalorder %s228, %s231
    %p237 = scmp.eq.s32.totalorder %s13, 0
    %p238 = por %p236, %p237
    %p239 = scmp.ne.s32.totalorder %s228, %s231
    %p240 = scmp.eq.s32.totalorder %s18, 1
    %p241 = por %p239, %p240
    %p242 = scmp.ne.s32.totalorder %s231, %s232
    %p243 = scmp.eq.s32.totalorder %s18, 0
    %p244 = por %p242, %p243
    %p245 = scmp.ne.s32.totalorder %s231, %s232
    %p246 = scmp.eq.s32.totalorder %s19, 1
    %p247 = por %p245, %p246
    %p249 = scmp.ne.s32.totalorder %s232, %s248
    %p250 = scmp.eq.s32.totalorder %s19, 0
    %p251 = por %p249, %p250
    %p252 = scmp.le.s32.totalorder 1, %s13
    %p253 = scmp.lt.s32.totalorder %s13, 3
    %p254 = pnand %p252, %p253
    %p255 = pneg %p254
    // Predicated region
    $region9: #{preact_basic_block.3} parent=5 // pred_check
      _
    $region10: #{preact_basic_block.3} parent=5 // pred_check_branch
      %257 = sbr.rel (%p254) target = $region12
    $region11: #{preact_basic_block.3} parent=5 // pred_region
      %s258 = ssub.s32 %s13, 1
      // Predicated region
      $region13: #{preact_basic_block.3} parent=11 // pred_check
        %p259 = pneg %p146
      $region14: #{preact_basic_block.3} parent=11 // pred_check_branch
        %261 = sbr.rel (%p259) target = $region16
      $region15: #{preact_basic_block.3} parent=11 // pred_region
        _
      $region16: #{preact_basic_block.3} parent=11 // pred_fallthru
        _
      // Predicated region
      $region17: #{preact_basic_block.3} parent=11 // pred_check
        %p262 = pneg %p167
      $region18: #{preact_basic_block.3} parent=11 // pred_check_branch
        %264 = sbr.rel (%p262) target = $region20
      $region19: #{preact_basic_block.3} parent=11 // pred_region
        _
      $region20: #{preact_basic_block.3} parent=11 // pred_fallthru
        _
      // Predicated region
      $region21: #{preact_basic_block.3} parent=11 // pred_check
        %p265 = pneg %p188
      $region22: #{preact_basic_block.3} parent=11 // pred_check_branch
        %267 = sbr.rel (%p265) target = $region24
      $region23: #{preact_basic_block.3} parent=11 // pred_region
        _
      $region24: #{preact_basic_block.3} parent=11 // pred_fallthru
        _
    $region12: #{preact_basic_block.3} parent=5 // pred_fallthru
      _
    %p268 = scmp.lt.s32.totalorder %s13, 2
    // Predicated region
    $region25: #{preact_basic_block.3} parent=5 // pred_check
      %p269 = pneg %p268
    $region26: #{preact_basic_block.3} parent=5 // pred_check_branch
      %271 = sbr.rel (%p269) target = $region28
    $region27: #{preact_basic_block.3} parent=5 // pred_region
      // Predicated region
      $region29: #{preact_basic_block.3} parent=27 // pred_check
        %p272 = pneg %p47
      $region30: #{preact_basic_block.3} parent=27 // pred_check_branch
        %274 = sbr.rel (%p272) target = $region32
      $region31: #{preact_basic_block.3} parent=27 // pred_region
        %s275 = smul.u32 16, %s21
        %p276 = scmp.lt.s32.totalorder %s20, 1
        %s277 = scalar_select %p276, %s20, 1
        %p278 = scmp.lt.s32.totalorder %s275, 15
        %s279 = scalar_select %p278, %s275, 15
        %s280 = smul.addr %s279, 2
        %s281 = smul.addr %s277, 32
        %s282 = sadd.s32 %s280, %s281
        %s283 = smul.addr %s282, 4
        %s284 = scalar_lea.vmem %s0, %s283
        %s285 = smul.u32 16, %s21
      $region32: #{preact_basic_block.3} parent=27 // pred_fallthru
        _
      // Predicated region
      $region33: #{preact_basic_block.3} parent=27 // pred_check
        %p286 = pneg %p83
      $region34: #{preact_basic_block.3} parent=27 // pred_check_branch
        %288 = sbr.rel (%p286) target = $region36
      $region35: #{preact_basic_block.3} parent=27 // pred_region
        %s289 = smul.u32 %s21, 16
        %s290 = ssub.s32 %s289, 1
        %p291 = scmp.gt.s32.totalorder %s290, 0
        %s292 = scalar_select %p291, %s290, 0
        %p293 = scmp.lt.s32.totalorder %s20, 1
        %s294 = scalar_select %p293, %s20, 1
        %p295 = scmp.lt.s32.totalorder %s292, 15
        %s296 = scalar_select %p295, %s292, 15
        %s297 = smul.addr %s296, 2
        %s298 = smul.addr %s294, 32
        %s299 = sadd.s32 %s297, %s298
        %s300 = smul.addr %s299, 4
        %s301 = scalar_lea.vmem %s1, %s300
        %s302 = smul.u32 %s21, 16
        %s303 = ssub.s32 %s302, 1
        %p304 = scmp.gt.s32.totalorder %s303, 0
        %s305 = scalar_select %p304, %s303, 0
      $region36: #{preact_basic_block.3} parent=27 // pred_fallthru
        _
      // Predicated region
      $region37: #{preact_basic_block.3} parent=27 // pred_check
        %p306 = pneg %p119
      $region38: #{preact_basic_block.3} parent=27 // pred_check_branch
        %308 = sbr.rel (%p306) target = $region40
      $region39: #{preact_basic_block.3} parent=27 // pred_region
        %s309 = smul.u32 %s21, 16
        %s310 = sadd.s32 %s309, 16
        %p311 = scmp.lt.s32.totalorder %s310, 15
        %s312 = scalar_select %p311, %s310, 15
        %p313 = scmp.lt.s32.totalorder %s20, 1
        %s314 = scalar_select %p313, %s20, 1
        %p315 = scmp.lt.s32.totalorder %s312, 15
        %s316 = scalar_select %p315, %s312, 15
        %s317 = smul.addr %s316, 2
        %s318 = smul.addr %s314, 32
        %s319 = sadd.s32 %s317, %s318
        %s320 = smul.addr %s319, 4
        %s321 = scalar_lea.vmem %s2, %s320
        %s322 = smul.u32 %s21, 16
        %s323 = sadd.s32 %s322, 16
        %p324 = scmp.lt.s32.totalorder %s323, 15
        %s325 = scalar_select %p324, %s323, 15
      $region40: #{preact_basic_block.3} parent=27 // pred_fallthru
        _
      // Predicated region
      $region41: #{preact_basic_block.3} parent=27 // pred_check
        %p326 = pneg %p210
      $region42: #{preact_basic_block.3} parent=27 // pred_check_branch
        %328 = sbr.rel (%p326) target = $region44
      $region43: #{preact_basic_block.3} parent=27 // pred_region
        %s329 = smul.u32 16, %s21
        %p330 = scmp.lt.s32.totalorder %s20, 1
        %s331 = scalar_select %p330, %s20, 1
        %p332 = scmp.lt.s32.totalorder %s329, 15
        %s333 = scalar_select %p332, %s329, 15
        %s334 = smul.addr %s333, 2
        %s335 = smul.addr %s331, 32
        %s336 = sadd.s32 %s334, %s335
        %s337 = smul.addr %s336, 8
        %s338 = scalar_lea.vmem %s6, %s337
        %s339 = smul.u32 16, %s21
      $region44: #{preact_basic_block.3} parent=27 // pred_fallthru
        _
    $region28: #{preact_basic_block.3} parent=5 // pred_fallthru
      _
    %p340 = scmp.le.s32.totalorder 1, %s13
    %p341 = scmp.lt.s32.totalorder %s13, 3
    %p342 = pnand %p340, %p341
    %p343 = pneg %p342
    // Predicated region
    $region45: #{preact_basic_block.3} parent=5 // pred_check
      _
    $region46: #{preact_basic_block.3} parent=5 // pred_check_branch
      %345 = sbr.rel (%p342) target = $region48
    $region47: #{preact_basic_block.3} parent=5 // pred_region
      %s346 = ssub.s32 %s13, 1
      %s347 = smul.u32 16, %s23
      %p348 = scmp.lt.s32.totalorder %s22, 1
      %s349 = scalar_select %p348, %s22, 1
      %p350 = scmp.lt.s32.totalorder %s347, 15
      %s351 = scalar_select %p350, %s347, 15
      %s352 = smul.addr %s351, 2
      %s353 = smul.addr %s349, 32
      %s354 = sadd.s32 %s352, %s353
      %s355 = smul.addr %s354, 4
      %s356 = scalar_lea.vmem %s0, %s355
      %p357 = pneg %p53
      %p358 = pneg %p50
      %s359 = smul.u32 %s23, 16
      %s360 = ssub.s32 %s359, 1
      %p361 = scmp.gt.s32.totalorder %s360, 0
      %s362 = scalar_select %p361, %s360, 0
      %p363 = scmp.lt.s32.totalorder %s22, 1
      %s364 = scalar_select %p363, %s22, 1
      %p365 = scmp.lt.s32.totalorder %s362, 15
      %s366 = scalar_select %p365, %s362, 15
      %s367 = smul.addr %s366, 2
      %s368 = smul.addr %s364, 32
      %s369 = sadd.s32 %s367, %s368
      %s370 = smul.addr %s369, 4
      %s371 = scalar_lea.vmem %s1, %s370
      %p372 = pneg %p89
      %p373 = pneg %p86
      %s374 = smul.u32 %s23, 16
      %s375 = sadd.s32 %s374, 16
      %p376 = scmp.lt.s32.totalorder %s375, 15
      %s377 = scalar_select %p376, %s375, 15
      %p378 = scmp.lt.s32.totalorder %s22, 1
      %s379 = scalar_select %p378, %s22, 1
      %p380 = scmp.lt.s32.totalorder %s377, 15
      %s381 = scalar_select %p380, %s377, 15
      %s382 = smul.addr %s381, 2
      %s383 = smul.addr %s379, 32
      %s384 = sadd.s32 %s382, %s383
      %s385 = smul.addr %s384, 4
      %s386 = scalar_lea.vmem %s2, %s385
      %p387 = pneg %p125
      %p388 = pneg %p122
      %p389 = pneg %p146
      %p390 = pneg %p143
      %p391 = pneg %p167
      %p392 = pneg %p164
      %p393 = pneg %p188
      %p394 = pneg %p185
      %s395 = smul.u32 16, %s23
      %p396 = scmp.lt.s32.totalorder %s22, 1
      %s397 = scalar_select %p396, %s22, 1
      %p398 = scmp.lt.s32.totalorder %s395, 15
      %s399 = scalar_select %p398, %s395, 15
      %s400 = smul.addr %s399, 2
      %s401 = smul.addr %s397, 32
      %s402 = sadd.s32 %s400, %s401
      %s403 = smul.addr %s402, 8
      %s404 = scalar_lea.vmem %s6, %s403
      %p405 = pneg %p216
      %p406 = pneg %p213
      %p407 = pneg %p244
      %p408 = pneg %p241
      %s409 = smul.u32 16, %s23
      %p410 = scmp.lt.s32.totalorder %s22, 1
      %s411 = scalar_select %p410, %s22, 1
      %p412 = scmp.lt.s32.totalorder %s409, 15
      %s413 = scalar_select %p412, %s409, 15
      %s414 = smul.addr %s413, 2
      %s415 = smul.addr %s411, 32
      %s416 = sadd.s32 %s414, %s415
      %s417 = smul.addr %s416, 8
      %s418 = scalar_lea.vmem %s7, %s417
      %s419 = smul.u32 16, %s23
      %p420 = scmp.lt.s32.totalorder %s22, 1
      %s421 = scalar_select %p420, %s22, 1
      %p422 = scmp.lt.s32.totalorder %s419, 15
      %s423 = scalar_select %p422, %s419, 15
      %s424 = smul.addr %s423, 2
      %s425 = smul.addr %s421, 32
      %s426 = sadd.s32 %s424, %s425
      %s427 = smul.addr %s426, 4
      %s428 = scalar_lea.vmem %s0, %s427
      %s429 = smul.u32 16, %s23
      %s430 = smul.u32 %s23, 16
      %s431 = ssub.s32 %s430, 1
      %p432 = scmp.gt.s32.totalorder %s431, 0
      %s433 = scalar_select %p432, %s431, 0
      %p434 = scmp.lt.s32.totalorder %s22, 1
      %s435 = scalar_select %p434, %s22, 1
      %p436 = scmp.lt.s32.totalorder %s433, 15
      %s437 = scalar_select %p436, %s433, 15
      %s438 = smul.addr %s437, 2
      %s439 = smul.addr %s435, 32
      %s440 = sadd.s32 %s438, %s439
      %s441 = smul.addr %s440, 4
      %s442 = scalar_lea.vmem %s1, %s441
      %s443 = smul.u32 %s23, 16
      %s444 = ssub.s32 %s443, 1
      %p445 = scmp.gt.s32.totalorder %s444, 0
      %s446 = scalar_select %p445, %s444, 0
      %s447 = smul.u32 %s23, 16
      %s448 = sadd.s32 %s447, 16
      %p449 = scmp.lt.s32.totalorder %s448, 15
      %s450 = scalar_select %p449, %s448, 15
      %p451 = scmp.lt.s32.totalorder %s22, 1
      %s452 = scalar_select %p451, %s22, 1
      %p453 = scmp.lt.s32.totalorder %s450, 15
      %s454 = scalar_select %p453, %s450, 15
      %s455 = smul.addr %s454, 2
      %s456 = smul.addr %s452, 32
      %s457 = sadd.s32 %s455, %s456
      %s458 = smul.addr %s457, 4
      %s459 = scalar_lea.vmem %s2, %s458
      %s460 = smul.u32 %s23, 16
      %s461 = sadd.s32 %s460, 16
      %p462 = scmp.lt.s32.totalorder %s461, 15
      %s463 = scalar_select %p462, %s461, 15
      %s464 = smul.u32 16, %s23
      %p465 = scmp.lt.s32.totalorder %s22, 1
      %s466 = scalar_select %p465, %s22, 1
      %p467 = scmp.lt.s32.totalorder %s464, 15
      %s468 = scalar_select %p467, %s464, 15
      %s469 = smul.addr %s468, 2
      %s470 = smul.addr %s466, 32
      %s471 = sadd.s32 %s469, %s470
      %s472 = smul.addr %s471, 8
      %s473 = scalar_lea.vmem %s6, %s472
      %s474 = smul.u32 16, %s23
      %s475 = smul.u32 16, %s23
      %p476 = scmp.lt.s32.totalorder %s22, 1
      %s477 = scalar_select %p476, %s22, 1
      %p478 = scmp.lt.s32.totalorder %s475, 15
      %s479 = scalar_select %p478, %s475, 15
      %s480 = smul.addr %s479, 2
      %s481 = smul.addr %s477, 32
      %s482 = sadd.s32 %s480, %s481
      %s483 = smul.addr %s482, 8
      %s484 = scalar_lea.vmem %s7, %s483
      %s485 = smul.u32 16, %s23
      %v487 = vld [vmem:[%s3] sm:$0x1]
      %v488 = vld [vmem:[%s4] sm:$0x1]
      %p489 = scmp.eq.s32.totalorder %s23, 0
      %s490 = scalar_select %p489, 0.0, 1.0
      %v491 = vld [vmem:[%s442] sm:$0xf]
      %v492 = vld [vmem:[%s442 + $0x4] sm:$0xf]
      %v493 = vunpack.c.l.bf16 %v491
      %v494 = vunpack.c.l.bf16 %v492
      %vm495 = vcmask 31744
      %v496 = vsel %vm495, %v493, 0.0
      %v497 = vsel %vm495, %v494, 0.0
      %v499 = vlaneseq
      %v500 = vshrl.u32 %v499, 7
      %v501 = vsub.s32 0, %v500
      %v502 = vrot.slane %v487, %v501
      %v504 = vmul.f32 %v496, %v502
      %v505 = vmul.f32 %v497, %v502
      %v507 = vlaneseq
      %v508 = vshrl.u32 %v507, 7
      %v509 = vsub.s32 0, %v508
      %v510 = vrot.slane %v488, %v509
      %v512 = vadd.f32 %v504, %v510
      %v513 = vadd.f32 %v505, %v510
      %v514 = vmax.f32 %v512, 0.0
      %v515 = vmax.f32 %v513, 0.0
      %v516 = vstv %s490
      %v517 = vmul.f32 %v514, %v516
      %v518 = vmul.f32 %v515, %v516
      %v519 = vld [vmem:[%s428] sm:$0xf]
      %v520 = vld [vmem:[%s428 + $0x4] sm:$0xf]
      %v521 = vld [vmem:[%s428 + $0x8] sm:$0xf]
      %v522 = vld [vmem:[%s428 + $0xc] sm:$0xf]
      %v523 = vld [vmem:[%s428 + $0x10] sm:$0xf]
      %v524 = vld [vmem:[%s428 + $0x14] sm:$0xf]
      %v525 = vld [vmem:[%s428 + $0x18] sm:$0xf]
      %v526 = vld [vmem:[%s428 + $0x1c] sm:$0xf]
      %v527 = vld [vmem:[%s428 + $0x20] sm:$0xf]
      %v528 = vld [vmem:[%s428 + $0x24] sm:$0xf]
      %v529 = vld [vmem:[%s428 + $0x28] sm:$0xf]
      %v530 = vld [vmem:[%s428 + $0x2c] sm:$0xf]
      %v531 = vld [vmem:[%s428 + $0x30] sm:$0xf]
      %v532 = vld [vmem:[%s428 + $0x34] sm:$0xf]
      %v533 = vld [vmem:[%s428 + $0x38] sm:$0xf]
      %v534 = vld [vmem:[%s428 + $0x3c] sm:$0xf]
      %v535 = vld [vmem:[%s428 + $0x40] sm:$0xf]
      %v536 = vld [vmem:[%s428 + $0x44] sm:$0xf]
      %v537 = vld [vmem:[%s428 + $0x48] sm:$0xf]
      %v538 = vld [vmem:[%s428 + $0x4c] sm:$0xf]
      %v539 = vld [vmem:[%s428 + $0x50] sm:$0xf]
      %v540 = vld [vmem:[%s428 + $0x54] sm:$0xf]
      %v541 = vld [vmem:[%s428 + $0x58] sm:$0xf]
      %v542 = vld [vmem:[%s428 + $0x5c] sm:$0xf]
      %v543 = vld [vmem:[%s428 + $0x60] sm:$0xf]
      %v544 = vld [vmem:[%s428 + $0x64] sm:$0xf]
      %v545 = vld [vmem:[%s428 + $0x68] sm:$0xf]
      %v546 = vld [vmem:[%s428 + $0x6c] sm:$0xf]
      %v547 = vld [vmem:[%s428 + $0x70] sm:$0xf]
      %v548 = vld [vmem:[%s428 + $0x74] sm:$0xf]
      %v549 = vld [vmem:[%s428 + $0x78] sm:$0xf]
      %v550 = vld [vmem:[%s428 + $0x7c] sm:$0xf]
      %v551 = vunpack.c.l.bf16 %v519
      %v552 = vunpack.c.l.bf16 %v520
      %v553 = vunpack.c.l.bf16 %v521
      %v554 = vunpack.c.l.bf16 %v522
      %v555 = vunpack.c.l.bf16 %v523
      %v556 = vunpack.c.l.bf16 %v524
      %v557 = vunpack.c.l.bf16 %v525
      %v558 = vunpack.c.l.bf16 %v526
      %v559 = vunpack.c.l.bf16 %v527
      %v560 = vunpack.c.l.bf16 %v528
      %v561 = vunpack.c.l.bf16 %v529
      %v562 = vunpack.c.l.bf16 %v530
      %v563 = vunpack.c.l.bf16 %v531
      %v564 = vunpack.c.l.bf16 %v532
      %v565 = vunpack.c.l.bf16 %v533
      %v566 = vunpack.c.l.bf16 %v534
      %v567 = vunpack.c.l.bf16 %v535
      %v568 = vunpack.c.l.bf16 %v536
      %v569 = vunpack.c.l.bf16 %v537
      %v570 = vunpack.c.l.bf16 %v538
      %v571 = vunpack.c.l.bf16 %v539
      %v572 = vunpack.c.l.bf16 %v540
      %v573 = vunpack.c.l.bf16 %v541
      %v574 = vunpack.c.l.bf16 %v542
      %v575 = vunpack.c.l.bf16 %v543
      %v576 = vunpack.c.l.bf16 %v544
      %v577 = vunpack.c.l.bf16 %v545
      %v578 = vunpack.c.l.bf16 %v546
      %v579 = vunpack.c.l.bf16 %v547
      %v580 = vunpack.c.l.bf16 %v548
      %v581 = vunpack.c.l.bf16 %v549
      %v582 = vunpack.c.l.bf16 %v550
      %v583 = vsel %vm495, %v551, 0.0
      %v584 = vsel %vm495, %v552, 0.0
      %v585 = vsel %vm495, %v553, 0.0
      %v586 = vsel %vm495, %v554, 0.0
      %v587 = vsel %vm495, %v555, 0.0
      %v588 = vsel %vm495, %v556, 0.0
      %v589 = vsel %vm495, %v557, 0.0
      %v590 = vsel %vm495, %v558, 0.0
      %v591 = vsel %vm495, %v559, 0.0
      %v592 = vsel %vm495, %v560, 0.0
      %v593 = vsel %vm495, %v561, 0.0
      %v594 = vsel %vm495, %v562, 0.0
      %v595 = vsel %vm495, %v563, 0.0
      %v596 = vsel %vm495, %v564, 0.0
      %v597 = vsel %vm495, %v565, 0.0
      %v598 = vsel %vm495, %v566, 0.0
      %v599 = vsel %vm495, %v567, 0.0
      %v600 = vsel %vm495, %v568, 0.0
      %v601 = vsel %vm495, %v569, 0.0
      %v602 = vsel %vm495, %v570, 0.0
      %v603 = vsel %vm495, %v571, 0.0
      %v604 = vsel %vm495, %v572, 0.0
      %v605 = vsel %vm495, %v573, 0.0
      %v606 = vsel %vm495, %v574, 0.0
      %v607 = vsel %vm495, %v575, 0.0
      %v608 = vsel %vm495, %v576, 0.0
      %v609 = vsel %vm495, %v577, 0.0
      %v610 = vsel %vm495, %v578, 0.0
      %v611 = vsel %vm495, %v579, 0.0
      %v612 = vsel %vm495, %v580, 0.0
      %v613 = vsel %vm495, %v581, 0.0
      %v614 = vsel %vm495, %v582, 0.0
      %v615 = vmul.f32 %v583, %v502
      %v616 = vmul.f32 %v584, %v502
      %v617 = vmul.f32 %v585, %v502
      %v618 = vmul.f32 %v586, %v502
      %v619 = vmul.f32 %v587, %v502
      %v620 = vmul.f32 %v588, %v502
      %v621 = vmul.f32 %v589, %v502
      %v622 = vmul.f32 %v590, %v502
      %v623 = vmul.f32 %v591, %v502
      %v624 = vmul.f32 %v592, %v502
      %v625 = vmul.f32 %v593, %v502
      %v626 = vmul.f32 %v594, %v502
      %v627 = vmul.f32 %v595, %v502
      %v628 = vmul.f32 %v596, %v502
      %v629 = vmul.f32 %v597, %v502
      %v630 = vmul.f32 %v598, %v502
      %v631 = vmul.f32 %v599, %v502
      %v632 = vmul.f32 %v600, %v502
      %v633 = vmul.f32 %v601, %v502
      %v634 = vmul.f32 %v602, %v502
      %v635 = vmul.f32 %v603, %v502
      %v636 = vmul.f32 %v604, %v502
      %v637 = vmul.f32 %v605, %v502
      %v638 = vmul.f32 %v606, %v502
      %v639 = vmul.f32 %v607, %v502
      %v640 = vmul.f32 %v608, %v502
      %v641 = vmul.f32 %v609, %v502
      %v642 = vmul.f32 %v610, %v502
      %v643 = vmul.f32 %v611, %v502
      %v644 = vmul.f32 %v612, %v502
      %v645 = vmul.f32 %v613, %v502
      %v646 = vmul.f32 %v614, %v502
      %v647 = vadd.f32 %v615, %v510
      %v648 = vadd.f32 %v616, %v510
      %v649 = vadd.f32 %v617, %v510
      %v650 = vadd.f32 %v618, %v510
      %v651 = vadd.f32 %v619, %v510
      %v652 = vadd.f32 %v620, %v510
      %v653 = vadd.f32 %v621, %v510
      %v654 = vadd.f32 %v622, %v510
      %v655 = vadd.f32 %v623, %v510
      %v656 = vadd.f32 %v624, %v510
      %v657 = vadd.f32 %v625, %v510
      %v658 = vadd.f32 %v626, %v510
      %v659 = vadd.f32 %v627, %v510
      %v660 = vadd.f32 %v628, %v510
      %v661 = vadd.f32 %v629, %v510
      %v662 = vadd.f32 %v630, %v510
      %v663 = vadd.f32 %v631, %v510
      %v664 = vadd.f32 %v632, %v510
      %v665 = vadd.f32 %v633, %v510
      %v666 = vadd.f32 %v634, %v510
      %v667 = vadd.f32 %v635, %v510
      %v668 = vadd.f32 %v636, %v510
      %v669 = vadd.f32 %v637, %v510
      %v670 = vadd.f32 %v638, %v510
      %v671 = vadd.f32 %v639, %v510
      %v672 = vadd.f32 %v640, %v510
      %v673 = vadd.f32 %v641, %v510
      %v674 = vadd.f32 %v642, %v510
      %v675 = vadd.f32 %v643, %v510
      %v676 = vadd.f32 %v644, %v510
      %v677 = vadd.f32 %v645, %v510
      %v678 = vadd.f32 %v646, %v510
      %v679 = vmax.f32 %v647, 0.0
      %v680 = vmax.f32 %v648, 0.0
      %v681 = vmax.f32 %v649, 0.0
      %v682 = vmax.f32 %v650, 0.0
      %v683 = vmax.f32 %v651, 0.0
      %v684 = vmax.f32 %v652, 0.0
      %v685 = vmax.f32 %v653, 0.0
      %v686 = vmax.f32 %v654, 0.0
      %v687 = vmax.f32 %v655, 0.0
      %v688 = vmax.f32 %v656, 0.0
      %v689 = vmax.f32 %v657, 0.0
      %v690 = vmax.f32 %v658, 0.0
      %v691 = vmax.f32 %v659, 0.0
      %v692 = vmax.f32 %v660, 0.0
      %v693 = vmax.f32 %v661, 0.0
      %v694 = vmax.f32 %v662, 0.0
      %v695 = vmax.f32 %v663, 0.0
      %v696 = vmax.f32 %v664, 0.0
      %v697 = vmax.f32 %v665, 0.0
      %v698 = vmax.f32 %v666, 0.0
      %v699 = vmax.f32 %v667, 0.0
      %v700 = vmax.f32 %v668, 0.0
      %v701 = vmax.f32 %v669, 0.0
      %v702 = vmax.f32 %v670, 0.0
      %v703 = vmax.f32 %v671, 0.0
      %v704 = vmax.f32 %v672, 0.0
      %v705 = vmax.f32 %v673, 0.0
      %v706 = vmax.f32 %v674, 0.0
      %v707 = vmax.f32 %v675, 0.0
      %v708 = vmax.f32 %v676, 0.0
      %v709 = vmax.f32 %v677, 0.0
      %v710 = vmax.f32 %v678, 0.0
      %v711 = vld [vmem:[%s459] sm:$0xf]
      %v712 = vld [vmem:[%s459 + $0x4] sm:$0xf]
      %v713 = vunpack.c.l.bf16 %v711
      %v714 = vunpack.c.l.bf16 %v712
      %v715 = vsel %vm495, %v713, 0.0
      %v716 = vsel %vm495, %v714, 0.0
      %v717 = vmul.f32 %v715, %v502
      %v718 = vmul.f32 %v716, %v502
      %v719 = vadd.f32 %v717, %v510
      %v720 = vadd.f32 %v718, %v510
      %v721 = vmax.f32 %v719, 0.0
      %v722 = vmax.f32 %v720, 0.0
      %v723 = vmul.f32 %v721, %v516
      %v724 = vmul.f32 %v722, %v516
      %vm761 = vcmask 1040384
      %v762 = vrot.slane %v517, 7
      %v763 = vrot.slane %v518, 7
      %v764 = vsel %vm761, %v762, %v763
      %v765 = vrot.slane %v679, 7
      %v766 = vrot.slane %v680, 7
      %v767 = vsel %vm761, %v765, %v766
      %v768 = vrot.slane %v681, 7
      %v769 = vrot.slane %v682, 7
      %v770 = vsel %vm761, %v768, %v769
      %v771 = vrot.slane %v683, 7
      %v772 = vrot.slane %v684, 7
      %v773 = vsel %vm761, %v771, %v772
      %v774 = vrot.slane %v685, 7
      %v775 = vrot.slane %v686, 7
      %v776 = vsel %vm761, %v774, %v775
      %v777 = vrot.slane %v687, 7
      %v778 = vrot.slane %v688, 7
      %v779 = vsel %vm761, %v777, %v778
      %v780 = vrot.slane %v689, 7
      %v781 = vrot.slane %v690, 7
      %v782 = vsel %vm761, %v780, %v781
      %v783 = vrot.slane %v691, 7
      %v784 = vrot.slane %v692, 7
      %v785 = vsel %vm761, %v783, %v784
      %v786 = vrot.slane %v693, 7
      %v787 = vrot.slane %v694, 7
      %v788 = vsel %vm761, %v786, %v787
      %v789 = vrot.slane %v695, 7
      %v790 = vrot.slane %v696, 7
      %v791 = vsel %vm761, %v789, %v790
      %v792 = vrot.slane %v697, 7
      %v793 = vrot.slane %v698, 7
      %v794 = vsel %vm761, %v792, %v793
      %v795 = vrot.slane %v699, 7
      %v796 = vrot.slane %v700, 7
      %v797 = vsel %vm761, %v795, %v796
      %v798 = vrot.slane %v701, 7
      %v799 = vrot.slane %v702, 7
      %v800 = vsel %vm761, %v798, %v799
      %v801 = vrot.slane %v703, 7
      %v802 = vrot.slane %v704, 7
      %v803 = vsel %vm761, %v801, %v802
      %v804 = vrot.slane %v705, 7
      %v805 = vrot.slane %v706, 7
      %v806 = vsel %vm761, %v804, %v805
      %v807 = vrot.slane %v707, 7
      %v808 = vrot.slane %v708, 7
      %v809 = vsel %vm761, %v807, %v808
      %v810 = vrot.slane %v709, 7
      %v811 = vrot.slane %v710, 7
      %v812 = vsel %vm761, %v810, %v811
      %v813 = vrot.slane %v723, 7
      %v814 = vrot.slane %v724, 7
      %v815 = vsel %vm761, %v813, %v814
      %v870 = vsel %vm761, 0.0, %v762
      %v871 = vsel %vm761, 0.0, %v765
      %v872 = vsel %vm761, 0.0, %v768
      %v873 = vsel %vm761, 0.0, %v771
      %v874 = vsel %vm761, 0.0, %v774
      %v875 = vsel %vm761, 0.0, %v777
      %v876 = vsel %vm761, 0.0, %v780
      %v877 = vsel %vm761, 0.0, %v783
      %v878 = vsel %vm761, 0.0, %v786
      %v879 = vsel %vm761, 0.0, %v789
      %v880 = vsel %vm761, 0.0, %v792
      %v881 = vsel %vm761, 0.0, %v795
      %v882 = vsel %vm761, 0.0, %v798
      %v883 = vsel %vm761, 0.0, %v801
      %v884 = vsel %vm761, 0.0, %v804
      %v885 = vsel %vm761, 0.0, %v807
      %v886 = vsel %vm761, 0.0, %v810
      %v887 = vsel %vm761, 0.0, %v813
      %v888 = vsel %vm761, %v763, 0.0
      %v889 = vsel %vm761, %v766, 0.0
      %v890 = vsel %vm761, %v769, 0.0
      %v891 = vsel %vm761, %v772, 0.0
      %v892 = vsel %vm761, %v775, 0.0
      %v893 = vsel %vm761, %v778, 0.0
      %v894 = vsel %vm761, %v781, 0.0
      %v895 = vsel %vm761, %v784, 0.0
      %v896 = vsel %vm761, %v787, 0.0
      %v897 = vsel %vm761, %v790, 0.0
      %v898 = vsel %vm761, %v793, 0.0
      %v899 = vsel %vm761, %v796, 0.0
      %v900 = vsel %vm761, %v799, 0.0
      %v901 = vsel %vm761, %v802, 0.0
      %v902 = vsel %vm761, %v805, 0.0
      %v903 = vsel %vm761, %v808, 0.0
      %v904 = vsel %vm761, %v811, 0.0
      %v905 = vsel %vm761, %v814, 0.0
      %v906 = vpack.c.bf16 %v764, %v870
      %v907 = vpack.c.bf16 %v888, %v888
      %v908 = vpack.c.bf16 %v767, %v871
      %v909 = vpack.c.bf16 %v889, %v889
      %v910 = vpack.c.bf16 %v770, %v872
      %v911 = vpack.c.bf16 %v890, %v890
      %v912 = vpack.c.bf16 %v773, %v873
      %v913 = vpack.c.bf16 %v891, %v891
      %v914 = vpack.c.bf16 %v776, %v874
      %v915 = vpack.c.bf16 %v892, %v892
      %v916 = vpack.c.bf16 %v779, %v875
      %v917 = vpack.c.bf16 %v893, %v893
      %v918 = vpack.c.bf16 %v782, %v876
      %v919 = vpack.c.bf16 %v894, %v894
      %v920 = vpack.c.bf16 %v785, %v877
      %v921 = vpack.c.bf16 %v895, %v895
      %v922 = vpack.c.bf16 %v788, %v878
      %v923 = vpack.c.bf16 %v896, %v896
      %v924 = vpack.c.bf16 %v791, %v879
      %v925 = vpack.c.bf16 %v897, %v897
      %v926 = vpack.c.bf16 %v794, %v880
      %v927 = vpack.c.bf16 %v898, %v898
      %v928 = vpack.c.bf16 %v797, %v881
      %v929 = vpack.c.bf16 %v899, %v899
      %v930 = vpack.c.bf16 %v800, %v882
      %v931 = vpack.c.bf16 %v900, %v900
      %v932 = vpack.c.bf16 %v803, %v883
      %v933 = vpack.c.bf16 %v901, %v901
      %v934 = vpack.c.bf16 %v806, %v884
      %v935 = vpack.c.bf16 %v902, %v902
      %v936 = vpack.c.bf16 %v809, %v885
      %v937 = vpack.c.bf16 %v903, %v903
      %v938 = vpack.c.bf16 %v812, %v886
      %v939 = vpack.c.bf16 %v904, %v904
      %v940 = vpack.c.bf16 %v815, %v887
      %v941 = vpack.c.bf16 %v905, %v905
      %v942 = vld [vmem:[%s5] sm:$0xf]
      %v943 = vld [vmem:[%s5 + $0x4] sm:$0xf]
      %v944 = vld [vmem:[%s5 + $0x8] sm:$0xf]
      %v945 = vld [vmem:[%s5 + $0xc] sm:$0xf]
      %v946 = vld [vmem:[%s5 + $0x10] sm:$0xf]
      %v947 = vld [vmem:[%s5 + $0x14] sm:$0xf]
      %v948 = vld [vmem:[%s5 + $0x18] sm:$0xf]
      %v949 = vld [vmem:[%s5 + $0x1c] sm:$0xf]
      %v950 = vld [vmem:[%s5 + $0x20] sm:$0xf]
      %v951 = vld [vmem:[%s5 + $0x24] sm:$0xf]
      %v952 = vld [vmem:[%s5 + $0x28] sm:$0xf]
      %v953 = vld [vmem:[%s5 + $0x2c] sm:$0xf]
      %v954 = vld [vmem:[%s5 + $0x30] sm:$0xf]
      %v955 = vld [vmem:[%s5 + $0x34] sm:$0xf]
      %v956 = vld [vmem:[%s5 + $0x38] sm:$0xf]
      %v957 = vld [vmem:[%s5 + $0x3c] sm:$0xf]
      %vm958 = vsmask.f32 7424
      %v960 = vshrl.u32 %v906, 16
      %v962 = vshll.u32 %v906, 16
      %v964 = vrot.slane %v962, 1
      %v965 = vor.u32 %v960, %v964
      %v967 = vshll.u32 %v907, 16
      %v969 = vrot.slane %v967, 1
      %v970 = vsel %vm958, %v965, %v969
      %v972 = vshrl.u32 %v908, 16
      %v974 = vshll.u32 %v908, 16
      %v976 = vrot.slane %v974, 1
      %v977 = vor.u32 %v972, %v976
      %v979 = vshll.u32 %v909, 16
      %v981 = vrot.slane %v979, 1
      %v982 = vsel %vm958, %v977, %v981
      %v984 = vshrl.u32 %v910, 16
      %v986 = vshll.u32 %v910, 16
      %v988 = vrot.slane %v986, 1
      %v989 = vor.u32 %v984, %v988
      %v991 = vshll.u32 %v911, 16
      %v993 = vrot.slane %v991, 1
      %v994 = vsel %vm958, %v989, %v993
      %v996 = vshrl.u32 %v912, 16
      %v998 = vshll.u32 %v912, 16
      %v1000 = vrot.slane %v998, 1
      %v1001 = vor.u32 %v996, %v1000
      %v1003 = vshll.u32 %v913, 16
      %v1005 = vrot.slane %v1003, 1
      %v1006 = vsel %vm958, %v1001, %v1005
      %v1008 = vshrl.u32 %v914, 16
      %v1010 = vshll.u32 %v914, 16
      %v1012 = vrot.slane %v1010, 1
      %v1013 = vor.u32 %v1008, %v1012
      %v1015 = vshll.u32 %v915, 16
      %v1017 = vrot.slane %v1015, 1
      %v1018 = vsel %vm958, %v1013, %v1017
      %v1020 = vshrl.u32 %v916, 16
      %v1022 = vshll.u32 %v916, 16
      %v1024 = vrot.slane %v1022, 1
      %v1025 = vor.u32 %v1020, %v1024
      %v1027 = vshll.u32 %v917, 16
      %v1029 = vrot.slane %v1027, 1
      %v1030 = vsel %vm958, %v1025, %v1029
      %v1032 = vshrl.u32 %v918, 16
      %v1034 = vshll.u32 %v918, 16
      %v1036 = vrot.slane %v1034, 1
      %v1037 = vor.u32 %v1032, %v1036
      %v1039 = vshll.u32 %v919, 16
      %v1041 = vrot.slane %v1039, 1
      %v1042 = vsel %vm958, %v1037, %v1041
      %v1044 = vshrl.u32 %v920, 16
      %v1046 = vshll.u32 %v920, 16
      %v1048 = vrot.slane %v1046, 1
      %v1049 = vor.u32 %v1044, %v1048
      %v1051 = vshll.u32 %v921, 16
      %v1053 = vrot.slane %v1051, 1
      %v1054 = vsel %vm958, %v1049, %v1053
      %v1056 = vshrl.u32 %v922, 16
      %v1058 = vshll.u32 %v922, 16
      %v1060 = vrot.slane %v1058, 1
      %v1061 = vor.u32 %v1056, %v1060
      %v1063 = vshll.u32 %v923, 16
      %v1065 = vrot.slane %v1063, 1
      %v1066 = vsel %vm958, %v1061, %v1065
      %v1068 = vshrl.u32 %v924, 16
      %v1070 = vshll.u32 %v924, 16
      %v1072 = vrot.slane %v1070, 1
      %v1073 = vor.u32 %v1068, %v1072
      %v1075 = vshll.u32 %v925, 16
      %v1077 = vrot.slane %v1075, 1
      %v1078 = vsel %vm958, %v1073, %v1077
      %v1080 = vshrl.u32 %v926, 16
      %v1082 = vshll.u32 %v926, 16
      %v1084 = vrot.slane %v1082, 1
      %v1085 = vor.u32 %v1080, %v1084
      %v1087 = vshll.u32 %v927, 16
      %v1089 = vrot.slane %v1087, 1
      %v1090 = vsel %vm958, %v1085, %v1089
      %v1092 = vshrl.u32 %v928, 16
      %v1094 = vshll.u32 %v928, 16
      %v1096 = vrot.slane %v1094, 1
      %v1097 = vor.u32 %v1092, %v1096
      %v1099 = vshll.u32 %v929, 16
      %v1101 = vrot.slane %v1099, 1
      %v1102 = vsel %vm958, %v1097, %v1101
      %v1104 = vshrl.u32 %v930, 16
      %v1106 = vshll.u32 %v930, 16
      %v1108 = vrot.slane %v1106, 1
      %v1109 = vor.u32 %v1104, %v1108
      %v1111 = vshll.u32 %v931, 16
      %v1113 = vrot.slane %v1111, 1
      %v1114 = vsel %vm958, %v1109, %v1113
      %v1116 = vshrl.u32 %v932, 16
      %v1118 = vshll.u32 %v932, 16
      %v1120 = vrot.slane %v1118, 1
      %v1121 = vor.u32 %v1116, %v1120
      %v1123 = vshll.u32 %v933, 16
      %v1125 = vrot.slane %v1123, 1
      %v1126 = vsel %vm958, %v1121, %v1125
      %v1128 = vshrl.u32 %v934, 16
      %v1130 = vshll.u32 %v934, 16
      %v1132 = vrot.slane %v1130, 1
      %v1133 = vor.u32 %v1128, %v1132
      %v1135 = vshll.u32 %v935, 16
      %v1137 = vrot.slane %v1135, 1
      %v1138 = vsel %vm958, %v1133, %v1137
      %v1140 = vshrl.u32 %v936, 16
      %v1142 = vshll.u32 %v936, 16
      %v1144 = vrot.slane %v1142, 1
      %v1145 = vor.u32 %v1140, %v1144
      %v1147 = vshll.u32 %v937, 16
      %v1149 = vrot.slane %v1147, 1
      %v1150 = vsel %vm958, %v1145, %v1149
      %s1167 = scalar_lea.vmem %s5, 64
      %v1168 = vld [vmem:[%s1167] sm:$0xf]
      %v1169 = vld [vmem:[%s1167 + $0x4] sm:$0xf]
      %v1170 = vld [vmem:[%s1167 + $0x8] sm:$0xf]
      %v1171 = vld [vmem:[%s1167 + $0xc] sm:$0xf]
      %v1172 = vld [vmem:[%s1167 + $0x10] sm:$0xf]
      %v1173 = vld [vmem:[%s1167 + $0x14] sm:$0xf]
      %v1174 = vld [vmem:[%s1167 + $0x18] sm:$0xf]
      %v1175 = vld [vmem:[%s1167 + $0x1c] sm:$0xf]
      %v1176 = vld [vmem:[%s1167 + $0x20] sm:$0xf]
      %v1177 = vld [vmem:[%s1167 + $0x24] sm:$0xf]
      %v1178 = vld [vmem:[%s1167 + $0x28] sm:$0xf]
      %v1179 = vld [vmem:[%s1167 + $0x2c] sm:$0xf]
      %v1180 = vld [vmem:[%s1167 + $0x30] sm:$0xf]
      %v1181 = vld [vmem:[%s1167 + $0x34] sm:$0xf]
      %v1182 = vld [vmem:[%s1167 + $0x38] sm:$0xf]
      %v1183 = vld [vmem:[%s1167 + $0x3c] sm:$0xf]
      %v1200 = vunpack.c.l.b16 %v1168
      %v1201 = vunpack.c.l.b16 %v1169
      %v1202 = vunpack.c.l.b16 %v1170
      %v1203 = vunpack.c.l.b16 %v1171
      %v1204 = vunpack.c.l.b16 %v1172
      %v1205 = vunpack.c.l.b16 %v1173
      %v1206 = vunpack.c.l.b16 %v1174
      %v1207 = vunpack.c.l.b16 %v1175
      %v1208 = vunpack.c.l.b16 %v1176
      %v1209 = vunpack.c.l.b16 %v1177
      %v1210 = vunpack.c.l.b16 %v1178
      %v1211 = vunpack.c.l.b16 %v1179
      %v1212 = vunpack.c.l.b16 %v1180
      %v1213 = vunpack.c.l.b16 %v1181
      %v1214 = vunpack.c.l.b16 %v1182
      %v1215 = vunpack.c.l.b16 %v1183
      %v1216 = vpack.c.b16 %v1201, %v1200
      %v1217 = vpack.c.b16 %v1203, %v1202
      %v1218 = vpack.c.b16 %v1205, %v1204
      %v1219 = vpack.c.b16 %v1207, %v1206
      %v1220 = vpack.c.b16 %v1209, %v1208
      %v1221 = vpack.c.b16 %v1211, %v1210
      %v1222 = vpack.c.b16 %v1213, %v1212
      %v1223 = vpack.c.b16 %v1215, %v1214
      %1232 = vmatprep.subr.bf16.mxu0 0
      %1233 = vmatpush1.bf16.msra.mxu0 %v1223
      %1234 = vmatprep.subr.bf16.mxu0 0
      %1235 = vmatpush1.bf16.msra.mxu0 %v1222
      %1236 = vmatprep.subr.bf16.mxu0 0
      %1237 = vmatpush1.bf16.msra.mxu0 %v1221
      %1238 = vmatprep.subr.bf16.mxu0 0
      %1239 = vmatpush1.bf16.msra.mxu0 %v1220
      %1240 = vmatprep.subr.bf16.mxu0 0
      %1241 = vmatpush1.bf16.msra.mxu0 %v1219
      %1242 = vmatprep.subr.bf16.mxu0 0
      %1243 = vmatpush1.bf16.msra.mxu0 %v1218
      %1244 = vmatprep.subr.bf16.mxu0 0
      %1245 = vmatpush1.bf16.msra.mxu0 %v1217
      %1246 = vmatprep.subr.bf16.mxu0 0
      %1247 = vmatpush1.bf16.msra.mxu0 %v1216
      %1248 = vmatprep.subr.bf16.mxu0 0
      %1249 = vmatpush2.bf16.msra.mxu0 0
      %1250 = vmatprep.subr.bf16.mxu0 0
      %1251 = vmatpush2.bf16.msra.mxu0 0
      %1252 = vmatprep.subr.bf16.mxu0 0
      %1253 = vmatpush2.bf16.msra.mxu0 0
      %1254 = vmatprep.subr.bf16.mxu0 0
      %1255 = vmatpush2.bf16.msra.mxu0 0
      %1256 = vmatprep.subr.bf16.mxu0 0
      %1257 = vmatpush2.bf16.msra.mxu0 0
      %1258 = vmatprep.subr.bf16.mxu0 0
      %1259 = vmatpush2.bf16.msra.mxu0 0
      %1260 = vmatprep.subr.bf16.mxu0 0
      %1261 = vmatpush2.bf16.msra.mxu0 0
      %1262 = vmatprep.subr.bf16.mxu0 0
      %1263 = vmatpush2.bf16.msra.mxu0 0
      %1264 = vmatprep.mubr.bf16.mxu0 0
      %1265 = vmatmul.mubr.bf16.gmra.mxu0 %v970
      %v1266 = vpop.f32.mrf.mxu0
      %v1267 = vadd.f32 0.0, %v1266
      %v1268 = vpop.f32.mrf.mxu0
      %v1269 = vpop.f32.mrf.mxu0
      %v1270 = vadd.f32 0.0, %v1269
      %v1271 = vpop.f32.mrf.mxu0
      %1272 = vmatprep.mubr.bf16.mxu0 0
      %1273 = vmatmul.mubr.bf16.gmra.mxu0 %v982
      %v1274 = vpop.f32.mrf.mxu0
      %v1275 = vadd.f32 0.0, %v1274
      %v1276 = vpop.f32.mrf.mxu0
      %v1277 = vpop.f32.mrf.mxu0
      %v1278 = vadd.f32 0.0, %v1277
      %v1279 = vpop.f32.mrf.mxu0
      %1280 = vmatprep.mubr.bf16.mxu0 0
      %1281 = vmatmul.mubr.bf16.gmra.mxu0 %v994
      %v1282 = vpop.f32.mrf.mxu0
      %v1283 = vadd.f32 0.0, %v1282
      %v1284 = vpop.f32.mrf.mxu0
      %v1285 = vpop.f32.mrf.mxu0
      %v1286 = vadd.f32 0.0, %v1285
      %v1287 = vpop.f32.mrf.mxu0
      %1288 = vmatprep.mubr.bf16.mxu0 0
      %1289 = vmatmul.mubr.bf16.gmra.mxu0 %v1006
      %v1290 = vpop.f32.mrf.mxu0
      %v1291 = vadd.f32 0.0, %v1290
      %v1292 = vpop.f32.mrf.mxu0
      %v1293 = vpop.f32.mrf.mxu0
      %v1294 = vadd.f32 0.0, %v1293
      %v1295 = vpop.f32.mrf.mxu0
      %1296 = vmatprep.mubr.bf16.mxu0 0
      %1297 = vmatmul.mubr.bf16.gmra.mxu0 %v1018
      %v1298 = vpop.f32.mrf.mxu0
      %v1299 = vadd.f32 0.0, %v1298
      %v1300 = vpop.f32.mrf.mxu0
      %v1301 = vpop.f32.mrf.mxu0
      %v1302 = vadd.f32 0.0, %v1301
      %v1303 = vpop.f32.mrf.mxu0
      %1304 = vmatprep.mubr.bf16.mxu0 0
      %1305 = vmatmul.mubr.bf16.gmra.mxu0 %v1030
      %v1306 = vpop.f32.mrf.mxu0
      %v1307 = vadd.f32 0.0, %v1306
      %v1308 = vpop.f32.mrf.mxu0
      %v1309 = vpop.f32.mrf.mxu0
      %v1310 = vadd.f32 0.0, %v1309
      %v1311 = vpop.f32.mrf.mxu0
      %1312 = vmatprep.mubr.bf16.mxu0 0
      %1313 = vmatmul.mubr.bf16.gmra.mxu0 %v1042
      %v1314 = vpop.f32.mrf.mxu0
      %v1315 = vadd.f32 0.0, %v1314
      %v1316 = vpop.f32.mrf.mxu0
      %v1317 = vpop.f32.mrf.mxu0
      %v1318 = vadd.f32 0.0, %v1317
      %v1319 = vpop.f32.mrf.mxu0
      %1320 = vmatprep.mubr.bf16.mxu0 0
      %1321 = vmatmul.mubr.bf16.gmra.mxu0 %v1054
      %v1322 = vpop.f32.mrf.mxu0
      %v1323 = vadd.f32 0.0, %v1322
      %v1324 = vpop.f32.mrf.mxu0
      %v1325 = vpop.f32.mrf.mxu0
      %v1326 = vadd.f32 0.0, %v1325
      %v1327 = vpop.f32.mrf.mxu0
      %1328 = vmatprep.mubr.bf16.mxu0 0
      %1329 = vmatmul.mubr.bf16.gmra.mxu0 %v1066
      %v1330 = vpop.f32.mrf.mxu0
      %v1331 = vadd.f32 0.0, %v1330
      %v1332 = vpop.f32.mrf.mxu0
      %v1333 = vpop.f32.mrf.mxu0
      %v1334 = vadd.f32 0.0, %v1333
      %v1335 = vpop.f32.mrf.mxu0
      %1336 = vmatprep.mubr.bf16.mxu0 0
      %1337 = vmatmul.mubr.bf16.gmra.mxu0 %v1078
      %v1338 = vpop.f32.mrf.mxu0
      %v1339 = vadd.f32 0.0, %v1338
      %v1340 = vpop.f32.mrf.mxu0
      %v1341 = vpop.f32.mrf.mxu0
      %v1342 = vadd.f32 0.0, %v1341
      %v1343 = vpop.f32.mrf.mxu0
      %1344 = vmatprep.mubr.bf16.mxu0 0
      %1345 = vmatmul.mubr.bf16.gmra.mxu0 %v1090
      %v1346 = vpop.f32.mrf.mxu0
      %v1347 = vadd.f32 0.0, %v1346
      %v1348 = vpop.f32.mrf.mxu0
      %v1349 = vpop.f32.mrf.mxu0
      %v1350 = vadd.f32 0.0, %v1349
      %v1351 = vpop.f32.mrf.mxu0
      %1352 = vmatprep.mubr.bf16.mxu0 0
      %1353 = vmatmul.mubr.bf16.gmra.mxu0 %v1102
      %v1354 = vpop.f32.mrf.mxu0
      %v1355 = vadd.f32 0.0, %v1354
      %v1356 = vpop.f32.mrf.mxu0
      %v1357 = vpop.f32.mrf.mxu0
      %v1358 = vadd.f32 0.0, %v1357
      %v1359 = vpop.f32.mrf.mxu0
      %1360 = vmatprep.mubr.bf16.mxu0 0
      %1361 = vmatmul.mubr.bf16.gmra.mxu0 %v1114
      %v1362 = vpop.f32.mrf.mxu0
      %v1363 = vadd.f32 0.0, %v1362
      %v1364 = vpop.f32.mrf.mxu0
      %v1365 = vpop.f32.mrf.mxu0
      %v1366 = vadd.f32 0.0, %v1365
      %v1367 = vpop.f32.mrf.mxu0
      %1368 = vmatprep.mubr.bf16.mxu0 0
      %1369 = vmatmul.mubr.bf16.gmra.mxu0 %v1126
      %v1370 = vpop.f32.mrf.mxu0
      %v1371 = vadd.f32 0.0, %v1370
      %v1372 = vpop.f32.mrf.mxu0
      %v1373 = vpop.f32.mrf.mxu0
      %v1374 = vadd.f32 0.0, %v1373
      %v1375 = vpop.f32.mrf.mxu0
      %1376 = vmatprep.mubr.bf16.mxu0 0
      %1377 = vmatmul.mubr.bf16.gmra.mxu0 %v1138
      %v1378 = vpop.f32.mrf.mxu0
      %v1379 = vadd.f32 0.0, %v1378
      %v1380 = vpop.f32.mrf.mxu0
      %v1381 = vpop.f32.mrf.mxu0
      %v1382 = vadd.f32 0.0, %v1381
      %v1383 = vpop.f32.mrf.mxu0
      %1384 = vmatprep.mubr.bf16.mxu0 0
      %1385 = vmatmul.mubr.bf16.gmra.mxu0 %v1150
      %v1386 = vpop.f32.mrf.mxu0
      %v1387 = vadd.f32 0.0, %v1386
      %v1388 = vpop.f32.mrf.mxu0
      %v1389 = vpop.f32.mrf.mxu0
      %v1390 = vadd.f32 0.0, %v1389
      %v1391 = vpop.f32.mrf.mxu0
      %1392 = vdwg.mxu0
      %v1409 = vunpack.c.l.b16 %v942
      %v1410 = vunpack.c.l.b16 %v943
      %v1411 = vunpack.c.l.b16 %v944
      %v1412 = vunpack.c.l.b16 %v945
      %v1413 = vunpack.c.l.b16 %v946
      %v1414 = vunpack.c.l.b16 %v947
      %v1415 = vunpack.c.l.b16 %v948
      %v1416 = vunpack.c.l.b16 %v949
      %v1417 = vunpack.c.l.b16 %v950
      %v1418 = vunpack.c.l.b16 %v951
      %v1419 = vunpack.c.l.b16 %v952
      %v1420 = vunpack.c.l.b16 %v953
      %v1421 = vunpack.c.l.b16 %v954
      %v1422 = vunpack.c.l.b16 %v955
      %v1423 = vunpack.c.l.b16 %v956
      %v1424 = vunpack.c.l.b16 %v957
      %v1425 = vpack.c.b16 %v1410, %v1409
      %v1426 = vpack.c.b16 %v1412, %v1411
      %v1427 = vpack.c.b16 %v1414, %v1413
      %v1428 = vpack.c.b16 %v1416, %v1415
      %v1429 = vpack.c.b16 %v1418, %v1417
      %v1430 = vpack.c.b16 %v1420, %v1419
      %v1431 = vpack.c.b16 %v1422, %v1421
      %v1432 = vpack.c.b16 %v1424, %v1423
      %1441 = vmatprep.subr.bf16.mxu0 0
      %1442 = vmatpush1.bf16.msra.mxu0 %v1432
      %1443 = vmatprep.subr.bf16.mxu0 0
      %1444 = vmatpush1.bf16.msra.mxu0 %v1431
      %1445 = vmatprep.subr.bf16.mxu0 0
      %1446 = vmatpush1.bf16.msra.mxu0 %v1430
      %1447 = vmatprep.subr.bf16.mxu0 0
      %1448 = vmatpush1.bf16.msra.mxu0 %v1429
      %1449 = vmatprep.subr.bf16.mxu0 0
      %1450 = vmatpush1.bf16.msra.mxu0 %v1428
      %1451 = vmatprep.subr.bf16.mxu0 0
      %1452 = vmatpush1.bf16.msra.mxu0 %v1427
      %1453 = vmatprep.subr.bf16.mxu0 0
      %1454 = vmatpush1.bf16.msra.mxu0 %v1426
      %1455 = vmatprep.subr.bf16.mxu0 0
      %1456 = vmatpush1.bf16.msra.mxu0 %v1425
      %1457 = vmatprep.subr.bf16.mxu0 0
      %1458 = vmatpush2.bf16.msra.mxu0 0
      %1459 = vmatprep.subr.bf16.mxu0 0
      %1460 = vmatpush2.bf16.msra.mxu0 0
      %1461 = vmatprep.subr.bf16.mxu0 0
      %1462 = vmatpush2.bf16.msra.mxu0 0
      %1463 = vmatprep.subr.bf16.mxu0 0
      %1464 = vmatpush2.bf16.msra.mxu0 0
      %1465 = vmatprep.subr.bf16.mxu0 0
      %1466 = vmatpush2.bf16.msra.mxu0 0
      %1467 = vmatprep.subr.bf16.mxu0 0
      %1468 = vmatpush2.bf16.msra.mxu0 0
      %1469 = vmatprep.subr.bf16.mxu0 0
      %1470 = vmatpush2.bf16.msra.mxu0 0
      %1471 = vmatprep.subr.bf16.mxu0 0
      %1472 = vmatpush2.bf16.msra.mxu0 0
      %1473 = vmatprep.mubr.bf16.mxu0 0
      %1474 = vmatmul.mubr.bf16.gmra.mxu0 %v906
      %v1475 = vpop.f32.mrf.mxu0
      %v1476 = vadd.f32 %v1267, %v1475
      %v1477 = vpop.f32.mrf.mxu0
      %v1478 = vpop.f32.mrf.mxu0
      %v1479 = vadd.f32 %v1270, %v1478
      %v1480 = vpop.f32.mrf.mxu0
      %1481 = vmatprep.mubr.bf16.mxu0 0
      %1482 = vmatmul.mubr.bf16.gmra.mxu0 %v908
      %v1483 = vpop.f32.mrf.mxu0
      %v1484 = vadd.f32 %v1275, %v1483
      %v1485 = vpop.f32.mrf.mxu0
      %v1486 = vpop.f32.mrf.mxu0
      %v1487 = vadd.f32 %v1278, %v1486
      %v1488 = vpop.f32.mrf.mxu0
      %1489 = vmatprep.mubr.bf16.mxu0 0
      %1490 = vmatmul.mubr.bf16.gmra.mxu0 %v910
      %v1491 = vpop.f32.mrf.mxu0
      %v1492 = vadd.f32 %v1283, %v1491
      %v1493 = vpop.f32.mrf.mxu0
      %v1494 = vpop.f32.mrf.mxu0
      %v1495 = vadd.f32 %v1286, %v1494
      %v1496 = vpop.f32.mrf.mxu0
      %1497 = vmatprep.mubr.bf16.mxu0 0
      %1498 = vmatmul.mubr.bf16.gmra.mxu0 %v912
      %v1499 = vpop.f32.mrf.mxu0
      %v1500 = vadd.f32 %v1291, %v1499
      %v1501 = vpop.f32.mrf.mxu0
      %v1502 = vpop.f32.mrf.mxu0
      %v1503 = vadd.f32 %v1294, %v1502
      %v1504 = vpop.f32.mrf.mxu0
      %1505 = vmatprep.mubr.bf16.mxu0 0
      %1506 = vmatmul.mubr.bf16.gmra.mxu0 %v914
      %v1507 = vpop.f32.mrf.mxu0
      %v1508 = vadd.f32 %v1299, %v1507
      %v1509 = vpop.f32.mrf.mxu0
      %v1510 = vpop.f32.mrf.mxu0
      %v1511 = vadd.f32 %v1302, %v1510
      %v1512 = vpop.f32.mrf.mxu0
      %1513 = vmatprep.mubr.bf16.mxu0 0
      %1514 = vmatmul.mubr.bf16.gmra.mxu0 %v916
      %v1515 = vpop.f32.mrf.mxu0
      %v1516 = vadd.f32 %v1307, %v1515
      %v1517 = vpop.f32.mrf.mxu0
      %v1518 = vpop.f32.mrf.mxu0
      %v1519 = vadd.f32 %v1310, %v1518
      %v1520 = vpop.f32.mrf.mxu0
      %1521 = vmatprep.mubr.bf16.mxu0 0
      %1522 = vmatmul.mubr.bf16.gmra.mxu0 %v918
      %v1523 = vpop.f32.mrf.mxu0
      %v1524 = vadd.f32 %v1315, %v1523
      %v1525 = vpop.f32.mrf.mxu0
      %v1526 = vpop.f32.mrf.mxu0
      %v1527 = vadd.f32 %v1318, %v1526
      %v1528 = vpop.f32.mrf.mxu0
      %1529 = vmatprep.mubr.bf16.mxu0 0
      %1530 = vmatmul.mubr.bf16.gmra.mxu0 %v920
      %v1531 = vpop.f32.mrf.mxu0
      %v1532 = vadd.f32 %v1323, %v1531
      %v1533 = vpop.f32.mrf.mxu0
      %v1534 = vpop.f32.mrf.mxu0
      %v1535 = vadd.f32 %v1326, %v1534
      %v1536 = vpop.f32.mrf.mxu0
      %1537 = vmatprep.mubr.bf16.mxu0 0
      %1538 = vmatmul.mubr.bf16.gmra.mxu0 %v922
      %v1539 = vpop.f32.mrf.mxu0
      %v1540 = vadd.f32 %v1331, %v1539
      %v1541 = vpop.f32.mrf.mxu0
      %v1542 = vpop.f32.mrf.mxu0
      %v1543 = vadd.f32 %v1334, %v1542
      %v1544 = vpop.f32.mrf.mxu0
      %1545 = vmatprep.mubr.bf16.mxu0 0
      %1546 = vmatmul.mubr.bf16.gmra.mxu0 %v924
      %v1547 = vpop.f32.mrf.mxu0
      %v1548 = vadd.f32 %v1339, %v1547
      %v1549 = vpop.f32.mrf.mxu0
      %v1550 = vpop.f32.mrf.mxu0
      %v1551 = vadd.f32 %v1342, %v1550
      %v1552 = vpop.f32.mrf.mxu0
      %1553 = vmatprep.mubr.bf16.mxu0 0
      %1554 = vmatmul.mubr.bf16.gmra.mxu0 %v926
      %v1555 = vpop.f32.mrf.mxu0
      %v1556 = vadd.f32 %v1347, %v1555
      %v1557 = vpop.f32.mrf.mxu0
      %v1558 = vpop.f32.mrf.mxu0
      %v1559 = vadd.f32 %v1350, %v1558
      %v1560 = vpop.f32.mrf.mxu0
      %1561 = vmatprep.mubr.bf16.mxu0 0
      %1562 = vmatmul.mubr.bf16.gmra.mxu0 %v928
      %v1563 = vpop.f32.mrf.mxu0
      %v1564 = vadd.f32 %v1355, %v1563
      %v1565 = vpop.f32.mrf.mxu0
      %v1566 = vpop.f32.mrf.mxu0
      %v1567 = vadd.f32 %v1358, %v1566
      %v1568 = vpop.f32.mrf.mxu0
      %1569 = vmatprep.mubr.bf16.mxu0 0
      %1570 = vmatmul.mubr.bf16.gmra.mxu0 %v930
      %v1571 = vpop.f32.mrf.mxu0
      %v1572 = vadd.f32 %v1363, %v1571
      %v1573 = vpop.f32.mrf.mxu0
      %v1574 = vpop.f32.mrf.mxu0
      %v1575 = vadd.f32 %v1366, %v1574
      %v1576 = vpop.f32.mrf.mxu0
      %1577 = vmatprep.mubr.bf16.mxu0 0
      %1578 = vmatmul.mubr.bf16.gmra.mxu0 %v932
      %v1579 = vpop.f32.mrf.mxu0
      %v1580 = vadd.f32 %v1371, %v1579
      %v1581 = vpop.f32.mrf.mxu0
      %v1582 = vpop.f32.mrf.mxu0
      %v1583 = vadd.f32 %v1374, %v1582
      %v1584 = vpop.f32.mrf.mxu0
      %1585 = vmatprep.mubr.bf16.mxu0 0
      %1586 = vmatmul.mubr.bf16.gmra.mxu0 %v934
      %v1587 = vpop.f32.mrf.mxu0
      %v1588 = vadd.f32 %v1379, %v1587
      %v1589 = vpop.f32.mrf.mxu0
      %v1590 = vpop.f32.mrf.mxu0
      %v1591 = vadd.f32 %v1382, %v1590
      %v1592 = vpop.f32.mrf.mxu0
      %1593 = vmatprep.mubr.bf16.mxu0 0
      %1594 = vmatmul.mubr.bf16.gmra.mxu0 %v936
      %v1595 = vpop.f32.mrf.mxu0
      %v1596 = vadd.f32 %v1387, %v1595
      %v1597 = vpop.f32.mrf.mxu0
      %v1598 = vpop.f32.mrf.mxu0
      %v1599 = vadd.f32 %v1390, %v1598
      %v1600 = vpop.f32.mrf.mxu0
      %1601 = vdwg.mxu0
      %vm1634 = vcmask 1046528
      %v1635 = vrot.slane %v906, 1
      %v1636 = vrot.slane %v907, 1
      %v1637 = vsel %vm1634, %v1635, %v1636
      %v1638 = vrot.slane %v908, 1
      %v1639 = vrot.slane %v909, 1
      %v1640 = vsel %vm1634, %v1638, %v1639
      %v1641 = vrot.slane %v910, 1
      %v1642 = vrot.slane %v911, 1
      %v1643 = vsel %vm1634, %v1641, %v1642
      %v1644 = vrot.slane %v912, 1
      %v1645 = vrot.slane %v913, 1
      %v1646 = vsel %vm1634, %v1644, %v1645
      %v1647 = vrot.slane %v914, 1
      %v1648 = vrot.slane %v915, 1
      %v1649 = vsel %vm1634, %v1647, %v1648
      %v1650 = vrot.slane %v916, 1
      %v1651 = vrot.slane %v917, 1
      %v1652 = vsel %vm1634, %v1650, %v1651
      %v1653 = vrot.slane %v918, 1
      %v1654 = vrot.slane %v919, 1
      %v1655 = vsel %vm1634, %v1653, %v1654
      %v1656 = vrot.slane %v920, 1
      %v1657 = vrot.slane %v921, 1
      %v1658 = vsel %vm1634, %v1656, %v1657
      %v1659 = vrot.slane %v922, 1
      %v1660 = vrot.slane %v923, 1
      %v1661 = vsel %vm1634, %v1659, %v1660
      %v1662 = vrot.slane %v924, 1
      %v1663 = vrot.slane %v925, 1
      %v1664 = vsel %vm1634, %v1662, %v1663
      %v1665 = vrot.slane %v926, 1
      %v1666 = vrot.slane %v927, 1
      %v1667 = vsel %vm1634, %v1665, %v1666
      %v1668 = vrot.slane %v928, 1
      %v1669 = vrot.slane %v929, 1
      %v1670 = vsel %vm1634, %v1668, %v1669
      %v1671 = vrot.slane %v930, 1
      %v1672 = vrot.slane %v931, 1
      %v1673 = vsel %vm1634, %v1671, %v1672
      %v1674 = vrot.slane %v932, 1
      %v1675 = vrot.slane %v933, 1
      %v1676 = vsel %vm1634, %v1674, %v1675
      %v1677 = vrot.slane %v934, 1
      %v1678 = vrot.slane %v935, 1
      %v1679 = vsel %vm1634, %v1677, %v1678
      %v1680 = vrot.slane %v936, 1
      %v1681 = vrot.slane %v937, 1
      %v1682 = vsel %vm1634, %v1680, %v1681
      %s1699 = scalar_lea.vmem %s5, 128
      %v1700 = vld [vmem:[%s1699] sm:$0xf]
      %v1701 = vld [vmem:[%s1699 + $0x4] sm:$0xf]
      %v1702 = vld [vmem:[%s1699 + $0x8] sm:$0xf]
      %v1703 = vld [vmem:[%s1699 + $0xc] sm:$0xf]
      %v1704 = vld [vmem:[%s1699 + $0x10] sm:$0xf]
      %v1705 = vld [vmem:[%s1699 + $0x14] sm:$0xf]
      %v1706 = vld [vmem:[%s1699 + $0x18] sm:$0xf]
      %v1707 = vld [vmem:[%s1699 + $0x1c] sm:$0xf]
      %v1708 = vld [vmem:[%s1699 + $0x20] sm:$0xf]
      %v1709 = vld [vmem:[%s1699 + $0x24] sm:$0xf]
      %v1710 = vld [vmem:[%s1699 + $0x28] sm:$0xf]
      %v1711 = vld [vmem:[%s1699 + $0x2c] sm:$0xf]
      %v1712 = vld [vmem:[%s1699 + $0x30] sm:$0xf]
      %v1713 = vld [vmem:[%s1699 + $0x34] sm:$0xf]
      %v1714 = vld [vmem:[%s1699 + $0x38] sm:$0xf]
      %v1715 = vld [vmem:[%s1699 + $0x3c] sm:$0xf]
      %v1732 = vunpack.c.l.b16 %v1700
      %v1733 = vunpack.c.l.b16 %v1701
      %v1734 = vunpack.c.l.b16 %v1702
      %v1735 = vunpack.c.l.b16 %v1703
      %v1736 = vunpack.c.l.b16 %v1704
      %v1737 = vunpack.c.l.b16 %v1705
      %v1738 = vunpack.c.l.b16 %v1706
      %v1739 = vunpack.c.l.b16 %v1707
      %v1740 = vunpack.c.l.b16 %v1708
      %v1741 = vunpack.c.l.b16 %v1709
      %v1742 = vunpack.c.l.b16 %v1710
      %v1743 = vunpack.c.l.b16 %v1711
      %v1744 = vunpack.c.l.b16 %v1712
      %v1745 = vunpack.c.l.b16 %v1713
      %v1746 = vunpack.c.l.b16 %v1714
      %v1747 = vunpack.c.l.b16 %v1715
      %v1748 = vpack.c.b16 %v1733, %v1732
      %v1749 = vpack.c.b16 %v1735, %v1734
      %v1750 = vpack.c.b16 %v1737, %v1736
      %v1751 = vpack.c.b16 %v1739, %v1738
      %v1752 = vpack.c.b16 %v1741, %v1740
      %v1753 = vpack.c.b16 %v1743, %v1742
      %v1754 = vpack.c.b16 %v1745, %v1744
      %v1755 = vpack.c.b16 %v1747, %v1746
      %1764 = vmatprep.subr.bf16.mxu0 0
      %1765 = vmatpush1.bf16.msra.mxu0 %v1755
      %1766 = vmatprep.subr.bf16.mxu0 0
      %1767 = vmatpush1.bf16.msra.mxu0 %v1754
      %1768 = vmatprep.subr.bf16.mxu0 0
      %1769 = vmatpush1.bf16.msra.mxu0 %v1753
      %1770 = vmatprep.subr.bf16.mxu0 0
      %1771 = vmatpush1.bf16.msra.mxu0 %v1752
      %1772 = vmatprep.subr.bf16.mxu0 0
      %1773 = vmatpush1.bf16.msra.mxu0 %v1751
      %1774 = vmatprep.subr.bf16.mxu0 0
      %1775 = vmatpush1.bf16.msra.mxu0 %v1750
      %1776 = vmatprep.subr.bf16.mxu0 0
      %1777 = vmatpush1.bf16.msra.mxu0 %v1749
      %1778 = vmatprep.subr.bf16.mxu0 0
      %1779 = vmatpush1.bf16.msra.mxu0 %v1748
      %1780 = vmatprep.subr.bf16.mxu0 0
      %1781 = vmatpush2.bf16.msra.mxu0 0
      %1782 = vmatprep.subr.bf16.mxu0 0
      %1783 = vmatpush2.bf16.msra.mxu0 0
      %1784 = vmatprep.subr.bf16.mxu0 0
      %1785 = vmatpush2.bf16.msra.mxu0 0
      %1786 = vmatprep.subr.bf16.mxu0 0
      %1787 = vmatpush2.bf16.msra.mxu0 0
      %1788 = vmatprep.subr.bf16.mxu0 0
      %1789 = vmatpush2.bf16.msra.mxu0 0
      %1790 = vmatprep.subr.bf16.mxu0 0
      %1791 = vmatpush2.bf16.msra.mxu0 0
      %1792 = vmatprep.subr.bf16.mxu0 0
      %1793 = vmatpush2.bf16.msra.mxu0 0
      %1794 = vmatprep.subr.bf16.mxu0 0
      %1795 = vmatpush2.bf16.msra.mxu0 0
      %1796 = vmatprep.mubr.bf16.mxu0 0
      %1797 = vmatmul.mubr.bf16.gmra.mxu0 %v1637
      %v1798 = vpop.f32.mrf.mxu0
      %v1799 = vadd.f32 0.0, %v1798
      %v1800 = vpop.f32.mrf.mxu0
      %v1801 = vpop.f32.mrf.mxu0
      %v1802 = vadd.f32 0.0, %v1801
      %v1803 = vpop.f32.mrf.mxu0
      %1804 = vmatprep.mubr.bf16.mxu0 0
      %1805 = vmatmul.mubr.bf16.gmra.mxu0 %v1640
      %v1806 = vpop.f32.mrf.mxu0
      %v1807 = vadd.f32 0.0, %v1806
      %v1808 = vpop.f32.mrf.mxu0
      %v1809 = vpop.f32.mrf.mxu0
      %v1810 = vadd.f32 0.0, %v1809
      %v1811 = vpop.f32.mrf.mxu0
      %1812 = vmatprep.mubr.bf16.mxu0 0
      %1813 = vmatmul.mubr.bf16.gmra.mxu0 %v1643
      %v1814 = vpop.f32.mrf.mxu0
      %v1815 = vadd.f32 0.0, %v1814
      %v1816 = vpop.f32.mrf.mxu0
      %v1817 = vpop.f32.mrf.mxu0
      %v1818 = vadd.f32 0.0, %v1817
      %v1819 = vpop.f32.mrf.mxu0
      %1820 = vmatprep.mubr.bf16.mxu0 0
      %1821 = vmatmul.mubr.bf16.gmra.mxu0 %v1646
      %v1822 = vpop.f32.mrf.mxu0
      %v1823 = vadd.f32 0.0, %v1822
      %v1824 = vpop.f32.mrf.mxu0
      %v1825 = vpop.f32.mrf.mxu0
      %v1826 = vadd.f32 0.0, %v1825
      %v1827 = vpop.f32.mrf.mxu0
      %1828 = vmatprep.mubr.bf16.mxu0 0
      %1829 = vmatmul.mubr.bf16.gmra.mxu0 %v1649
      %v1830 = vpop.f32.mrf.mxu0
      %v1831 = vadd.f32 0.0, %v1830
      %v1832 = vpop.f32.mrf.mxu0
      %v1833 = vpop.f32.mrf.mxu0
      %v1834 = vadd.f32 0.0, %v1833
      %v1835 = vpop.f32.mrf.mxu0
      %1836 = vmatprep.mubr.bf16.mxu0 0
      %1837 = vmatmul.mubr.bf16.gmra.mxu0 %v1652
      %v1838 = vpop.f32.mrf.mxu0
      %v1839 = vadd.f32 0.0, %v1838
      %v1840 = vpop.f32.mrf.mxu0
      %v1841 = vpop.f32.mrf.mxu0
      %v1842 = vadd.f32 0.0, %v1841
      %v1843 = vpop.f32.mrf.mxu0
      %1844 = vmatprep.mubr.bf16.mxu0 0
      %1845 = vmatmul.mubr.bf16.gmra.mxu0 %v1655
      %v1846 = vpop.f32.mrf.mxu0
      %v1847 = vadd.f32 0.0, %v1846
      %v1848 = vpop.f32.mrf.mxu0
      %v1849 = vpop.f32.mrf.mxu0
      %v1850 = vadd.f32 0.0, %v1849
      %v1851 = vpop.f32.mrf.mxu0
      %1852 = vmatprep.mubr.bf16.mxu0 0
      %1853 = vmatmul.mubr.bf16.gmra.mxu0 %v1658
      %v1854 = vpop.f32.mrf.mxu0
      %v1855 = vadd.f32 0.0, %v1854
      %v1856 = vpop.f32.mrf.mxu0
      %v1857 = vpop.f32.mrf.mxu0
      %v1858 = vadd.f32 0.0, %v1857
      %v1859 = vpop.f32.mrf.mxu0
      %1860 = vmatprep.mubr.bf16.mxu0 0
      %1861 = vmatmul.mubr.bf16.gmra.mxu0 %v1661
      %v1862 = vpop.f32.mrf.mxu0
      %v1863 = vadd.f32 0.0, %v1862
      %v1864 = vpop.f32.mrf.mxu0
      %v1865 = vpop.f32.mrf.mxu0
      %v1866 = vadd.f32 0.0, %v1865
      %v1867 = vpop.f32.mrf.mxu0
      %1868 = vmatprep.mubr.bf16.mxu0 0
      %1869 = vmatmul.mubr.bf16.gmra.mxu0 %v1664
      %v1870 = vpop.f32.mrf.mxu0
      %v1871 = vadd.f32 0.0, %v1870
      %v1872 = vpop.f32.mrf.mxu0
      %v1873 = vpop.f32.mrf.mxu0
      %v1874 = vadd.f32 0.0, %v1873
      %v1875 = vpop.f32.mrf.mxu0
      %1876 = vmatprep.mubr.bf16.mxu0 0
      %1877 = vmatmul.mubr.bf16.gmra.mxu0 %v1667
      %v1878 = vpop.f32.mrf.mxu0
      %v1879 = vadd.f32 0.0, %v1878
      %v1880 = vpop.f32.mrf.mxu0
      %v1881 = vpop.f32.mrf.mxu0
      %v1882 = vadd.f32 0.0, %v1881
      %v1883 = vpop.f32.mrf.mxu0
      %1884 = vmatprep.mubr.bf16.mxu0 0
      %1885 = vmatmul.mubr.bf16.gmra.mxu0 %v1670
      %v1886 = vpop.f32.mrf.mxu0
      %v1887 = vadd.f32 0.0, %v1886
      %v1888 = vpop.f32.mrf.mxu0
      %v1889 = vpop.f32.mrf.mxu0
      %v1890 = vadd.f32 0.0, %v1889
      %v1891 = vpop.f32.mrf.mxu0
      %1892 = vmatprep.mubr.bf16.mxu0 0
      %1893 = vmatmul.mubr.bf16.gmra.mxu0 %v1673
      %v1894 = vpop.f32.mrf.mxu0
      %v1895 = vadd.f32 0.0, %v1894
      %v1896 = vpop.f32.mrf.mxu0
      %v1897 = vpop.f32.mrf.mxu0
      %v1898 = vadd.f32 0.0, %v1897
      %v1899 = vpop.f32.mrf.mxu0
      %1900 = vmatprep.mubr.bf16.mxu0 0
      %1901 = vmatmul.mubr.bf16.gmra.mxu0 %v1676
      %v1902 = vpop.f32.mrf.mxu0
      %v1903 = vadd.f32 0.0, %v1902
      %v1904 = vpop.f32.mrf.mxu0
      %v1905 = vpop.f32.mrf.mxu0
      %v1906 = vadd.f32 0.0, %v1905
      %v1907 = vpop.f32.mrf.mxu0
      %1908 = vmatprep.mubr.bf16.mxu0 0
      %1909 = vmatmul.mubr.bf16.gmra.mxu0 %v1679
      %v1910 = vpop.f32.mrf.mxu0
      %v1911 = vadd.f32 0.0, %v1910
      %v1912 = vpop.f32.mrf.mxu0
      %v1913 = vpop.f32.mrf.mxu0
      %v1914 = vadd.f32 0.0, %v1913
      %v1915 = vpop.f32.mrf.mxu0
      %1916 = vmatprep.mubr.bf16.mxu0 0
      %1917 = vmatmul.mubr.bf16.gmra.mxu0 %v1682
      %v1918 = vpop.f32.mrf.mxu0
      %v1919 = vadd.f32 0.0, %v1918
      %v1920 = vpop.f32.mrf.mxu0
      %v1921 = vpop.f32.mrf.mxu0
      %v1922 = vadd.f32 0.0, %v1921
      %v1923 = vpop.f32.mrf.mxu0
      %1924 = vdwg.mxu0
      %v1925 = vadd.f32 %v1476, %v1799
      %v1926 = vadd.f32 %v1479, %v1802
      %v1927 = vadd.f32 %v1484, %v1807
      %v1928 = vadd.f32 %v1487, %v1810
      %v1929 = vadd.f32 %v1492, %v1815
      %v1930 = vadd.f32 %v1495, %v1818
      %v1931 = vadd.f32 %v1500, %v1823
      %v1932 = vadd.f32 %v1503, %v1826
      %v1933 = vadd.f32 %v1508, %v1831
      %v1934 = vadd.f32 %v1511, %v1834
      %v1935 = vadd.f32 %v1516, %v1839
      %v1936 = vadd.f32 %v1519, %v1842
      %v1937 = vadd.f32 %v1524, %v1847
      %v1938 = vadd.f32 %v1527, %v1850
      %v1939 = vadd.f32 %v1532, %v1855
      %v1940 = vadd.f32 %v1535, %v1858
      %v1941 = vadd.f32 %v1540, %v1863
      %v1942 = vadd.f32 %v1543, %v1866
      %v1943 = vadd.f32 %v1548, %v1871
      %v1944 = vadd.f32 %v1551, %v1874
      %v1945 = vadd.f32 %v1556, %v1879
      %v1946 = vadd.f32 %v1559, %v1882
      %v1947 = vadd.f32 %v1564, %v1887
      %v1948 = vadd.f32 %v1567, %v1890
      %v1949 = vadd.f32 %v1572, %v1895
      %v1950 = vadd.f32 %v1575, %v1898
      %v1951 = vadd.f32 %v1580, %v1903
      %v1952 = vadd.f32 %v1583, %v1906
      %v1953 = vadd.f32 %v1588, %v1911
      %v1954 = vadd.f32 %v1591, %v1914
      %v1955 = vadd.f32 %v1596, %v1919
      %v1956 = vadd.f32 %v1599, %v1922
      %s1957 = scalar_lea.vmem %s5, 192
      %v1958 = vld [vmem:[%s1957] sm:$0xf]
      %v1959 = vld [vmem:[%s1957 + $0x4] sm:$0xf]
      %v1960 = vld [vmem:[%s1957 + $0x8] sm:$0xf]
      %v1961 = vld [vmem:[%s1957 + $0xc] sm:$0xf]
      %v1962 = vld [vmem:[%s1957 + $0x10] sm:$0xf]
      %v1963 = vld [vmem:[%s1957 + $0x14] sm:$0xf]
      %v1964 = vld [vmem:[%s1957 + $0x18] sm:$0xf]
      %v1965 = vld [vmem:[%s1957 + $0x1c] sm:$0xf]
      %v1966 = vld [vmem:[%s1957 + $0x20] sm:$0xf]
      %v1967 = vld [vmem:[%s1957 + $0x24] sm:$0xf]
      %v1968 = vld [vmem:[%s1957 + $0x28] sm:$0xf]
      %v1969 = vld [vmem:[%s1957 + $0x2c] sm:$0xf]
      %v1970 = vld [vmem:[%s1957 + $0x30] sm:$0xf]
      %v1971 = vld [vmem:[%s1957 + $0x34] sm:$0xf]
      %v1972 = vld [vmem:[%s1957 + $0x38] sm:$0xf]
      %v1973 = vld [vmem:[%s1957 + $0x3c] sm:$0xf]
      %v1990 = vunpack.c.l.b16 %v1958
      %v1991 = vunpack.c.l.b16 %v1959
      %v1992 = vunpack.c.l.b16 %v1960
      %v1993 = vunpack.c.l.b16 %v1961
      %v1994 = vunpack.c.l.b16 %v1962
      %v1995 = vunpack.c.l.b16 %v1963
      %v1996 = vunpack.c.l.b16 %v1964
      %v1997 = vunpack.c.l.b16 %v1965
      %v1998 = vunpack.c.l.b16 %v1966
      %v1999 = vunpack.c.l.b16 %v1967
      %v2000 = vunpack.c.l.b16 %v1968
      %v2001 = vunpack.c.l.b16 %v1969
      %v2002 = vunpack.c.l.b16 %v1970
      %v2003 = vunpack.c.l.b16 %v1971
      %v2004 = vunpack.c.l.b16 %v1972
      %v2005 = vunpack.c.l.b16 %v1973
      %v2006 = vpack.c.b16 %v1991, %v1990
      %v2007 = vpack.c.b16 %v1993, %v1992
      %v2008 = vpack.c.b16 %v1995, %v1994
      %v2009 = vpack.c.b16 %v1997, %v1996
      %v2010 = vpack.c.b16 %v1999, %v1998
      %v2011 = vpack.c.b16 %v2001, %v2000
      %v2012 = vpack.c.b16 %v2003, %v2002
      %v2013 = vpack.c.b16 %v2005, %v2004
      %2022 = vmatprep.subr.bf16.mxu0 0
      %2023 = vmatpush1.bf16.msra.mxu0 %v2013
      %2024 = vmatprep.subr.bf16.mxu0 0
      %2025 = vmatpush1.bf16.msra.mxu0 %v2012
      %2026 = vmatprep.subr.bf16.mxu0 0
      %2027 = vmatpush1.bf16.msra.mxu0 %v2011
      %2028 = vmatprep.subr.bf16.mxu0 0
      %2029 = vmatpush1.bf16.msra.mxu0 %v2010
      %2030 = vmatprep.subr.bf16.mxu0 0
      %2031 = vmatpush1.bf16.msra.mxu0 %v2009
      %2032 = vmatprep.subr.bf16.mxu0 0
      %2033 = vmatpush1.bf16.msra.mxu0 %v2008
      %2034 = vmatprep.subr.bf16.mxu0 0
      %2035 = vmatpush1.bf16.msra.mxu0 %v2007
      %2036 = vmatprep.subr.bf16.mxu0 0
      %2037 = vmatpush1.bf16.msra.mxu0 %v2006
      %2038 = vmatprep.subr.bf16.mxu0 0
      %2039 = vmatpush2.bf16.msra.mxu0 0
      %2040 = vmatprep.subr.bf16.mxu0 0
      %2041 = vmatpush2.bf16.msra.mxu0 0
      %2042 = vmatprep.subr.bf16.mxu0 0
      %2043 = vmatpush2.bf16.msra.mxu0 0
      %2044 = vmatprep.subr.bf16.mxu0 0
      %2045 = vmatpush2.bf16.msra.mxu0 0
      %2046 = vmatprep.subr.bf16.mxu0 0
      %2047 = vmatpush2.bf16.msra.mxu0 0
      %2048 = vmatprep.subr.bf16.mxu0 0
      %2049 = vmatpush2.bf16.msra.mxu0 0
      %2050 = vmatprep.subr.bf16.mxu0 0
      %2051 = vmatpush2.bf16.msra.mxu0 0
      %2052 = vmatprep.subr.bf16.mxu0 0
      %2053 = vmatpush2.bf16.msra.mxu0 0
      %2054 = vmatprep.mubr.bf16.mxu0 0
      %2055 = vmatmul.mubr.bf16.gmra.mxu0 %v908
      %v2056 = vpop.f32.mrf.mxu0
      %v2057 = vadd.f32 0.0, %v2056
      %v2058 = vpop.f32.mrf.mxu0
      %v2059 = vpop.f32.mrf.mxu0
      %v2060 = vadd.f32 0.0, %v2059
      %v2061 = vpop.f32.mrf.mxu0
      %2062 = vmatprep.mubr.bf16.mxu0 0
      %2063 = vmatmul.mubr.bf16.gmra.mxu0 %v910
      %v2064 = vpop.f32.mrf.mxu0
      %v2065 = vadd.f32 0.0, %v2064
      %v2066 = vpop.f32.mrf.mxu0
      %v2067 = vpop.f32.mrf.mxu0
      %v2068 = vadd.f32 0.0, %v2067
      %v2069 = vpop.f32.mrf.mxu0
      %2070 = vmatprep.mubr.bf16.mxu0 0
      %2071 = vmatmul.mubr.bf16.gmra.mxu0 %v912
      %v2072 = vpop.f32.mrf.mxu0
      %v2073 = vadd.f32 0.0, %v2072
      %v2074 = vpop.f32.mrf.mxu0
      %v2075 = vpop.f32.mrf.mxu0
      %v2076 = vadd.f32 0.0, %v2075
      %v2077 = vpop.f32.mrf.mxu0
      %2078 = vmatprep.mubr.bf16.mxu0 0
      %2079 = vmatmul.mubr.bf16.gmra.mxu0 %v914
      %v2080 = vpop.f32.mrf.mxu0
      %v2081 = vadd.f32 0.0, %v2080
      %v2082 = vpop.f32.mrf.mxu0
      %v2083 = vpop.f32.mrf.mxu0
      %v2084 = vadd.f32 0.0, %v2083
      %v2085 = vpop.f32.mrf.mxu0
      %2086 = vmatprep.mubr.bf16.mxu0 0
      %2087 = vmatmul.mubr.bf16.gmra.mxu0 %v916
      %v2088 = vpop.f32.mrf.mxu0
      %v2089 = vadd.f32 0.0, %v2088
      %v2090 = vpop.f32.mrf.mxu0
      %v2091 = vpop.f32.mrf.mxu0
      %v2092 = vadd.f32 0.0, %v2091
      %v2093 = vpop.f32.mrf.mxu0
      %2094 = vmatprep.mubr.bf16.mxu0 0
      %2095 = vmatmul.mubr.bf16.gmra.mxu0 %v918
      %v2096 = vpop.f32.mrf.mxu0
      %v2097 = vadd.f32 0.0, %v2096
      %v2098 = vpop.f32.mrf.mxu0
      %v2099 = vpop.f32.mrf.mxu0
      %v2100 = vadd.f32 0.0, %v2099
      %v2101 = vpop.f32.mrf.mxu0
      %2102 = vmatprep.mubr.bf16.mxu0 0
      %2103 = vmatmul.mubr.bf16.gmra.mxu0 %v920
      %v2104 = vpop.f32.mrf.mxu0
      %v2105 = vadd.f32 0.0, %v2104
      %v2106 = vpop.f32.mrf.mxu0
      %v2107 = vpop.f32.mrf.mxu0
      %v2108 = vadd.f32 0.0, %v2107
      %v2109 = vpop.f32.mrf.mxu0
      %2110 = vmatprep.mubr.bf16.mxu0 0
      %2111 = vmatmul.mubr.bf16.gmra.mxu0 %v922
      %v2112 = vpop.f32.mrf.mxu0
      %v2113 = vadd.f32 0.0, %v2112
      %v2114 = vpop.f32.mrf.mxu0
      %v2115 = vpop.f32.mrf.mxu0
      %v2116 = vadd.f32 0.0, %v2115
      %v2117 = vpop.f32.mrf.mxu0
      %2118 = vmatprep.mubr.bf16.mxu0 0
      %2119 = vmatmul.mubr.bf16.gmra.mxu0 %v924
      %v2120 = vpop.f32.mrf.mxu0
      %v2121 = vadd.f32 0.0, %v2120
      %v2122 = vpop.f32.mrf.mxu0
      %v2123 = vpop.f32.mrf.mxu0
      %v2124 = vadd.f32 0.0, %v2123
      %v2125 = vpop.f32.mrf.mxu0
      %2126 = vmatprep.mubr.bf16.mxu0 0
      %2127 = vmatmul.mubr.bf16.gmra.mxu0 %v926
      %v2128 = vpop.f32.mrf.mxu0
      %v2129 = vadd.f32 0.0, %v2128
      %v2130 = vpop.f32.mrf.mxu0
      %v2131 = vpop.f32.mrf.mxu0
      %v2132 = vadd.f32 0.0, %v2131
      %v2133 = vpop.f32.mrf.mxu0
      %2134 = vmatprep.mubr.bf16.mxu0 0
      %2135 = vmatmul.mubr.bf16.gmra.mxu0 %v928
      %v2136 = vpop.f32.mrf.mxu0
      %v2137 = vadd.f32 0.0, %v2136
      %v2138 = vpop.f32.mrf.mxu0
      %v2139 = vpop.f32.mrf.mxu0
      %v2140 = vadd.f32 0.0, %v2139
      %v2141 = vpop.f32.mrf.mxu0
      %2142 = vmatprep.mubr.bf16.mxu0 0
      %2143 = vmatmul.mubr.bf16.gmra.mxu0 %v930
      %v2144 = vpop.f32.mrf.mxu0
      %v2145 = vadd.f32 0.0, %v2144
      %v2146 = vpop.f32.mrf.mxu0
      %v2147 = vpop.f32.mrf.mxu0
      %v2148 = vadd.f32 0.0, %v2147
      %v2149 = vpop.f32.mrf.mxu0
      %2150 = vmatprep.mubr.bf16.mxu0 0
      %2151 = vmatmul.mubr.bf16.gmra.mxu0 %v932
      %v2152 = vpop.f32.mrf.mxu0
      %v2153 = vadd.f32 0.0, %v2152
      %v2154 = vpop.f32.mrf.mxu0
      %v2155 = vpop.f32.mrf.mxu0
      %v2156 = vadd.f32 0.0, %v2155
      %v2157 = vpop.f32.mrf.mxu0
      %2158 = vmatprep.mubr.bf16.mxu0 0
      %2159 = vmatmul.mubr.bf16.gmra.mxu0 %v934
      %v2160 = vpop.f32.mrf.mxu0
      %v2161 = vadd.f32 0.0, %v2160
      %v2162 = vpop.f32.mrf.mxu0
      %v2163 = vpop.f32.mrf.mxu0
      %v2164 = vadd.f32 0.0, %v2163
      %v2165 = vpop.f32.mrf.mxu0
      %2166 = vmatprep.mubr.bf16.mxu0 0
      %2167 = vmatmul.mubr.bf16.gmra.mxu0 %v936
      %v2168 = vpop.f32.mrf.mxu0
      %v2169 = vadd.f32 0.0, %v2168
      %v2170 = vpop.f32.mrf.mxu0
      %v2171 = vpop.f32.mrf.mxu0
      %v2172 = vadd.f32 0.0, %v2171
      %v2173 = vpop.f32.mrf.mxu0
      %2174 = vmatprep.mubr.bf16.mxu0 0
      %2175 = vmatmul.mubr.bf16.gmra.mxu0 %v938
      %v2176 = vpop.f32.mrf.mxu0
      %v2177 = vadd.f32 0.0, %v2176
      %v2178 = vpop.f32.mrf.mxu0
      %v2179 = vpop.f32.mrf.mxu0
      %v2180 = vadd.f32 0.0, %v2179
      %v2181 = vpop.f32.mrf.mxu0
      %2182 = vdwg.mxu0
      %v2183 = vadd.f32 %v1925, %v2057
      %v2184 = vadd.f32 %v1926, %v2060
      %v2185 = vadd.f32 %v1927, %v2065
      %v2186 = vadd.f32 %v1928, %v2068
      %v2187 = vadd.f32 %v1929, %v2073
      %v2188 = vadd.f32 %v1930, %v2076
      %v2189 = vadd.f32 %v1931, %v2081
      %v2190 = vadd.f32 %v1932, %v2084
      %v2191 = vadd.f32 %v1933, %v2089
      %v2192 = vadd.f32 %v1934, %v2092
      %v2193 = vadd.f32 %v1935, %v2097
      %v2194 = vadd.f32 %v1936, %v2100
      %v2195 = vadd.f32 %v1937, %v2105
      %v2196 = vadd.f32 %v1938, %v2108
      %v2197 = vadd.f32 %v1939, %v2113
      %v2198 = vadd.f32 %v1940, %v2116
      %v2199 = vadd.f32 %v1941, %v2121
      %v2200 = vadd.f32 %v1942, %v2124
      %v2201 = vadd.f32 %v1943, %v2129
      %v2202 = vadd.f32 %v1944, %v2132
      %v2203 = vadd.f32 %v1945, %v2137
      %v2204 = vadd.f32 %v1946, %v2140
      %v2205 = vadd.f32 %v1947, %v2145
      %v2206 = vadd.f32 %v1948, %v2148
      %v2207 = vadd.f32 %v1949, %v2153
      %v2208 = vadd.f32 %v1950, %v2156
      %v2209 = vadd.f32 %v1951, %v2161
      %v2210 = vadd.f32 %v1952, %v2164
      %v2211 = vadd.f32 %v1953, %v2169
      %v2212 = vadd.f32 %v1954, %v2172
      %v2213 = vadd.f32 %v1955, %v2177
      %v2214 = vadd.f32 %v1956, %v2180
      %v2216 = vshrl.u32 %v938, 16
      %v2218 = vshll.u32 %v938, 16
      %v2220 = vrot.slane %v2218, 1
      %v2221 = vor.u32 %v2216, %v2220
      %v2223 = vshll.u32 %v939, 16
      %v2225 = vrot.slane %v2223, 1
      %v2226 = vsel %vm958, %v2221, %v2225
      %s2228 = scalar_lea.vmem %s5, 256
      %v2229 = vld [vmem:[%s2228] sm:$0xf]
      %v2230 = vld [vmem:[%s2228 + $0x4] sm:$0xf]
      %v2231 = vld [vmem:[%s2228 + $0x8] sm:$0xf]
      %v2232 = vld [vmem:[%s2228 + $0xc] sm:$0xf]
      %v2233 = vld [vmem:[%s2228 + $0x10] sm:$0xf]
      %v2234 = vld [vmem:[%s2228 + $0x14] sm:$0xf]
      %v2235 = vld [vmem:[%s2228 + $0x18] sm:$0xf]
      %v2236 = vld [vmem:[%s2228 + $0x1c] sm:$0xf]
      %v2237 = vld [vmem:[%s2228 + $0x20] sm:$0xf]
      %v2238 = vld [vmem:[%s2228 + $0x24] sm:$0xf]
      %v2239 = vld [vmem:[%s2228 + $0x28] sm:$0xf]
      %v2240 = vld [vmem:[%s2228 + $0x2c] sm:$0xf]
      %v2241 = vld [vmem:[%s2228 + $0x30] sm:$0xf]
      %v2242 = vld [vmem:[%s2228 + $0x34] sm:$0xf]
      %v2243 = vld [vmem:[%s2228 + $0x38] sm:$0xf]
      %v2244 = vld [vmem:[%s2228 + $0x3c] sm:$0xf]
      %v2261 = vunpack.c.l.b16 %v2229
      %v2262 = vunpack.c.l.b16 %v2230
      %v2263 = vunpack.c.l.b16 %v2231
      %v2264 = vunpack.c.l.b16 %v2232
      %v2265 = vunpack.c.l.b16 %v2233
      %v2266 = vunpack.c.l.b16 %v2234
      %v2267 = vunpack.c.l.b16 %v2235
      %v2268 = vunpack.c.l.b16 %v2236
      %v2269 = vunpack.c.l.b16 %v2237
      %v2270 = vunpack.c.l.b16 %v2238
      %v2271 = vunpack.c.l.b16 %v2239
      %v2272 = vunpack.c.l.b16 %v2240
      %v2273 = vunpack.c.l.b16 %v2241
      %v2274 = vunpack.c.l.b16 %v2242
      %v2275 = vunpack.c.l.b16 %v2243
      %v2276 = vunpack.c.l.b16 %v2244
      %v2277 = vpack.c.b16 %v2262, %v2261
      %v2278 = vpack.c.b16 %v2264, %v2263
      %v2279 = vpack.c.b16 %v2266, %v2265
      %v2280 = vpack.c.b16 %v2268, %v2267
      %v2281 = vpack.c.b16 %v2270, %v2269
      %v2282 = vpack.c.b16 %v2272, %v2271
      %v2283 = vpack.c.b16 %v2274, %v2273
      %v2284 = vpack.c.b16 %v2276, %v2275
      %2293 = vmatprep.subr.bf16.mxu0 0
      %2294 = vmatpush1.bf16.msra.mxu0 %v2284
      %2295 = vmatprep.subr.bf16.mxu0 0
      %2296 = vmatpush1.bf16.msra.mxu0 %v2283
      %2297 = vmatprep.subr.bf16.mxu0 0
      %2298 = vmatpush1.bf16.msra.mxu0 %v2282
      %2299 = vmatprep.subr.bf16.mxu0 0
      %2300 = vmatpush1.bf16.msra.mxu0 %v2281
      %2301 = vmatprep.subr.bf16.mxu0 0
      %2302 = vmatpush1.bf16.msra.mxu0 %v2280
      %2303 = vmatprep.subr.bf16.mxu0 0
      %2304 = vmatpush1.bf16.msra.mxu0 %v2279
      %2305 = vmatprep.subr.bf16.mxu0 0
      %2306 = vmatpush1.bf16.msra.mxu0 %v2278
      %2307 = vmatprep.subr.bf16.mxu0 0
      %2308 = vmatpush1.bf16.msra.mxu0 %v2277
      %2309 = vmatprep.subr.bf16.mxu0 0
      %2310 = vmatpush2.bf16.msra.mxu0 0
      %2311 = vmatprep.subr.bf16.mxu0 0
      %2312 = vmatpush2.bf16.msra.mxu0 0
      %2313 = vmatprep.subr.bf16.mxu0 0
      %2314 = vmatpush2.bf16.msra.mxu0 0
      %2315 = vmatprep.subr.bf16.mxu0 0
      %2316 = vmatpush2.bf16.msra.mxu0 0
      %2317 = vmatprep.subr.bf16.mxu0 0
      %2318 = vmatpush2.bf16.msra.mxu0 0
      %2319 = vmatprep.subr.bf16.mxu0 0
      %2320 = vmatpush2.bf16.msra.mxu0 0
      %2321 = vmatprep.subr.bf16.mxu0 0
      %2322 = vmatpush2.bf16.msra.mxu0 0
      %2323 = vmatprep.subr.bf16.mxu0 0
      %2324 = vmatpush2.bf16.msra.mxu0 0
      %2325 = vmatprep.mubr.bf16.mxu0 0
      %2326 = vmatmul.mubr.bf16.gmra.mxu0 %v982
      %v2327 = vpop.f32.mrf.mxu0
      %v2328 = vadd.f32 0.0, %v2327
      %v2329 = vpop.f32.mrf.mxu0
      %v2330 = vpop.f32.mrf.mxu0
      %v2331 = vadd.f32 0.0, %v2330
      %v2332 = vpop.f32.mrf.mxu0
      %2333 = vmatprep.mubr.bf16.mxu0 0
      %2334 = vmatmul.mubr.bf16.gmra.mxu0 %v994
      %v2335 = vpop.f32.mrf.mxu0
      %v2336 = vadd.f32 0.0, %v2335
      %v2337 = vpop.f32.mrf.mxu0
      %v2338 = vpop.f32.mrf.mxu0
      %v2339 = vadd.f32 0.0, %v2338
      %v2340 = vpop.f32.mrf.mxu0
      %2341 = vmatprep.mubr.bf16.mxu0 0
      %2342 = vmatmul.mubr.bf16.gmra.mxu0 %v1006
      %v2343 = vpop.f32.mrf.mxu0
      %v2344 = vadd.f32 0.0, %v2343
      %v2345 = vpop.f32.mrf.mxu0
      %v2346 = vpop.f32.mrf.mxu0
      %v2347 = vadd.f32 0.0, %v2346
      %v2348 = vpop.f32.mrf.mxu0
      %2349 = vmatprep.mubr.bf16.mxu0 0
      %2350 = vmatmul.mubr.bf16.gmra.mxu0 %v1018
      %v2351 = vpop.f32.mrf.mxu0
      %v2352 = vadd.f32 0.0, %v2351
      %v2353 = vpop.f32.mrf.mxu0
      %v2354 = vpop.f32.mrf.mxu0
      %v2355 = vadd.f32 0.0, %v2354
      %v2356 = vpop.f32.mrf.mxu0
      %2357 = vmatprep.mubr.bf16.mxu0 0
      %2358 = vmatmul.mubr.bf16.gmra.mxu0 %v1030
      %v2359 = vpop.f32.mrf.mxu0
      %v2360 = vadd.f32 0.0, %v2359
      %v2361 = vpop.f32.mrf.mxu0
      %v2362 = vpop.f32.mrf.mxu0
      %v2363 = vadd.f32 0.0, %v2362
      %v2364 = vpop.f32.mrf.mxu0
      %2365 = vmatprep.mubr.bf16.mxu0 0
      %2366 = vmatmul.mubr.bf16.gmra.mxu0 %v1042
      %v2367 = vpop.f32.mrf.mxu0
      %v2368 = vadd.f32 0.0, %v2367
      %v2369 = vpop.f32.mrf.mxu0
      %v2370 = vpop.f32.mrf.mxu0
      %v2371 = vadd.f32 0.0, %v2370
      %v2372 = vpop.f32.mrf.mxu0
      %2373 = vmatprep.mubr.bf16.mxu0 0
      %2374 = vmatmul.mubr.bf16.gmra.mxu0 %v1054
      %v2375 = vpop.f32.mrf.mxu0
      %v2376 = vadd.f32 0.0, %v2375
      %v2377 = vpop.f32.mrf.mxu0
      %v2378 = vpop.f32.mrf.mxu0
      %v2379 = vadd.f32 0.0, %v2378
      %v2380 = vpop.f32.mrf.mxu0
      %2381 = vmatprep.mubr.bf16.mxu0 0
      %2382 = vmatmul.mubr.bf16.gmra.mxu0 %v1066
      %v2383 = vpop.f32.mrf.mxu0
      %v2384 = vadd.f32 0.0, %v2383
      %v2385 = vpop.f32.mrf.mxu0
      %v2386 = vpop.f32.mrf.mxu0
      %v2387 = vadd.f32 0.0, %v2386
      %v2388 = vpop.f32.mrf.mxu0
      %2389 = vmatprep.mubr.bf16.mxu0 0
      %2390 = vmatmul.mubr.bf16.gmra.mxu0 %v1078
      %v2391 = vpop.f32.mrf.mxu0
      %v2392 = vadd.f32 0.0, %v2391
      %v2393 = vpop.f32.mrf.mxu0
      %v2394 = vpop.f32.mrf.mxu0
      %v2395 = vadd.f32 0.0, %v2394
      %v2396 = vpop.f32.mrf.mxu0
      %2397 = vmatprep.mubr.bf16.mxu0 0
      %2398 = vmatmul.mubr.bf16.gmra.mxu0 %v1090
      %v2399 = vpop.f32.mrf.mxu0
      %v2400 = vadd.f32 0.0, %v2399
      %v2401 = vpop.f32.mrf.mxu0
      %v2402 = vpop.f32.mrf.mxu0
      %v2403 = vadd.f32 0.0, %v2402
      %v2404 = vpop.f32.mrf.mxu0
      %2405 = vmatprep.mubr.bf16.mxu0 0
      %2406 = vmatmul.mubr.bf16.gmra.mxu0 %v1102
      %v2407 = vpop.f32.mrf.mxu0
      %v2408 = vadd.f32 0.0, %v2407
      %v2409 = vpop.f32.mrf.mxu0
      %v2410 = vpop.f32.mrf.mxu0
      %v2411 = vadd.f32 0.0, %v2410
      %v2412 = vpop.f32.mrf.mxu0
      %2413 = vmatprep.mubr.bf16.mxu0 0
      %2414 = vmatmul.mubr.bf16.gmra.mxu0 %v1114
      %v2415 = vpop.f32.mrf.mxu0
      %v2416 = vadd.f32 0.0, %v2415
      %v2417 = vpop.f32.mrf.mxu0
      %v2418 = vpop.f32.mrf.mxu0
      %v2419 = vadd.f32 0.0, %v2418
      %v2420 = vpop.f32.mrf.mxu0
      %2421 = vmatprep.mubr.bf16.mxu0 0
      %2422 = vmatmul.mubr.bf16.gmra.mxu0 %v1126
      %v2423 = vpop.f32.mrf.mxu0
      %v2424 = vadd.f32 0.0, %v2423
      %v2425 = vpop.f32.mrf.mxu0
      %v2426 = vpop.f32.mrf.mxu0
      %v2427 = vadd.f32 0.0, %v2426
      %v2428 = vpop.f32.mrf.mxu0
      %2429 = vmatprep.mubr.bf16.mxu0 0
      %2430 = vmatmul.mubr.bf16.gmra.mxu0 %v1138
      %v2431 = vpop.f32.mrf.mxu0
      %v2432 = vadd.f32 0.0, %v2431
      %v2433 = vpop.f32.mrf.mxu0
      %v2434 = vpop.f32.mrf.mxu0
      %v2435 = vadd.f32 0.0, %v2434
      %v2436 = vpop.f32.mrf.mxu0
      %2437 = vmatprep.mubr.bf16.mxu0 0
      %2438 = vmatmul.mubr.bf16.gmra.mxu0 %v1150
      %v2439 = vpop.f32.mrf.mxu0
      %v2440 = vadd.f32 0.0, %v2439
      %v2441 = vpop.f32.mrf.mxu0
      %v2442 = vpop.f32.mrf.mxu0
      %v2443 = vadd.f32 0.0, %v2442
      %v2444 = vpop.f32.mrf.mxu0
      %2445 = vmatprep.mubr.bf16.mxu0 0
      %2446 = vmatmul.mubr.bf16.gmra.mxu0 %v2226
      %v2447 = vpop.f32.mrf.mxu0
      %v2448 = vadd.f32 0.0, %v2447
      %v2449 = vpop.f32.mrf.mxu0
      %v2450 = vpop.f32.mrf.mxu0
      %v2451 = vadd.f32 0.0, %v2450
      %v2452 = vpop.f32.mrf.mxu0
      %2453 = vdwg.mxu0
      %v2454 = vadd.f32 %v2183, %v2328
      %v2455 = vadd.f32 %v2184, %v2331
      %v2456 = vadd.f32 %v2185, %v2336
      %v2457 = vadd.f32 %v2186, %v2339
      %v2458 = vadd.f32 %v2187, %v2344
      %v2459 = vadd.f32 %v2188, %v2347
      %v2460 = vadd.f32 %v2189, %v2352
      %v2461 = vadd.f32 %v2190, %v2355
      %v2462 = vadd.f32 %v2191, %v2360
      %v2463 = vadd.f32 %v2192, %v2363
      %v2464 = vadd.f32 %v2193, %v2368
      %v2465 = vadd.f32 %v2194, %v2371
      %v2466 = vadd.f32 %v2195, %v2376
      %v2467 = vadd.f32 %v2196, %v2379
      %v2468 = vadd.f32 %v2197, %v2384
      %v2469 = vadd.f32 %v2198, %v2387
      %v2470 = vadd.f32 %v2199, %v2392
      %v2471 = vadd.f32 %v2200, %v2395
      %v2472 = vadd.f32 %v2201, %v2400
      %v2473 = vadd.f32 %v2202, %v2403
      %v2474 = vadd.f32 %v2203, %v2408
      %v2475 = vadd.f32 %v2204, %v2411
      %v2476 = vadd.f32 %v2205, %v2416
      %v2477 = vadd.f32 %v2206, %v2419
      %v2478 = vadd.f32 %v2207, %v2424
      %v2479 = vadd.f32 %v2208, %v2427
      %v2480 = vadd.f32 %v2209, %v2432
      %v2481 = vadd.f32 %v2210, %v2435
      %v2482 = vadd.f32 %v2211, %v2440
      %v2483 = vadd.f32 %v2212, %v2443
      %v2484 = vadd.f32 %v2213, %v2448
      %v2485 = vadd.f32 %v2214, %v2451
      %v2488 = vrot.slane %v938, 1
      %v2489 = vrot.slane %v939, 1
      %v2490 = vsel %vm1634, %v2488, %v2489
      %s2492 = scalar_lea.vmem %s5, 320
      %v2493 = vld [vmem:[%s2492] sm:$0xf]
      %v2494 = vld [vmem:[%s2492 + $0x4] sm:$0xf]
      %v2495 = vld [vmem:[%s2492 + $0x8] sm:$0xf]
      %v2496 = vld [vmem:[%s2492 + $0xc] sm:$0xf]
      %v2497 = vld [vmem:[%s2492 + $0x10] sm:$0xf]
      %v2498 = vld [vmem:[%s2492 + $0x14] sm:$0xf]
      %v2499 = vld [vmem:[%s2492 + $0x18] sm:$0xf]
      %v2500 = vld [vmem:[%s2492 + $0x1c] sm:$0xf]
      %v2501 = vld [vmem:[%s2492 + $0x20] sm:$0xf]
      %v2502 = vld [vmem:[%s2492 + $0x24] sm:$0xf]
      %v2503 = vld [vmem:[%s2492 + $0x28] sm:$0xf]
      %v2504 = vld [vmem:[%s2492 + $0x2c] sm:$0xf]
      %v2505 = vld [vmem:[%s2492 + $0x30] sm:$0xf]
      %v2506 = vld [vmem:[%s2492 + $0x34] sm:$0xf]
      %v2507 = vld [vmem:[%s2492 + $0x38] sm:$0xf]
      %v2508 = vld [vmem:[%s2492 + $0x3c] sm:$0xf]
      %v2525 = vunpack.c.l.b16 %v2493
      %v2526 = vunpack.c.l.b16 %v2494
      %v2527 = vunpack.c.l.b16 %v2495
      %v2528 = vunpack.c.l.b16 %v2496
      %v2529 = vunpack.c.l.b16 %v2497
      %v2530 = vunpack.c.l.b16 %v2498
      %v2531 = vunpack.c.l.b16 %v2499
      %v2532 = vunpack.c.l.b16 %v2500
      %v2533 = vunpack.c.l.b16 %v2501
      %v2534 = vunpack.c.l.b16 %v2502
      %v2535 = vunpack.c.l.b16 %v2503
      %v2536 = vunpack.c.l.b16 %v2504
      %v2537 = vunpack.c.l.b16 %v2505
      %v2538 = vunpack.c.l.b16 %v2506
      %v2539 = vunpack.c.l.b16 %v2507
      %v2540 = vunpack.c.l.b16 %v2508
      %v2541 = vpack.c.b16 %v2526, %v2525
      %v2542 = vpack.c.b16 %v2528, %v2527
      %v2543 = vpack.c.b16 %v2530, %v2529
      %v2544 = vpack.c.b16 %v2532, %v2531
      %v2545 = vpack.c.b16 %v2534, %v2533
      %v2546 = vpack.c.b16 %v2536, %v2535
      %v2547 = vpack.c.b16 %v2538, %v2537
      %v2548 = vpack.c.b16 %v2540, %v2539
      %2557 = vmatprep.subr.bf16.mxu0 0
      %2558 = vmatpush1.bf16.msra.mxu0 %v2548
      %2559 = vmatprep.subr.bf16.mxu0 0
      %2560 = vmatpush1.bf16.msra.mxu0 %v2547
      %2561 = vmatprep.subr.bf16.mxu0 0
      %2562 = vmatpush1.bf16.msra.mxu0 %v2546
      %2563 = vmatprep.subr.bf16.mxu0 0
      %2564 = vmatpush1.bf16.msra.mxu0 %v2545
      %2565 = vmatprep.subr.bf16.mxu0 0
      %2566 = vmatpush1.bf16.msra.mxu0 %v2544
      %2567 = vmatprep.subr.bf16.mxu0 0
      %2568 = vmatpush1.bf16.msra.mxu0 %v2543
      %2569 = vmatprep.subr.bf16.mxu0 0
      %2570 = vmatpush1.bf16.msra.mxu0 %v2542
      %2571 = vmatprep.subr.bf16.mxu0 0
      %2572 = vmatpush1.bf16.msra.mxu0 %v2541
      %2573 = vmatprep.subr.bf16.mxu0 0
      %2574 = vmatpush2.bf16.msra.mxu0 0
      %2575 = vmatprep.subr.bf16.mxu0 0
      %2576 = vmatpush2.bf16.msra.mxu0 0
      %2577 = vmatprep.subr.bf16.mxu0 0
      %2578 = vmatpush2.bf16.msra.mxu0 0
      %2579 = vmatprep.subr.bf16.mxu0 0
      %2580 = vmatpush2.bf16.msra.mxu0 0
      %2581 = vmatprep.subr.bf16.mxu0 0
      %2582 = vmatpush2.bf16.msra.mxu0 0
      %2583 = vmatprep.subr.bf16.mxu0 0
      %2584 = vmatpush2.bf16.msra.mxu0 0
      %2585 = vmatprep.subr.bf16.mxu0 0
      %2586 = vmatpush2.bf16.msra.mxu0 0
      %2587 = vmatprep.subr.bf16.mxu0 0
      %2588 = vmatpush2.bf16.msra.mxu0 0
      %2589 = vmatprep.mubr.bf16.mxu0 0
      %2590 = vmatmul.mubr.bf16.gmra.mxu0 %v1640
      %v2591 = vpop.f32.mrf.mxu0
      %v2592 = vadd.f32 0.0, %v2591
      %v2593 = vpop.f32.mrf.mxu0
      %v2594 = vpop.f32.mrf.mxu0
      %v2595 = vadd.f32 0.0, %v2594
      %v2596 = vpop.f32.mrf.mxu0
      %2597 = vmatprep.mubr.bf16.mxu0 0
      %2598 = vmatmul.mubr.bf16.gmra.mxu0 %v1643
      %v2599 = vpop.f32.mrf.mxu0
      %v2600 = vadd.f32 0.0, %v2599
      %v2601 = vpop.f32.mrf.mxu0
      %v2602 = vpop.f32.mrf.mxu0
      %v2603 = vadd.f32 0.0, %v2602
      %v2604 = vpop.f32.mrf.mxu0
      %2605 = vmatprep.mubr.bf16.mxu0 0
      %2606 = vmatmul.mubr.bf16.gmra.mxu0 %v1646
      %v2607 = vpop.f32.mrf.mxu0
      %v2608 = vadd.f32 0.0, %v2607
      %v2609 = vpop.f32.mrf.mxu0
      %v2610 = vpop.f32.mrf.mxu0
      %v2611 = vadd.f32 0.0, %v2610
      %v2612 = vpop.f32.mrf.mxu0
      %2613 = vmatprep.mubr.bf16.mxu0 0
      %2614 = vmatmul.mubr.bf16.gmra.mxu0 %v1649
      %v2615 = vpop.f32.mrf.mxu0
      %v2616 = vadd.f32 0.0, %v2615
      %v2617 = vpop.f32.mrf.mxu0
      %v2618 = vpop.f32.mrf.mxu0
      %v2619 = vadd.f32 0.0, %v2618
      %v2620 = vpop.f32.mrf.mxu0
      %2621 = vmatprep.mubr.bf16.mxu0 0
      %2622 = vmatmul.mubr.bf16.gmra.mxu0 %v1652
      %v2623 = vpop.f32.mrf.mxu0
      %v2624 = vadd.f32 0.0, %v2623
      %v2625 = vpop.f32.mrf.mxu0
      %v2626 = vpop.f32.mrf.mxu0
      %v2627 = vadd.f32 0.0, %v2626
      %v2628 = vpop.f32.mrf.mxu0
      %2629 = vmatprep.mubr.bf16.mxu0 0
      %2630 = vmatmul.mubr.bf16.gmra.mxu0 %v1655
      %v2631 = vpop.f32.mrf.mxu0
      %v2632 = vadd.f32 0.0, %v2631
      %v2633 = vpop.f32.mrf.mxu0
      %v2634 = vpop.f32.mrf.mxu0
      %v2635 = vadd.f32 0.0, %v2634
      %v2636 = vpop.f32.mrf.mxu0
      %2637 = vmatprep.mubr.bf16.mxu0 0
      %2638 = vmatmul.mubr.bf16.gmra.mxu0 %v1658
      %v2639 = vpop.f32.mrf.mxu0
      %v2640 = vadd.f32 0.0, %v2639
      %v2641 = vpop.f32.mrf.mxu0
      %v2642 = vpop.f32.mrf.mxu0
      %v2643 = vadd.f32 0.0, %v2642
      %v2644 = vpop.f32.mrf.mxu0
      %2645 = vmatprep.mubr.bf16.mxu0 0
      %2646 = vmatmul.mubr.bf16.gmra.mxu0 %v1661
      %v2647 = vpop.f32.mrf.mxu0
      %v2648 = vadd.f32 0.0, %v2647
      %v2649 = vpop.f32.mrf.mxu0
      %v2650 = vpop.f32.mrf.mxu0
      %v2651 = vadd.f32 0.0, %v2650
      %v2652 = vpop.f32.mrf.mxu0
      %2653 = vmatprep.mubr.bf16.mxu0 0
      %2654 = vmatmul.mubr.bf16.gmra.mxu0 %v1664
      %v2655 = vpop.f32.mrf.mxu0
      %v2656 = vadd.f32 0.0, %v2655
      %v2657 = vpop.f32.mrf.mxu0
      %v2658 = vpop.f32.mrf.mxu0
      %v2659 = vadd.f32 0.0, %v2658
      %v2660 = vpop.f32.mrf.mxu0
      %2661 = vmatprep.mubr.bf16.mxu0 0
      %2662 = vmatmul.mubr.bf16.gmra.mxu0 %v1667
      %v2663 = vpop.f32.mrf.mxu0
      %v2664 = vadd.f32 0.0, %v2663
      %v2665 = vpop.f32.mrf.mxu0
      %v2666 = vpop.f32.mrf.mxu0
      %v2667 = vadd.f32 0.0, %v2666
      %v2668 = vpop.f32.mrf.mxu0
      %2669 = vmatprep.mubr.bf16.mxu0 0
      %2670 = vmatmul.mubr.bf16.gmra.mxu0 %v1670
      %v2671 = vpop.f32.mrf.mxu0
      %v2672 = vadd.f32 0.0, %v2671
      %v2673 = vpop.f32.mrf.mxu0
      %v2674 = vpop.f32.mrf.mxu0
      %v2675 = vadd.f32 0.0, %v2674
      %v2676 = vpop.f32.mrf.mxu0
      %2677 = vmatprep.mubr.bf16.mxu0 0
      %2678 = vmatmul.mubr.bf16.gmra.mxu0 %v1673
      %v2679 = vpop.f32.mrf.mxu0
      %v2680 = vadd.f32 0.0, %v2679
      %v2681 = vpop.f32.mrf.mxu0
      %v2682 = vpop.f32.mrf.mxu0
      %v2683 = vadd.f32 0.0, %v2682
      %v2684 = vpop.f32.mrf.mxu0
      %2685 = vmatprep.mubr.bf16.mxu0 0
      %2686 = vmatmul.mubr.bf16.gmra.mxu0 %v1676
      %v2687 = vpop.f32.mrf.mxu0
      %v2688 = vadd.f32 0.0, %v2687
      %v2689 = vpop.f32.mrf.mxu0
      %v2690 = vpop.f32.mrf.mxu0
      %v2691 = vadd.f32 0.0, %v2690
      %v2692 = vpop.f32.mrf.mxu0
      %2693 = vmatprep.mubr.bf16.mxu0 0
      %2694 = vmatmul.mubr.bf16.gmra.mxu0 %v1679
      %v2695 = vpop.f32.mrf.mxu0
      %v2696 = vadd.f32 0.0, %v2695
      %v2697 = vpop.f32.mrf.mxu0
      %v2698 = vpop.f32.mrf.mxu0
      %v2699 = vadd.f32 0.0, %v2698
      %v2700 = vpop.f32.mrf.mxu0
      %2701 = vmatprep.mubr.bf16.mxu0 0
      %2702 = vmatmul.mubr.bf16.gmra.mxu0 %v1682
      %v2703 = vpop.f32.mrf.mxu0
      %v2704 = vadd.f32 0.0, %v2703
      %v2705 = vpop.f32.mrf.mxu0
      %v2706 = vpop.f32.mrf.mxu0
      %v2707 = vadd.f32 0.0, %v2706
      %v2708 = vpop.f32.mrf.mxu0
      %2709 = vmatprep.mubr.bf16.mxu0 0
      %2710 = vmatmul.mubr.bf16.gmra.mxu0 %v2490
      %v2711 = vpop.f32.mrf.mxu0
      %v2712 = vadd.f32 0.0, %v2711
      %v2713 = vpop.f32.mrf.mxu0
      %v2714 = vpop.f32.mrf.mxu0
      %v2715 = vadd.f32 0.0, %v2714
      %v2716 = vpop.f32.mrf.mxu0
      %2717 = vdwg.mxu0
      %v2718 = vadd.f32 %v2454, %v2592
      %v2719 = vadd.f32 %v2455, %v2595
      %v2720 = vadd.f32 %v2456, %v2600
      %v2721 = vadd.f32 %v2457, %v2603
      %v2722 = vadd.f32 %v2458, %v2608
      %v2723 = vadd.f32 %v2459, %v2611
      %v2724 = vadd.f32 %v2460, %v2616
      %v2725 = vadd.f32 %v2461, %v2619
      %v2726 = vadd.f32 %v2462, %v2624
      %v2727 = vadd.f32 %v2463, %v2627
      %v2728 = vadd.f32 %v2464, %v2632
      %v2729 = vadd.f32 %v2465, %v2635
      %v2730 = vadd.f32 %v2466, %v2640
      %v2731 = vadd.f32 %v2467, %v2643
      %v2732 = vadd.f32 %v2468, %v2648
      %v2733 = vadd.f32 %v2469, %v2651
      %v2734 = vadd.f32 %v2470, %v2656
      %v2735 = vadd.f32 %v2471, %v2659
      %v2736 = vadd.f32 %v2472, %v2664
      %v2737 = vadd.f32 %v2473, %v2667
      %v2738 = vadd.f32 %v2474, %v2672
      %v2739 = vadd.f32 %v2475, %v2675
      %v2740 = vadd.f32 %v2476, %v2680
      %v2741 = vadd.f32 %v2477, %v2683
      %v2742 = vadd.f32 %v2478, %v2688
      %v2743 = vadd.f32 %v2479, %v2691
      %v2744 = vadd.f32 %v2480, %v2696
      %v2745 = vadd.f32 %v2481, %v2699
      %v2746 = vadd.f32 %v2482, %v2704
      %v2747 = vadd.f32 %v2483, %v2707
      %v2748 = vadd.f32 %v2484, %v2712
      %v2749 = vadd.f32 %v2485, %v2715
      %s2750 = scalar_lea.vmem %s5, 384
      %v2751 = vld [vmem:[%s2750] sm:$0xf]
      %v2752 = vld [vmem:[%s2750 + $0x4] sm:$0xf]
      %v2753 = vld [vmem:[%s2750 + $0x8] sm:$0xf]
      %v2754 = vld [vmem:[%s2750 + $0xc] sm:$0xf]
      %v2755 = vld [vmem:[%s2750 + $0x10] sm:$0xf]
      %v2756 = vld [vmem:[%s2750 + $0x14] sm:$0xf]
      %v2757 = vld [vmem:[%s2750 + $0x18] sm:$0xf]
      %v2758 = vld [vmem:[%s2750 + $0x1c] sm:$0xf]
      %v2759 = vld [vmem:[%s2750 + $0x20] sm:$0xf]
      %v2760 = vld [vmem:[%s2750 + $0x24] sm:$0xf]
      %v2761 = vld [vmem:[%s2750 + $0x28] sm:$0xf]
      %v2762 = vld [vmem:[%s2750 + $0x2c] sm:$0xf]
      %v2763 = vld [vmem:[%s2750 + $0x30] sm:$0xf]
      %v2764 = vld [vmem:[%s2750 + $0x34] sm:$0xf]
      %v2765 = vld [vmem:[%s2750 + $0x38] sm:$0xf]
      %v2766 = vld [vmem:[%s2750 + $0x3c] sm:$0xf]
      %v2783 = vunpack.c.l.b16 %v2751
      %v2784 = vunpack.c.l.b16 %v2752
      %v2785 = vunpack.c.l.b16 %v2753
      %v2786 = vunpack.c.l.b16 %v2754
      %v2787 = vunpack.c.l.b16 %v2755
      %v2788 = vunpack.c.l.b16 %v2756
      %v2789 = vunpack.c.l.b16 %v2757
      %v2790 = vunpack.c.l.b16 %v2758
      %v2791 = vunpack.c.l.b16 %v2759
      %v2792 = vunpack.c.l.b16 %v2760
      %v2793 = vunpack.c.l.b16 %v2761
      %v2794 = vunpack.c.l.b16 %v2762
      %v2795 = vunpack.c.l.b16 %v2763
      %v2796 = vunpack.c.l.b16 %v2764
      %v2797 = vunpack.c.l.b16 %v2765
      %v2798 = vunpack.c.l.b16 %v2766
      %v2799 = vpack.c.b16 %v2784, %v2783
      %v2800 = vpack.c.b16 %v2786, %v2785
      %v2801 = vpack.c.b16 %v2788, %v2787
      %v2802 = vpack.c.b16 %v2790, %v2789
      %v2803 = vpack.c.b16 %v2792, %v2791
      %v2804 = vpack.c.b16 %v2794, %v2793
      %v2805 = vpack.c.b16 %v2796, %v2795
      %v2806 = vpack.c.b16 %v2798, %v2797
      %2815 = vmatprep.subr.bf16.mxu0 0
      %2816 = vmatpush1.bf16.msra.mxu0 %v2806
      %2817 = vmatprep.subr.bf16.mxu0 0
      %2818 = vmatpush1.bf16.msra.mxu0 %v2805
      %2819 = vmatprep.subr.bf16.mxu0 0
      %2820 = vmatpush1.bf16.msra.mxu0 %v2804
      %2821 = vmatprep.subr.bf16.mxu0 0
      %2822 = vmatpush1.bf16.msra.mxu0 %v2803
      %2823 = vmatprep.subr.bf16.mxu0 0
      %2824 = vmatpush1.bf16.msra.mxu0 %v2802
      %2825 = vmatprep.subr.bf16.mxu0 0
      %2826 = vmatpush1.bf16.msra.mxu0 %v2801
      %2827 = vmatprep.subr.bf16.mxu0 0
      %2828 = vmatpush1.bf16.msra.mxu0 %v2800
      %2829 = vmatprep.subr.bf16.mxu0 0
      %2830 = vmatpush1.bf16.msra.mxu0 %v2799
      %2831 = vmatprep.subr.bf16.mxu0 0
      %2832 = vmatpush2.bf16.msra.mxu0 0
      %2833 = vmatprep.subr.bf16.mxu0 0
      %2834 = vmatpush2.bf16.msra.mxu0 0
      %2835 = vmatprep.subr.bf16.mxu0 0
      %2836 = vmatpush2.bf16.msra.mxu0 0
      %2837 = vmatprep.subr.bf16.mxu0 0
      %2838 = vmatpush2.bf16.msra.mxu0 0
      %2839 = vmatprep.subr.bf16.mxu0 0
      %2840 = vmatpush2.bf16.msra.mxu0 0
      %2841 = vmatprep.subr.bf16.mxu0 0
      %2842 = vmatpush2.bf16.msra.mxu0 0
      %2843 = vmatprep.subr.bf16.mxu0 0
      %2844 = vmatpush2.bf16.msra.mxu0 0
      %2845 = vmatprep.subr.bf16.mxu0 0
      %2846 = vmatpush2.bf16.msra.mxu0 0
      %2847 = vmatprep.mubr.bf16.mxu0 0
      %2848 = vmatmul.mubr.bf16.gmra.mxu0 %v910
      %v2849 = vpop.f32.mrf.mxu0
      %v2850 = vadd.f32 0.0, %v2849
      %v2851 = vpop.f32.mrf.mxu0
      %v2852 = vpop.f32.mrf.mxu0
      %v2853 = vadd.f32 0.0, %v2852
      %v2854 = vpop.f32.mrf.mxu0
      %2855 = vmatprep.mubr.bf16.mxu0 0
      %2856 = vmatmul.mubr.bf16.gmra.mxu0 %v912
      %v2857 = vpop.f32.mrf.mxu0
      %v2858 = vadd.f32 0.0, %v2857
      %v2859 = vpop.f32.mrf.mxu0
      %v2860 = vpop.f32.mrf.mxu0
      %v2861 = vadd.f32 0.0, %v2860
      %v2862 = vpop.f32.mrf.mxu0
      %2863 = vmatprep.mubr.bf16.mxu0 0
      %2864 = vmatmul.mubr.bf16.gmra.mxu0 %v914
      %v2865 = vpop.f32.mrf.mxu0
      %v2866 = vadd.f32 0.0, %v2865
      %v2867 = vpop.f32.mrf.mxu0
      %v2868 = vpop.f32.mrf.mxu0
      %v2869 = vadd.f32 0.0, %v2868
      %v2870 = vpop.f32.mrf.mxu0
      %2871 = vmatprep.mubr.bf16.mxu0 0
      %2872 = vmatmul.mubr.bf16.gmra.mxu0 %v916
      %v2873 = vpop.f32.mrf.mxu0
      %v2874 = vadd.f32 0.0, %v2873
      %v2875 = vpop.f32.mrf.mxu0
      %v2876 = vpop.f32.mrf.mxu0
      %v2877 = vadd.f32 0.0, %v2876
      %v2878 = vpop.f32.mrf.mxu0
      %2879 = vmatprep.mubr.bf16.mxu0 0
      %2880 = vmatmul.mubr.bf16.gmra.mxu0 %v918
      %v2881 = vpop.f32.mrf.mxu0
      %v2882 = vadd.f32 0.0, %v2881
      %v2883 = vpop.f32.mrf.mxu0
      %v2884 = vpop.f32.mrf.mxu0
      %v2885 = vadd.f32 0.0, %v2884
      %v2886 = vpop.f32.mrf.mxu0
      %2887 = vmatprep.mubr.bf16.mxu0 0
      %2888 = vmatmul.mubr.bf16.gmra.mxu0 %v920
      %v2889 = vpop.f32.mrf.mxu0
      %v2890 = vadd.f32 0.0, %v2889
      %v2891 = vpop.f32.mrf.mxu0
      %v2892 = vpop.f32.mrf.mxu0
      %v2893 = vadd.f32 0.0, %v2892
      %v2894 = vpop.f32.mrf.mxu0
      %2895 = vmatprep.mubr.bf16.mxu0 0
      %2896 = vmatmul.mubr.bf16.gmra.mxu0 %v922
      %v2897 = vpop.f32.mrf.mxu0
      %v2898 = vadd.f32 0.0, %v2897
      %v2899 = vpop.f32.mrf.mxu0
      %v2900 = vpop.f32.mrf.mxu0
      %v2901 = vadd.f32 0.0, %v2900
      %v2902 = vpop.f32.mrf.mxu0
      %2903 = vmatprep.mubr.bf16.mxu0 0
      %2904 = vmatmul.mubr.bf16.gmra.mxu0 %v924
      %v2905 = vpop.f32.mrf.mxu0
      %v2906 = vadd.f32 0.0, %v2905
      %v2907 = vpop.f32.mrf.mxu0
      %v2908 = vpop.f32.mrf.mxu0
      %v2909 = vadd.f32 0.0, %v2908
      %v2910 = vpop.f32.mrf.mxu0
      %2911 = vmatprep.mubr.bf16.mxu0 0
      %2912 = vmatmul.mubr.bf16.gmra.mxu0 %v926
      %v2913 = vpop.f32.mrf.mxu0
      %v2914 = vadd.f32 0.0, %v2913
      %v2915 = vpop.f32.mrf.mxu0
      %v2916 = vpop.f32.mrf.mxu0
      %v2917 = vadd.f32 0.0, %v2916
      %v2918 = vpop.f32.mrf.mxu0
      %2919 = vmatprep.mubr.bf16.mxu0 0
      %2920 = vmatmul.mubr.bf16.gmra.mxu0 %v928
      %v2921 = vpop.f32.mrf.mxu0
      %v2922 = vadd.f32 0.0, %v2921
      %v2923 = vpop.f32.mrf.mxu0
      %v2924 = vpop.f32.mrf.mxu0
      %v2925 = vadd.f32 0.0, %v2924
      %v2926 = vpop.f32.mrf.mxu0
      %2927 = vmatprep.mubr.bf16.mxu0 0
      %2928 = vmatmul.mubr.bf16.gmra.mxu0 %v930
      %v2929 = vpop.f32.mrf.mxu0
      %v2930 = vadd.f32 0.0, %v2929
      %v2931 = vpop.f32.mrf.mxu0
      %v2932 = vpop.f32.mrf.mxu0
      %v2933 = vadd.f32 0.0, %v2932
      %v2934 = vpop.f32.mrf.mxu0
      %2935 = vmatprep.mubr.bf16.mxu0 0
      %2936 = vmatmul.mubr.bf16.gmra.mxu0 %v932
      %v2937 = vpop.f32.mrf.mxu0
      %v2938 = vadd.f32 0.0, %v2937
      %v2939 = vpop.f32.mrf.mxu0
      %v2940 = vpop.f32.mrf.mxu0
      %v2941 = vadd.f32 0.0, %v2940
      %v2942 = vpop.f32.mrf.mxu0
      %2943 = vmatprep.mubr.bf16.mxu0 0
      %2944 = vmatmul.mubr.bf16.gmra.mxu0 %v934
      %v2945 = vpop.f32.mrf.mxu0
      %v2946 = vadd.f32 0.0, %v2945
      %v2947 = vpop.f32.mrf.mxu0
      %v2948 = vpop.f32.mrf.mxu0
      %v2949 = vadd.f32 0.0, %v2948
      %v2950 = vpop.f32.mrf.mxu0
      %2951 = vmatprep.mubr.bf16.mxu0 0
      %2952 = vmatmul.mubr.bf16.gmra.mxu0 %v936
      %v2953 = vpop.f32.mrf.mxu0
      %v2954 = vadd.f32 0.0, %v2953
      %v2955 = vpop.f32.mrf.mxu0
      %v2956 = vpop.f32.mrf.mxu0
      %v2957 = vadd.f32 0.0, %v2956
      %v2958 = vpop.f32.mrf.mxu0
      %2959 = vmatprep.mubr.bf16.mxu0 0
      %2960 = vmatmul.mubr.bf16.gmra.mxu0 %v938
      %v2961 = vpop.f32.mrf.mxu0
      %v2962 = vadd.f32 0.0, %v2961
      %v2963 = vpop.f32.mrf.mxu0
      %v2964 = vpop.f32.mrf.mxu0
      %v2965 = vadd.f32 0.0, %v2964
      %v2966 = vpop.f32.mrf.mxu0
      %2967 = vmatprep.mubr.bf16.mxu0 0
      %2968 = vmatmul.mubr.bf16.gmra.mxu0 %v940
      %v2969 = vpop.f32.mrf.mxu0
      %v2970 = vadd.f32 0.0, %v2969
      %v2971 = vpop.f32.mrf.mxu0
      %v2972 = vpop.f32.mrf.mxu0
      %v2973 = vadd.f32 0.0, %v2972
      %v2974 = vpop.f32.mrf.mxu0
      %2975 = vdwg.mxu0
      %v2976 = vadd.f32 %v2718, %v2850
      %v2977 = vadd.f32 %v2719, %v2853
      %v2978 = vadd.f32 %v2720, %v2858
      %v2979 = vadd.f32 %v2721, %v2861
      %v2980 = vadd.f32 %v2722, %v2866
      %v2981 = vadd.f32 %v2723, %v2869
      %v2982 = vadd.f32 %v2724, %v2874
      %v2983 = vadd.f32 %v2725, %v2877
      %v2984 = vadd.f32 %v2726, %v2882
      %v2985 = vadd.f32 %v2727, %v2885
      %v2986 = vadd.f32 %v2728, %v2890
      %v2987 = vadd.f32 %v2729, %v2893
      %v2988 = vadd.f32 %v2730, %v2898
      %v2989 = vadd.f32 %v2731, %v2901
      %v2990 = vadd.f32 %v2732, %v2906
      %v2991 = vadd.f32 %v2733, %v2909
      %v2992 = vadd.f32 %v2734, %v2914
      %v2993 = vadd.f32 %v2735, %v2917
      %v2994 = vadd.f32 %v2736, %v2922
      %v2995 = vadd.f32 %v2737, %v2925
      %v2996 = vadd.f32 %v2738, %v2930
      %v2997 = vadd.f32 %v2739, %v2933
      %v2998 = vadd.f32 %v2740, %v2938
      %v2999 = vadd.f32 %v2741, %v2941
      %v3000 = vadd.f32 %v2742, %v2946
      %v3001 = vadd.f32 %v2743, %v2949
      %v3002 = vadd.f32 %v2744, %v2954
      %v3003 = vadd.f32 %v2745, %v2957
      %v3004 = vadd.f32 %v2746, %v2962
      %v3005 = vadd.f32 %v2747, %v2965
      %v3006 = vadd.f32 %v2748, %v2970
      %v3007 = vadd.f32 %v2749, %v2973
      %v3009 = vshrl.u32 %v940, 16
      %v3011 = vshll.u32 %v940, 16
      %v3013 = vrot.slane %v3011, 1
      %v3014 = vor.u32 %v3009, %v3013
      %v3016 = vshll.u32 %v941, 16
      %v3018 = vrot.slane %v3016, 1
      %v3019 = vsel %vm958, %v3014, %v3018
      %s3021 = scalar_lea.vmem %s5, 448
      %v3022 = vld [vmem:[%s3021] sm:$0xf]
      %v3023 = vld [vmem:[%s3021 + $0x4] sm:$0xf]
      %v3024 = vld [vmem:[%s3021 + $0x8] sm:$0xf]
      %v3025 = vld [vmem:[%s3021 + $0xc] sm:$0xf]
      %v3026 = vld [vmem:[%s3021 + $0x10] sm:$0xf]
      %v3027 = vld [vmem:[%s3021 + $0x14] sm:$0xf]
      %v3028 = vld [vmem:[%s3021 + $0x18] sm:$0xf]
      %v3029 = vld [vmem:[%s3021 + $0x1c] sm:$0xf]
      %v3030 = vld [vmem:[%s3021 + $0x20] sm:$0xf]
      %v3031 = vld [vmem:[%s3021 + $0x24] sm:$0xf]
      %v3032 = vld [vmem:[%s3021 + $0x28] sm:$0xf]
      %v3033 = vld [vmem:[%s3021 + $0x2c] sm:$0xf]
      %v3034 = vld [vmem:[%s3021 + $0x30] sm:$0xf]
      %v3035 = vld [vmem:[%s3021 + $0x34] sm:$0xf]
      %v3036 = vld [vmem:[%s3021 + $0x38] sm:$0xf]
      %v3037 = vld [vmem:[%s3021 + $0x3c] sm:$0xf]
      %v3054 = vunpack.c.l.b16 %v3022
      %v3055 = vunpack.c.l.b16 %v3023
      %v3056 = vunpack.c.l.b16 %v3024
      %v3057 = vunpack.c.l.b16 %v3025
      %v3058 = vunpack.c.l.b16 %v3026
      %v3059 = vunpack.c.l.b16 %v3027
      %v3060 = vunpack.c.l.b16 %v3028
      %v3061 = vunpack.c.l.b16 %v3029
      %v3062 = vunpack.c.l.b16 %v3030
      %v3063 = vunpack.c.l.b16 %v3031
      %v3064 = vunpack.c.l.b16 %v3032
      %v3065 = vunpack.c.l.b16 %v3033
      %v3066 = vunpack.c.l.b16 %v3034
      %v3067 = vunpack.c.l.b16 %v3035
      %v3068 = vunpack.c.l.b16 %v3036
      %v3069 = vunpack.c.l.b16 %v3037
      %v3070 = vpack.c.b16 %v3055, %v3054
      %v3071 = vpack.c.b16 %v3057, %v3056
      %v3072 = vpack.c.b16 %v3059, %v3058
      %v3073 = vpack.c.b16 %v3061, %v3060
      %v3074 = vpack.c.b16 %v3063, %v3062
      %v3075 = vpack.c.b16 %v3065, %v3064
      %v3076 = vpack.c.b16 %v3067, %v3066
      %v3077 = vpack.c.b16 %v3069, %v3068
      %3086 = vmatprep.subr.bf16.mxu0 0
      %3087 = vmatpush1.bf16.msra.mxu0 %v3077
      %3088 = vmatprep.subr.bf16.mxu0 0
      %3089 = vmatpush1.bf16.msra.mxu0 %v3076
      %3090 = vmatprep.subr.bf16.mxu0 0
      %3091 = vmatpush1.bf16.msra.mxu0 %v3075
      %3092 = vmatprep.subr.bf16.mxu0 0
      %3093 = vmatpush1.bf16.msra.mxu0 %v3074
      %3094 = vmatprep.subr.bf16.mxu0 0
      %3095 = vmatpush1.bf16.msra.mxu0 %v3073
      %3096 = vmatprep.subr.bf16.mxu0 0
      %3097 = vmatpush1.bf16.msra.mxu0 %v3072
      %3098 = vmatprep.subr.bf16.mxu0 0
      %3099 = vmatpush1.bf16.msra.mxu0 %v3071
      %3100 = vmatprep.subr.bf16.mxu0 0
      %3101 = vmatpush1.bf16.msra.mxu0 %v3070
      %3102 = vmatprep.subr.bf16.mxu0 0
      %3103 = vmatpush2.bf16.msra.mxu0 0
      %3104 = vmatprep.subr.bf16.mxu0 0
      %3105 = vmatpush2.bf16.msra.mxu0 0
      %3106 = vmatprep.subr.bf16.mxu0 0
      %3107 = vmatpush2.bf16.msra.mxu0 0
      %3108 = vmatprep.subr.bf16.mxu0 0
      %3109 = vmatpush2.bf16.msra.mxu0 0
      %3110 = vmatprep.subr.bf16.mxu0 0
      %3111 = vmatpush2.bf16.msra.mxu0 0
      %3112 = vmatprep.subr.bf16.mxu0 0
      %3113 = vmatpush2.bf16.msra.mxu0 0
      %3114 = vmatprep.subr.bf16.mxu0 0
      %3115 = vmatpush2.bf16.msra.mxu0 0
      %3116 = vmatprep.subr.bf16.mxu0 0
      %3117 = vmatpush2.bf16.msra.mxu0 0
      %3118 = vmatprep.mubr.bf16.mxu0 0
      %3119 = vmatmul.mubr.bf16.gmra.mxu0 %v994
      %v3120 = vpop.f32.mrf.mxu0
      %v3121 = vadd.f32 0.0, %v3120
      %v3122 = vpop.f32.mrf.mxu0
      %v3123 = vpop.f32.mrf.mxu0
      %v3124 = vadd.f32 0.0, %v3123
      %v3125 = vpop.f32.mrf.mxu0
      %3126 = vmatprep.mubr.bf16.mxu0 0
      %3127 = vmatmul.mubr.bf16.gmra.mxu0 %v1006
      %v3128 = vpop.f32.mrf.mxu0
      %v3129 = vadd.f32 0.0, %v3128
      %v3130 = vpop.f32.mrf.mxu0
      %v3131 = vpop.f32.mrf.mxu0
      %v3132 = vadd.f32 0.0, %v3131
      %v3133 = vpop.f32.mrf.mxu0
      %3134 = vmatprep.mubr.bf16.mxu0 0
      %3135 = vmatmul.mubr.bf16.gmra.mxu0 %v1018
      %v3136 = vpop.f32.mrf.mxu0
      %v3137 = vadd.f32 0.0, %v3136
      %v3138 = vpop.f32.mrf.mxu0
      %v3139 = vpop.f32.mrf.mxu0
      %v3140 = vadd.f32 0.0, %v3139
      %v3141 = vpop.f32.mrf.mxu0
      %3142 = vmatprep.mubr.bf16.mxu0 0
      %3143 = vmatmul.mubr.bf16.gmra.mxu0 %v1030
      %v3144 = vpop.f32.mrf.mxu0
      %v3145 = vadd.f32 0.0, %v3144
      %v3146 = vpop.f32.mrf.mxu0
      %v3147 = vpop.f32.mrf.mxu0
      %v3148 = vadd.f32 0.0, %v3147
      %v3149 = vpop.f32.mrf.mxu0
      %3150 = vmatprep.mubr.bf16.mxu0 0
      %3151 = vmatmul.mubr.bf16.gmra.mxu0 %v1042
      %v3152 = vpop.f32.mrf.mxu0
      %v3153 = vadd.f32 0.0, %v3152
      %v3154 = vpop.f32.mrf.mxu0
      %v3155 = vpop.f32.mrf.mxu0
      %v3156 = vadd.f32 0.0, %v3155
      %v3157 = vpop.f32.mrf.mxu0
      %3158 = vmatprep.mubr.bf16.mxu0 0
      %3159 = vmatmul.mubr.bf16.gmra.mxu0 %v1054
      %v3160 = vpop.f32.mrf.mxu0
      %v3161 = vadd.f32 0.0, %v3160
      %v3162 = vpop.f32.mrf.mxu0
      %v3163 = vpop.f32.mrf.mxu0
      %v3164 = vadd.f32 0.0, %v3163
      %v3165 = vpop.f32.mrf.mxu0
      %3166 = vmatprep.mubr.bf16.mxu0 0
      %3167 = vmatmul.mubr.bf16.gmra.mxu0 %v1066
      %v3168 = vpop.f32.mrf.mxu0
      %v3169 = vadd.f32 0.0, %v3168
      %v3170 = vpop.f32.mrf.mxu0
      %v3171 = vpop.f32.mrf.mxu0
      %v3172 = vadd.f32 0.0, %v3171
      %v3173 = vpop.f32.mrf.mxu0
      %3174 = vmatprep.mubr.bf16.mxu0 0
      %3175 = vmatmul.mubr.bf16.gmra.mxu0 %v1078
      %v3176 = vpop.f32.mrf.mxu0
      %v3177 = vadd.f32 0.0, %v3176
      %v3178 = vpop.f32.mrf.mxu0
      %v3179 = vpop.f32.mrf.mxu0
      %v3180 = vadd.f32 0.0, %v3179
      %v3181 = vpop.f32.mrf.mxu0
      %3182 = vmatprep.mubr.bf16.mxu0 0
      %3183 = vmatmul.mubr.bf16.gmra.mxu0 %v1090
      %v3184 = vpop.f32.mrf.mxu0
      %v3185 = vadd.f32 0.0, %v3184
      %v3186 = vpop.f32.mrf.mxu0
      %v3187 = vpop.f32.mrf.mxu0
      %v3188 = vadd.f32 0.0, %v3187
      %v3189 = vpop.f32.mrf.mxu0
      %3190 = vmatprep.mubr.bf16.mxu0 0
      %3191 = vmatmul.mubr.bf16.gmra.mxu0 %v1102
      %v3192 = vpop.f32.mrf.mxu0
      %v3193 = vadd.f32 0.0, %v3192
      %v3194 = vpop.f32.mrf.mxu0
      %v3195 = vpop.f32.mrf.mxu0
      %v3196 = vadd.f32 0.0, %v3195
      %v3197 = vpop.f32.mrf.mxu0
      %3198 = vmatprep.mubr.bf16.mxu0 0
      %3199 = vmatmul.mubr.bf16.gmra.mxu0 %v1114
      %v3200 = vpop.f32.mrf.mxu0
      %v3201 = vadd.f32 0.0, %v3200
      %v3202 = vpop.f32.mrf.mxu0
      %v3203 = vpop.f32.mrf.mxu0
      %v3204 = vadd.f32 0.0, %v3203
      %v3205 = vpop.f32.mrf.mxu0
      %3206 = vmatprep.mubr.bf16.mxu0 0
      %3207 = vmatmul.mubr.bf16.gmra.mxu0 %v1126
      %v3208 = vpop.f32.mrf.mxu0
      %v3209 = vadd.f32 0.0, %v3208
      %v3210 = vpop.f32.mrf.mxu0
      %v3211 = vpop.f32.mrf.mxu0
      %v3212 = vadd.f32 0.0, %v3211
      %v3213 = vpop.f32.mrf.mxu0
      %3214 = vmatprep.mubr.bf16.mxu0 0
      %3215 = vmatmul.mubr.bf16.gmra.mxu0 %v1138
      %v3216 = vpop.f32.mrf.mxu0
      %v3217 = vadd.f32 0.0, %v3216
      %v3218 = vpop.f32.mrf.mxu0
      %v3219 = vpop.f32.mrf.mxu0
      %v3220 = vadd.f32 0.0, %v3219
      %v3221 = vpop.f32.mrf.mxu0
      %3222 = vmatprep.mubr.bf16.mxu0 0
      %3223 = vmatmul.mubr.bf16.gmra.mxu0 %v1150
      %v3224 = vpop.f32.mrf.mxu0
      %v3225 = vadd.f32 0.0, %v3224
      %v3226 = vpop.f32.mrf.mxu0
      %v3227 = vpop.f32.mrf.mxu0
      %v3228 = vadd.f32 0.0, %v3227
      %v3229 = vpop.f32.mrf.mxu0
      %3230 = vmatprep.mubr.bf16.mxu0 0
      %3231 = vmatmul.mubr.bf16.gmra.mxu0 %v2226
      %v3232 = vpop.f32.mrf.mxu0
      %v3233 = vadd.f32 0.0, %v3232
      %v3234 = vpop.f32.mrf.mxu0
      %v3235 = vpop.f32.mrf.mxu0
      %v3236 = vadd.f32 0.0, %v3235
      %v3237 = vpop.f32.mrf.mxu0
      %3238 = vmatprep.mubr.bf16.mxu0 0
      %3239 = vmatmul.mubr.bf16.gmra.mxu0 %v3019
      %v3240 = vpop.f32.mrf.mxu0
      %v3241 = vadd.f32 0.0, %v3240
      %v3242 = vpop.f32.mrf.mxu0
      %v3243 = vpop.f32.mrf.mxu0
      %v3244 = vadd.f32 0.0, %v3243
      %v3245 = vpop.f32.mrf.mxu0
      %3246 = vdwg.mxu0
      %v3247 = vadd.f32 %v2976, %v3121
      %v3248 = vadd.f32 %v2977, %v3124
      %v3249 = vadd.f32 %v2978, %v3129
      %v3250 = vadd.f32 %v2979, %v3132
      %v3251 = vadd.f32 %v2980, %v3137
      %v3252 = vadd.f32 %v2981, %v3140
      %v3253 = vadd.f32 %v2982, %v3145
      %v3254 = vadd.f32 %v2983, %v3148
      %v3255 = vadd.f32 %v2984, %v3153
      %v3256 = vadd.f32 %v2985, %v3156
      %v3257 = vadd.f32 %v2986, %v3161
      %v3258 = vadd.f32 %v2987, %v3164
      %v3259 = vadd.f32 %v2988, %v3169
      %v3260 = vadd.f32 %v2989, %v3172
      %v3261 = vadd.f32 %v2990, %v3177
      %v3262 = vadd.f32 %v2991, %v3180
      %v3263 = vadd.f32 %v2992, %v3185
      %v3264 = vadd.f32 %v2993, %v3188
      %v3265 = vadd.f32 %v2994, %v3193
      %v3266 = vadd.f32 %v2995, %v3196
      %v3267 = vadd.f32 %v2996, %v3201
      %v3268 = vadd.f32 %v2997, %v3204
      %v3269 = vadd.f32 %v2998, %v3209
      %v3270 = vadd.f32 %v2999, %v3212
      %v3271 = vadd.f32 %v3000, %v3217
      %v3272 = vadd.f32 %v3001, %v3220
      %v3273 = vadd.f32 %v3002, %v3225
      %v3274 = vadd.f32 %v3003, %v3228
      %v3275 = vadd.f32 %v3004, %v3233
      %v3276 = vadd.f32 %v3005, %v3236
      %v3277 = vadd.f32 %v3006, %v3241
      %v3278 = vadd.f32 %v3007, %v3244
      %v3281 = vrot.slane %v940, 1
      %v3282 = vrot.slane %v941, 1
      %v3283 = vsel %vm1634, %v3281, %v3282
      %s3285 = scalar_lea.vmem %s5, 512
      %v3286 = vld [vmem:[%s3285] sm:$0xf]
      %v3287 = vld [vmem:[%s3285 + $0x4] sm:$0xf]
      %v3288 = vld [vmem:[%s3285 + $0x8] sm:$0xf]
      %v3289 = vld [vmem:[%s3285 + $0xc] sm:$0xf]
      %v3290 = vld [vmem:[%s3285 + $0x10] sm:$0xf]
      %v3291 = vld [vmem:[%s3285 + $0x14] sm:$0xf]
      %v3292 = vld [vmem:[%s3285 + $0x18] sm:$0xf]
      %v3293 = vld [vmem:[%s3285 + $0x1c] sm:$0xf]
      %v3294 = vld [vmem:[%s3285 + $0x20] sm:$0xf]
      %v3295 = vld [vmem:[%s3285 + $0x24] sm:$0xf]
      %v3296 = vld [vmem:[%s3285 + $0x28] sm:$0xf]
      %v3297 = vld [vmem:[%s3285 + $0x2c] sm:$0xf]
      %v3298 = vld [vmem:[%s3285 + $0x30] sm:$0xf]
      %v3299 = vld [vmem:[%s3285 + $0x34] sm:$0xf]
      %v3300 = vld [vmem:[%s3285 + $0x38] sm:$0xf]
      %v3301 = vld [vmem:[%s3285 + $0x3c] sm:$0xf]
      %v3318 = vunpack.c.l.b16 %v3286
      %v3319 = vunpack.c.l.b16 %v3287
      %v3320 = vunpack.c.l.b16 %v3288
      %v3321 = vunpack.c.l.b16 %v3289
      %v3322 = vunpack.c.l.b16 %v3290
      %v3323 = vunpack.c.l.b16 %v3291
      %v3324 = vunpack.c.l.b16 %v3292
      %v3325 = vunpack.c.l.b16 %v3293
      %v3326 = vunpack.c.l.b16 %v3294
      %v3327 = vunpack.c.l.b16 %v3295
      %v3328 = vunpack.c.l.b16 %v3296
      %v3329 = vunpack.c.l.b16 %v3297
      %v3330 = vunpack.c.l.b16 %v3298
      %v3331 = vunpack.c.l.b16 %v3299
      %v3332 = vunpack.c.l.b16 %v3300
      %v3333 = vunpack.c.l.b16 %v3301
      %v3334 = vpack.c.b16 %v3319, %v3318
      %v3335 = vpack.c.b16 %v3321, %v3320
      %v3336 = vpack.c.b16 %v3323, %v3322
      %v3337 = vpack.c.b16 %v3325, %v3324
      %v3338 = vpack.c.b16 %v3327, %v3326
      %v3339 = vpack.c.b16 %v3329, %v3328
      %v3340 = vpack.c.b16 %v3331, %v3330
      %v3341 = vpack.c.b16 %v3333, %v3332
      %3350 = vmatprep.subr.bf16.mxu0 0
      %3351 = vmatpush1.bf16.msra.mxu0 %v3341
      %3352 = vmatprep.subr.bf16.mxu0 0
      %3353 = vmatpush1.bf16.msra.mxu0 %v3340
      %3354 = vmatprep.subr.bf16.mxu0 0
      %3355 = vmatpush1.bf16.msra.mxu0 %v3339
      %3356 = vmatprep.subr.bf16.mxu0 0
      %3357 = vmatpush1.bf16.msra.mxu0 %v3338
      %3358 = vmatprep.subr.bf16.mxu0 0
      %3359 = vmatpush1.bf16.msra.mxu0 %v3337
      %3360 = vmatprep.subr.bf16.mxu0 0
      %3361 = vmatpush1.bf16.msra.mxu0 %v3336
      %3362 = vmatprep.subr.bf16.mxu0 0
      %3363 = vmatpush1.bf16.msra.mxu0 %v3335
      %3364 = vmatprep.subr.bf16.mxu0 0
      %3365 = vmatpush1.bf16.msra.mxu0 %v3334
      %3366 = vmatprep.subr.bf16.mxu0 0
      %3367 = vmatpush2.bf16.msra.mxu0 0
      %3368 = vmatprep.subr.bf16.mxu0 0
      %3369 = vmatpush2.bf16.msra.mxu0 0
      %3370 = vmatprep.subr.bf16.mxu0 0
      %3371 = vmatpush2.bf16.msra.mxu0 0
      %3372 = vmatprep.subr.bf16.mxu0 0
      %3373 = vmatpush2.bf16.msra.mxu0 0
      %3374 = vmatprep.subr.bf16.mxu0 0
      %3375 = vmatpush2.bf16.msra.mxu0 0
      %3376 = vmatprep.subr.bf16.mxu0 0
      %3377 = vmatpush2.bf16.msra.mxu0 0
      %3378 = vmatprep.subr.bf16.mxu0 0
      %3379 = vmatpush2.bf16.msra.mxu0 0
      %3380 = vmatprep.subr.bf16.mxu0 0
      %3381 = vmatpush2.bf16.msra.mxu0 0
      %3382 = vmatprep.mubr.bf16.mxu0 0
      %3383 = vmatmul.mubr.bf16.gmra.mxu0 %v1643
      %v3384 = vpop.f32.mrf.mxu0
      %v3385 = vadd.f32 0.0, %v3384
      %v3386 = vpop.f32.mrf.mxu0
      %v3387 = vpop.f32.mrf.mxu0
      %v3388 = vadd.f32 0.0, %v3387
      %v3389 = vpop.f32.mrf.mxu0
      %3390 = vmatprep.mubr.bf16.mxu0 0
      %3391 = vmatmul.mubr.bf16.gmra.mxu0 %v1646
      %v3392 = vpop.f32.mrf.mxu0
      %v3393 = vadd.f32 0.0, %v3392
      %v3394 = vpop.f32.mrf.mxu0
      %v3395 = vpop.f32.mrf.mxu0
      %v3396 = vadd.f32 0.0, %v3395
      %v3397 = vpop.f32.mrf.mxu0
      %3398 = vmatprep.mubr.bf16.mxu0 0
      %3399 = vmatmul.mubr.bf16.gmra.mxu0 %v1649
      %v3400 = vpop.f32.mrf.mxu0
      %v3401 = vadd.f32 0.0, %v3400
      %v3402 = vpop.f32.mrf.mxu0
      %v3403 = vpop.f32.mrf.mxu0
      %v3404 = vadd.f32 0.0, %v3403
      %v3405 = vpop.f32.mrf.mxu0
      %3406 = vmatprep.mubr.bf16.mxu0 0
      %3407 = vmatmul.mubr.bf16.gmra.mxu0 %v1652
      %v3408 = vpop.f32.mrf.mxu0
      %v3409 = vadd.f32 0.0, %v3408
      %v3410 = vpop.f32.mrf.mxu0
      %v3411 = vpop.f32.mrf.mxu0
      %v3412 = vadd.f32 0.0, %v3411
      %v3413 = vpop.f32.mrf.mxu0
      %3414 = vmatprep.mubr.bf16.mxu0 0
      %3415 = vmatmul.mubr.bf16.gmra.mxu0 %v1655
      %v3416 = vpop.f32.mrf.mxu0
      %v3417 = vadd.f32 0.0, %v3416
      %v3418 = vpop.f32.mrf.mxu0
      %v3419 = vpop.f32.mrf.mxu0
      %v3420 = vadd.f32 0.0, %v3419
      %v3421 = vpop.f32.mrf.mxu0
      %3422 = vmatprep.mubr.bf16.mxu0 0
      %3423 = vmatmul.mubr.bf16.gmra.mxu0 %v1658
      %v3424 = vpop.f32.mrf.mxu0
      %v3425 = vadd.f32 0.0, %v3424
      %v3426 = vpop.f32.mrf.mxu0
      %v3427 = vpop.f32.mrf.mxu0
      %v3428 = vadd.f32 0.0, %v3427
      %v3429 = vpop.f32.mrf.mxu0
      %3430 = vmatprep.mubr.bf16.mxu0 0
      %3431 = vmatmul.mubr.bf16.gmra.mxu0 %v1661
      %v3432 = vpop.f32.mrf.mxu0
      %v3433 = vadd.f32 0.0, %v3432
      %v3434 = vpop.f32.mrf.mxu0
      %v3435 = vpop.f32.mrf.mxu0
      %v3436 = vadd.f32 0.0, %v3435
      %v3437 = vpop.f32.mrf.mxu0
      %3438 = vmatprep.mubr.bf16.mxu0 0
      %3439 = vmatmul.mubr.bf16.gmra.mxu0 %v1664
      %v3440 = vpop.f32.mrf.mxu0
      %v3441 = vadd.f32 0.0, %v3440
      %v3442 = vpop.f32.mrf.mxu0
      %v3443 = vpop.f32.mrf.mxu0
      %v3444 = vadd.f32 0.0, %v3443
      %v3445 = vpop.f32.mrf.mxu0
      %3446 = vmatprep.mubr.bf16.mxu0 0
      %3447 = vmatmul.mubr.bf16.gmra.mxu0 %v1667
      %v3448 = vpop.f32.mrf.mxu0
      %v3449 = vadd.f32 0.0, %v3448
      %v3450 = vpop.f32.mrf.mxu0
      %v3451 = vpop.f32.mrf.mxu0
      %v3452 = vadd.f32 0.0, %v3451
      %v3453 = vpop.f32.mrf.mxu0
      %3454 = vmatprep.mubr.bf16.mxu0 0
      %3455 = vmatmul.mubr.bf16.gmra.mxu0 %v1670
      %v3456 = vpop.f32.mrf.mxu0
      %v3457 = vadd.f32 0.0, %v3456
      %v3458 = vpop.f32.mrf.mxu0
      %v3459 = vpop.f32.mrf.mxu0
      %v3460 = vadd.f32 0.0, %v3459
      %v3461 = vpop.f32.mrf.mxu0
      %3462 = vmatprep.mubr.bf16.mxu0 0
      %3463 = vmatmul.mubr.bf16.gmra.mxu0 %v1673
      %v3464 = vpop.f32.mrf.mxu0
      %v3465 = vadd.f32 0.0, %v3464
      %v3466 = vpop.f32.mrf.mxu0
      %v3467 = vpop.f32.mrf.mxu0
      %v3468 = vadd.f32 0.0, %v3467
      %v3469 = vpop.f32.mrf.mxu0
      %3470 = vmatprep.mubr.bf16.mxu0 0
      %3471 = vmatmul.mubr.bf16.gmra.mxu0 %v1676
      %v3472 = vpop.f32.mrf.mxu0
      %v3473 = vadd.f32 0.0, %v3472
      %v3474 = vpop.f32.mrf.mxu0
      %v3475 = vpop.f32.mrf.mxu0
      %v3476 = vadd.f32 0.0, %v3475
      %v3477 = vpop.f32.mrf.mxu0
      %3478 = vmatprep.mubr.bf16.mxu0 0
      %3479 = vmatmul.mubr.bf16.gmra.mxu0 %v1679
      %v3480 = vpop.f32.mrf.mxu0
      %v3481 = vadd.f32 0.0, %v3480
      %v3482 = vpop.f32.mrf.mxu0
      %v3483 = vpop.f32.mrf.mxu0
      %v3484 = vadd.f32 0.0, %v3483
      %v3485 = vpop.f32.mrf.mxu0
      %3486 = vmatprep.mubr.bf16.mxu0 0
      %3487 = vmatmul.mubr.bf16.gmra.mxu0 %v1682
      %v3488 = vpop.f32.mrf.mxu0
      %v3489 = vadd.f32 0.0, %v3488
      %v3490 = vpop.f32.mrf.mxu0
      %v3491 = vpop.f32.mrf.mxu0
      %v3492 = vadd.f32 0.0, %v3491
      %v3493 = vpop.f32.mrf.mxu0
      %3494 = vmatprep.mubr.bf16.mxu0 0
      %3495 = vmatmul.mubr.bf16.gmra.mxu0 %v2490
      %v3496 = vpop.f32.mrf.mxu0
      %v3497 = vadd.f32 0.0, %v3496
      %v3498 = vpop.f32.mrf.mxu0
      %v3499 = vpop.f32.mrf.mxu0
      %v3500 = vadd.f32 0.0, %v3499
      %v3501 = vpop.f32.mrf.mxu0
      %3502 = vmatprep.mubr.bf16.mxu0 0
      %3503 = vmatmul.mubr.bf16.gmra.mxu0 %v3283
      %v3504 = vpop.f32.mrf.mxu0
      %v3505 = vadd.f32 0.0, %v3504
      %v3506 = vpop.f32.mrf.mxu0
      %v3507 = vpop.f32.mrf.mxu0
      %v3508 = vadd.f32 0.0, %v3507
      %v3509 = vpop.f32.mrf.mxu0
      %3510 = vdwg.mxu0
      %v3511 = vadd.f32 %v3247, %v3385
      %v3512 = vadd.f32 %v3248, %v3388
      %v3513 = vadd.f32 %v3249, %v3393
      %v3514 = vadd.f32 %v3250, %v3396
      %v3515 = vadd.f32 %v3251, %v3401
      %v3516 = vadd.f32 %v3252, %v3404
      %v3517 = vadd.f32 %v3253, %v3409
      %v3518 = vadd.f32 %v3254, %v3412
      %v3519 = vadd.f32 %v3255, %v3417
      %v3520 = vadd.f32 %v3256, %v3420
      %v3521 = vadd.f32 %v3257, %v3425
      %v3522 = vadd.f32 %v3258, %v3428
      %v3523 = vadd.f32 %v3259, %v3433
      %v3524 = vadd.f32 %v3260, %v3436
      %v3525 = vadd.f32 %v3261, %v3441
      %v3526 = vadd.f32 %v3262, %v3444
      %v3527 = vadd.f32 %v3263, %v3449
      %v3528 = vadd.f32 %v3264, %v3452
      %v3529 = vadd.f32 %v3265, %v3457
      %v3530 = vadd.f32 %v3266, %v3460
      %v3531 = vadd.f32 %v3267, %v3465
      %v3532 = vadd.f32 %v3268, %v3468
      %v3533 = vadd.f32 %v3269, %v3473
      %v3534 = vadd.f32 %v3270, %v3476
      %v3535 = vadd.f32 %v3271, %v3481
      %v3536 = vadd.f32 %v3272, %v3484
      %v3537 = vadd.f32 %v3273, %v3489
      %v3538 = vadd.f32 %v3274, %v3492
      %v3539 = vadd.f32 %v3275, %v3497
      %v3540 = vadd.f32 %v3276, %v3500
      %v3541 = vadd.f32 %v3277, %v3505
      %v3542 = vadd.f32 %v3278, %v3508
      %v3543 = vld [vmem:[%s473] sm:$0xff]
      %v3544 = vld [vmem:[%s473 + $0x8] sm:$0xff]
      %v3545 = vld [vmem:[%s473 + $0x10] sm:$0xff]
      %v3546 = vld [vmem:[%s473 + $0x18] sm:$0xff]
      %v3547 = vld [vmem:[%s473 + $0x20] sm:$0xff]
      %v3548 = vld [vmem:[%s473 + $0x28] sm:$0xff]
      %v3549 = vld [vmem:[%s473 + $0x30] sm:$0xff]
      %v3550 = vld [vmem:[%s473 + $0x38] sm:$0xff]
      %v3551 = vld [vmem:[%s473 + $0x40] sm:$0xff]
      %v3552 = vld [vmem:[%s473 + $0x48] sm:$0xff]
      %v3553 = vld [vmem:[%s473 + $0x50] sm:$0xff]
      %v3554 = vld [vmem:[%s473 + $0x58] sm:$0xff]
      %v3555 = vld [vmem:[%s473 + $0x60] sm:$0xff]
      %v3556 = vld [vmem:[%s473 + $0x68] sm:$0xff]
      %v3557 = vld [vmem:[%s473 + $0x70] sm:$0xff]
      %v3558 = vld [vmem:[%s473 + $0x78] sm:$0xff]
      %v3559 = vld [vmem:[%s473 + $0x80] sm:$0xff]
      %v3560 = vld [vmem:[%s473 + $0x88] sm:$0xff]
      %v3561 = vld [vmem:[%s473 + $0x90] sm:$0xff]
      %v3562 = vld [vmem:[%s473 + $0x98] sm:$0xff]
      %v3563 = vld [vmem:[%s473 + $0xa0] sm:$0xff]
      %v3564 = vld [vmem:[%s473 + $0xa8] sm:$0xff]
      %v3565 = vld [vmem:[%s473 + $0xb0] sm:$0xff]
      %v3566 = vld [vmem:[%s473 + $0xb8] sm:$0xff]
      %v3567 = vld [vmem:[%s473 + $0xc0] sm:$0xff]
      %v3568 = vld [vmem:[%s473 + $0xc8] sm:$0xff]
      %v3569 = vld [vmem:[%s473 + $0xd0] sm:$0xff]
      %v3570 = vld [vmem:[%s473 + $0xd8] sm:$0xff]
      %v3571 = vld [vmem:[%s473 + $0xe0] sm:$0xff]
      %v3572 = vld [vmem:[%s473 + $0xe8] sm:$0xff]
      %v3573 = vld [vmem:[%s473 + $0xf0] sm:$0xff]
      %v3574 = vld [vmem:[%s473 + $0xf8] sm:$0xff]
      %v3575 = vadd.f32 %v3511, %v3543
      %v3576 = vadd.f32 %v3512, %v3544
      %v3577 = vadd.f32 %v3513, %v3545
      %v3578 = vadd.f32 %v3514, %v3546
      %v3579 = vadd.f32 %v3515, %v3547
      %v3580 = vadd.f32 %v3516, %v3548
      %v3581 = vadd.f32 %v3517, %v3549
      %v3582 = vadd.f32 %v3518, %v3550
      %v3583 = vadd.f32 %v3519, %v3551
      %v3584 = vadd.f32 %v3520, %v3552
      %v3585 = vadd.f32 %v3521, %v3553
      %v3586 = vadd.f32 %v3522, %v3554
      %v3587 = vadd.f32 %v3523, %v3555
      %v3588 = vadd.f32 %v3524, %v3556
      %v3589 = vadd.f32 %v3525, %v3557
      %v3590 = vadd.f32 %v3526, %v3558
      %v3591 = vadd.f32 %v3527, %v3559
      %v3592 = vadd.f32 %v3528, %v3560
      %v3593 = vadd.f32 %v3529, %v3561
      %v3594 = vadd.f32 %v3530, %v3562
      %v3595 = vadd.f32 %v3531, %v3563
      %v3596 = vadd.f32 %v3532, %v3564
      %v3597 = vadd.f32 %v3533, %v3565
      %v3598 = vadd.f32 %v3534, %v3566
      %v3599 = vadd.f32 %v3535, %v3567
      %v3600 = vadd.f32 %v3536, %v3568
      %v3601 = vadd.f32 %v3537, %v3569
      %v3602 = vadd.f32 %v3538, %v3570
      %v3603 = vadd.f32 %v3539, %v3571
      %v3604 = vadd.f32 %v3540, %v3572
      %v3605 = vadd.f32 %v3541, %v3573
      %v3606 = vadd.f32 %v3542, %v3574
      %3607 = vst.msk [vmem:[%s484] sm:$0xff] %vm495, %v3575
      %3608 = vst.msk [vmem:[%s484 + $0x8] sm:$0xff] %vm495, %v3576
      %3609 = vst.msk [vmem:[%s484 + $0x10] sm:$0xff] %vm495, %v3577
      %3610 = vst.msk [vmem:[%s484 + $0x18] sm:$0xff] %vm495, %v3578
      %3611 = vst.msk [vmem:[%s484 + $0x20] sm:$0xff] %vm495, %v3579
      %3612 = vst.msk [vmem:[%s484 + $0x28] sm:$0xff] %vm495, %v3580
      %3613 = vst.msk [vmem:[%s484 + $0x30] sm:$0xff] %vm495, %v3581
      %3614 = vst.msk [vmem:[%s484 + $0x38] sm:$0xff] %vm495, %v3582
      %3615 = vst.msk [vmem:[%s484 + $0x40] sm:$0xff] %vm495, %v3583
      %3616 = vst.msk [vmem:[%s484 + $0x48] sm:$0xff] %vm495, %v3584
      %3617 = vst.msk [vmem:[%s484 + $0x50] sm:$0xff] %vm495, %v3585
      %3618 = vst.msk [vmem:[%s484 + $0x58] sm:$0xff] %vm495, %v3586
      %3619 = vst.msk [vmem:[%s484 + $0x60] sm:$0xff] %vm495, %v3587
      %3620 = vst.msk [vmem:[%s484 + $0x68] sm:$0xff] %vm495, %v3588
      %3621 = vst.msk [vmem:[%s484 + $0x70] sm:$0xff] %vm495, %v3589
      %3622 = vst.msk [vmem:[%s484 + $0x78] sm:$0xff] %vm495, %v3590
      %3623 = vst.msk [vmem:[%s484 + $0x80] sm:$0xff] %vm495, %v3591
      %3624 = vst.msk [vmem:[%s484 + $0x88] sm:$0xff] %vm495, %v3592
      %3625 = vst.msk [vmem:[%s484 + $0x90] sm:$0xff] %vm495, %v3593
      %3626 = vst.msk [vmem:[%s484 + $0x98] sm:$0xff] %vm495, %v3594
      %3627 = vst.msk [vmem:[%s484 + $0xa0] sm:$0xff] %vm495, %v3595
      %3628 = vst.msk [vmem:[%s484 + $0xa8] sm:$0xff] %vm495, %v3596
      %3629 = vst.msk [vmem:[%s484 + $0xb0] sm:$0xff] %vm495, %v3597
      %3630 = vst.msk [vmem:[%s484 + $0xb8] sm:$0xff] %vm495, %v3598
      %3631 = vst.msk [vmem:[%s484 + $0xc0] sm:$0xff] %vm495, %v3599
      %3632 = vst.msk [vmem:[%s484 + $0xc8] sm:$0xff] %vm495, %v3600
      %3633 = vst.msk [vmem:[%s484 + $0xd0] sm:$0xff] %vm495, %v3601
      %3634 = vst.msk [vmem:[%s484 + $0xd8] sm:$0xff] %vm495, %v3602
      %3635 = vst.msk [vmem:[%s484 + $0xe0] sm:$0xff] %vm495, %v3603
      %3636 = vst.msk [vmem:[%s484 + $0xe8] sm:$0xff] %vm495, %v3604
      %3637 = vst.msk [vmem:[%s484 + $0xf0] sm:$0xff] %vm495, %v3605
      %3638 = vst.msk [vmem:[%s484 + $0xf8] sm:$0xff] %vm495, %v3606
      %s3639 = smul.u32 16, %s23
      %p3640 = scmp.lt.s32.totalorder %s22, 1
      %s3641 = scalar_select %p3640, %s22, 1
      %p3642 = scmp.lt.s32.totalorder %s3639, 15
      %s3643 = scalar_select %p3642, %s3639, 15
      %s3644 = smul.addr %s3643, 2
      %s3645 = smul.addr %s3641, 32
      %s3646 = sadd.s32 %s3644, %s3645
      %s3647 = smul.addr %s3646, 8
      %s3648 = scalar_lea.vmem %s7, %s3647
      // Predicated region
      $region49: #{preact_basic_block.3} parent=47 // pred_check
        %p3649 = pneg %p241
      $region50: #{preact_basic_block.3} parent=47 // pred_check_branch
        %3651 = sbr.rel (%p3649) target = $region52
      $region51: #{preact_basic_block.3} parent=47 // pred_region
        %s3652 = smul.u32 16, %s23
      $region52: #{preact_basic_block.3} parent=47 // pred_fallthru
        _
    $region48: #{preact_basic_block.3} parent=5 // pred_fallthru
      _
    %p3653 = scmp.le.s32.totalorder 2, %s13
    // Predicated region
    $region53: #{preact_basic_block.3} parent=5 // pred_check
      %p3654 = pneg %p3653
    $region54: #{preact_basic_block.3} parent=5 // pred_check_branch
      %3656 = sbr.rel (%p3654) target = $region56
    $region55: #{preact_basic_block.3} parent=5 // pred_region
      %s3657 = ssub.s32 %s13, 2
      // Predicated region
      $region57: #{preact_basic_block.3} parent=55 // pred_check
        %p3658 = pneg %p247
      $region58: #{preact_basic_block.3} parent=55 // pred_check_branch
        %3660 = sbr.rel (%p3658) target = $region60
      $region59: #{preact_basic_block.3} parent=55 // pred_region
        %s3661 = smul.u32 16, %s25
        %p3662 = scmp.lt.s32.totalorder %s24, 1
        %s3663 = scalar_select %p3662, %s24, 1
        %p3664 = scmp.lt.s32.totalorder %s3661, 15
        %s3665 = scalar_select %p3664, %s3661, 15
        %s3666 = smul.addr %s3665, 2
        %s3667 = smul.addr %s3663, 32
        %s3668 = sadd.s32 %s3666, %s3667
        %s3669 = smul.addr %s3668, 8
        %s3670 = scalar_lea.vmem %s7, %s3669
      $region60: #{preact_basic_block.3} parent=55 // pred_fallthru
        _
    $region56: #{preact_basic_block.3} parent=5 // pred_fallthru
      _
  $region6: #{preact_basic_block.3} parent=0 // loop_footer
    %s17 = sadd.s32 1, %s13
  $region7: #{preact_basic_block.3} parent=0 // loop_footer_branch
    %12 = sbr.rel target = $region3
  $region8: #{preact_basic_block.3} parent=0 // loop_exit
    _

</llo_original>
